<compile_context>
chip_gen: v6e
topology: v6e:2x2x1
jax: 0.10.0
libtpu: 0.0.40
codegen_flags: <defaults>
</compile_context>

<pallas_src>
import functools
import math

import jax
import jax.numpy as jnp
from jax.experimental import pallas as pl
from jax.experimental.pallas import tpu as pltpu


# --------------------------------------------------------------------------
# Static layer plan for VGG_FeatureExtractor (stride-1 convs, floor-mode pools)
# --------------------------------------------------------------------------
def _vgg_plan(input_channel, output_channel, img_h, img_w):
    oc = [output_channel // 8, output_channel // 4, output_channel // 2, output_channel]
    raw = [
        # cin,          cout,  kh, kw, ph, pw, pool_h, pool_w, bn
        (input_channel, oc[0], 3, 3, 1, 1, 2, 2, False),
        (oc[0],         oc[1], 3, 3, 1, 1, 2, 2, False),
        (oc[1],         oc[2], 3, 3, 1, 1, 1, 1, False),
        (oc[2],         oc[2], 3, 3, 1, 1, 2, 1, False),
        (oc[2],         oc[3], 3, 3, 1, 1, 1, 1, True),
        (oc[3],         oc[3], 3, 3, 1, 1, 2, 1, True),
        (oc[3],         oc[3], 2, 2, 0, 0, 1, 1, False),
    ]
    plan = []
    h, w = img_h, img_w
    for (cin, cout, kh, kw, ph, pw, qh, qw, bn) in raw:
        assert (qh, qw) in ((1, 1), (2, 1), (2, 2))
        hp, wp = h + 2 * ph, w + 2 * pw
        ho, wo = hp - kh + 1, wp - kw + 1
        plan.append(dict(cin=cin, cout=cout, kh=kh, kw=kw, ph=ph, pw=pw,
                         h_in=h, w_in=w, hp=hp, wp=wp, ho=ho, wo=wo,
                         pool_h=qh, pool_w=qw,
                         h_out=ho // qh, w_out=wo // qw, bn=bn))
        h, w = ho // qh, wo // qw
    return plan


# --------------------------------------------------------------------------
# Fused forward kernel (one grid step == one image, everything stays in VMEM)
# --------------------------------------------------------------------------
def _make_fused_kernel(plan):
    n_layers = len(plan)

    def kernel(*refs):
        # ---- unpack refs: inputs, outputs, scratch (order fixed by wrapper) ----
        pos = 0
        x_ref = refs[pos]; pos += 1
        layer_refs = []
        for _ in plan:
            layer_refs.append((refs[pos], refs[pos + 1], refs[pos + 2]))
            pos += 3
        wlin_ref = refs[pos]; blin_ref = refs[pos + 1]; pos += 2
        out_ref = refs[pos]; feat_ref = refs[pos + 1]; pos += 2
        bufs = list(refs[pos:pos + n_layers]); pos += n_layers
        tmp_ref = refs[pos]                       # scratch for (2,2)-pool intermediate

        def write_padded(buf, val, ph, pw, c, h, w):
            # val: (h, w*c) written into the interior of a zero-padded (H, W*C) buffer
            if ph == 0 and pw == 0:
                buf[...] = val
            else:
                buf[...] = jnp.zeros(buf.shape, jnp.float32)
                buf[ph:ph + h, pw * c:(pw + w) * c] = val

        # image -> first padded buffer
        c0 = plan[0]
        write_padded(bufs[0], x_ref[...].astype(jnp.float32),
                     c0["ph"], c0["pw"], c0["cin"], c0["h_in"], c0["w_in"])

        y = None
        for l, cfg in enumerate(plan):
            cin, cout = cfg["cin"], cfg["cout"]
            kh, kw = cfg["kh"], cfg["kw"]
            ho, wo = cfg["ho"], cfg["wo"]
            wblk_ref, sc_ref, sh_ref = layer_refs[l]
            buf = bufs[l]

            # conv = kh*kw shifted matmuls against block-diagonal tap matrices (MXU)
            acc = jnp.zeros((ho, wo * cout), jnp.float32)
            t = 0
            for di in range(kh):
                for dj in range(kw):
                    slab = buf[di:di + ho, dj * cin:(dj + wo) * cin]   # (ho, wo*cin)
                    acc = acc + jnp.dot(slab, wblk_ref[t],
                                        preferred_element_type=jnp.float32)
                    t += 1
            # folded BatchNorm (inference running stats) / conv bias, then ReLU
            y = jnp.maximum(acc * sc_ref[...] + sh_ref[...], 0.0)

            # max-pool (kernel == stride, floor) and hand off to the next layer's buffer
            qh, qw = cfg["pool_h"], cfg["pool_w"]
            h2, w2 = cfg["h_out"], cfg["w_out"]
            if l + 1 < n_layers:
                nxt = plan[l + 1]
                nph, npw, nc = nxt["ph"], nxt["pw"], nxt["cin"]        # nc == cout
                nbuf = bufs[l + 1]
                if nph or npw:
                    nbuf[...] = jnp.zeros(nbuf.shape, jnp.float32)
                if qh == 1 and qw == 1:                                # no pooling
                    if nph or npw:
                        nbuf[nph:nph + ho, npw * nc:(npw + wo) * nc] = y
                    else:
                        nbuf[...] = y
                elif qw == 1:                                          # pool over H only
                    for hh in range(h2):
                        row = jnp.maximum(y[2 * hh:2 * hh + 1, :],
                                          y[2 * hh + 1:2 * hh + 2, :])
                        nbuf[nph + hh:nph + hh + 1,
                             npw * nc:(npw + wo) * nc] = row
                else:                                                  # pool over H and W
                    for hh in range(h2):
                        row = jnp.maximum(y[2 * hh:2 * hh + 1, :],
                                          y[2 * hh + 1:2 * hh + 2, :])
                        tmp_ref[hh:hh + 1, 0:wo * cout] = row
                    hpool = tmp_ref[0:h2, 0:wo * cout]
                    for ww in range(w2):
                        blk = jnp.maximum(
                            hpool[:, (2 * ww) * cout:(2 * ww + 1) * cout],
                            hpool[:, (2 * ww + 1) * cout:(2 * ww + 2) * cout])
                        nbuf[nph:nph + h2,
                             (npw + ww) * nc:(npw + ww + 1) * nc] = blk

        # ---- classifier head: mean over H', mean over W', Linear(C, 1) (VPU) ----
        last = plan[-1]
        hf, wf, cf = last["h_out"], last["w_out"], last["cout"]
        row = jnp.sum(y, axis=0, keepdims=True) * (1.0 / hf)           # mean over H'
        vf = row[:, 0:cf]
        for ww in range(1, wf):
            vf = vf + row[:, ww * cf:(ww + 1) * cf]
        vf = vf * (1.0 / wf)                                           # mean over W'
        feat_ref[...] = vf
        out_ref[...] = (jnp.sum(vf * wlin_ref[...], axis=1, keepdims=True)
                        + blin_ref[...])

    return kernel


# --------------------------------------------------------------------------
# Host-side glue: layout conversion + tiny weight preprocessing
# --------------------------------------------------------------------------
def _prep_inputs(image_nchw, params, plan):
    N, c_in, H0, W0 = image_nchw.shape
    inputs, in_specs = [], []

    def add_full(arr):
        arr = jnp.asarray(arr, jnp.float32)
        r = arr.ndim
        inputs.append(arr)
        in_specs.append(pl.BlockSpec(arr.shape, lambda n, _r=r: (0,) * _r))

    # image: NCHW -> per-image (H, W*C) tiles (C innermost on the lane dim)
    x2d = jnp.transpose(image_nchw, (0, 2, 3, 1)).reshape(N, H0, W0 * c_in)
    inputs.append(x2d.astype(jnp.float32))
    in_specs.append(pl.BlockSpec((None, H0, W0 * c_in), lambda n: (n, 0, 0)))

    for l, cfg in enumerate(plan):
        w = jnp.asarray(params[f"w{l + 1}"], jnp.float32)     # (cout, cin, kh, kw)
        cout, cin, kh, kw = w.shape
        wo = cfg["wo"]
        eye = jnp.eye(wo, dtype=jnp.float32)
        # block-diagonal tap matrices: (wo*cin, wo*cout), one per kernel offset
        taps = [jnp.kron(eye, w[:, :, di, dj].T)
                for di in range(kh) for dj in range(kw)]
        wblk = jnp.stack(taps)                                # (kh*kw, wo*cin, wo*cout)
        if cfg["bn"]:
            scale = params[f"bn{l + 1}_scale"]
            shift = params[f"bn{l + 1}_shift"]
        else:
            scale = jnp.ones((cout,), jnp.float32)
            shift = params[f"b{l + 1}"]
        sc = jnp.tile(jnp.asarray(scale, jnp.float32), wo).reshape(1, wo * cout)
        sh = jnp.tile(jnp.asarray(shift, jnp.float32), wo).reshape(1, wo * cout)
        add_full(wblk); add_full(sc); add_full(sh)

    add_full(jnp.asarray(params["pred_w"], jnp.float32).reshape(1, -1))
    add_full(jnp.asarray(params["pred_b"], jnp.float32).reshape(1, 1))
    return inputs, in_specs


def baseline_classifier_forward(image_nchw, params, extract_feature=False):
    # Transformation stage: args.Transformation == 'None' -> identity.
    N, c_in, H0, W0 = image_nchw.shape
    out_channels = params["pred_w"].shape[1]
    plan = _vgg_plan(c_in, out_channels, H0, W0)

    inputs, in_specs = _prep_inputs(image_nchw, params, plan)

    cf = plan[-1]["cout"]
    out_shapes = (jax.ShapeDtypeStruct((N, 1, 1), jnp.float32),
                  jax.ShapeDtypeStruct((N, 1, cf), jnp.float32))
    out_specs = (pl.BlockSpec((None, 1, 1), lambda n: (n, 0, 0)),
                 pl.BlockSpec((None, 1, cf), lambda n: (n, 0, 0)))

    # padded per-layer activation buffers + one (2,2)-pool intermediate, all tiny
    scratch = [pltpu.VMEM((cfg["hp"], cfg["wp"] * cfg["cin"]), jnp.float32)
               for cfg in plan]
    tmp_rows = max([cfg["h_out"] for cfg in plan if cfg["pool_w"] == 2] + [8])
    tmp_cols = max([cfg["wo"] * cfg["cout"] for cfg in plan if cfg["pool_w"] == 2] + [128])
    scratch.append(pltpu.VMEM((tmp_rows, tmp_cols), jnp.float32))

    out3, feat3 = pl.pallas_call(
        _make_fused_kernel(plan),
        out_shape=out_shapes,
        grid_spec=pltpu.PrefetchScalarGridSpec(
            num_scalar_prefetch=0,
            grid=(N,),
            in_specs=in_specs,
            out_specs=out_specs,
            scratch_shapes=scratch),
        compiler_params=pltpu.CompilerParams(
            dimension_semantics=("parallel",)),
    )(*inputs)

    out = out3.reshape(N, 1)
    feat = feat3.reshape(N, cf)
    if extract_feature:
        return out, feat
    return out


# --------------------------------------------------------------------------
# Deterministic parameter initialization (shapes per the module's __init__)
# --------------------------------------------------------------------------
def _conv_init(k, cout, cin, kh, kw, bias=True):
    kw_, kb_ = jax.random.split(k)
    fan_in = cin * kh * kw
    w = jax.random.normal(kw_, (cout, cin, kh, kw), jnp.float32) / math.sqrt(fan_in)
    b = 0.01 * jax.random.normal(kb_, (cout,), jnp.float32) if bias else None
    return w, b


def _bn_fold(k, c, eps=1e-5):
    k1, k2, k3, k4 = jax.random.split(k, 4)
    gamma = 1.0 + 0.1 * jax.random.normal(k1, (c,), jnp.float32)
    beta = 0.1 * jax.random.normal(k2, (c,), jnp.float32)
    mean = 0.1 * jax.random.normal(k3, (c,), jnp.float32)
    var = 1.0 + 0.1 * jax.random.uniform(k4, (c,), jnp.float32)
    scale = gamma * jax.lax.rsqrt(var + eps)
    shift = beta - mean * scale
    return scale, shift


def init_params(key, input_channel=1, output_channel=32):
    oc = [output_channel // 8, output_channel // 4, output_channel // 2, output_channel]
    ks = jax.random.split(key, 12)
    p = {}
    p["w1"], p["b1"] = _conv_init(ks[0], oc[0], input_channel, 3, 3)
    p["w2"], p["b2"] = _conv_init(ks[1], oc[1], oc[0], 3, 3)
    p["w3"], p["b3"] = _conv_init(ks[2], oc[2], oc[1], 3, 3)
    p["w4"], p["b4"] = _conv_init(ks[3], oc[2], oc[2], 3, 3)
    p["w5"], _ = _conv_init(ks[4], oc[3], oc[2], 3, 3, bias=False)
    p["bn5_scale"], p["bn5_shift"] = _bn_fold(ks[5], oc[3])
    p["w6"], _ = _conv_init(ks[6], oc[3], oc[3], 3, 3, bias=False)
    p["bn6_scale"], p["bn6_shift"] = _bn_fold(ks[7], oc[3])
    p["w7"], p["b7"] = _conv_init(ks[8], oc[3], oc[3], 2, 2)
    # nn.Linear(Classifier_input = output_channel, 1)
    p["pred_w"] = jax.random.normal(ks[9], (1, oc[3]), jnp.float32) / math.sqrt(oc[3])
    p["pred_b"] = 0.01 * jax.random.normal(ks[10], (1,), jnp.float32)
    return p


if __name__ == "__main__":
    key = jax.random.PRNGKey(0)
    kp, kx = jax.random.split(key)
    params = init_params(kp, input_channel=1, output_channel=32)
    # NCHW like PyTorch: (batch=2, input_channel=1, imgH=32, imgW=16)
    image = jax.random.normal(kx, (2, 1, 32, 16), jnp.float32)

    fwd = jax.jit(functools.partial(baseline_classifier_forward, extract_feature=True))
    out, feat = fwd(image, params)
    jax.block_until_ready((out, feat))
    assert out.shape == (2, 1), out.shape
    assert feat.shape == (2, 32), feat.shape
    print("KERNEL_OK")
</pallas_src>

<mosaic_0001>
module attributes {stable_mosaic.version = 11 : i64} {
  func.func @kernel(%arg0: i32, %arg1: memref<1x32x16xf32, #tpu.memory_space<vmem>>, %arg2: memref<9x16x64xf32, #tpu.memory_space<vmem>>, %arg3: memref<1x64xf32, #tpu.memory_space<vmem>>, %arg4: memref<1x64xf32, #tpu.memory_space<vmem>>, %arg5: memref<9x32x64xf32, #tpu.memory_space<vmem>>, %arg6: memref<1x64xf32, #tpu.memory_space<vmem>>, %arg7: memref<1x64xf32, #tpu.memory_space<vmem>>, %arg8: memref<9x32x64xf32, #tpu.memory_space<vmem>>, %arg9: memref<1x64xf32, #tpu.memory_space<vmem>>, %arg10: memref<1x64xf32, #tpu.memory_space<vmem>>, %arg11: memref<9x64x64xf32, #tpu.memory_space<vmem>>, %arg12: memref<1x64xf32, #tpu.memory_space<vmem>>, %arg13: memref<1x64xf32, #tpu.memory_space<vmem>>, %arg14: memref<9x64x128xf32, #tpu.memory_space<vmem>>, %arg15: memref<1x128xf32, #tpu.memory_space<vmem>>, %arg16: memref<1x128xf32, #tpu.memory_space<vmem>>, %arg17: memref<9x128x128xf32, #tpu.memory_space<vmem>>, %arg18: memref<1x128xf32, #tpu.memory_space<vmem>>, %arg19: memref<1x128xf32, #tpu.memory_space<vmem>>, %arg20: memref<4x96x96xf32, #tpu.memory_space<vmem>>, %arg21: memref<1x96xf32, #tpu.memory_space<vmem>>, %arg22: memref<1x96xf32, #tpu.memory_space<vmem>>, %arg23: memref<1x32xf32, #tpu.memory_space<vmem>>, %arg24: memref<1x1xf32, #tpu.memory_space<vmem>>, %arg25: memref<1x1x1xf32, #tpu.memory_space<vmem>>, %arg26: memref<1x1x32xf32, #tpu.memory_space<vmem>>, %arg27: memref<34x18xf32, #tpu.memory_space<vmem>>, %arg28: memref<18x40xf32, #tpu.memory_space<vmem>>, %arg29: memref<10x48xf32, #tpu.memory_space<vmem>>, %arg30: memref<10x96xf32, #tpu.memory_space<vmem>>, %arg31: memref<6x96xf32, #tpu.memory_space<vmem>>, %arg32: memref<6x192xf32, #tpu.memory_space<vmem>>, %arg33: memref<2x128xf32, #tpu.memory_space<vmem>>, %arg34: memref<16x128xf32, #tpu.memory_space<vmem>>) attributes {dimension_semantics = [#tpu.dimension_semantics<parallel>], iteration_bounds = array<i64: 2>, scalar_prefetch = 0 : i64, scratch_operands = 8 : i64, tpu.core_type = #tpu.core_type<tc>, window_params = [{transform_indices = @transform_0, window_bounds = array<i64: 1, 32, 16>}, {pipeline_mode = #tpu.pipeline_mode<synchronous>, transform_indices = @transform_1, window_bounds = array<i64: 9, 16, 64>}, {pipeline_mode = #tpu.pipeline_mode<synchronous>, transform_indices = @transform_2, window_bounds = array<i64: 1, 64>}, {pipeline_mode = #tpu.pipeline_mode<synchronous>, transform_indices = @transform_3, window_bounds = array<i64: 1, 64>}, {pipeline_mode = #tpu.pipeline_mode<synchronous>, transform_indices = @transform_4, window_bounds = array<i64: 9, 32, 64>}, {pipeline_mode = #tpu.pipeline_mode<synchronous>, transform_indices = @transform_5, window_bounds = array<i64: 1, 64>}, {pipeline_mode = #tpu.pipeline_mode<synchronous>, transform_indices = @transform_6, window_bounds = array<i64: 1, 64>}, {pipeline_mode = #tpu.pipeline_mode<synchronous>, transform_indices = @transform_7, window_bounds = array<i64: 9, 32, 64>}, {pipeline_mode = #tpu.pipeline_mode<synchronous>, transform_indices = @transform_8, window_bounds = array<i64: 1, 64>}, {pipeline_mode = #tpu.pipeline_mode<synchronous>, transform_indices = @transform_9, window_bounds = array<i64: 1, 64>}, {pipeline_mode = #tpu.pipeline_mode<synchronous>, transform_indices = @transform_10, window_bounds = array<i64: 9, 64, 64>}, {pipeline_mode = #tpu.pipeline_mode<synchronous>, transform_indices = @transform_11, window_bounds = array<i64: 1, 64>}, {pipeline_mode = #tpu.pipeline_mode<synchronous>, transform_indices = @transform_12, window_bounds = array<i64: 1, 64>}, {pipeline_mode = #tpu.pipeline_mode<synchronous>, transform_indices = @transform_13, window_bounds = array<i64: 9, 64, 128>}, {pipeline_mode = #tpu.pipeline_mode<synchronous>, transform_indices = @transform_14, window_bounds = array<i64: 1, 128>}, {pipeline_mode = #tpu.pipeline_mode<synchronous>, transform_indices = @transform_15, window_bounds = array<i64: 1, 128>}, {pipeline_mode = #tpu.pipeline_mode<synchronous>, transform_indices = @transform_16, window_bounds = array<i64: 9, 128, 128>}, {pipeline_mode = #tpu.pipeline_mode<synchronous>, transform_indices = @transform_17, window_bounds = array<i64: 1, 128>}, {pipeline_mode = #tpu.pipeline_mode<synchronous>, transform_indices = @transform_18, window_bounds = array<i64: 1, 128>}, {pipeline_mode = #tpu.pipeline_mode<synchronous>, transform_indices = @transform_19, window_bounds = array<i64: 4, 96, 96>}, {pipeline_mode = #tpu.pipeline_mode<synchronous>, transform_indices = @transform_20, window_bounds = array<i64: 1, 96>}, {pipeline_mode = #tpu.pipeline_mode<synchronous>, transform_indices = @transform_21, window_bounds = array<i64: 1, 96>}, {pipeline_mode = #tpu.pipeline_mode<synchronous>, transform_indices = @transform_22, window_bounds = array<i64: 1, 32>}, {pipeline_mode = #tpu.pipeline_mode<synchronous>, transform_indices = @transform_23, window_bounds = array<i64: 1, 1>}, {transform_indices = @transform_24, window_bounds = array<i64: 1, 1, 1>}, {transform_indices = @transform_25, window_bounds = array<i64: 1, 1, 32>}]} {
    %c0 = arith.constant 0 : index
    %c0_0 = arith.constant 0 : index
    %c0_1 = arith.constant 0 : index
    %0 = vector.load %arg1[%c0, %c0_0, %c0_1] : memref<1x32x16xf32, #tpu.memory_space<vmem>>, vector<1x32x16xf32>
    %1 = vector.shape_cast %0 : vector<1x32x16xf32> to vector<32x16xf32>
    %cst = arith.constant 0.000000e+00 : f32
    %2 = vector.broadcast %cst : f32 to vector<34x18xf32>
    %c0_2 = arith.constant 0 : index
    %c0_3 = arith.constant 0 : index
    %3 = vector.load %arg27[%c0_2, %c0_3] : memref<34x18xf32, #tpu.memory_space<vmem>>, vector<34x18xf32>
    tpu.vector_store %arg27[%c0_2, %c0_3], %2 {strides = array<i32>} : memref<34x18xf32, #tpu.memory_space<vmem>>, vector<34x18xf32>,
    %c1 = arith.constant 1 : index
    %c1_4 = arith.constant 1 : index
    %4 = vector.load %arg27[%c1, %c1_4] : memref<34x18xf32, #tpu.memory_space<vmem>>, vector<32x16xf32>
    tpu.vector_store %arg27[%c1, %c1_4], %1 {strides = array<i32>} : memref<34x18xf32, #tpu.memory_space<vmem>>, vector<32x16xf32>,
    %cst_5 = arith.constant 0.000000e+00 : f32
    %5 = vector.broadcast %cst_5 : f32 to vector<32x64xf32>
    %c0_6 = arith.constant 0 : index
    %c0_7 = arith.constant 0 : index
    %6 = vector.load %arg27[%c0_6, %c0_7] : memref<34x18xf32, #tpu.memory_space<vmem>>, vector<32x16xf32>
    %c0_8 = arith.constant 0 : index
    %c0_9 = arith.constant 0 : index
    %c0_10 = arith.constant 0 : index
    %7 = vector.load %arg2[%c0_8, %c0_9, %c0_10] : memref<9x16x64xf32, #tpu.memory_space<vmem>>, vector<1x16x64xf32>
    %8 = vector.shape_cast %7 : vector<1x16x64xf32> to vector<16x64xf32>
    %cst_11 = arith.constant dense<0.000000e+00> : vector<32x64xf32>
    %9 = tpu.matmul %6, %8, %cst_11 {dimension_numbers = #tpu.dot_dimension_numbers<[1], [0], [0], [1], [0, 0, 1, 1], [], []>} : vector<32x16xf32>, vector<16x64xf32>, vector<32x64xf32> -> vector<32x64xf32>
    %10 = arith.addf %5, %9 : vector<32x64xf32>
    %c0_12 = arith.constant 0 : index
    %c1_13 = arith.constant 1 : index
    %11 = vector.load %arg27[%c0_12, %c1_13] : memref<34x18xf32, #tpu.memory_space<vmem>>, vector<32x16xf32>
    %c1_14 = arith.constant 1 : index
    %c0_15 = arith.constant 0 : index
    %c0_16 = arith.constant 0 : index
    %12 = vector.load %arg2[%c1_14, %c0_15, %c0_16] : memref<9x16x64xf32, #tpu.memory_space<vmem>>, vector<1x16x64xf32>
    %13 = vector.shape_cast %12 : vector<1x16x64xf32> to vector<16x64xf32>
    %cst_17 = arith.constant dense<0.000000e+00> : vector<32x64xf32>
    %14 = tpu.matmul %11, %13, %cst_17 {dimension_numbers = #tpu.dot_dimension_numbers<[1], [0], [0], [1], [0, 0, 1, 1], [], []>} : vector<32x16xf32>, vector<16x64xf32>, vector<32x64xf32> -> vector<32x64xf32>
    %15 = arith.addf %10, %14 : vector<32x64xf32>
    %c0_18 = arith.constant 0 : index
    %c2 = arith.constant 2 : index
    %16 = vector.load %arg27[%c0_18, %c2] : memref<34x18xf32, #tpu.memory_space<vmem>>, vector<32x16xf32>
    %c2_19 = arith.constant 2 : index
    %c0_20 = arith.constant 0 : index
    %c0_21 = arith.constant 0 : index
    %17 = vector.load %arg2[%c2_19, %c0_20, %c0_21] : memref<9x16x64xf32, #tpu.memory_space<vmem>>, vector<1x16x64xf32>
    %18 = vector.shape_cast %17 : vector<1x16x64xf32> to vector<16x64xf32>
    %cst_22 = arith.constant dense<0.000000e+00> : vector<32x64xf32>
    %19 = tpu.matmul %16, %18, %cst_22 {dimension_numbers = #tpu.dot_dimension_numbers<[1], [0], [0], [1], [0, 0, 1, 1], [], []>} : vector<32x16xf32>, vector<16x64xf32>, vector<32x64xf32> -> vector<32x64xf32>
    %20 = arith.addf %15, %19 : vector<32x64xf32>
    %c1_23 = arith.constant 1 : index
    %c0_24 = arith.constant 0 : index
    %21 = vector.load %arg27[%c1_23, %c0_24] : memref<34x18xf32, #tpu.memory_space<vmem>>, vector<32x16xf32>
    %c3 = arith.constant 3 : index
    %c0_25 = arith.constant 0 : index
    %c0_26 = arith.constant 0 : index
    %22 = vector.load %arg2[%c3, %c0_25, %c0_26] : memref<9x16x64xf32, #tpu.memory_space<vmem>>, vector<1x16x64xf32>
    %23 = vector.shape_cast %22 : vector<1x16x64xf32> to vector<16x64xf32>
    %cst_27 = arith.constant dense<0.000000e+00> : vector<32x64xf32>
    %24 = tpu.matmul %21, %23, %cst_27 {dimension_numbers = #tpu.dot_dimension_numbers<[1], [0], [0], [1], [0, 0, 1, 1], [], []>} : vector<32x16xf32>, vector<16x64xf32>, vector<32x64xf32> -> vector<32x64xf32>
    %25 = arith.addf %20, %24 : vector<32x64xf32>
    %c1_28 = arith.constant 1 : index
    %c1_29 = arith.constant 1 : index
    %26 = vector.load %arg27[%c1_28, %c1_29] : memref<34x18xf32, #tpu.memory_space<vmem>>, vector<32x16xf32>
    %c4 = arith.constant 4 : index
    %c0_30 = arith.constant 0 : index
    %c0_31 = arith.constant 0 : index
    %27 = vector.load %arg2[%c4, %c0_30, %c0_31] : memref<9x16x64xf32, #tpu.memory_space<vmem>>, vector<1x16x64xf32>
    %28 = vector.shape_cast %27 : vector<1x16x64xf32> to vector<16x64xf32>
    %cst_32 = arith.constant dense<0.000000e+00> : vector<32x64xf32>
    %29 = tpu.matmul %26, %28, %cst_32 {dimension_numbers = #tpu.dot_dimension_numbers<[1], [0], [0], [1], [0, 0, 1, 1], [], []>} : vector<32x16xf32>, vector<16x64xf32>, vector<32x64xf32> -> vector<32x64xf32>
    %30 = arith.addf %25, %29 : vector<32x64xf32>
    %c1_33 = arith.constant 1 : index
    %c2_34 = arith.constant 2 : index
    %31 = vector.load %arg27[%c1_33, %c2_34] : memref<34x18xf32, #tpu.memory_space<vmem>>, vector<32x16xf32>
    %c5 = arith.constant 5 : index
    %c0_35 = arith.constant 0 : index
    %c0_36 = arith.constant 0 : index
    %32 = vector.load %arg2[%c5, %c0_35, %c0_36] : memref<9x16x64xf32, #tpu.memory_space<vmem>>, vector<1x16x64xf32>
    %33 = vector.shape_cast %32 : vector<1x16x64xf32> to vector<16x64xf32>
    %cst_37 = arith.constant dense<0.000000e+00> : vector<32x64xf32>
    %34 = tpu.matmul %31, %33, %cst_37 {dimension_numbers = #tpu.dot_dimension_numbers<[1], [0], [0], [1], [0, 0, 1, 1], [], []>} : vector<32x16xf32>, vector<16x64xf32>, vector<32x64xf32> -> vector<32x64xf32>
    %35 = arith.addf %30, %34 : vector<32x64xf32>
    %c2_38 = arith.constant 2 : index
    %c0_39 = arith.constant 0 : index
    %36 = vector.load %arg27[%c2_38, %c0_39] : memref<34x18xf32, #tpu.memory_space<vmem>>, vector<32x16xf32>
    %c6 = arith.constant 6 : index
    %c0_40 = arith.constant 0 : index
    %c0_41 = arith.constant 0 : index
    %37 = vector.load %arg2[%c6, %c0_40, %c0_41] : memref<9x16x64xf32, #tpu.memory_space<vmem>>, vector<1x16x64xf32>
    %38 = vector.shape_cast %37 : vector<1x16x64xf32> to vector<16x64xf32>
    %cst_42 = arith.constant dense<0.000000e+00> : vector<32x64xf32>
    %39 = tpu.matmul %36, %38, %cst_42 {dimension_numbers = #tpu.dot_dimension_numbers<[1], [0], [0], [1], [0, 0, 1, 1], [], []>} : vector<32x16xf32>, vector<16x64xf32>, vector<32x64xf32> -> vector<32x64xf32>
    %40 = arith.addf %35, %39 : vector<32x64xf32>
    %c2_43 = arith.constant 2 : index
    %c1_44 = arith.constant 1 : index
    %41 = vector.load %arg27[%c2_43, %c1_44] : memref<34x18xf32, #tpu.memory_space<vmem>>, vector<32x16xf32>
    %c7 = arith.constant 7 : index
    %c0_45 = arith.constant 0 : index
    %c0_46 = arith.constant 0 : index
    %42 = vector.load %arg2[%c7, %c0_45, %c0_46] : memref<9x16x64xf32, #tpu.memory_space<vmem>>, vector<1x16x64xf32>
    %43 = vector.shape_cast %42 : vector<1x16x64xf32> to vector<16x64xf32>
    %cst_47 = arith.constant dense<0.000000e+00> : vector<32x64xf32>
    %44 = tpu.matmul %41, %43, %cst_47 {dimension_numbers = #tpu.dot_dimension_numbers<[1], [0], [0], [1], [0, 0, 1, 1], [], []>} : vector<32x16xf32>, vector<16x64xf32>, vector<32x64xf32> -> vector<32x64xf32>
    %45 = arith.addf %40, %44 : vector<32x64xf32>
    %c2_48 = arith.constant 2 : index
    %c2_49 = arith.constant 2 : index
    %46 = vector.load %arg27[%c2_48, %c2_49] : memref<34x18xf32, #tpu.memory_space<vmem>>, vector<32x16xf32>
    %c8 = arith.constant 8 : index
    %c0_50 = arith.constant 0 : index
    %c0_51 = arith.constant 0 : index
    %47 = vector.load %arg2[%c8, %c0_50, %c0_51] : memref<9x16x64xf32, #tpu.memory_space<vmem>>, vector<1x16x64xf32>
    %48 = vector.shape_cast %47 : vector<1x16x64xf32> to vector<16x64xf32>
    %cst_52 = arith.constant dense<0.000000e+00> : vector<32x64xf32>
    %49 = tpu.matmul %46, %48, %cst_52 {dimension_numbers = #tpu.dot_dimension_numbers<[1], [0], [0], [1], [0, 0, 1, 1], [], []>} : vector<32x16xf32>, vector<16x64xf32>, vector<32x64xf32> -> vector<32x64xf32>
    %50 = arith.addf %45, %49 : vector<32x64xf32>
    %c0_53 = arith.constant 0 : index
    %c0_54 = arith.constant 0 : index
    %51 = vector.load %arg3[%c0_53, %c0_54] : memref<1x64xf32, #tpu.memory_space<vmem>>, vector<1x64xf32>
    %52 = vector.broadcast %51 : vector<1x64xf32> to vector<32x64xf32>
    %53 = arith.mulf %50, %52 : vector<32x64xf32>
    %c0_55 = arith.constant 0 : index
    %c0_56 = arith.constant 0 : index
    %54 = vector.load %arg4[%c0_55, %c0_56] : memref<1x64xf32, #tpu.memory_space<vmem>>, vector<1x64xf32>
    %55 = vector.broadcast %54 : vector<1x64xf32> to vector<32x64xf32>
    %56 = arith.addf %53, %55 : vector<32x64xf32>
    %cst_57 = arith.constant 0.000000e+00 : f32
    %57 = vector.broadcast %cst_57 : f32 to vector<32x64xf32>
    %58 = arith.maximumf %56, %57 : vector<32x64xf32>
    %cst_58 = arith.constant 0.000000e+00 : f32
    %59 = vector.broadcast %cst_58 : f32 to vector<18x40xf32>
    %c0_59 = arith.constant 0 : index
    %c0_60 = arith.constant 0 : index
    %60 = vector.load %arg28[%c0_59, %c0_60] : memref<18x40xf32, #tpu.memory_space<vmem>>, vector<18x40xf32>
    tpu.vector_store %arg28[%c0_59, %c0_60], %59 {strides = array<i32>} : memref<18x40xf32, #tpu.memory_space<vmem>>, vector<18x40xf32>,
    %61 = vector.extract_strided_slice %58 {offsets = [0, 0], sizes = [1, 64], strides = [1, 1]} : vector<32x64xf32> to vector<1x64xf32>
    %62 = vector.extract_strided_slice %58 {offsets = [1, 0], sizes = [1, 64], strides = [1, 1]} : vector<32x64xf32> to vector<1x64xf32>
    %63 = arith.maximumf %61, %62 : vector<1x64xf32>
    %c0_61 = arith.constant 0 : index
    %c0_62 = arith.constant 0 : index
    %64 = vector.load %arg34[%c0_61, %c0_62] : memref<16x128xf32, #tpu.memory_space<vmem>>, vector<1x64xf32>
    tpu.vector_store %arg34[%c0_61, %c0_62], %63 {strides = array<i32>} : memref<16x128xf32, #tpu.memory_space<vmem>>, vector<1x64xf32>,
    %65 = vector.extract_strided_slice %58 {offsets = [2, 0], sizes = [1, 64], strides = [1, 1]} : vector<32x64xf32> to vector<1x64xf32>
    %66 = vector.extract_strided_slice %58 {offsets = [3, 0], sizes = [1, 64], strides = [1, 1]} : vector<32x64xf32> to vector<1x64xf32>
    %67 = arith.maximumf %65, %66 : vector<1x64xf32>
    %c1_63 = arith.constant 1 : index
    %c0_64 = arith.constant 0 : index
    %68 = vector.load %arg34[%c1_63, %c0_64] : memref<16x128xf32, #tpu.memory_space<vmem>>, vector<1x64xf32>
    tpu.vector_store %arg34[%c1_63, %c0_64], %67 {strides = array<i32>} : memref<16x128xf32, #tpu.memory_space<vmem>>, vector<1x64xf32>,
    %69 = vector.extract_strided_slice %58 {offsets = [4, 0], sizes = [1, 64], strides = [1, 1]} : vector<32x64xf32> to vector<1x64xf32>
    %70 = vector.extract_strided_slice %58 {offsets = [5, 0], sizes = [1, 64], strides = [1, 1]} : vector<32x64xf32> to vector<1x64xf32>
    %71 = arith.maximumf %69, %70 : vector<1x64xf32>
    %c2_65 = arith.constant 2 : index
    %c0_66 = arith.constant 0 : index
    %72 = vector.load %arg34[%c2_65, %c0_66] : memref<16x128xf32, #tpu.memory_space<vmem>>, vector<1x64xf32>
    tpu.vector_store %arg34[%c2_65, %c0_66], %71 {strides = array<i32>} : memref<16x128xf32, #tpu.memory_space<vmem>>, vector<1x64xf32>,
    %73 = vector.extract_strided_slice %58 {offsets = [6, 0], sizes = [1, 64], strides = [1, 1]} : vector<32x64xf32> to vector<1x64xf32>
    %74 = vector.extract_strided_slice %58 {offsets = [7, 0], sizes = [1, 64], strides = [1, 1]} : vector<32x64xf32> to vector<1x64xf32>
    %75 = arith.maximumf %73, %74 : vector<1x64xf32>
    %c3_67 = arith.constant 3 : index
    %c0_68 = arith.constant 0 : index
    %76 = vector.load %arg34[%c3_67, %c0_68] : memref<16x128xf32, #tpu.memory_space<vmem>>, vector<1x64xf32>
    tpu.vector_store %arg34[%c3_67, %c0_68], %75 {strides = array<i32>} : memref<16x128xf32, #tpu.memory_space<vmem>>, vector<1x64xf32>,
    %77 = vector.extract_strided_slice %58 {offsets = [8, 0], sizes = [1, 64], strides = [1, 1]} : vector<32x64xf32> to vector<1x64xf32>
    %78 = vector.extract_strided_slice %58 {offsets = [9, 0], sizes = [1, 64], strides = [1, 1]} : vector<32x64xf32> to vector<1x64xf32>
    %79 = arith.maximumf %77, %78 : vector<1x64xf32>
    %c4_69 = arith.constant 4 : index
    %c0_70 = arith.constant 0 : index
    %80 = vector.load %arg34[%c4_69, %c0_70] : memref<16x128xf32, #tpu.memory_space<vmem>>, vector<1x64xf32>
    tpu.vector_store %arg34[%c4_69, %c0_70], %79 {strides = array<i32>} : memref<16x128xf32, #tpu.memory_space<vmem>>, vector<1x64xf32>,
    %81 = vector.extract_strided_slice %58 {offsets = [10, 0], sizes = [1, 64], strides = [1, 1]} : vector<32x64xf32> to vector<1x64xf32>
    %82 = vector.extract_strided_slice %58 {offsets = [11, 0], sizes = [1, 64], strides = [1, 1]} : vector<32x64xf32> to vector<1x64xf32>
    %83 = arith.maximumf %81, %82 : vector<1x64xf32>
    %c5_71 = arith.constant 5 : index
    %c0_72 = arith.constant 0 : index
    %84 = vector.load %arg34[%c5_71, %c0_72] : memref<16x128xf32, #tpu.memory_space<vmem>>, vector<1x64xf32>
    tpu.vector_store %arg34[%c5_71, %c0_72], %83 {strides = array<i32>} : memref<16x128xf32, #tpu.memory_space<vmem>>, vector<1x64xf32>,
    %85 = vector.extract_strided_slice %58 {offsets = [12, 0], sizes = [1, 64], strides = [1, 1]} : vector<32x64xf32> to vector<1x64xf32>
    %86 = vector.extract_strided_slice %58 {offsets = [13, 0], sizes = [1, 64], strides = [1, 1]} : vector<32x64xf32> to vector<1x64xf32>
    %87 = arith.maximumf %85, %86 : vector<1x64xf32>
    %c6_73 = arith.constant 6 : index
    %c0_74 = arith.constant 0 : index
    %88 = vector.load %arg34[%c6_73, %c0_74] : memref<16x128xf32, #tpu.memory_space<vmem>>, vector<1x64xf32>
    tpu.vector_store %arg34[%c6_73, %c0_74], %87 {strides = array<i32>} : memref<16x128xf32, #tpu.memory_space<vmem>>, vector<1x64xf32>,
    %89 = vector.extract_strided_slice %58 {offsets = [14, 0], sizes = [1, 64], strides = [1, 1]} : vector<32x64xf32> to vector<1x64xf32>
    %90 = vector.extract_strided_slice %58 {offsets = [15, 0], sizes = [1, 64], strides = [1, 1]} : vector<32x64xf32> to vector<1x64xf32>
    %91 = arith.maximumf %89, %90 : vector<1x64xf32>
    %c7_75 = arith.constant 7 : index
    %c0_76 = arith.constant 0 : index
    %92 = vector.load %arg34[%c7_75, %c0_76] : memref<16x128xf32, #tpu.memory_space<vmem>>, vector<1x64xf32>
    tpu.vector_store %arg34[%c7_75, %c0_76], %91 {strides = array<i32>} : memref<16x128xf32, #tpu.memory_space<vmem>>, vector<1x64xf32>,
    %93 = vector.extract_strided_slice %58 {offsets = [16, 0], sizes = [1, 64], strides = [1, 1]} : vector<32x64xf32> to vector<1x64xf32>
    %94 = vector.extract_strided_slice %58 {offsets = [17, 0], sizes = [1, 64], strides = [1, 1]} : vector<32x64xf32> to vector<1x64xf32>
    %95 = arith.maximumf %93, %94 : vector<1x64xf32>
    %c8_77 = arith.constant 8 : index
    %c0_78 = arith.constant 0 : index
    %96 = vector.load %arg34[%c8_77, %c0_78] : memref<16x128xf32, #tpu.memory_space<vmem>>, vector<1x64xf32>
    tpu.vector_store %arg34[%c8_77, %c0_78], %95 {strides = array<i32>} : memref<16x128xf32, #tpu.memory_space<vmem>>, vector<1x64xf32>,
    %97 = vector.extract_strided_slice %58 {offsets = [18, 0], sizes = [1, 64], strides = [1, 1]} : vector<32x64xf32> to vector<1x64xf32>
    %98 = vector.extract_strided_slice %58 {offsets = [19, 0], sizes = [1, 64], strides = [1, 1]} : vector<32x64xf32> to vector<1x64xf32>
    %99 = arith.maximumf %97, %98 : vector<1x64xf32>
    %c9 = arith.constant 9 : index
    %c0_79 = arith.constant 0 : index
    %100 = vector.load %arg34[%c9, %c0_79] : memref<16x128xf32, #tpu.memory_space<vmem>>, vector<1x64xf32>
    tpu.vector_store %arg34[%c9, %c0_79], %99 {strides = array<i32>} : memref<16x128xf32, #tpu.memory_space<vmem>>, vector<1x64xf32>,
    %101 = vector.extract_strided_slice %58 {offsets = [20, 0], sizes = [1, 64], strides = [1, 1]} : vector<32x64xf32> to vector<1x64xf32>
    %102 = vector.extract_strided_slice %58 {offsets = [21, 0], sizes = [1, 64], strides = [1, 1]} : vector<32x64xf32> to vector<1x64xf32>
    %103 = arith.maximumf %101, %102 : vector<1x64xf32>
    %c10 = arith.constant 10 : index
    %c0_80 = arith.constant 0 : index
    %104 = vector.load %arg34[%c10, %c0_80] : memref<16x128xf32, #tpu.memory_space<vmem>>, vector<1x64xf32>
    tpu.vector_store %arg34[%c10, %c0_80], %103 {strides = array<i32>} : memref<16x128xf32, #tpu.memory_space<vmem>>, vector<1x64xf32>,
    %105 = vector.extract_strided_slice %58 {offsets = [22, 0], sizes = [1, 64], strides = [1, 1]} : vector<32x64xf32> to vector<1x64xf32>
    %106 = vector.extract_strided_slice %58 {offsets = [23, 0], sizes = [1, 64], strides = [1, 1]} : vector<32x64xf32> to vector<1x64xf32>
    %107 = arith.maximumf %105, %106 : vector<1x64xf32>
    %c11 = arith.constant 11 : index
    %c0_81 = arith.constant 0 : index
    %108 = vector.load %arg34[%c11, %c0_81] : memref<16x128xf32, #tpu.memory_space<vmem>>, vector<1x64xf32>
    tpu.vector_store %arg34[%c11, %c0_81], %107 {strides = array<i32>} : memref<16x128xf32, #tpu.memory_space<vmem>>, vector<1x64xf32>,
    %109 = vector.extract_strided_slice %58 {offsets = [24, 0], sizes = [1, 64], strides = [1, 1]} : vector<32x64xf32> to vector<1x64xf32>
    %110 = vector.extract_strided_slice %58 {offsets = [25, 0], sizes = [1, 64], strides = [1, 1]} : vector<32x64xf32> to vector<1x64xf32>
    %111 = arith.maximumf %109, %110 : vector<1x64xf32>
    %c12 = arith.constant 12 : index
    %c0_82 = arith.constant 0 : index
    %112 = vector.load %arg34[%c12, %c0_82] : memref<16x128xf32, #tpu.memory_space<vmem>>, vector<1x64xf32>
    tpu.vector_store %arg34[%c12, %c0_82], %111 {strides = array<i32>} : memref<16x128xf32, #tpu.memory_space<vmem>>, vector<1x64xf32>,
    %113 = vector.extract_strided_slice %58 {offsets = [26, 0], sizes = [1, 64], strides = [1, 1]} : vector<32x64xf32> to vector<1x64xf32>
    %114 = vector.extract_strided_slice %58 {offsets = [27, 0], sizes = [1, 64], strides = [1, 1]} : vector<32x64xf32> to vector<1x64xf32>
    %115 = arith.maximumf %113, %114 : vector<1x64xf32>
    %c13 = arith.constant 13 : index
    %c0_83 = arith.constant 0 : index
    %116 = vector.load %arg34[%c13, %c0_83] : memref<16x128xf32, #tpu.memory_space<vmem>>, vector<1x64xf32>
    tpu.vector_store %arg34[%c13, %c0_83], %115 {strides = array<i32>} : memref<16x128xf32, #tpu.memory_space<vmem>>, vector<1x64xf32>,
    %117 = vector.extract_strided_slice %58 {offsets = [28, 0], sizes = [1, 64], strides = [1, 1]} : vector<32x64xf32> to vector<1x64xf32>
    %118 = vector.extract_strided_slice %58 {offsets = [29, 0], sizes = [1, 64], strides = [1, 1]} : vector<32x64xf32> to vector<1x64xf32>
    %119 = arith.maximumf %117, %118 : vector<1x64xf32>
    %c14 = arith.constant 14 : index
    %c0_84 = arith.constant 0 : index
    %120 = vector.load %arg34[%c14, %c0_84] : memref<16x128xf32, #tpu.memory_space<vmem>>, vector<1x64xf32>
    tpu.vector_store %arg34[%c14, %c0_84], %119 {strides = array<i32>} : memref<16x128xf32, #tpu.memory_space<vmem>>, vector<1x64xf32>,
    %121 = vector.extract_strided_slice %58 {offsets = [30, 0], sizes = [1, 64], strides = [1, 1]} : vector<32x64xf32> to vector<1x64xf32>
    %122 = vector.extract_strided_slice %58 {offsets = [31, 0], sizes = [1, 64], strides = [1, 1]} : vector<32x64xf32> to vector<1x64xf32>
    %123 = arith.maximumf %121, %122 : vector<1x64xf32>
    %c15 = arith.constant 15 : index
    %c0_85 = arith.constant 0 : index
    %124 = vector.load %arg34[%c15, %c0_85] : memref<16x128xf32, #tpu.memory_space<vmem>>, vector<1x64xf32>
    tpu.vector_store %arg34[%c15, %c0_85], %123 {strides = array<i32>} : memref<16x128xf32, #tpu.memory_space<vmem>>, vector<1x64xf32>,
    %c0_86 = arith.constant 0 : index
    %c0_87 = arith.constant 0 : index
    %125 = vector.load %arg34[%c0_86, %c0_87] : memref<16x128xf32, #tpu.memory_space<vmem>>, vector<16x64xf32>
    %126 = vector.extract_strided_slice %125 {offsets = [0, 0], sizes = [16, 4], strides = [1, 1]} : vector<16x64xf32> to vector<16x4xf32>
    %127 = vector.extract_strided_slice %125 {offsets = [0, 4], sizes = [16, 4], strides = [1, 1]} : vector<16x64xf32> to vector<16x4xf32>
    %128 = arith.maximumf %126, %127 : vector<16x4xf32>
    %c1_88 = arith.constant 1 : index
    %c4_89 = arith.constant 4 : index
    %129 = vector.load %arg28[%c1_88, %c4_89] : memref<18x40xf32, #tpu.memory_space<vmem>>, vector<16x4xf32>
    tpu.vector_store %arg28[%c1_88, %c4_89], %128 {strides = array<i32>} : memref<18x40xf32, #tpu.memory_space<vmem>>, vector<16x4xf32>,
    %130 = vector.extract_strided_slice %125 {offsets = [0, 8], sizes = [16, 4], strides = [1, 1]} : vector<16x64xf32> to vector<16x4xf32>
    %131 = vector.extract_strided_slice %125 {offsets = [0, 12], sizes = [16, 4], strides = [1, 1]} : vector<16x64xf32> to vector<16x4xf32>
    %132 = arith.maximumf %130, %131 : vector<16x4xf32>
    %c1_90 = arith.constant 1 : index
    %c8_91 = arith.constant 8 : index
    %133 = vector.load %arg28[%c1_90, %c8_91] : memref<18x40xf32, #tpu.memory_space<vmem>>, vector<16x4xf32>
    tpu.vector_store %arg28[%c1_90, %c8_91], %132 {strides = array<i32>} : memref<18x40xf32, #tpu.memory_space<vmem>>, vector<16x4xf32>,
    %134 = vector.extract_strided_slice %125 {offsets = [0, 16], sizes = [16, 4], strides = [1, 1]} : vector<16x64xf32> to vector<16x4xf32>
    %135 = vector.extract_strided_slice %125 {offsets = [0, 20], sizes = [16, 4], strides = [1, 1]} : vector<16x64xf32> to vector<16x4xf32>
    %136 = arith.maximumf %134, %135 : vector<16x4xf32>
    %c1_92 = arith.constant 1 : index
    %c12_93 = arith.constant 12 : index
    %137 = vector.load %arg28[%c1_92, %c12_93] : memref<18x40xf32, #tpu.memory_space<vmem>>, vector<16x4xf32>
    tpu.vector_store %arg28[%c1_92, %c12_93], %136 {strides = array<i32>} : memref<18x40xf32, #tpu.memory_space<vmem>>, vector<16x4xf32>,
    %138 = vector.extract_strided_slice %125 {offsets = [0, 24], sizes = [16, 4], strides = [1, 1]} : vector<16x64xf32> to vector<16x4xf32>
    %139 = vector.extract_strided_slice %125 {offsets = [0, 28], sizes = [16, 4], strides = [1, 1]} : vector<16x64xf32> to vector<16x4xf32>
    %140 = arith.maximumf %138, %139 : vector<16x4xf32>
    %c1_94 = arith.constant 1 : index
    %c16 = arith.constant 16 : index
    %141 = vector.load %arg28[%c1_94, %c16] : memref<18x40xf32, #tpu.memory_space<vmem>>, vector<16x4xf32>
    tpu.vector_store %arg28[%c1_94, %c16], %140 {strides = array<i32>} : memref<18x40xf32, #tpu.memory_space<vmem>>, vector<16x4xf32>,
    %142 = vector.extract_strided_slice %125 {offsets = [0, 32], sizes = [16, 4], strides = [1, 1]} : vector<16x64xf32> to vector<16x4xf32>
    %143 = vector.extract_strided_slice %125 {offsets = [0, 36], sizes = [16, 4], strides = [1, 1]} : vector<16x64xf32> to vector<16x4xf32>
    %144 = arith.maximumf %142, %143 : vector<16x4xf32>
    %c1_95 = arith.constant 1 : index
    %c20 = arith.constant 20 : index
    %145 = vector.load %arg28[%c1_95, %c20] : memref<18x40xf32, #tpu.memory_space<vmem>>, vector<16x4xf32>
    tpu.vector_store %arg28[%c1_95, %c20], %144 {strides = array<i32>} : memref<18x40xf32, #tpu.memory_space<vmem>>, vector<16x4xf32>,
    %146 = vector.extract_strided_slice %125 {offsets = [0, 40], sizes = [16, 4], strides = [1, 1]} : vector<16x64xf32> to vector<16x4xf32>
    %147 = vector.extract_strided_slice %125 {offsets = [0, 44], sizes = [16, 4], strides = [1, 1]} : vector<16x64xf32> to vector<16x4xf32>
    %148 = arith.maximumf %146, %147 : vector<16x4xf32>
    %c1_96 = arith.constant 1 : index
    %c24 = arith.constant 24 : index
    %149 = vector.load %arg28[%c1_96, %c24] : memref<18x40xf32, #tpu.memory_space<vmem>>, vector<16x4xf32>
    tpu.vector_store %arg28[%c1_96, %c24], %148 {strides = array<i32>} : memref<18x40xf32, #tpu.memory_space<vmem>>, vector<16x4xf32>,
    %150 = vector.extract_strided_slice %125 {offsets = [0, 48], sizes = [16, 4], strides = [1, 1]} : vector<16x64xf32> to vector<16x4xf32>
    %151 = vector.extract_strided_slice %125 {offsets = [0, 52], sizes = [16, 4], strides = [1, 1]} : vector<16x64xf32> to vector<16x4xf32>
    %152 = arith.maximumf %150, %151 : vector<16x4xf32>
    %c1_97 = arith.constant 1 : index
    %c28 = arith.constant 28 : index
    %153 = vector.load %arg28[%c1_97, %c28] : memref<18x40xf32, #tpu.memory_space<vmem>>, vector<16x4xf32>
    tpu.vector_store %arg28[%c1_97, %c28], %152 {strides = array<i32>} : memref<18x40xf32, #tpu.memory_space<vmem>>, vector<16x4xf32>,
    %154 = vector.extract_strided_slice %125 {offsets = [0, 56], sizes = [16, 4], strides = [1, 1]} : vector<16x64xf32> to vector<16x4xf32>
    %155 = vector.extract_strided_slice %125 {offsets = [0, 60], sizes = [16, 4], strides = [1, 1]} : vector<16x64xf32> to vector<16x4xf32>
    %156 = arith.maximumf %154, %155 : vector<16x4xf32>
    %c1_98 = arith.constant 1 : index
    %c32 = arith.constant 32 : index
    %157 = vector.load %arg28[%c1_98, %c32] : memref<18x40xf32, #tpu.memory_space<vmem>>, vector<16x4xf32>
    tpu.vector_store %arg28[%c1_98, %c32], %156 {strides = array<i32>} : memref<18x40xf32, #tpu.memory_space<vmem>>, vector<16x4xf32>,
    %cst_99 = arith.constant 0.000000e+00 : f32
    %158 = vector.broadcast %cst_99 : f32 to vector<16x64xf32>
    %c0_100 = arith.constant 0 : index
    %c0_101 = arith.constant 0 : index
    %159 = vector.load %arg28[%c0_100, %c0_101] : memref<18x40xf32, #tpu.memory_space<vmem>>, vector<16x32xf32>
    %c0_102 = arith.constant 0 : index
    %c0_103 = arith.constant 0 : index
    %c0_104 = arith.constant 0 : index
    %160 = vector.load %arg5[%c0_102, %c0_103, %c0_104] : memref<9x32x64xf32, #tpu.memory_space<vmem>>, vector<1x32x64xf32>
    %161 = vector.shape_cast %160 : vector<1x32x64xf32> to vector<32x64xf32>
    %cst_105 = arith.constant dense<0.000000e+00> : vector<16x64xf32>
    %162 = tpu.matmul %159, %161, %cst_105 {dimension_numbers = #tpu.dot_dimension_numbers<[1], [0], [0], [1], [0, 0, 1, 1], [], []>} : vector<16x32xf32>, vector<32x64xf32>, vector<16x64xf32> -> vector<16x64xf32>
    %163 = arith.addf %158, %162 : vector<16x64xf32>
    %c0_106 = arith.constant 0 : index
    %c4_107 = arith.constant 4 : index
    %164 = vector.load %arg28[%c0_106, %c4_107] : memref<18x40xf32, #tpu.memory_space<vmem>>, vector<16x32xf32>
    %c1_108 = arith.constant 1 : index
    %c0_109 = arith.constant 0 : index
    %c0_110 = arith.constant 0 : index
    %165 = vector.load %arg5[%c1_108, %c0_109, %c0_110] : memref<9x32x64xf32, #tpu.memory_space<vmem>>, vector<1x32x64xf32>
    %166 = vector.shape_cast %165 : vector<1x32x64xf32> to vector<32x64xf32>
    %cst_111 = arith.constant dense<0.000000e+00> : vector<16x64xf32>
    %167 = tpu.matmul %164, %166, %cst_111 {dimension_numbers = #tpu.dot_dimension_numbers<[1], [0], [0], [1], [0, 0, 1, 1], [], []>} : vector<16x32xf32>, vector<32x64xf32>, vector<16x64xf32> -> vector<16x64xf32>
    %168 = arith.addf %163, %167 : vector<16x64xf32>
    %c0_112 = arith.constant 0 : index
    %c8_113 = arith.constant 8 : index
    %169 = vector.load %arg28[%c0_112, %c8_113] : memref<18x40xf32, #tpu.memory_space<vmem>>, vector<16x32xf32>
    %c2_114 = arith.constant 2 : index
    %c0_115 = arith.constant 0 : index
    %c0_116 = arith.constant 0 : index
    %170 = vector.load %arg5[%c2_114, %c0_115, %c0_116] : memref<9x32x64xf32, #tpu.memory_space<vmem>>, vector<1x32x64xf32>
    %171 = vector.shape_cast %170 : vector<1x32x64xf32> to vector<32x64xf32>
    %cst_117 = arith.constant dense<0.000000e+00> : vector<16x64xf32>
    %172 = tpu.matmul %169, %171, %cst_117 {dimension_numbers = #tpu.dot_dimension_numbers<[1], [0], [0], [1], [0, 0, 1, 1], [], []>} : vector<16x32xf32>, vector<32x64xf32>, vector<16x64xf32> -> vector<16x64xf32>
    %173 = arith.addf %168, %172 : vector<16x64xf32>
    %c1_118 = arith.constant 1 : index
    %c0_119 = arith.constant 0 : index
    %174 = vector.load %arg28[%c1_118, %c0_119] : memref<18x40xf32, #tpu.memory_space<vmem>>, vector<16x32xf32>
    %c3_120 = arith.constant 3 : index
    %c0_121 = arith.constant 0 : index
    %c0_122 = arith.constant 0 : index
    %175 = vector.load %arg5[%c3_120, %c0_121, %c0_122] : memref<9x32x64xf32, #tpu.memory_space<vmem>>, vector<1x32x64xf32>
    %176 = vector.shape_cast %175 : vector<1x32x64xf32> to vector<32x64xf32>
    %cst_123 = arith.constant dense<0.000000e+00> : vector<16x64xf32>
    %177 = tpu.matmul %174, %176, %cst_123 {dimension_numbers = #tpu.dot_dimension_numbers<[1], [0], [0], [1], [0, 0, 1, 1], [], []>} : vector<16x32xf32>, vector<32x64xf32>, vector<16x64xf32> -> vector<16x64xf32>
    %178 = arith.addf %173, %177 : vector<16x64xf32>
    %c1_124 = arith.constant 1 : index
    %c4_125 = arith.constant 4 : index
    %179 = vector.load %arg28[%c1_124, %c4_125] : memref<18x40xf32, #tpu.memory_space<vmem>>, vector<16x32xf32>
    %c4_126 = arith.constant 4 : index
    %c0_127 = arith.constant 0 : index
    %c0_128 = arith.constant 0 : index
    %180 = vector.load %arg5[%c4_126, %c0_127, %c0_128] : memref<9x32x64xf32, #tpu.memory_space<vmem>>, vector<1x32x64xf32>
    %181 = vector.shape_cast %180 : vector<1x32x64xf32> to vector<32x64xf32>
    %cst_129 = arith.constant dense<0.000000e+00> : vector<16x64xf32>
    %182 = tpu.matmul %179, %181, %cst_129 {dimension_numbers = #tpu.dot_dimension_numbers<[1], [0], [0], [1], [0, 0, 1, 1], [], []>} : vector<16x32xf32>, vector<32x64xf32>, vector<16x64xf32> -> vector<16x64xf32>
    %183 = arith.addf %178, %182 : vector<16x64xf32>
    %c1_130 = arith.constant 1 : index
    %c8_131 = arith.constant 8 : index
    %184 = vector.load %arg28[%c1_130, %c8_131] : memref<18x40xf32, #tpu.memory_space<vmem>>, vector<16x32xf32>
    %c5_132 = arith.constant 5 : index
    %c0_133 = arith.constant 0 : index
    %c0_134 = arith.constant 0 : index
    %185 = vector.load %arg5[%c5_132, %c0_133, %c0_134] : memref<9x32x64xf32, #tpu.memory_space<vmem>>, vector<1x32x64xf32>
    %186 = vector.shape_cast %185 : vector<1x32x64xf32> to vector<32x64xf32>
    %cst_135 = arith.constant dense<0.000000e+00> : vector<16x64xf32>
    %187 = tpu.matmul %184, %186, %cst_135 {dimension_numbers = #tpu.dot_dimension_numbers<[1], [0], [0], [1], [0, 0, 1, 1], [], []>} : vector<16x32xf32>, vector<32x64xf32>, vector<16x64xf32> -> vector<16x64xf32>
    %188 = arith.addf %183, %187 : vector<16x64xf32>
    %c2_136 = arith.constant 2 : index
    %c0_137 = arith.constant 0 : index
    %189 = vector.load %arg28[%c2_136, %c0_137] : memref<18x40xf32, #tpu.memory_space<vmem>>, vector<16x32xf32>
    %c6_138 = arith.constant 6 : index
    %c0_139 = arith.constant 0 : index
    %c0_140 = arith.constant 0 : index
    %190 = vector.load %arg5[%c6_138, %c0_139, %c0_140] : memref<9x32x64xf32, #tpu.memory_space<vmem>>, vector<1x32x64xf32>
    %191 = vector.shape_cast %190 : vector<1x32x64xf32> to vector<32x64xf32>
    %cst_141 = arith.constant dense<0.000000e+00> : vector<16x64xf32>
    %192 = tpu.matmul %189, %191, %cst_141 {dimension_numbers = #tpu.dot_dimension_numbers<[1], [0], [0], [1], [0, 0, 1, 1], [], []>} : vector<16x32xf32>, vector<32x64xf32>, vector<16x64xf32> -> vector<16x64xf32>
    %193 = arith.addf %188, %192 : vector<16x64xf32>
    %c2_142 = arith.constant 2 : index
    %c4_143 = arith.constant 4 : index
    %194 = vector.load %arg28[%c2_142, %c4_143] : memref<18x40xf32, #tpu.memory_space<vmem>>, vector<16x32xf32>
    %c7_144 = arith.constant 7 : index
    %c0_145 = arith.constant 0 : index
    %c0_146 = arith.constant 0 : index
    %195 = vector.load %arg5[%c7_144, %c0_145, %c0_146] : memref<9x32x64xf32, #tpu.memory_space<vmem>>, vector<1x32x64xf32>
    %196 = vector.shape_cast %195 : vector<1x32x64xf32> to vector<32x64xf32>
    %cst_147 = arith.constant dense<0.000000e+00> : vector<16x64xf32>
    %197 = tpu.matmul %194, %196, %cst_147 {dimension_numbers = #tpu.dot_dimension_numbers<[1], [0], [0], [1], [0, 0, 1, 1], [], []>} : vector<16x32xf32>, vector<32x64xf32>, vector<16x64xf32> -> vector<16x64xf32>
    %198 = arith.addf %193, %197 : vector<16x64xf32>
    %c2_148 = arith.constant 2 : index
    %c8_149 = arith.constant 8 : index
    %199 = vector.load %arg28[%c2_148, %c8_149] : memref<18x40xf32, #tpu.memory_space<vmem>>, vector<16x32xf32>
    %c8_150 = arith.constant 8 : index
    %c0_151 = arith.constant 0 : index
    %c0_152 = arith.constant 0 : index
    %200 = vector.load %arg5[%c8_150, %c0_151, %c0_152] : memref<9x32x64xf32, #tpu.memory_space<vmem>>, vector<1x32x64xf32>
    %201 = vector.shape_cast %200 : vector<1x32x64xf32> to vector<32x64xf32>
    %cst_153 = arith.constant dense<0.000000e+00> : vector<16x64xf32>
    %202 = tpu.matmul %199, %201, %cst_153 {dimension_numbers = #tpu.dot_dimension_numbers<[1], [0], [0], [1], [0, 0, 1, 1], [], []>} : vector<16x32xf32>, vector<32x64xf32>, vector<16x64xf32> -> vector<16x64xf32>
    %203 = arith.addf %198, %202 : vector<16x64xf32>
    %c0_154 = arith.constant 0 : index
    %c0_155 = arith.constant 0 : index
    %204 = vector.load %arg6[%c0_154, %c0_155] : memref<1x64xf32, #tpu.memory_space<vmem>>, vector<1x64xf32>
    %205 = vector.broadcast %204 : vector<1x64xf32> to vector<16x64xf32>
    %206 = arith.mulf %203, %205 : vector<16x64xf32>
    %c0_156 = arith.constant 0 : index
    %c0_157 = arith.constant 0 : index
    %207 = vector.load %arg7[%c0_156, %c0_157] : memref<1x64xf32, #tpu.memory_space<vmem>>, vector<1x64xf32>
    %208 = vector.broadcast %207 : vector<1x64xf32> to vector<16x64xf32>
    %209 = arith.addf %206, %208 : vector<16x64xf32>
    %cst_158 = arith.constant 0.000000e+00 : f32
    %210 = vector.broadcast %cst_158 : f32 to vector<16x64xf32>
    %211 = arith.maximumf %209, %210 : vector<16x64xf32>
    %cst_159 = arith.constant 0.000000e+00 : f32
    %212 = vector.broadcast %cst_159 : f32 to vector<10x48xf32>
    %c0_160 = arith.constant 0 : index
    %c0_161 = arith.constant 0 : index
    %213 = vector.load %arg29[%c0_160, %c0_161] : memref<10x48xf32, #tpu.memory_space<vmem>>, vector<10x48xf32>
    tpu.vector_store %arg29[%c0_160, %c0_161], %212 {strides = array<i32>} : memref<10x48xf32, #tpu.memory_space<vmem>>, vector<10x48xf32>,
    %214 = vector.extract_strided_slice %211 {offsets = [0, 0], sizes = [1, 64], strides = [1, 1]} : vector<16x64xf32> to vector<1x64xf32>
    %215 = vector.extract_strided_slice %211 {offsets = [1, 0], sizes = [1, 64], strides = [1, 1]} : vector<16x64xf32> to vector<1x64xf32>
    %216 = arith.maximumf %214, %215 : vector<1x64xf32>
    %c0_162 = arith.constant 0 : index
    %c0_163 = arith.constant 0 : index
    %217 = vector.load %arg34[%c0_162, %c0_163] : memref<16x128xf32, #tpu.memory_space<vmem>>, vector<1x64xf32>
    tpu.vector_store %arg34[%c0_162, %c0_163], %216 {strides = array<i32>} : memref<16x128xf32, #tpu.memory_space<vmem>>, vector<1x64xf32>,
    %218 = vector.extract_strided_slice %211 {offsets = [2, 0], sizes = [1, 64], strides = [1, 1]} : vector<16x64xf32> to vector<1x64xf32>
    %219 = vector.extract_strided_slice %211 {offsets = [3, 0], sizes = [1, 64], strides = [1, 1]} : vector<16x64xf32> to vector<1x64xf32>
    %220 = arith.maximumf %218, %219 : vector<1x64xf32>
    %c1_164 = arith.constant 1 : index
    %c0_165 = arith.constant 0 : index
    %221 = vector.load %arg34[%c1_164, %c0_165] : memref<16x128xf32, #tpu.memory_space<vmem>>, vector<1x64xf32>
    tpu.vector_store %arg34[%c1_164, %c0_165], %220 {strides = array<i32>} : memref<16x128xf32, #tpu.memory_space<vmem>>, vector<1x64xf32>,
    %222 = vector.extract_strided_slice %211 {offsets = [4, 0], sizes = [1, 64], strides = [1, 1]} : vector<16x64xf32> to vector<1x64xf32>
    %223 = vector.extract_strided_slice %211 {offsets = [5, 0], sizes = [1, 64], strides = [1, 1]} : vector<16x64xf32> to vector<1x64xf32>
    %224 = arith.maximumf %222, %223 : vector<1x64xf32>
    %c2_166 = arith.constant 2 : index
    %c0_167 = arith.constant 0 : index
    %225 = vector.load %arg34[%c2_166, %c0_167] : memref<16x128xf32, #tpu.memory_space<vmem>>, vector<1x64xf32>
    tpu.vector_store %arg34[%c2_166, %c0_167], %224 {strides = array<i32>} : memref<16x128xf32, #tpu.memory_space<vmem>>, vector<1x64xf32>,
    %226 = vector.extract_strided_slice %211 {offsets = [6, 0], sizes = [1, 64], strides = [1, 1]} : vector<16x64xf32> to vector<1x64xf32>
    %227 = vector.extract_strided_slice %211 {offsets = [7, 0], sizes = [1, 64], strides = [1, 1]} : vector<16x64xf32> to vector<1x64xf32>
    %228 = arith.maximumf %226, %227 : vector<1x64xf32>
    %c3_168 = arith.constant 3 : index
    %c0_169 = arith.constant 0 : index
    %229 = vector.load %arg34[%c3_168, %c0_169] : memref<16x128xf32, #tpu.memory_space<vmem>>, vector<1x64xf32>
    tpu.vector_store %arg34[%c3_168, %c0_169], %228 {strides = array<i32>} : memref<16x128xf32, #tpu.memory_space<vmem>>, vector<1x64xf32>,
    %230 = vector.extract_strided_slice %211 {offsets = [8, 0], sizes = [1, 64], strides = [1, 1]} : vector<16x64xf32> to vector<1x64xf32>
    %231 = vector.extract_strided_slice %211 {offsets = [9, 0], sizes = [1, 64], strides = [1, 1]} : vector<16x64xf32> to vector<1x64xf32>
    %232 = arith.maximumf %230, %231 : vector<1x64xf32>
    %c4_170 = arith.constant 4 : index
    %c0_171 = arith.constant 0 : index
    %233 = vector.load %arg34[%c4_170, %c0_171] : memref<16x128xf32, #tpu.memory_space<vmem>>, vector<1x64xf32>
    tpu.vector_store %arg34[%c4_170, %c0_171], %232 {strides = array<i32>} : memref<16x128xf32, #tpu.memory_space<vmem>>, vector<1x64xf32>,
    %234 = vector.extract_strided_slice %211 {offsets = [10, 0], sizes = [1, 64], strides = [1, 1]} : vector<16x64xf32> to vector<1x64xf32>
    %235 = vector.extract_strided_slice %211 {offsets = [11, 0], sizes = [1, 64], strides = [1, 1]} : vector<16x64xf32> to vector<1x64xf32>
    %236 = arith.maximumf %234, %235 : vector<1x64xf32>
    %c5_172 = arith.constant 5 : index
    %c0_173 = arith.constant 0 : index
    %237 = vector.load %arg34[%c5_172, %c0_173] : memref<16x128xf32, #tpu.memory_space<vmem>>, vector<1x64xf32>
    tpu.vector_store %arg34[%c5_172, %c0_173], %236 {strides = array<i32>} : memref<16x128xf32, #tpu.memory_space<vmem>>, vector<1x64xf32>,
    %238 = vector.extract_strided_slice %211 {offsets = [12, 0], sizes = [1, 64], strides = [1, 1]} : vector<16x64xf32> to vector<1x64xf32>
    %239 = vector.extract_strided_slice %211 {offsets = [13, 0], sizes = [1, 64], strides = [1, 1]} : vector<16x64xf32> to vector<1x64xf32>
    %240 = arith.maximumf %238, %239 : vector<1x64xf32>
    %c6_174 = arith.constant 6 : index
    %c0_175 = arith.constant 0 : index
    %241 = vector.load %arg34[%c6_174, %c0_175] : memref<16x128xf32, #tpu.memory_space<vmem>>, vector<1x64xf32>
    tpu.vector_store %arg34[%c6_174, %c0_175], %240 {strides = array<i32>} : memref<16x128xf32, #tpu.memory_space<vmem>>, vector<1x64xf32>,
    %242 = vector.extract_strided_slice %211 {offsets = [14, 0], sizes = [1, 64], strides = [1, 1]} : vector<16x64xf32> to vector<1x64xf32>
    %243 = vector.extract_strided_slice %211 {offsets = [15, 0], sizes = [1, 64], strides = [1, 1]} : vector<16x64xf32> to vector<1x64xf32>
    %244 = arith.maximumf %242, %243 : vector<1x64xf32>
    %c7_176 = arith.constant 7 : index
    %c0_177 = arith.constant 0 : index
    %245 = vector.load %arg34[%c7_176, %c0_177] : memref<16x128xf32, #tpu.memory_space<vmem>>, vector<1x64xf32>
    tpu.vector_store %arg34[%c7_176, %c0_177], %244 {strides = array<i32>} : memref<16x128xf32, #tpu.memory_space<vmem>>, vector<1x64xf32>,
    %c0_178 = arith.constant 0 : index
    %c0_179 = arith.constant 0 : index
    %246 = vector.load %arg34[%c0_178, %c0_179] : memref<16x128xf32, #tpu.memory_space<vmem>>, vector<8x64xf32>
    %247 = vector.extract_strided_slice %246 {offsets = [0, 0], sizes = [8, 8], strides = [1, 1]} : vector<8x64xf32> to vector<8x8xf32>
    %248 = vector.extract_strided_slice %246 {offsets = [0, 8], sizes = [8, 8], strides = [1, 1]} : vector<8x64xf32> to vector<8x8xf32>
    %249 = arith.maximumf %247, %248 : vector<8x8xf32>
    %c1_180 = arith.constant 1 : index
    %c8_181 = arith.constant 8 : index
    %250 = vector.load %arg29[%c1_180, %c8_181] : memref<10x48xf32, #tpu.memory_space<vmem>>, vector<8x8xf32>
    tpu.vector_store %arg29[%c1_180, %c8_181], %249 {strides = array<i32>} : memref<10x48xf32, #tpu.memory_space<vmem>>, vector<8x8xf32>,
    %251 = vector.extract_strided_slice %246 {offsets = [0, 16], sizes = [8, 8], strides = [1, 1]} : vector<8x64xf32> to vector<8x8xf32>
    %252 = vector.extract_strided_slice %246 {offsets = [0, 24], sizes = [8, 8], strides = [1, 1]} : vector<8x64xf32> to vector<8x8xf32>
    %253 = arith.maximumf %251, %252 : vector<8x8xf32>
    %c1_182 = arith.constant 1 : index
    %c16_183 = arith.constant 16 : index
    %254 = vector.load %arg29[%c1_182, %c16_183] : memref<10x48xf32, #tpu.memory_space<vmem>>, vector<8x8xf32>
    tpu.vector_store %arg29[%c1_182, %c16_183], %253 {strides = array<i32>} : memref<10x48xf32, #tpu.memory_space<vmem>>, vector<8x8xf32>,
    %255 = vector.extract_strided_slice %246 {offsets = [0, 32], sizes = [8, 8], strides = [1, 1]} : vector<8x64xf32> to vector<8x8xf32>
    %256 = vector.extract_strided_slice %246 {offsets = [0, 40], sizes = [8, 8], strides = [1, 1]} : vector<8x64xf32> to vector<8x8xf32>
    %257 = arith.maximumf %255, %256 : vector<8x8xf32>
    %c1_184 = arith.constant 1 : index
    %c24_185 = arith.constant 24 : index
    %258 = vector.load %arg29[%c1_184, %c24_185] : memref<10x48xf32, #tpu.memory_space<vmem>>, vector<8x8xf32>
    tpu.vector_store %arg29[%c1_184, %c24_185], %257 {strides = array<i32>} : memref<10x48xf32, #tpu.memory_space<vmem>>, vector<8x8xf32>,
    %259 = vector.extract_strided_slice %246 {offsets = [0, 48], sizes = [8, 8], strides = [1, 1]} : vector<8x64xf32> to vector<8x8xf32>
    %260 = vector.extract_strided_slice %246 {offsets = [0, 56], sizes = [8, 8], strides = [1, 1]} : vector<8x64xf32> to vector<8x8xf32>
    %261 = arith.maximumf %259, %260 : vector<8x8xf32>
    %c1_186 = arith.constant 1 : index
    %c32_187 = arith.constant 32 : index
    %262 = vector.load %arg29[%c1_186, %c32_187] : memref<10x48xf32, #tpu.memory_space<vmem>>, vector<8x8xf32>
    tpu.vector_store %arg29[%c1_186, %c32_187], %261 {strides = array<i32>} : memref<10x48xf32, #tpu.memory_space<vmem>>, vector<8x8xf32>,
    %cst_188 = arith.constant 0.000000e+00 : f32
    %263 = vector.broadcast %cst_188 : f32 to vector<8x64xf32>
    %c0_189 = arith.constant 0 : index
    %c0_190 = arith.constant 0 : index
    %264 = vector.load %arg29[%c0_189, %c0_190] : memref<10x48xf32, #tpu.memory_space<vmem>>, vector<8x32xf32>
    %c0_191 = arith.constant 0 : index
    %c0_192 = arith.constant 0 : index
    %c0_193 = arith.constant 0 : index
    %265 = vector.load %arg8[%c0_191, %c0_192, %c0_193] : memref<9x32x64xf32, #tpu.memory_space<vmem>>, vector<1x32x64xf32>
    %266 = vector.shape_cast %265 : vector<1x32x64xf32> to vector<32x64xf32>
    %cst_194 = arith.constant dense<0.000000e+00> : vector<8x64xf32>
    %267 = tpu.matmul %264, %266, %cst_194 {dimension_numbers = #tpu.dot_dimension_numbers<[1], [0], [0], [1], [0, 0, 1, 1], [], []>} : vector<8x32xf32>, vector<32x64xf32>, vector<8x64xf32> -> vector<8x64xf32>
    %268 = arith.addf %263, %267 : vector<8x64xf32>
    %c0_195 = arith.constant 0 : index
    %c8_196 = arith.constant 8 : index
    %269 = vector.load %arg29[%c0_195, %c8_196] : memref<10x48xf32, #tpu.memory_space<vmem>>, vector<8x32xf32>
    %c1_197 = arith.constant 1 : index
    %c0_198 = arith.constant 0 : index
    %c0_199 = arith.constant 0 : index
    %270 = vector.load %arg8[%c1_197, %c0_198, %c0_199] : memref<9x32x64xf32, #tpu.memory_space<vmem>>, vector<1x32x64xf32>
    %271 = vector.shape_cast %270 : vector<1x32x64xf32> to vector<32x64xf32>
    %cst_200 = arith.constant dense<0.000000e+00> : vector<8x64xf32>
    %272 = tpu.matmul %269, %271, %cst_200 {dimension_numbers = #tpu.dot_dimension_numbers<[1], [0], [0], [1], [0, 0, 1, 1], [], []>} : vector<8x32xf32>, vector<32x64xf32>, vector<8x64xf32> -> vector<8x64xf32>
    %273 = arith.addf %268, %272 : vector<8x64xf32>
    %c0_201 = arith.constant 0 : index
    %c16_202 = arith.constant 16 : index
    %274 = vector.load %arg29[%c0_201, %c16_202] : memref<10x48xf32, #tpu.memory_space<vmem>>, vector<8x32xf32>
    %c2_203 = arith.constant 2 : index
    %c0_204 = arith.constant 0 : index
    %c0_205 = arith.constant 0 : index
    %275 = vector.load %arg8[%c2_203, %c0_204, %c0_205] : memref<9x32x64xf32, #tpu.memory_space<vmem>>, vector<1x32x64xf32>
    %276 = vector.shape_cast %275 : vector<1x32x64xf32> to vector<32x64xf32>
    %cst_206 = arith.constant dense<0.000000e+00> : vector<8x64xf32>
    %277 = tpu.matmul %274, %276, %cst_206 {dimension_numbers = #tpu.dot_dimension_numbers<[1], [0], [0], [1], [0, 0, 1, 1], [], []>} : vector<8x32xf32>, vector<32x64xf32>, vector<8x64xf32> -> vector<8x64xf32>
    %278 = arith.addf %273, %277 : vector<8x64xf32>
    %c1_207 = arith.constant 1 : index
    %c0_208 = arith.constant 0 : index
    %279 = vector.load %arg29[%c1_207, %c0_208] : memref<10x48xf32, #tpu.memory_space<vmem>>, vector<8x32xf32>
    %c3_209 = arith.constant 3 : index
    %c0_210 = arith.constant 0 : index
    %c0_211 = arith.constant 0 : index
    %280 = vector.load %arg8[%c3_209, %c0_210, %c0_211] : memref<9x32x64xf32, #tpu.memory_space<vmem>>, vector<1x32x64xf32>
    %281 = vector.shape_cast %280 : vector<1x32x64xf32> to vector<32x64xf32>
    %cst_212 = arith.constant dense<0.000000e+00> : vector<8x64xf32>
    %282 = tpu.matmul %279, %281, %cst_212 {dimension_numbers = #tpu.dot_dimension_numbers<[1], [0], [0], [1], [0, 0, 1, 1], [], []>} : vector<8x32xf32>, vector<32x64xf32>, vector<8x64xf32> -> vector<8x64xf32>
    %283 = arith.addf %278, %282 : vector<8x64xf32>
    %c1_213 = arith.constant 1 : index
    %c8_214 = arith.constant 8 : index
    %284 = vector.load %arg29[%c1_213, %c8_214] : memref<10x48xf32, #tpu.memory_space<vmem>>, vector<8x32xf32>
    %c4_215 = arith.constant 4 : index
    %c0_216 = arith.constant 0 : index
    %c0_217 = arith.constant 0 : index
    %285 = vector.load %arg8[%c4_215, %c0_216, %c0_217] : memref<9x32x64xf32, #tpu.memory_space<vmem>>, vector<1x32x64xf32>
    %286 = vector.shape_cast %285 : vector<1x32x64xf32> to vector<32x64xf32>
    %cst_218 = arith.constant dense<0.000000e+00> : vector<8x64xf32>
    %287 = tpu.matmul %284, %286, %cst_218 {dimension_numbers = #tpu.dot_dimension_numbers<[1], [0], [0], [1], [0, 0, 1, 1], [], []>} : vector<8x32xf32>, vector<32x64xf32>, vector<8x64xf32> -> vector<8x64xf32>
    %288 = arith.addf %283, %287 : vector<8x64xf32>
    %c1_219 = arith.constant 1 : index
    %c16_220 = arith.constant 16 : index
    %289 = vector.load %arg29[%c1_219, %c16_220] : memref<10x48xf32, #tpu.memory_space<vmem>>, vector<8x32xf32>
    %c5_221 = arith.constant 5 : index
    %c0_222 = arith.constant 0 : index
    %c0_223 = arith.constant 0 : index
    %290 = vector.load %arg8[%c5_221, %c0_222, %c0_223] : memref<9x32x64xf32, #tpu.memory_space<vmem>>, vector<1x32x64xf32>
    %291 = vector.shape_cast %290 : vector<1x32x64xf32> to vector<32x64xf32>
    %cst_224 = arith.constant dense<0.000000e+00> : vector<8x64xf32>
    %292 = tpu.matmul %289, %291, %cst_224 {dimension_numbers = #tpu.dot_dimension_numbers<[1], [0], [0], [1], [0, 0, 1, 1], [], []>} : vector<8x32xf32>, vector<32x64xf32>, vector<8x64xf32> -> vector<8x64xf32>
    %293 = arith.addf %288, %292 : vector<8x64xf32>
    %c2_225 = arith.constant 2 : index
    %c0_226 = arith.constant 0 : index
    %294 = vector.load %arg29[%c2_225, %c0_226] : memref<10x48xf32, #tpu.memory_space<vmem>>, vector<8x32xf32>
    %c6_227 = arith.constant 6 : index
    %c0_228 = arith.constant 0 : index
    %c0_229 = arith.constant 0 : index
    %295 = vector.load %arg8[%c6_227, %c0_228, %c0_229] : memref<9x32x64xf32, #tpu.memory_space<vmem>>, vector<1x32x64xf32>
    %296 = vector.shape_cast %295 : vector<1x32x64xf32> to vector<32x64xf32>
    %cst_230 = arith.constant dense<0.000000e+00> : vector<8x64xf32>
    %297 = tpu.matmul %294, %296, %cst_230 {dimension_numbers = #tpu.dot_dimension_numbers<[1], [0], [0], [1], [0, 0, 1, 1], [], []>} : vector<8x32xf32>, vector<32x64xf32>, vector<8x64xf32> -> vector<8x64xf32>
    %298 = arith.addf %293, %297 : vector<8x64xf32>
    %c2_231 = arith.constant 2 : index
    %c8_232 = arith.constant 8 : index
    %299 = vector.load %arg29[%c2_231, %c8_232] : memref<10x48xf32, #tpu.memory_space<vmem>>, vector<8x32xf32>
    %c7_233 = arith.constant 7 : index
    %c0_234 = arith.constant 0 : index
    %c0_235 = arith.constant 0 : index
    %300 = vector.load %arg8[%c7_233, %c0_234, %c0_235] : memref<9x32x64xf32, #tpu.memory_space<vmem>>, vector<1x32x64xf32>
    %301 = vector.shape_cast %300 : vector<1x32x64xf32> to vector<32x64xf32>
    %cst_236 = arith.constant dense<0.000000e+00> : vector<8x64xf32>
    %302 = tpu.matmul %299, %301, %cst_236 {dimension_numbers = #tpu.dot_dimension_numbers<[1], [0], [0], [1], [0, 0, 1, 1], [], []>} : vector<8x32xf32>, vector<32x64xf32>, vector<8x64xf32> -> vector<8x64xf32>
    %303 = arith.addf %298, %302 : vector<8x64xf32>
    %c2_237 = arith.constant 2 : index
    %c16_238 = arith.constant 16 : index
    %304 = vector.load %arg29[%c2_237, %c16_238] : memref<10x48xf32, #tpu.memory_space<vmem>>, vector<8x32xf32>
    %c8_239 = arith.constant 8 : index
    %c0_240 = arith.constant 0 : index
    %c0_241 = arith.constant 0 : index
    %305 = vector.load %arg8[%c8_239, %c0_240, %c0_241] : memref<9x32x64xf32, #tpu.memory_space<vmem>>, vector<1x32x64xf32>
    %306 = vector.shape_cast %305 : vector<1x32x64xf32> to vector<32x64xf32>
    %cst_242 = arith.constant dense<0.000000e+00> : vector<8x64xf32>
    %307 = tpu.matmul %304, %306, %cst_242 {dimension_numbers = #tpu.dot_dimension_numbers<[1], [0], [0], [1], [0, 0, 1, 1], [], []>} : vector<8x32xf32>, vector<32x64xf32>, vector<8x64xf32> -> vector<8x64xf32>
    %308 = arith.addf %303, %307 : vector<8x64xf32>
    %c0_243 = arith.constant 0 : index
    %c0_244 = arith.constant 0 : index
    %309 = vector.load %arg9[%c0_243, %c0_244] : memref<1x64xf32, #tpu.memory_space<vmem>>, vector<1x64xf32>
    %310 = vector.broadcast %309 : vector<1x64xf32> to vector<8x64xf32>
    %311 = arith.mulf %308, %310 : vector<8x64xf32>
    %c0_245 = arith.constant 0 : index
    %c0_246 = arith.constant 0 : index
    %312 = vector.load %arg10[%c0_245, %c0_246] : memref<1x64xf32, #tpu.memory_space<vmem>>, vector<1x64xf32>
    %313 = vector.broadcast %312 : vector<1x64xf32> to vector<8x64xf32>
    %314 = arith.addf %311, %313 : vector<8x64xf32>
    %cst_247 = arith.constant 0.000000e+00 : f32
    %315 = vector.broadcast %cst_247 : f32 to vector<8x64xf32>
    %316 = arith.maximumf %314, %315 : vector<8x64xf32>
    %cst_248 = arith.constant 0.000000e+00 : f32
    %317 = vector.broadcast %cst_248 : f32 to vector<10x96xf32>
    %c0_249 = arith.constant 0 : index
    %c0_250 = arith.constant 0 : index
    %318 = vector.load %arg30[%c0_249, %c0_250] : memref<10x96xf32, #tpu.memory_space<vmem>>, vector<10x96xf32>
    tpu.vector_store %arg30[%c0_249, %c0_250], %317 {strides = array<i32>} : memref<10x96xf32, #tpu.memory_space<vmem>>, vector<10x96xf32>,
    %c1_251 = arith.constant 1 : index
    %c16_252 = arith.constant 16 : index
    %319 = vector.load %arg30[%c1_251, %c16_252] : memref<10x96xf32, #tpu.memory_space<vmem>>, vector<8x64xf32>
    tpu.vector_store %arg30[%c1_251, %c16_252], %316 {strides = array<i32>} : memref<10x96xf32, #tpu.memory_space<vmem>>, vector<8x64xf32>,
    %cst_253 = arith.constant 0.000000e+00 : f32
    %320 = vector.broadcast %cst_253 : f32 to vector<8x64xf32>
    %c0_254 = arith.constant 0 : index
    %c0_255 = arith.constant 0 : index
    %321 = vector.load %arg30[%c0_254, %c0_255] : memref<10x96xf32, #tpu.memory_space<vmem>>, vector<8x64xf32>
    %c0_256 = arith.constant 0 : index
    %c0_257 = arith.constant 0 : index
    %c0_258 = arith.constant 0 : index
    %322 = vector.load %arg11[%c0_256, %c0_257, %c0_258] : memref<9x64x64xf32, #tpu.memory_space<vmem>>, vector<1x64x64xf32>
    %323 = vector.shape_cast %322 : vector<1x64x64xf32> to vector<64x64xf32>
    %cst_259 = arith.constant dense<0.000000e+00> : vector<8x64xf32>
    %324 = tpu.matmul %321, %323, %cst_259 {dimension_numbers = #tpu.dot_dimension_numbers<[1], [0], [0], [1], [0, 0, 1, 1], [], []>} : vector<8x64xf32>, vector<64x64xf32>, vector<8x64xf32> -> vector<8x64xf32>
    %325 = arith.addf %320, %324 : vector<8x64xf32>
    %c0_260 = arith.constant 0 : index
    %c16_261 = arith.constant 16 : index
    %326 = vector.load %arg30[%c0_260, %c16_261] : memref<10x96xf32, #tpu.memory_space<vmem>>, vector<8x64xf32>
    %c1_262 = arith.constant 1 : index
    %c0_263 = arith.constant 0 : index
    %c0_264 = arith.constant 0 : index
    %327 = vector.load %arg11[%c1_262, %c0_263, %c0_264] : memref<9x64x64xf32, #tpu.memory_space<vmem>>, vector<1x64x64xf32>
    %328 = vector.shape_cast %327 : vector<1x64x64xf32> to vector<64x64xf32>
    %cst_265 = arith.constant dense<0.000000e+00> : vector<8x64xf32>
    %329 = tpu.matmul %326, %328, %cst_265 {dimension_numbers = #tpu.dot_dimension_numbers<[1], [0], [0], [1], [0, 0, 1, 1], [], []>} : vector<8x64xf32>, vector<64x64xf32>, vector<8x64xf32> -> vector<8x64xf32>
    %330 = arith.addf %325, %329 : vector<8x64xf32>
    %c0_266 = arith.constant 0 : index
    %c32_267 = arith.constant 32 : index
    %331 = vector.load %arg30[%c0_266, %c32_267] : memref<10x96xf32, #tpu.memory_space<vmem>>, vector<8x64xf32>
    %c2_268 = arith.constant 2 : index
    %c0_269 = arith.constant 0 : index
    %c0_270 = arith.constant 0 : index
    %332 = vector.load %arg11[%c2_268, %c0_269, %c0_270] : memref<9x64x64xf32, #tpu.memory_space<vmem>>, vector<1x64x64xf32>
    %333 = vector.shape_cast %332 : vector<1x64x64xf32> to vector<64x64xf32>
    %cst_271 = arith.constant dense<0.000000e+00> : vector<8x64xf32>
    %334 = tpu.matmul %331, %333, %cst_271 {dimension_numbers = #tpu.dot_dimension_numbers<[1], [0], [0], [1], [0, 0, 1, 1], [], []>} : vector<8x64xf32>, vector<64x64xf32>, vector<8x64xf32> -> vector<8x64xf32>
    %335 = arith.addf %330, %334 : vector<8x64xf32>
    %c1_272 = arith.constant 1 : index
    %c0_273 = arith.constant 0 : index
    %336 = vector.load %arg30[%c1_272, %c0_273] : memref<10x96xf32, #tpu.memory_space<vmem>>, vector<8x64xf32>
    %c3_274 = arith.constant 3 : index
    %c0_275 = arith.constant 0 : index
    %c0_276 = arith.constant 0 : index
    %337 = vector.load %arg11[%c3_274, %c0_275, %c0_276] : memref<9x64x64xf32, #tpu.memory_space<vmem>>, vector<1x64x64xf32>
    %338 = vector.shape_cast %337 : vector<1x64x64xf32> to vector<64x64xf32>
    %cst_277 = arith.constant dense<0.000000e+00> : vector<8x64xf32>
    %339 = tpu.matmul %336, %338, %cst_277 {dimension_numbers = #tpu.dot_dimension_numbers<[1], [0], [0], [1], [0, 0, 1, 1], [], []>} : vector<8x64xf32>, vector<64x64xf32>, vector<8x64xf32> -> vector<8x64xf32>
    %340 = arith.addf %335, %339 : vector<8x64xf32>
    %c1_278 = arith.constant 1 : index
    %c16_279 = arith.constant 16 : index
    %341 = vector.load %arg30[%c1_278, %c16_279] : memref<10x96xf32, #tpu.memory_space<vmem>>, vector<8x64xf32>
    %c4_280 = arith.constant 4 : index
    %c0_281 = arith.constant 0 : index
    %c0_282 = arith.constant 0 : index
    %342 = vector.load %arg11[%c4_280, %c0_281, %c0_282] : memref<9x64x64xf32, #tpu.memory_space<vmem>>, vector<1x64x64xf32>
    %343 = vector.shape_cast %342 : vector<1x64x64xf32> to vector<64x64xf32>
    %cst_283 = arith.constant dense<0.000000e+00> : vector<8x64xf32>
    %344 = tpu.matmul %341, %343, %cst_283 {dimension_numbers = #tpu.dot_dimension_numbers<[1], [0], [0], [1], [0, 0, 1, 1], [], []>} : vector<8x64xf32>, vector<64x64xf32>, vector<8x64xf32> -> vector<8x64xf32>
    %345 = arith.addf %340, %344 : vector<8x64xf32>
    %c1_284 = arith.constant 1 : index
    %c32_285 = arith.constant 32 : index
    %346 = vector.load %arg30[%c1_284, %c32_285] : memref<10x96xf32, #tpu.memory_space<vmem>>, vector<8x64xf32>
    %c5_286 = arith.constant 5 : index
    %c0_287 = arith.constant 0 : index
    %c0_288 = arith.constant 0 : index
    %347 = vector.load %arg11[%c5_286, %c0_287, %c0_288] : memref<9x64x64xf32, #tpu.memory_space<vmem>>, vector<1x64x64xf32>
    %348 = vector.shape_cast %347 : vector<1x64x64xf32> to vector<64x64xf32>
    %cst_289 = arith.constant dense<0.000000e+00> : vector<8x64xf32>
    %349 = tpu.matmul %346, %348, %cst_289 {dimension_numbers = #tpu.dot_dimension_numbers<[1], [0], [0], [1], [0, 0, 1, 1], [], []>} : vector<8x64xf32>, vector<64x64xf32>, vector<8x64xf32> -> vector<8x64xf32>
    %350 = arith.addf %345, %349 : vector<8x64xf32>
    %c2_290 = arith.constant 2 : index
    %c0_291 = arith.constant 0 : index
    %351 = vector.load %arg30[%c2_290, %c0_291] : memref<10x96xf32, #tpu.memory_space<vmem>>, vector<8x64xf32>
    %c6_292 = arith.constant 6 : index
    %c0_293 = arith.constant 0 : index
    %c0_294 = arith.constant 0 : index
    %352 = vector.load %arg11[%c6_292, %c0_293, %c0_294] : memref<9x64x64xf32, #tpu.memory_space<vmem>>, vector<1x64x64xf32>
    %353 = vector.shape_cast %352 : vector<1x64x64xf32> to vector<64x64xf32>
    %cst_295 = arith.constant dense<0.000000e+00> : vector<8x64xf32>
    %354 = tpu.matmul %351, %353, %cst_295 {dimension_numbers = #tpu.dot_dimension_numbers<[1], [0], [0], [1], [0, 0, 1, 1], [], []>} : vector<8x64xf32>, vector<64x64xf32>, vector<8x64xf32> -> vector<8x64xf32>
    %355 = arith.addf %350, %354 : vector<8x64xf32>
    %c2_296 = arith.constant 2 : index
    %c16_297 = arith.constant 16 : index
    %356 = vector.load %arg30[%c2_296, %c16_297] : memref<10x96xf32, #tpu.memory_space<vmem>>, vector<8x64xf32>
    %c7_298 = arith.constant 7 : index
    %c0_299 = arith.constant 0 : index
    %c0_300 = arith.constant 0 : index
    %357 = vector.load %arg11[%c7_298, %c0_299, %c0_300] : memref<9x64x64xf32, #tpu.memory_space<vmem>>, vector<1x64x64xf32>
    %358 = vector.shape_cast %357 : vector<1x64x64xf32> to vector<64x64xf32>
    %cst_301 = arith.constant dense<0.000000e+00> : vector<8x64xf32>
    %359 = tpu.matmul %356, %358, %cst_301 {dimension_numbers = #tpu.dot_dimension_numbers<[1], [0], [0], [1], [0, 0, 1, 1], [], []>} : vector<8x64xf32>, vector<64x64xf32>, vector<8x64xf32> -> vector<8x64xf32>
    %360 = arith.addf %355, %359 : vector<8x64xf32>
    %c2_302 = arith.constant 2 : index
    %c32_303 = arith.constant 32 : index
    %361 = vector.load %arg30[%c2_302, %c32_303] : memref<10x96xf32, #tpu.memory_space<vmem>>, vector<8x64xf32>
    %c8_304 = arith.constant 8 : index
    %c0_305 = arith.constant 0 : index
    %c0_306 = arith.constant 0 : index
    %362 = vector.load %arg11[%c8_304, %c0_305, %c0_306] : memref<9x64x64xf32, #tpu.memory_space<vmem>>, vector<1x64x64xf32>
    %363 = vector.shape_cast %362 : vector<1x64x64xf32> to vector<64x64xf32>
    %cst_307 = arith.constant dense<0.000000e+00> : vector<8x64xf32>
    %364 = tpu.matmul %361, %363, %cst_307 {dimension_numbers = #tpu.dot_dimension_numbers<[1], [0], [0], [1], [0, 0, 1, 1], [], []>} : vector<8x64xf32>, vector<64x64xf32>, vector<8x64xf32> -> vector<8x64xf32>
    %365 = arith.addf %360, %364 : vector<8x64xf32>
    %c0_308 = arith.constant 0 : index
    %c0_309 = arith.constant 0 : index
    %366 = vector.load %arg12[%c0_308, %c0_309] : memref<1x64xf32, #tpu.memory_space<vmem>>, vector<1x64xf32>
    %367 = vector.broadcast %366 : vector<1x64xf32> to vector<8x64xf32>
    %368 = arith.mulf %365, %367 : vector<8x64xf32>
    %c0_310 = arith.constant 0 : index
    %c0_311 = arith.constant 0 : index
    %369 = vector.load %arg13[%c0_310, %c0_311] : memref<1x64xf32, #tpu.memory_space<vmem>>, vector<1x64xf32>
    %370 = vector.broadcast %369 : vector<1x64xf32> to vector<8x64xf32>
    %371 = arith.addf %368, %370 : vector<8x64xf32>
    %cst_312 = arith.constant 0.000000e+00 : f32
    %372 = vector.broadcast %cst_312 : f32 to vector<8x64xf32>
    %373 = arith.maximumf %371, %372 : vector<8x64xf32>
    %cst_313 = arith.constant 0.000000e+00 : f32
    %374 = vector.broadcast %cst_313 : f32 to vector<6x96xf32>
    %c0_314 = arith.constant 0 : index
    %c0_315 = arith.constant 0 : index
    %375 = vector.load %arg31[%c0_314, %c0_315] : memref<6x96xf32, #tpu.memory_space<vmem>>, vector<6x96xf32>
    tpu.vector_store %arg31[%c0_314, %c0_315], %374 {strides = array<i32>} : memref<6x96xf32, #tpu.memory_space<vmem>>, vector<6x96xf32>,
    %376 = vector.extract_strided_slice %373 {offsets = [0, 0], sizes = [1, 64], strides = [1, 1]} : vector<8x64xf32> to vector<1x64xf32>
    %377 = vector.extract_strided_slice %373 {offsets = [1, 0], sizes = [1, 64], strides = [1, 1]} : vector<8x64xf32> to vector<1x64xf32>
    %378 = arith.maximumf %376, %377 : vector<1x64xf32>
    %c1_316 = arith.constant 1 : index
    %c16_317 = arith.constant 16 : index
    %379 = vector.load %arg31[%c1_316, %c16_317] : memref<6x96xf32, #tpu.memory_space<vmem>>, vector<1x64xf32>
    tpu.vector_store %arg31[%c1_316, %c16_317], %378 {strides = array<i32>} : memref<6x96xf32, #tpu.memory_space<vmem>>, vector<1x64xf32>,
    %380 = vector.extract_strided_slice %373 {offsets = [2, 0], sizes = [1, 64], strides = [1, 1]} : vector<8x64xf32> to vector<1x64xf32>
    %381 = vector.extract_strided_slice %373 {offsets = [3, 0], sizes = [1, 64], strides = [1, 1]} : vector<8x64xf32> to vector<1x64xf32>
    %382 = arith.maximumf %380, %381 : vector<1x64xf32>
    %c2_318 = arith.constant 2 : index
    %c16_319 = arith.constant 16 : index
    %383 = vector.load %arg31[%c2_318, %c16_319] : memref<6x96xf32, #tpu.memory_space<vmem>>, vector<1x64xf32>
    tpu.vector_store %arg31[%c2_318, %c16_319], %382 {strides = array<i32>} : memref<6x96xf32, #tpu.memory_space<vmem>>, vector<1x64xf32>,
    %384 = vector.extract_strided_slice %373 {offsets = [4, 0], sizes = [1, 64], strides = [1, 1]} : vector<8x64xf32> to vector<1x64xf32>
    %385 = vector.extract_strided_slice %373 {offsets = [5, 0], sizes = [1, 64], strides = [1, 1]} : vector<8x64xf32> to vector<1x64xf32>
    %386 = arith.maximumf %384, %385 : vector<1x64xf32>
    %c3_320 = arith.constant 3 : index
    %c16_321 = arith.constant 16 : index
    %387 = vector.load %arg31[%c3_320, %c16_321] : memref<6x96xf32, #tpu.memory_space<vmem>>, vector<1x64xf32>
    tpu.vector_store %arg31[%c3_320, %c16_321], %386 {strides = array<i32>} : memref<6x96xf32, #tpu.memory_space<vmem>>, vector<1x64xf32>,
    %388 = vector.extract_strided_slice %373 {offsets = [6, 0], sizes = [1, 64], strides = [1, 1]} : vector<8x64xf32> to vector<1x64xf32>
    %389 = vector.extract_strided_slice %373 {offsets = [7, 0], sizes = [1, 64], strides = [1, 1]} : vector<8x64xf32> to vector<1x64xf32>
    %390 = arith.maximumf %388, %389 : vector<1x64xf32>
    %c4_322 = arith.constant 4 : index
    %c16_323 = arith.constant 16 : index
    %391 = vector.load %arg31[%c4_322, %c16_323] : memref<6x96xf32, #tpu.memory_space<vmem>>, vector<1x64xf32>
    tpu.vector_store %arg31[%c4_322, %c16_323], %390 {strides = array<i32>} : memref<6x96xf32, #tpu.memory_space<vmem>>, vector<1x64xf32>,
    %cst_324 = arith.constant 0.000000e+00 : f32
    %392 = vector.broadcast %cst_324 : f32 to vector<4x128xf32>
    %c0_325 = arith.constant 0 : index
    %c0_326 = arith.constant 0 : index
    %393 = vector.load %arg31[%c0_325, %c0_326] : memref<6x96xf32, #tpu.memory_space<vmem>>, vector<4x64xf32>
    %c0_327 = arith.constant 0 : index
    %c0_328 = arith.constant 0 : index
    %c0_329 = arith.constant 0 : index
    %394 = vector.load %arg14[%c0_327, %c0_328, %c0_329] : memref<9x64x128xf32, #tpu.memory_space<vmem>>, vector<1x64x128xf32>
    %395 = vector.shape_cast %394 : vector<1x64x128xf32> to vector<64x128xf32>
    %cst_330 = arith.constant dense<0.000000e+00> : vector<4x128xf32>
    %396 = tpu.matmul %393, %395, %cst_330 {dimension_numbers = #tpu.dot_dimension_numbers<[1], [0], [0], [1], [0, 0, 1, 1], [], []>} : vector<4x64xf32>, vector<64x128xf32>, vector<4x128xf32> -> vector<4x128xf32>
    %397 = arith.addf %392, %396 : vector<4x128xf32>
    %c0_331 = arith.constant 0 : index
    %c16_332 = arith.constant 16 : index
    %398 = vector.load %arg31[%c0_331, %c16_332] : memref<6x96xf32, #tpu.memory_space<vmem>>, vector<4x64xf32>
    %c1_333 = arith.constant 1 : index
    %c0_334 = arith.constant 0 : index
    %c0_335 = arith.constant 0 : index
    %399 = vector.load %arg14[%c1_333, %c0_334, %c0_335] : memref<9x64x128xf32, #tpu.memory_space<vmem>>, vector<1x64x128xf32>
    %400 = vector.shape_cast %399 : vector<1x64x128xf32> to vector<64x128xf32>
    %cst_336 = arith.constant dense<0.000000e+00> : vector<4x128xf32>
    %401 = tpu.matmul %398, %400, %cst_336 {dimension_numbers = #tpu.dot_dimension_numbers<[1], [0], [0], [1], [0, 0, 1, 1], [], []>} : vector<4x64xf32>, vector<64x128xf32>, vector<4x128xf32> -> vector<4x128xf32>
    %402 = arith.addf %397, %401 : vector<4x128xf32>
    %c0_337 = arith.constant 0 : index
    %c32_338 = arith.constant 32 : index
    %403 = vector.load %arg31[%c0_337, %c32_338] : memref<6x96xf32, #tpu.memory_space<vmem>>, vector<4x64xf32>
    %c2_339 = arith.constant 2 : index
    %c0_340 = arith.constant 0 : index
    %c0_341 = arith.constant 0 : index
    %404 = vector.load %arg14[%c2_339, %c0_340, %c0_341] : memref<9x64x128xf32, #tpu.memory_space<vmem>>, vector<1x64x128xf32>
    %405 = vector.shape_cast %404 : vector<1x64x128xf32> to vector<64x128xf32>
    %cst_342 = arith.constant dense<0.000000e+00> : vector<4x128xf32>
    %406 = tpu.matmul %403, %405, %cst_342 {dimension_numbers = #tpu.dot_dimension_numbers<[1], [0], [0], [1], [0, 0, 1, 1], [], []>} : vector<4x64xf32>, vector<64x128xf32>, vector<4x128xf32> -> vector<4x128xf32>
    %407 = arith.addf %402, %406 : vector<4x128xf32>
    %c1_343 = arith.constant 1 : index
    %c0_344 = arith.constant 0 : index
    %408 = vector.load %arg31[%c1_343, %c0_344] : memref<6x96xf32, #tpu.memory_space<vmem>>, vector<4x64xf32>
    %c3_345 = arith.constant 3 : index
    %c0_346 = arith.constant 0 : index
    %c0_347 = arith.constant 0 : index
    %409 = vector.load %arg14[%c3_345, %c0_346, %c0_347] : memref<9x64x128xf32, #tpu.memory_space<vmem>>, vector<1x64x128xf32>
    %410 = vector.shape_cast %409 : vector<1x64x128xf32> to vector<64x128xf32>
    %cst_348 = arith.constant dense<0.000000e+00> : vector<4x128xf32>
    %411 = tpu.matmul %408, %410, %cst_348 {dimension_numbers = #tpu.dot_dimension_numbers<[1], [0], [0], [1], [0, 0, 1, 1], [], []>} : vector<4x64xf32>, vector<64x128xf32>, vector<4x128xf32> -> vector<4x128xf32>
    %412 = arith.addf %407, %411 : vector<4x128xf32>
    %c1_349 = arith.constant 1 : index
    %c16_350 = arith.constant 16 : index
    %413 = vector.load %arg31[%c1_349, %c16_350] : memref<6x96xf32, #tpu.memory_space<vmem>>, vector<4x64xf32>
    %c4_351 = arith.constant 4 : index
    %c0_352 = arith.constant 0 : index
    %c0_353 = arith.constant 0 : index
    %414 = vector.load %arg14[%c4_351, %c0_352, %c0_353] : memref<9x64x128xf32, #tpu.memory_space<vmem>>, vector<1x64x128xf32>
    %415 = vector.shape_cast %414 : vector<1x64x128xf32> to vector<64x128xf32>
    %cst_354 = arith.constant dense<0.000000e+00> : vector<4x128xf32>
    %416 = tpu.matmul %413, %415, %cst_354 {dimension_numbers = #tpu.dot_dimension_numbers<[1], [0], [0], [1], [0, 0, 1, 1], [], []>} : vector<4x64xf32>, vector<64x128xf32>, vector<4x128xf32> -> vector<4x128xf32>
    %417 = arith.addf %412, %416 : vector<4x128xf32>
    %c1_355 = arith.constant 1 : index
    %c32_356 = arith.constant 32 : index
    %418 = vector.load %arg31[%c1_355, %c32_356] : memref<6x96xf32, #tpu.memory_space<vmem>>, vector<4x64xf32>
    %c5_357 = arith.constant 5 : index
    %c0_358 = arith.constant 0 : index
    %c0_359 = arith.constant 0 : index
    %419 = vector.load %arg14[%c5_357, %c0_358, %c0_359] : memref<9x64x128xf32, #tpu.memory_space<vmem>>, vector<1x64x128xf32>
    %420 = vector.shape_cast %419 : vector<1x64x128xf32> to vector<64x128xf32>
    %cst_360 = arith.constant dense<0.000000e+00> : vector<4x128xf32>
    %421 = tpu.matmul %418, %420, %cst_360 {dimension_numbers = #tpu.dot_dimension_numbers<[1], [0], [0], [1], [0, 0, 1, 1], [], []>} : vector<4x64xf32>, vector<64x128xf32>, vector<4x128xf32> -> vector<4x128xf32>
    %422 = arith.addf %417, %421 : vector<4x128xf32>
    %c2_361 = arith.constant 2 : index
    %c0_362 = arith.constant 0 : index
    %423 = vector.load %arg31[%c2_361, %c0_362] : memref<6x96xf32, #tpu.memory_space<vmem>>, vector<4x64xf32>
    %c6_363 = arith.constant 6 : index
    %c0_364 = arith.constant 0 : index
    %c0_365 = arith.constant 0 : index
    %424 = vector.load %arg14[%c6_363, %c0_364, %c0_365] : memref<9x64x128xf32, #tpu.memory_space<vmem>>, vector<1x64x128xf32>
    %425 = vector.shape_cast %424 : vector<1x64x128xf32> to vector<64x128xf32>
    %cst_366 = arith.constant dense<0.000000e+00> : vector<4x128xf32>
    %426 = tpu.matmul %423, %425, %cst_366 {dimension_numbers = #tpu.dot_dimension_numbers<[1], [0], [0], [1], [0, 0, 1, 1], [], []>} : vector<4x64xf32>, vector<64x128xf32>, vector<4x128xf32> -> vector<4x128xf32>
    %427 = arith.addf %422, %426 : vector<4x128xf32>
    %c2_367 = arith.constant 2 : index
    %c16_368 = arith.constant 16 : index
    %428 = vector.load %arg31[%c2_367, %c16_368] : memref<6x96xf32, #tpu.memory_space<vmem>>, vector<4x64xf32>
    %c7_369 = arith.constant 7 : index
    %c0_370 = arith.constant 0 : index
    %c0_371 = arith.constant 0 : index
    %429 = vector.load %arg14[%c7_369, %c0_370, %c0_371] : memref<9x64x128xf32, #tpu.memory_space<vmem>>, vector<1x64x128xf32>
    %430 = vector.shape_cast %429 : vector<1x64x128xf32> to vector<64x128xf32>
    %cst_372 = arith.constant dense<0.000000e+00> : vector<4x128xf32>
    %431 = tpu.matmul %428, %430, %cst_372 {dimension_numbers = #tpu.dot_dimension_numbers<[1], [0], [0], [1], [0, 0, 1, 1], [], []>} : vector<4x64xf32>, vector<64x128xf32>, vector<4x128xf32> -> vector<4x128xf32>
    %432 = arith.addf %427, %431 : vector<4x128xf32>
    %c2_373 = arith.constant 2 : index
    %c32_374 = arith.constant 32 : index
    %433 = vector.load %arg31[%c2_373, %c32_374] : memref<6x96xf32, #tpu.memory_space<vmem>>, vector<4x64xf32>
    %c8_375 = arith.constant 8 : index
    %c0_376 = arith.constant 0 : index
    %c0_377 = arith.constant 0 : index
    %434 = vector.load %arg14[%c8_375, %c0_376, %c0_377] : memref<9x64x128xf32, #tpu.memory_space<vmem>>, vector<1x64x128xf32>
    %435 = vector.shape_cast %434 : vector<1x64x128xf32> to vector<64x128xf32>
    %cst_378 = arith.constant dense<0.000000e+00> : vector<4x128xf32>
    %436 = tpu.matmul %433, %435, %cst_378 {dimension_numbers = #tpu.dot_dimension_numbers<[1], [0], [0], [1], [0, 0, 1, 1], [], []>} : vector<4x64xf32>, vector<64x128xf32>, vector<4x128xf32> -> vector<4x128xf32>
    %437 = arith.addf %432, %436 : vector<4x128xf32>
    %c0_379 = arith.constant 0 : index
    %c0_380 = arith.constant 0 : index
    %438 = vector.load %arg15[%c0_379, %c0_380] : memref<1x128xf32, #tpu.memory_space<vmem>>, vector<1x128xf32>
    %439 = vector.broadcast %438 : vector<1x128xf32> to vector<4x128xf32>
    %440 = arith.mulf %437, %439 : vector<4x128xf32>
    %c0_381 = arith.constant 0 : index
    %c0_382 = arith.constant 0 : index
    %441 = vector.load %arg16[%c0_381, %c0_382] : memref<1x128xf32, #tpu.memory_space<vmem>>, vector<1x128xf32>
    %442 = vector.broadcast %441 : vector<1x128xf32> to vector<4x128xf32>
    %443 = arith.addf %440, %442 : vector<4x128xf32>
    %cst_383 = arith.constant 0.000000e+00 : f32
    %444 = vector.broadcast %cst_383 : f32 to vector<4x128xf32>
    %445 = arith.maximumf %443, %444 : vector<4x128xf32>
    %cst_384 = arith.constant 0.000000e+00 : f32
    %446 = vector.broadcast %cst_384 : f32 to vector<6x192xf32>
    %c0_385 = arith.constant 0 : index
    %c0_386 = arith.constant 0 : index
    %447 = vector.load %arg32[%c0_385, %c0_386] : memref<6x192xf32, #tpu.memory_space<vmem>>, vector<6x192xf32>
    tpu.vector_store %arg32[%c0_385, %c0_386], %446 {strides = array<i32>} : memref<6x192xf32, #tpu.memory_space<vmem>>, vector<6x192xf32>,
    %c1_387 = arith.constant 1 : index
    %c32_388 = arith.constant 32 : index
    %448 = vector.load %arg32[%c1_387, %c32_388] : memref<6x192xf32, #tpu.memory_space<vmem>>, vector<4x128xf32>
    tpu.vector_store %arg32[%c1_387, %c32_388], %445 {strides = array<i32>} : memref<6x192xf32, #tpu.memory_space<vmem>>, vector<4x128xf32>,
    %cst_389 = arith.constant 0.000000e+00 : f32
    %449 = vector.broadcast %cst_389 : f32 to vector<4x128xf32>
    %c0_390 = arith.constant 0 : index
    %c0_391 = arith.constant 0 : index
    %450 = vector.load %arg32[%c0_390, %c0_391] : memref<6x192xf32, #tpu.memory_space<vmem>>, vector<4x128xf32>
    %c0_392 = arith.constant 0 : index
    %c0_393 = arith.constant 0 : index
    %c0_394 = arith.constant 0 : index
    %451 = vector.load %arg17[%c0_392, %c0_393, %c0_394] : memref<9x128x128xf32, #tpu.memory_space<vmem>>, vector<1x128x128xf32>
    %452 = vector.shape_cast %451 : vector<1x128x128xf32> to vector<128x128xf32>
    %cst_395 = arith.constant dense<0.000000e+00> : vector<4x128xf32>
    %453 = tpu.matmul %450, %452, %cst_395 {dimension_numbers = #tpu.dot_dimension_numbers<[1], [0], [0], [1], [0, 0, 1, 1], [], []>} : vector<4x128xf32>, vector<128x128xf32>, vector<4x128xf32> -> vector<4x128xf32>
    %454 = arith.addf %449, %453 : vector<4x128xf32>
    %c0_396 = arith.constant 0 : index
    %c32_397 = arith.constant 32 : index
    %455 = vector.load %arg32[%c0_396, %c32_397] : memref<6x192xf32, #tpu.memory_space<vmem>>, vector<4x128xf32>
    %c1_398 = arith.constant 1 : index
    %c0_399 = arith.constant 0 : index
    %c0_400 = arith.constant 0 : index
    %456 = vector.load %arg17[%c1_398, %c0_399, %c0_400] : memref<9x128x128xf32, #tpu.memory_space<vmem>>, vector<1x128x128xf32>
    %457 = vector.shape_cast %456 : vector<1x128x128xf32> to vector<128x128xf32>
    %cst_401 = arith.constant dense<0.000000e+00> : vector<4x128xf32>
    %458 = tpu.matmul %455, %457, %cst_401 {dimension_numbers = #tpu.dot_dimension_numbers<[1], [0], [0], [1], [0, 0, 1, 1], [], []>} : vector<4x128xf32>, vector<128x128xf32>, vector<4x128xf32> -> vector<4x128xf32>
    %459 = arith.addf %454, %458 : vector<4x128xf32>
    %c0_402 = arith.constant 0 : index
    %c64 = arith.constant 64 : index
    %460 = vector.load %arg32[%c0_402, %c64] : memref<6x192xf32, #tpu.memory_space<vmem>>, vector<4x128xf32>
    %c2_403 = arith.constant 2 : index
    %c0_404 = arith.constant 0 : index
    %c0_405 = arith.constant 0 : index
    %461 = vector.load %arg17[%c2_403, %c0_404, %c0_405] : memref<9x128x128xf32, #tpu.memory_space<vmem>>, vector<1x128x128xf32>
    %462 = vector.shape_cast %461 : vector<1x128x128xf32> to vector<128x128xf32>
    %cst_406 = arith.constant dense<0.000000e+00> : vector<4x128xf32>
    %463 = tpu.matmul %460, %462, %cst_406 {dimension_numbers = #tpu.dot_dimension_numbers<[1], [0], [0], [1], [0, 0, 1, 1], [], []>} : vector<4x128xf32>, vector<128x128xf32>, vector<4x128xf32> -> vector<4x128xf32>
    %464 = arith.addf %459, %463 : vector<4x128xf32>
    %c1_407 = arith.constant 1 : index
    %c0_408 = arith.constant 0 : index
    %465 = vector.load %arg32[%c1_407, %c0_408] : memref<6x192xf32, #tpu.memory_space<vmem>>, vector<4x128xf32>
    %c3_409 = arith.constant 3 : index
    %c0_410 = arith.constant 0 : index
    %c0_411 = arith.constant 0 : index
    %466 = vector.load %arg17[%c3_409, %c0_410, %c0_411] : memref<9x128x128xf32, #tpu.memory_space<vmem>>, vector<1x128x128xf32>
    %467 = vector.shape_cast %466 : vector<1x128x128xf32> to vector<128x128xf32>
    %cst_412 = arith.constant dense<0.000000e+00> : vector<4x128xf32>
    %468 = tpu.matmul %465, %467, %cst_412 {dimension_numbers = #tpu.dot_dimension_numbers<[1], [0], [0], [1], [0, 0, 1, 1], [], []>} : vector<4x128xf32>, vector<128x128xf32>, vector<4x128xf32> -> vector<4x128xf32>
    %469 = arith.addf %464, %468 : vector<4x128xf32>
    %c1_413 = arith.constant 1 : index
    %c32_414 = arith.constant 32 : index
    %470 = vector.load %arg32[%c1_413, %c32_414] : memref<6x192xf32, #tpu.memory_space<vmem>>, vector<4x128xf32>
    %c4_415 = arith.constant 4 : index
    %c0_416 = arith.constant 0 : index
    %c0_417 = arith.constant 0 : index
    %471 = vector.load %arg17[%c4_415, %c0_416, %c0_417] : memref<9x128x128xf32, #tpu.memory_space<vmem>>, vector<1x128x128xf32>
    %472 = vector.shape_cast %471 : vector<1x128x128xf32> to vector<128x128xf32>
    %cst_418 = arith.constant dense<0.000000e+00> : vector<4x128xf32>
    %473 = tpu.matmul %470, %472, %cst_418 {dimension_numbers = #tpu.dot_dimension_numbers<[1], [0], [0], [1], [0, 0, 1, 1], [], []>} : vector<4x128xf32>, vector<128x128xf32>, vector<4x128xf32> -> vector<4x128xf32>
    %474 = arith.addf %469, %473 : vector<4x128xf32>
    %c1_419 = arith.constant 1 : index
    %c64_420 = arith.constant 64 : index
    %475 = vector.load %arg32[%c1_419, %c64_420] : memref<6x192xf32, #tpu.memory_space<vmem>>, vector<4x128xf32>
    %c5_421 = arith.constant 5 : index
    %c0_422 = arith.constant 0 : index
    %c0_423 = arith.constant 0 : index
    %476 = vector.load %arg17[%c5_421, %c0_422, %c0_423] : memref<9x128x128xf32, #tpu.memory_space<vmem>>, vector<1x128x128xf32>
    %477 = vector.shape_cast %476 : vector<1x128x128xf32> to vector<128x128xf32>
    %cst_424 = arith.constant dense<0.000000e+00> : vector<4x128xf32>
    %478 = tpu.matmul %475, %477, %cst_424 {dimension_numbers = #tpu.dot_dimension_numbers<[1], [0], [0], [1], [0, 0, 1, 1], [], []>} : vector<4x128xf32>, vector<128x128xf32>, vector<4x128xf32> -> vector<4x128xf32>
    %479 = arith.addf %474, %478 : vector<4x128xf32>
    %c2_425 = arith.constant 2 : index
    %c0_426 = arith.constant 0 : index
    %480 = vector.load %arg32[%c2_425, %c0_426] : memref<6x192xf32, #tpu.memory_space<vmem>>, vector<4x128xf32>
    %c6_427 = arith.constant 6 : index
    %c0_428 = arith.constant 0 : index
    %c0_429 = arith.constant 0 : index
    %481 = vector.load %arg17[%c6_427, %c0_428, %c0_429] : memref<9x128x128xf32, #tpu.memory_space<vmem>>, vector<1x128x128xf32>
    %482 = vector.shape_cast %481 : vector<1x128x128xf32> to vector<128x128xf32>
    %cst_430 = arith.constant dense<0.000000e+00> : vector<4x128xf32>
    %483 = tpu.matmul %480, %482, %cst_430 {dimension_numbers = #tpu.dot_dimension_numbers<[1], [0], [0], [1], [0, 0, 1, 1], [], []>} : vector<4x128xf32>, vector<128x128xf32>, vector<4x128xf32> -> vector<4x128xf32>
    %484 = arith.addf %479, %483 : vector<4x128xf32>
    %c2_431 = arith.constant 2 : index
    %c32_432 = arith.constant 32 : index
    %485 = vector.load %arg32[%c2_431, %c32_432] : memref<6x192xf32, #tpu.memory_space<vmem>>, vector<4x128xf32>
    %c7_433 = arith.constant 7 : index
    %c0_434 = arith.constant 0 : index
    %c0_435 = arith.constant 0 : index
    %486 = vector.load %arg17[%c7_433, %c0_434, %c0_435] : memref<9x128x128xf32, #tpu.memory_space<vmem>>, vector<1x128x128xf32>
    %487 = vector.shape_cast %486 : vector<1x128x128xf32> to vector<128x128xf32>
    %cst_436 = arith.constant dense<0.000000e+00> : vector<4x128xf32>
    %488 = tpu.matmul %485, %487, %cst_436 {dimension_numbers = #tpu.dot_dimension_numbers<[1], [0], [0], [1], [0, 0, 1, 1], [], []>} : vector<4x128xf32>, vector<128x128xf32>, vector<4x128xf32> -> vector<4x128xf32>
    %489 = arith.addf %484, %488 : vector<4x128xf32>
    %c2_437 = arith.constant 2 : index
    %c64_438 = arith.constant 64 : index
    %490 = vector.load %arg32[%c2_437, %c64_438] : memref<6x192xf32, #tpu.memory_space<vmem>>, vector<4x128xf32>
    %c8_439 = arith.constant 8 : index
    %c0_440 = arith.constant 0 : index
    %c0_441 = arith.constant 0 : index
    %491 = vector.load %arg17[%c8_439, %c0_440, %c0_441] : memref<9x128x128xf32, #tpu.memory_space<vmem>>, vector<1x128x128xf32>
    %492 = vector.shape_cast %491 : vector<1x128x128xf32> to vector<128x128xf32>
    %cst_442 = arith.constant dense<0.000000e+00> : vector<4x128xf32>
    %493 = tpu.matmul %490, %492, %cst_442 {dimension_numbers = #tpu.dot_dimension_numbers<[1], [0], [0], [1], [0, 0, 1, 1], [], []>} : vector<4x128xf32>, vector<128x128xf32>, vector<4x128xf32> -> vector<4x128xf32>
    %494 = arith.addf %489, %493 : vector<4x128xf32>
    %c0_443 = arith.constant 0 : index
    %c0_444 = arith.constant 0 : index
    %495 = vector.load %arg18[%c0_443, %c0_444] : memref<1x128xf32, #tpu.memory_space<vmem>>, vector<1x128xf32>
    %496 = vector.broadcast %495 : vector<1x128xf32> to vector<4x128xf32>
    %497 = arith.mulf %494, %496 : vector<4x128xf32>
    %c0_445 = arith.constant 0 : index
    %c0_446 = arith.constant 0 : index
    %498 = vector.load %arg19[%c0_445, %c0_446] : memref<1x128xf32, #tpu.memory_space<vmem>>, vector<1x128xf32>
    %499 = vector.broadcast %498 : vector<1x128xf32> to vector<4x128xf32>
    %500 = arith.addf %497, %499 : vector<4x128xf32>
    %cst_447 = arith.constant 0.000000e+00 : f32
    %501 = vector.broadcast %cst_447 : f32 to vector<4x128xf32>
    %502 = arith.maximumf %500, %501 : vector<4x128xf32>
    %503 = vector.extract_strided_slice %502 {offsets = [0, 0], sizes = [1, 128], strides = [1, 1]} : vector<4x128xf32> to vector<1x128xf32>
    %504 = vector.extract_strided_slice %502 {offsets = [1, 0], sizes = [1, 128], strides = [1, 1]} : vector<4x128xf32> to vector<1x128xf32>
    %505 = arith.maximumf %503, %504 : vector<1x128xf32>
    %c0_448 = arith.constant 0 : index
    %c0_449 = arith.constant 0 : index
    %506 = vector.load %arg33[%c0_448, %c0_449] : memref<2x128xf32, #tpu.memory_space<vmem>>, vector<1x128xf32>
    tpu.vector_store %arg33[%c0_448, %c0_449], %505 {strides = array<i32>} : memref<2x128xf32, #tpu.memory_space<vmem>>, vector<1x128xf32>,
    %507 = vector.extract_strided_slice %502 {offsets = [2, 0], sizes = [1, 128], strides = [1, 1]} : vector<4x128xf32> to vector<1x128xf32>
    %508 = vector.extract_strided_slice %502 {offsets = [3, 0], sizes = [1, 128], strides = [1, 1]} : vector<4x128xf32> to vector<1x128xf32>
    %509 = arith.maximumf %507, %508 : vector<1x128xf32>
    %c1_450 = arith.constant 1 : index
    %c0_451 = arith.constant 0 : index
    %510 = vector.load %arg33[%c1_450, %c0_451] : memref<2x128xf32, #tpu.memory_space<vmem>>, vector<1x128xf32>
    tpu.vector_store %arg33[%c1_450, %c0_451], %509 {strides = array<i32>} : memref<2x128xf32, #tpu.memory_space<vmem>>, vector<1x128xf32>,
    %cst_452 = arith.constant 0.000000e+00 : f32
    %511 = vector.broadcast %cst_452 : f32 to vector<1x96xf32>
    %c0_453 = arith.constant 0 : index
    %c0_454 = arith.constant 0 : index
    %512 = vector.load %arg33[%c0_453, %c0_454] : memref<2x128xf32, #tpu.memory_space<vmem>>, vector<1x96xf32>
    %c0_455 = arith.constant 0 : index
    %c0_456 = arith.constant 0 : index
    %c0_457 = arith.constant 0 : index
    %513 = vector.load %arg20[%c0_455, %c0_456, %c0_457] : memref<4x96x96xf32, #tpu.memory_space<vmem>>, vector<1x96x96xf32>
    %514 = vector.shape_cast %513 : vector<1x96x96xf32> to vector<96x96xf32>
    %cst_458 = arith.constant dense<0.000000e+00> : vector<1x96xf32>
    %515 = tpu.matmul %512, %514, %cst_458 {dimension_numbers = #tpu.dot_dimension_numbers<[1], [0], [0], [1], [0, 0, 1, 1], [], []>} : vector<1x96xf32>, vector<96x96xf32>, vector<1x96xf32> -> vector<1x96xf32>
    %516 = arith.addf %511, %515 : vector<1x96xf32>
    %c0_459 = arith.constant 0 : index
    %c32_460 = arith.constant 32 : index
    %517 = vector.load %arg33[%c0_459, %c32_460] : memref<2x128xf32, #tpu.memory_space<vmem>>, vector<1x96xf32>
    %c1_461 = arith.constant 1 : index
    %c0_462 = arith.constant 0 : index
    %c0_463 = arith.constant 0 : index
    %518 = vector.load %arg20[%c1_461, %c0_462, %c0_463] : memref<4x96x96xf32, #tpu.memory_space<vmem>>, vector<1x96x96xf32>
    %519 = vector.shape_cast %518 : vector<1x96x96xf32> to vector<96x96xf32>
    %cst_464 = arith.constant dense<0.000000e+00> : vector<1x96xf32>
    %520 = tpu.matmul %517, %519, %cst_464 {dimension_numbers = #tpu.dot_dimension_numbers<[1], [0], [0], [1], [0, 0, 1, 1], [], []>} : vector<1x96xf32>, vector<96x96xf32>, vector<1x96xf32> -> vector<1x96xf32>
    %521 = arith.addf %516, %520 : vector<1x96xf32>
    %c1_465 = arith.constant 1 : index
    %c0_466 = arith.constant 0 : index
    %522 = vector.load %arg33[%c1_465, %c0_466] : memref<2x128xf32, #tpu.memory_space<vmem>>, vector<1x96xf32>
    %c2_467 = arith.constant 2 : index
    %c0_468 = arith.constant 0 : index
    %c0_469 = arith.constant 0 : index
    %523 = vector.load %arg20[%c2_467, %c0_468, %c0_469] : memref<4x96x96xf32, #tpu.memory_space<vmem>>, vector<1x96x96xf32>
    %524 = vector.shape_cast %523 : vector<1x96x96xf32> to vector<96x96xf32>
    %cst_470 = arith.constant dense<0.000000e+00> : vector<1x96xf32>
    %525 = tpu.matmul %522, %524, %cst_470 {dimension_numbers = #tpu.dot_dimension_numbers<[1], [0], [0], [1], [0, 0, 1, 1], [], []>} : vector<1x96xf32>, vector<96x96xf32>, vector<1x96xf32> -> vector<1x96xf32>
    %526 = arith.addf %521, %525 : vector<1x96xf32>
    %c1_471 = arith.constant 1 : index
    %c32_472 = arith.constant 32 : index
    %527 = vector.load %arg33[%c1_471, %c32_472] : memref<2x128xf32, #tpu.memory_space<vmem>>, vector<1x96xf32>
    %c3_473 = arith.constant 3 : index
    %c0_474 = arith.constant 0 : index
    %c0_475 = arith.constant 0 : index
    %528 = vector.load %arg20[%c3_473, %c0_474, %c0_475] : memref<4x96x96xf32, #tpu.memory_space<vmem>>, vector<1x96x96xf32>
    %529 = vector.shape_cast %528 : vector<1x96x96xf32> to vector<96x96xf32>
    %cst_476 = arith.constant dense<0.000000e+00> : vector<1x96xf32>
    %530 = tpu.matmul %527, %529, %cst_476 {dimension_numbers = #tpu.dot_dimension_numbers<[1], [0], [0], [1], [0, 0, 1, 1], [], []>} : vector<1x96xf32>, vector<96x96xf32>, vector<1x96xf32> -> vector<1x96xf32>
    %531 = arith.addf %526, %530 : vector<1x96xf32>
    %c0_477 = arith.constant 0 : index
    %c0_478 = arith.constant 0 : index
    %532 = vector.load %arg21[%c0_477, %c0_478] : memref<1x96xf32, #tpu.memory_space<vmem>>, vector<1x96xf32>
    %533 = arith.mulf %531, %532 : vector<1x96xf32>
    %c0_479 = arith.constant 0 : index
    %c0_480 = arith.constant 0 : index
    %534 = vector.load %arg22[%c0_479, %c0_480] : memref<1x96xf32, #tpu.memory_space<vmem>>, vector<1x96xf32>
    %535 = arith.addf %533, %534 : vector<1x96xf32>
    %cst_481 = arith.constant 0.000000e+00 : f32
    %536 = vector.broadcast %cst_481 : f32 to vector<1x96xf32>
    %537 = arith.maximumf %535, %536 : vector<1x96xf32>
    %cst_482 = arith.constant dense<0.000000e+00> : vector<96xf32>
    %538 = vector.multi_reduction <add>, %537, %cst_482 [0] : vector<1x96xf32> to vector<96xf32>
    %539 = vector.shape_cast %538 : vector<96xf32> to vector<1x96xf32>
    %cst_483 = arith.constant 1.000000e+00 : f32
    %540 = vector.broadcast %cst_483 : f32 to vector<1x96xf32>
    %541 = arith.mulf %539, %540 : vector<1x96xf32>
    %542 = vector.extract_strided_slice %541 {offsets = [0, 0], sizes = [1, 32], strides = [1, 1]} : vector<1x96xf32> to vector<1x32xf32>
    %543 = vector.extract_strided_slice %541 {offsets = [0, 32], sizes = [1, 32], strides = [1, 1]} : vector<1x96xf32> to vector<1x32xf32>
    %544 = arith.addf %542, %543 : vector<1x32xf32>
    %545 = vector.extract_strided_slice %541 {offsets = [0, 64], sizes = [1, 32], strides = [1, 1]} : vector<1x96xf32> to vector<1x32xf32>
    %546 = arith.addf %544, %545 : vector<1x32xf32>
    %cst_484 = arith.constant 0.333333343 : f32
    %547 = vector.broadcast %cst_484 : f32 to vector<1x32xf32>
    %548 = arith.mulf %546, %547 : vector<1x32xf32>
    %c0_485 = arith.constant 0 : index
    %c0_486 = arith.constant 0 : index
    %c0_487 = arith.constant 0 : index
    %549 = vector.load %arg26[%c0_485, %c0_486, %c0_487] : memref<1x1x32xf32, #tpu.memory_space<vmem>>, vector<1x1x32xf32>
    %550 = vector.shape_cast %549 : vector<1x1x32xf32> to vector<1x32xf32>
    %551 = vector.shape_cast %548 : vector<1x32xf32> to vector<1x1x32xf32>
    tpu.vector_store %arg26[%c0_485, %c0_486, %c0_487], %551 {strides = array<i32>} : memref<1x1x32xf32, #tpu.memory_space<vmem>>, vector<1x1x32xf32>,
    %c0_488 = arith.constant 0 : index
    %c0_489 = arith.constant 0 : index
    %552 = vector.load %arg23[%c0_488, %c0_489] : memref<1x32xf32, #tpu.memory_space<vmem>>, vector<1x32xf32>
    %553 = arith.mulf %548, %552 : vector<1x32xf32>
    %cst_490 = arith.constant dense<0.000000e+00> : vector<1xf32>
    %554 = vector.multi_reduction <add>, %553, %cst_490 [1] : vector<1x32xf32> to vector<1xf32>
    %555 = vector.shape_cast %554 : vector<1xf32> to vector<1x1xf32>
    %c0_491 = arith.constant 0 : index
    %c0_492 = arith.constant 0 : index
    %556 = vector.load %arg24[%c0_491, %c0_492] : memref<1x1xf32, #tpu.memory_space<vmem>>, vector<1x1xf32>
    %557 = arith.addf %555, %556 : vector<1x1xf32>
    %c0_493 = arith.constant 0 : index
    %c0_494 = arith.constant 0 : index
    %c0_495 = arith.constant 0 : index
    %558 = vector.load %arg25[%c0_493, %c0_494, %c0_495] : memref<1x1x1xf32, #tpu.memory_space<vmem>>, vector<1x1x1xf32>
    %559 = vector.shape_cast %558 : vector<1x1x1xf32> to vector<1x1xf32>
    %560 = vector.shape_cast %557 : vector<1x1xf32> to vector<1x1x1xf32>
    tpu.vector_store %arg25[%c0_493, %c0_494, %c0_495], %560 {strides = array<i32>} : memref<1x1x1xf32, #tpu.memory_space<vmem>>, vector<1x1x1xf32>,
    return
  }
  func.func @transform_0(%arg0: i32) -> (i32, i32, i32) {
    %c0_i32 = arith.constant 0 : i32
    %c0_i32_0 = arith.constant 0 : i32
    %c0_i32_1 = arith.constant 0 : i32
    return %arg0, %c0_i32, %c0_i32_0 : i32, i32, i32
  }
  func.func @transform_1(%arg0: i32) -> (i32, i32, i32) {
    %c0_i32 = arith.constant 0 : i32
    %c0_i32_0 = arith.constant 0 : i32
    %c0_i32_1 = arith.constant 0 : i32
    %c0_i32_2 = arith.constant 0 : i32
    return %c0_i32, %c0_i32_0, %c0_i32_1 : i32, i32, i32
  }
  func.func @transform_2(%arg0: i32) -> (i32, i32) {
    %c0_i32 = arith.constant 0 : i32
    %c0_i32_0 = arith.constant 0 : i32
    %c0_i32_1 = arith.constant 0 : i32
    return %c0_i32, %c0_i32_0 : i32, i32
  }
  func.func @transform_3(%arg0: i32) -> (i32, i32) {
    %c0_i32 = arith.constant 0 : i32
    %c0_i32_0 = arith.constant 0 : i32
    %c0_i32_1 = arith.constant 0 : i32
    return %c0_i32, %c0_i32_0 : i32, i32
  }
  func.func @transform_4(%arg0: i32) -> (i32, i32, i32) {
    %c0_i32 = arith.constant 0 : i32
    %c0_i32_0 = arith.constant 0 : i32
    %c0_i32_1 = arith.constant 0 : i32
    %c0_i32_2 = arith.constant 0 : i32
    return %c0_i32, %c0_i32_0, %c0_i32_1 : i32, i32, i32
  }
  func.func @transform_5(%arg0: i32) -> (i32, i32) {
    %c0_i32 = arith.constant 0 : i32
    %c0_i32_0 = arith.constant 0 : i32
    %c0_i32_1 = arith.constant 0 : i32
    return %c0_i32, %c0_i32_0 : i32, i32
  }
  func.func @transform_6(%arg0: i32) -> (i32, i32) {
    %c0_i32 = arith.constant 0 : i32
    %c0_i32_0 = arith.constant 0 : i32
    %c0_i32_1 = arith.constant 0 : i32
    return %c0_i32, %c0_i32_0 : i32, i32
  }
  func.func @transform_7(%arg0: i32) -> (i32, i32, i32) {
    %c0_i32 = arith.constant 0 : i32
    %c0_i32_0 = arith.constant 0 : i32
    %c0_i32_1 = arith.constant 0 : i32
    %c0_i32_2 = arith.constant 0 : i32
    return %c0_i32, %c0_i32_0, %c0_i32_1 : i32, i32, i32
  }
  func.func @transform_8(%arg0: i32) -> (i32, i32) {
    %c0_i32 = arith.constant 0 : i32
    %c0_i32_0 = arith.constant 0 : i32
    %c0_i32_1 = arith.constant 0 : i32
    return %c0_i32, %c0_i32_0 : i32, i32
  }
  func.func @transform_9(%arg0: i32) -> (i32, i32) {
    %c0_i32 = arith.constant 0 : i32
    %c0_i32_0 = arith.constant 0 : i32
    %c0_i32_1 = arith.constant 0 : i32
    return %c0_i32, %c0_i32_0 : i32, i32
  }
  func.func @transform_10(%arg0: i32) -> (i32, i32, i32) {
    %c0_i32 = arith.constant 0 : i32
    %c0_i32_0 = arith.constant 0 : i32
    %c0_i32_1 = arith.constant 0 : i32
    %c0_i32_2 = arith.constant 0 : i32
    return %c0_i32, %c0_i32_0, %c0_i32_1 : i32, i32, i32
  }
  func.func @transform_11(%arg0: i32) -> (i32, i32) {
    %c0_i32 = arith.constant 0 : i32
    %c0_i32_0 = arith.constant 0 : i32
    %c0_i32_1 = arith.constant 0 : i32
    return %c0_i32, %c0_i32_0 : i32, i32
  }
  func.func @transform_12(%arg0: i32) -> (i32, i32) {
    %c0_i32 = arith.constant 0 : i32
    %c0_i32_0 = arith.constant 0 : i32
    %c0_i32_1 = arith.constant 0 : i32
    return %c0_i32, %c0_i32_0 : i32, i32
  }
  func.func @transform_13(%arg0: i32) -> (i32, i32, i32) {
    %c0_i32 = arith.constant 0 : i32
    %c0_i32_0 = arith.constant 0 : i32
    %c0_i32_1 = arith.constant 0 : i32
    %c0_i32_2 = arith.constant 0 : i32
    return %c0_i32, %c0_i32_0, %c0_i32_1 : i32, i32, i32
  }
  func.func @transform_14(%arg0: i32) -> (i32, i32) {
    %c0_i32 = arith.constant 0 : i32
    %c0_i32_0 = arith.constant 0 : i32
    %c0_i32_1 = arith.constant 0 : i32
    return %c0_i32, %c0_i32_0 : i32, i32
  }
  func.func @transform_15(%arg0: i32) -> (i32, i32) {
    %c0_i32 = arith.constant 0 : i32
    %c0_i32_0 = arith.constant 0 : i32
    %c0_i32_1 = arith.constant 0 : i32
    return %c0_i32, %c0_i32_0 : i32, i32
  }
  func.func @transform_16(%arg0: i32) -> (i32, i32, i32) {
    %c0_i32 = arith.constant 0 : i32
    %c0_i32_0 = arith.constant 0 : i32
    %c0_i32_1 = arith.constant 0 : i32
    %c0_i32_2 = arith.constant 0 : i32
    return %c0_i32, %c0_i32_0, %c0_i32_1 : i32, i32, i32
  }
  func.func @transform_17(%arg0: i32) -> (i32, i32) {
    %c0_i32 = arith.constant 0 : i32
    %c0_i32_0 = arith.constant 0 : i32
    %c0_i32_1 = arith.constant 0 : i32
    return %c0_i32, %c0_i32_0 : i32, i32
  }
  func.func @transform_18(%arg0: i32) -> (i32, i32) {
    %c0_i32 = arith.constant 0 : i32
    %c0_i32_0 = arith.constant 0 : i32
    %c0_i32_1 = arith.constant 0 : i32
    return %c0_i32, %c0_i32_0 : i32, i32
  }
  func.func @transform_19(%arg0: i32) -> (i32, i32, i32) {
    %c0_i32 = arith.constant 0 : i32
    %c0_i32_0 = arith.constant 0 : i32
    %c0_i32_1 = arith.constant 0 : i32
    %c0_i32_2 = arith.constant 0 : i32
    return %c0_i32, %c0_i32_0, %c0_i32_1 : i32, i32, i32
  }
  func.func @transform_20(%arg0: i32) -> (i32, i32) {
    %c0_i32 = arith.constant 0 : i32
    %c0_i32_0 = arith.constant 0 : i32
    %c0_i32_1 = arith.constant 0 : i32
    return %c0_i32, %c0_i32_0 : i32, i32
  }
  func.func @transform_21(%arg0: i32) -> (i32, i32) {
    %c0_i32 = arith.constant 0 : i32
    %c0_i32_0 = arith.constant 0 : i32
    %c0_i32_1 = arith.constant 0 : i32
    return %c0_i32, %c0_i32_0 : i32, i32
  }
  func.func @transform_22(%arg0: i32) -> (i32, i32) {
    %c0_i32 = arith.constant 0 : i32
    %c0_i32_0 = arith.constant 0 : i32
    %c0_i32_1 = arith.constant 0 : i32
    return %c0_i32, %c0_i32_0 : i32, i32
  }
  func.func @transform_23(%arg0: i32) -> (i32, i32) {
    %c0_i32 = arith.constant 0 : i32
    %c0_i32_0 = arith.constant 0 : i32
    %c0_i32_1 = arith.constant 0 : i32
    return %c0_i32, %c0_i32_0 : i32, i32
  }
  func.func @transform_24(%arg0: i32) -> (i32, i32, i32) {
    %c0_i32 = arith.constant 0 : i32
    %c0_i32_0 = arith.constant 0 : i32
    %c0_i32_1 = arith.constant 0 : i32
    return %arg0, %c0_i32, %c0_i32_0 : i32, i32, i32
  }
  func.func @transform_25(%arg0: i32) -> (i32, i32, i32) {
    %c0_i32 = arith.constant 0 : i32
    %c0_i32_0 = arith.constant 0 : i32
    %c0_i32_1 = arith.constant 0 : i32
    return %arg0, %c0_i32, %c0_i32_0 : i32, i32, i32
  }
}

</mosaic_0001>

<llo_original>
// kernel: tile.51
$region0: #{tile.51}
  %s0 = inlined_call_operand.vmem [shape: f32[16,4], index: 0, kind: input, shape index: {}]
  %s1 = inlined_call_operand.vmem [shape: f32[1,64], index: 1, kind: output, shape index: {}]
  $region1: #{tile.51} parent=0
    #allocation0 [shape = 'u8[4096]{0}', space=vmem, size = 0x1000, scoped, tag = 'scoped mem for output reshape']
    %v2 = vld [vmem:[%s0] sm:$0x1]
    %vm3 = vcmask 31744
    %4 = vst.msk [vmem:[#allocation0] sm:$0x1] %vm3, %v2
    %s5 = scalar_lea.vmem %s0, 15
    %v6 = vld [vmem:[%s5] sm:$0x1]
    %7 = vrot.lane.b32.xlu0 %v6, 60
    %v8 = vpop.permute.xlu0 %7
    %vm9 = vcmask 523744
    %10 = vst.msk [vmem:[#allocation0] sm:$0x1] %vm9, %v8
    %s11 = scalar_lea.vmem %s0, 14
    %v12 = vld [vmem:[%s11] sm:$0x1]
    %13 = vrot.lane.b32.xlu0 %v12, 56
    %v14 = vpop.permute.xlu0 %13
    %vm15 = vcmask 490944
    %16 = vst.msk [vmem:[#allocation0] sm:$0x1] %vm15, %v14
    %s17 = scalar_lea.vmem %s0, 13
    %v18 = vld [vmem:[%s17] sm:$0x1]
    %19 = vrot.lane.b32.xlu0 %v18, 52
    %v20 = vpop.permute.xlu0 %19
    %vm21 = vcmask 458144
    %22 = vst.msk [vmem:[#allocation0] sm:$0x1] %vm21, %v20
    %s23 = scalar_lea.vmem %s0, 12
    %v24 = vld [vmem:[%s23] sm:$0x1]
    %25 = vrot.lane.b32.xlu0 %v24, 48
    %v26 = vpop.permute.xlu0 %25
    %vm27 = vcmask 425344
    %28 = vst.msk [vmem:[#allocation0] sm:$0x1] %vm27, %v26
    %s29 = scalar_lea.vmem %s0, 11
    %v30 = vld [vmem:[%s29] sm:$0x1]
    %31 = vrot.lane.b32.xlu0 %v30, 44
    %v32 = vpop.permute.xlu0 %31
    %vm33 = vcmask 392544
    %34 = vst.msk [vmem:[#allocation0] sm:$0x1] %vm33, %v32
    %s35 = scalar_lea.vmem %s0, 10
    %v36 = vld [vmem:[%s35] sm:$0x1]
    %37 = vrot.lane.b32.xlu0 %v36, 40
    %v38 = vpop.permute.xlu0 %37
    %vm39 = vcmask 359744
    %40 = vst.msk [vmem:[#allocation0] sm:$0x1] %vm39, %v38
    %s41 = scalar_lea.vmem %s0, 9
    %v42 = vld [vmem:[%s41] sm:$0x1]
    %43 = vrot.lane.b32.xlu0 %v42, 36
    %v44 = vpop.permute.xlu0 %43
    %vm45 = vcmask 326944
    %46 = vst.msk [vmem:[#allocation0] sm:$0x1] %vm45, %v44
    %s47 = scalar_lea.vmem %s0, 8
    %v48 = vld [vmem:[%s47] sm:$0x1]
    %49 = vrot.lane.b32.xlu0 %v48, 32
    %v50 = vpop.permute.xlu0 %49
    %vm51 = vcmask 294144
    %52 = vst.msk [vmem:[#allocation0] sm:$0x1] %vm51, %v50
    %s53 = scalar_lea.vmem %s0, 7
    %v54 = vld [vmem:[%s53] sm:$0x1]
    %55 = vrot.lane.b32.xlu0 %v54, 28
    %v56 = vpop.permute.xlu0 %55
    %vm57 = vcmask 261344
    %58 = vst.msk [vmem:[#allocation0] sm:$0x1] %vm57, %v56
    %s59 = scalar_lea.vmem %s0, 6
    %v60 = vld [vmem:[%s59] sm:$0x1]
    %61 = vrot.lane.b32.xlu0 %v60, 24
    %v62 = vpop.permute.xlu0 %61
    %vm63 = vcmask 228544
    %64 = vst.msk [vmem:[#allocation0] sm:$0x1] %vm63, %v62
    %s65 = scalar_lea.vmem %s0, 5
    %v66 = vld [vmem:[%s65] sm:$0x1]
    %67 = vrot.lane.b32.xlu0 %v66, 20
    %v68 = vpop.permute.xlu0 %67
    %vm69 = vcmask 195744
    %70 = vst.msk [vmem:[#allocation0] sm:$0x1] %vm69, %v68
    %s71 = scalar_lea.vmem %s0, 4
    %v72 = vld [vmem:[%s71] sm:$0x1]
    %73 = vrot.lane.b32.xlu0 %v72, 16
    %v74 = vpop.permute.xlu0 %73
    %vm75 = vcmask 162944
    %76 = vst.msk [vmem:[#allocation0] sm:$0x1] %vm75, %v74
    %s77 = scalar_lea.vmem %s0, 3
    %v78 = vld [vmem:[%s77] sm:$0x1]
    %79 = vrot.lane.b32.xlu0 %v78, 12
    %v80 = vpop.permute.xlu0 %79
    %vm81 = vcmask 130144
    %82 = vst.msk [vmem:[#allocation0] sm:$0x1] %vm81, %v80
    %s83 = scalar_lea.vmem %s0, 2
    %v84 = vld [vmem:[%s83] sm:$0x1]
    %85 = vrot.lane.b32.xlu0 %v84, 8
    %v86 = vpop.permute.xlu0 %85
    %vm87 = vcmask 97344
    %88 = vst.msk [vmem:[#allocation0] sm:$0x1] %vm87, %v86
    %s89 = scalar_lea.vmem %s0, 1
    %v90 = vld [vmem:[%s89] sm:$0x1]
    %91 = vrot.lane.b32.xlu0 %v90, 4
    %v92 = vpop.permute.xlu0 %91
    %vm93 = vcmask 64544
    %94 = vst.msk [vmem:[#allocation0] sm:$0x1] %vm93, %v92
    %s96 = sshll.u32 1, 1
    %s97 = ssub.s32 %s96, 1
    %v99 = vld [vmem:[#allocation0] sm:%s97]
    %s100 = sshll.u32 1, 1
    %s101 = ssub.s32 %s100, 1
    %102 = vst [vmem:[%s1] sm:%s101] %v99

// kernel: tile.55
$region0: #{tile.55}
  #allocation0 [shape = 's32[1]{0}', space=sflag, size = 0x4, scoped, tag = 'scoped memory for tile.55']
  %s0 = inlined_call_operand.vmem [shape: f32[8], index: 0, kind: input, shape index: {}]
  %s1 = inlined_call_operand.vmem [shape: f32[8,8], index: 1, kind: output, shape index: {}]
  // Predicated region
  $region2: #{tile.55} parent=0 // pred_check
    _
  $region3: #{tile.55} parent=0 // pred_check_branch
    %3 = sbr.rel (0) target = $region5
  $region4: #{tile.55} parent=0 // pred_region
    _
  $region5: #{tile.55} parent=0 // pred_fallthru
    _
  %v4 = vld [vmem:[%s0] ss:$0 sm:$0xff]
  %5 = vst [vmem:[%s1] sm:$0xff] %v4

// kernel: tile.56
$region0: #{tile.56}
  %s0 = inlined_call_operand.vmem [shape: f32[8,8], index: 0, kind: input, shape index: {}]
  %s1 = inlined_call_operand.vmem [shape: f32[1,64], index: 1, kind: output, shape index: {}]
  $region1: #{tile.56} parent=0
    #allocation0 [shape = 'u8[4096]{0}', space=vmem, size = 0x1000, scoped, tag = 'scoped mem for output reshape']
    %v2 = vld [vmem:[%s0] sm:$0x1]
    %vm3 = vcmask 64512
    %4 = vst.msk [vmem:[#allocation0] sm:$0x1] %vm3, %v2
    %s5 = scalar_lea.vmem %s0, 7
    %v6 = vld [vmem:[%s5] sm:$0x1]
    %7 = vrot.lane.b32.xlu0 %v6, 56
    %v8 = vpop.permute.xlu0 %7
    %vm9 = vcmask 523712
    %10 = vst.msk [vmem:[#allocation0] sm:$0x1] %vm9, %v8
    %s11 = scalar_lea.vmem %s0, 6
    %v12 = vld [vmem:[%s11] sm:$0x1]
    %13 = vrot.lane.b32.xlu0 %v12, 48
    %v14 = vpop.permute.xlu0 %13
    %vm15 = vcmask 458112
    %16 = vst.msk [vmem:[#allocation0] sm:$0x1] %vm15, %v14
    %s17 = scalar_lea.vmem %s0, 5
    %v18 = vld [vmem:[%s17] sm:$0x1]
    %19 = vrot.lane.b32.xlu0 %v18, 40
    %v20 = vpop.permute.xlu0 %19
    %vm21 = vcmask 392512
    %22 = vst.msk [vmem:[#allocation0] sm:$0x1] %vm21, %v20
    %s23 = scalar_lea.vmem %s0, 4
    %v24 = vld [vmem:[%s23] sm:$0x1]
    %25 = vrot.lane.b32.xlu0 %v24, 32
    %v26 = vpop.permute.xlu0 %25
    %vm27 = vcmask 326912
    %28 = vst.msk [vmem:[#allocation0] sm:$0x1] %vm27, %v26
    %s29 = scalar_lea.vmem %s0, 3
    %v30 = vld [vmem:[%s29] sm:$0x1]
    %31 = vrot.lane.b32.xlu0 %v30, 24
    %v32 = vpop.permute.xlu0 %31
    %vm33 = vcmask 261312
    %34 = vst.msk [vmem:[#allocation0] sm:$0x1] %vm33, %v32
    %s35 = scalar_lea.vmem %s0, 2
    %v36 = vld [vmem:[%s35] sm:$0x1]
    %37 = vrot.lane.b32.xlu0 %v36, 16
    %v38 = vpop.permute.xlu0 %37
    %vm39 = vcmask 195712
    %40 = vst.msk [vmem:[#allocation0] sm:$0x1] %vm39, %v38
    %s41 = scalar_lea.vmem %s0, 1
    %v42 = vld [vmem:[%s41] sm:$0x1]
    %43 = vrot.lane.b32.xlu0 %v42, 8
    %v44 = vpop.permute.xlu0 %43
    %vm45 = vcmask 130112
    %46 = vst.msk [vmem:[#allocation0] sm:$0x1] %vm45, %v44
    %s48 = sshll.u32 1, 1
    %s49 = ssub.s32 %s48, 1
    %v51 = vld [vmem:[#allocation0] sm:%s49]
    %s52 = sshll.u32 1, 1
    %s53 = ssub.s32 %s52, 1
    %54 = vst [vmem:[%s1] sm:%s53] %v51

// kernel: tile.60
$region0: #{tile.60}
  #allocation0 [shape = 's32[1]{0}', space=sflag, size = 0x4, scoped, tag = 'scoped memory for tile.60']
  %s0 = inlined_call_operand.vmem [shape: f32[16], index: 0, kind: input, shape index: {}]
  %s1 = inlined_call_operand.vmem [shape: f32[4,16], index: 1, kind: output, shape index: {}]
  // Predicated region
  $region2: #{tile.60} parent=0 // pred_check
    _
  $region3: #{tile.60} parent=0 // pred_check_branch
    %3 = sbr.rel (0) target = $region5
  $region4: #{tile.60} parent=0 // pred_region
    _
  $region5: #{tile.60} parent=0 // pred_fallthru
    _
  %v4 = vld [vmem:[%s0] ss:$0 sm:$0xff]
  %5 = vst [vmem:[%s1] sm:$0xf] %v4

// kernel: tile.61
$region0: #{tile.61}
  %s0 = inlined_call_operand.vmem [shape: f32[4,16], index: 0, kind: input, shape index: {}]
  %s1 = inlined_call_operand.vmem [shape: f32[1,64], index: 1, kind: output, shape index: {}]
  $region1: #{tile.61} parent=0
    #allocation0 [shape = 'u8[4096]{0}', space=vmem, size = 0x1000, scoped, tag = 'scoped mem for output reshape']
    #allocation1 [shape = 'u8[4096]{0}', space=vmem, size = 0x1000, scoped, tag = 'scoped mem for input reshape']
    %s3 = sshll.u32 1, 4
    %s4 = ssub.s32 %s3, 1
    %v5 = vld [vmem:[%s0] sm:%s4]
    %6 = vst [vmem:[#allocation1] sm:%s4] %v5
    %v7 = vld [vmem:[#allocation1] sm:$0x1]
    %vm8 = vcmask 130048
    %9 = vst.msk [vmem:[#allocation0] sm:$0x1] %vm8, %v7
    %s10 = scalar_lea.vmem [#allocation1], 3
    %v11 = vld [vmem:[%s10] sm:$0x1]
    %12 = vrot.lane.b32.xlu0 %v11, 48
    %v13 = vpop.permute.xlu0 %12
    %vm14 = vcmask 523648
    %15 = vst.msk [vmem:[#allocation0] sm:$0x1] %vm14, %v13
    %s16 = scalar_lea.vmem [#allocation1], 2
    %v17 = vld [vmem:[%s16] sm:$0x1]
    %18 = vrot.lane.b32.xlu0 %v17, 32
    %v19 = vpop.permute.xlu0 %18
    %vm20 = vcmask 392448
    %21 = vst.msk [vmem:[#allocation0] sm:$0x1] %vm20, %v19
    %s22 = scalar_lea.vmem [#allocation1], 1
    %v23 = vld [vmem:[%s22] sm:$0x1]
    %24 = vrot.lane.b32.xlu0 %v23, 16
    %v25 = vpop.permute.xlu0 %24
    %vm26 = vcmask 261248
    %27 = vst.msk [vmem:[#allocation0] sm:$0x1] %vm26, %v25
    %s29 = sshll.u32 1, 1
    %s30 = ssub.s32 %s29, 1
    %v32 = vld [vmem:[#allocation0] sm:%s30]
    %s33 = sshll.u32 1, 1
    %s34 = ssub.s32 %s33, 1
    %35 = vst [vmem:[%s1] sm:%s34] %v32

// kernel: tile.70
$region0: #{tile.70}
  #allocation0 [shape = 's32[1]{0}', space=sflag, size = 0x4, scoped, tag = 'scoped memory for tile.70']
  %s0 = inlined_call_operand.vmem [shape: f32[32], index: 0, kind: input, shape index: {}]
  %s1 = inlined_call_operand.vmem [shape: f32[4,32], index: 1, kind: output, shape index: {}]
  // Predicated region
  $region2: #{tile.70} parent=0 // pred_check
    _
  $region3: #{tile.70} parent=0 // pred_check_branch
    %3 = sbr.rel (0) target = $region5
  $region4: #{tile.70} parent=0 // pred_region
    _
  $region5: #{tile.70} parent=0 // pred_fallthru
    _
  %v4 = vld [vmem:[%s0] ss:$0 sm:$0xff]
  %5 = vst [vmem:[%s1] sm:$0xf] %v4

// kernel: tile.71
$region0: #{tile.71}
  %s0 = inlined_call_operand.vmem [shape: f32[4,32], index: 0, kind: input, shape index: {}]
  %s1 = inlined_call_operand.vmem [shape: f32[1,128], index: 1, kind: output, shape index: {}]
  $region1: #{tile.71} parent=0
    #allocation0 [shape = 'u8[4096]{0}', space=vmem, size = 0x1000, scoped, tag = 'scoped mem for output reshape']
    #allocation1 [shape = 'u8[4096]{0}', space=vmem, size = 0x1000, scoped, tag = 'scoped mem for input reshape']
    %s3 = sshll.u32 1, 4
    %s4 = ssub.s32 %s3, 1
    %v5 = vld [vmem:[%s0] sm:%s4]
    %6 = vst [vmem:[#allocation1] sm:%s4] %v5
    %v7 = vld [vmem:[#allocation1] sm:$0x1]
    %vm8 = vcmask 261120
    %9 = vst.msk [vmem:[#allocation0] sm:$0x1] %vm8, %v7
    %s10 = scalar_lea.vmem [#allocation1], 3
    %v11 = vld [vmem:[%s10] sm:$0x1]
    %12 = vrot.lane.b32.xlu0 %v11, 96
    %v13 = vpop.permute.xlu0 %12
    %vm14 = vcmask 1048320
    %15 = vst.msk [vmem:[#allocation0] sm:$0x1] %vm14, %v13
    %s16 = scalar_lea.vmem [#allocation1], 2
    %v17 = vld [vmem:[%s16] sm:$0x1]
    %18 = vrot.lane.b32.xlu0 %v17, 64
    %v19 = vpop.permute.xlu0 %18
    %vm20 = vcmask 785920
    %21 = vst.msk [vmem:[#allocation0] sm:$0x1] %vm20, %v19
    %s22 = scalar_lea.vmem [#allocation1], 1
    %v23 = vld [vmem:[%s22] sm:$0x1]
    %24 = vrot.lane.b32.xlu0 %v23, 32
    %v25 = vpop.permute.xlu0 %24
    %vm26 = vcmask 523520
    %27 = vst.msk [vmem:[#allocation0] sm:$0x1] %vm26, %v25
    %s29 = sshll.u32 1, 1
    %s30 = ssub.s32 %s29, 1
    %v32 = vld [vmem:[#allocation0] sm:%s30]
    %s33 = sshll.u32 1, 1
    %s34 = ssub.s32 %s33, 1
    %35 = vst [vmem:[%s1] sm:%s34] %v32

// kernel: tile.90
$region0: #{tile.90}
  #allocation0 [shape = 's32[1]{0}', space=sflag, size = 0x4, scoped, tag = 'scoped memory for tile.90']
  %s0 = inlined_call_operand.vmem [shape: f32[32], index: 0, kind: input, shape index: {}]
  %s1 = inlined_call_operand.vmem [shape: f32[3,32], index: 1, kind: output, shape index: {}]
  // Predicated region
  $region2: #{tile.90} parent=0 // pred_check
    _
  $region3: #{tile.90} parent=0 // pred_check_branch
    %3 = sbr.rel (0) target = $region5
  $region4: #{tile.90} parent=0 // pred_region
    _
  $region5: #{tile.90} parent=0 // pred_fallthru
    _
  %v4 = vld [vmem:[%s0] ss:$0 sm:$0xff]
  %5 = vst [vmem:[%s1] sm:$0xf] %v4

// kernel: tile.91
$region0: #{tile.91}
  %s0 = inlined_call_operand.vmem [shape: f32[3,32], index: 0, kind: input, shape index: {}]
  %s1 = inlined_call_operand.vmem [shape: f32[1,96], index: 1, kind: output, shape index: {}]
  $region1: #{tile.91} parent=0
    #allocation0 [shape = 'u8[4096]{0}', space=vmem, size = 0x1000, scoped, tag = 'scoped mem for output reshape']
    #allocation1 [shape = 'u8[4096]{0}', space=vmem, size = 0x1000, scoped, tag = 'scoped mem for input reshape']
    %s3 = sshll.u32 1, 4
    %s4 = ssub.s32 %s3, 1
    %v5 = vld [vmem:[%s0] sm:%s4]
    %6 = vst [vmem:[#allocation1] sm:%s4] %v5
    %v7 = vld [vmem:[#allocation1] sm:$0x1]
    %vm8 = vcmask 261120
    %9 = vst.msk [vmem:[#allocation0] sm:$0x1] %vm8, %v7
    %s10 = scalar_lea.vmem [#allocation1], 2
    %v11 = vld [vmem:[%s10] sm:$0x1]
    %12 = vrot.lane.b32.xlu0 %v11, 64
    %v13 = vpop.permute.xlu0 %12
    %vm14 = vcmask 785920
    %15 = vst.msk [vmem:[#allocation0] sm:$0x1] %vm14, %v13
    %s16 = scalar_lea.vmem [#allocation1], 1
    %v17 = vld [vmem:[%s16] sm:$0x1]
    %18 = vrot.lane.b32.xlu0 %v17, 32
    %v19 = vpop.permute.xlu0 %18
    %vm20 = vcmask 523520
    %21 = vst.msk [vmem:[#allocation0] sm:$0x1] %vm20, %v19
    %s23 = sshll.u32 1, 1
    %s24 = ssub.s32 %s23, 1
    %v26 = vld [vmem:[#allocation0] sm:%s24]
    %s27 = sshll.u32 1, 1
    %s28 = ssub.s32 %s27, 1
    %29 = vst [vmem:[%s1] sm:%s28] %v26

// kernel: tile.46
$region0: #{tile.46}
  #allocation0 [shape = 's32[1]{0}', space=sflag, size = 0x4, scoped, tag = 'scoped memory for tile.46']
  %s0 = inlined_call_operand.<no memory space> [shape: f32[], index: 0, kind: input, shape index: {}]
  %s1 = inlined_call_operand.vmem [shape: f32[1,96], index: 1, kind: output, shape index: {}]
  %v2 = vstv %s0
  %3 = vst [vmem:[%s1] sm:$0x1] %v2

// kernel: baseline_classifier_forward.1
$region0: #{baseline_classifier_forward.1}
  #allocation0 [shape = 'u32[]', space=smem, size = 0x4, offset = 0x4, fixed_abs, tag = 'smem constant byte address 0x4 - core index']
  #allocation1 [shape = 'u32[144,128]{1,0:T(1,128)}', space=vmem, size = 0x12000, scoped, tag = 'internal scratch']
  #allocation2 [shape = 'f32[34,18]{1,0:T(8,128)}', space=vmem, size = 0x5000, scoped, tag = 'scratch operand']
  #allocation3 [shape = 'f32[18,40]{1,0:T(8,128)}', space=vmem, size = 0x3000, scoped, tag = 'scratch operand']
  #allocation4 [shape = 'f32[10,48]{1,0:T(8,128)}', space=vmem, size = 0x2000, scoped, tag = 'scratch operand']
  #allocation5 [shape = 'f32[10,96]{1,0:T(8,128)}', space=vmem, size = 0x2000, scoped, tag = 'scratch operand']
  #allocation6 [shape = 'f32[6,96]{1,0:T(8,128)}', space=vmem, size = 0x1000, scoped, tag = 'scratch operand']
  #allocation7 [shape = 'f32[6,192]{1,0:T(8,128)}', space=vmem, size = 0x2000, scoped, tag = 'scratch operand']
  #allocation8 [shape = 'f32[2,128]{1,0:T(2,128)}', space=vmem, size = 0x400, scoped, tag = 'scratch operand']
  #allocation9 [shape = 'f32[16,128]{1,0:T(8,128)}', space=vmem, size = 0x2000, scoped, tag = 'scratch operand']
  #allocation10 [shape = 'f32[1,1]{1,0:T(1,128)S(1)}', space=vmem, size = 0x200, scoped, tag = 'scoped memory for baseline_classifier_forward.1']
  %s0 = inlined_call_operand.vmem [shape: f32[2,32,16], index: 0, kind: input, shape index: {}]
  %s1 = inlined_call_operand.vmem [shape: f32[9,16,64], index: 1, kind: input, shape index: {}]
  %s2 = inlined_call_operand.vmem [shape: f32[1,64], index: 2, kind: input, shape index: {}, may-alias: {2,5,8,11}]
  %s3 = inlined_call_operand.vmem [shape: f32[1,64], index: 3, kind: input, shape index: {}]
  %s4 = inlined_call_operand.vmem [shape: f32[9,32,64], index: 4, kind: input, shape index: {}]
  %s5 = inlined_call_operand.vmem [shape: f32[1,64], index: 5, kind: input, shape index: {}, may-alias: {2,5,8,11}]
  %s6 = inlined_call_operand.vmem [shape: f32[1,64], index: 6, kind: input, shape index: {}]
  %s7 = inlined_call_operand.vmem [shape: f32[9,32,64], index: 7, kind: input, shape index: {}]
  %s8 = inlined_call_operand.vmem [shape: f32[1,64], index: 8, kind: input, shape index: {}, may-alias: {2,5,8,11}]
  %s9 = inlined_call_operand.vmem [shape: f32[1,64], index: 9, kind: input, shape index: {}]
  %s10 = inlined_call_operand.vmem [shape: f32[9,64,64], index: 10, kind: input, shape index: {}]
  %s11 = inlined_call_operand.vmem [shape: f32[1,64], index: 11, kind: input, shape index: {}, may-alias: {2,5,8,11}]
  %s12 = inlined_call_operand.vmem [shape: f32[1,64], index: 12, kind: input, shape index: {}]
  %s13 = inlined_call_operand.vmem [shape: f32[9,64,128], index: 13, kind: input, shape index: {}]
  %s14 = inlined_call_operand.vmem [shape: f32[1,128], index: 14, kind: input, shape index: {}]
  %s15 = inlined_call_operand.vmem [shape: f32[1,128], index: 15, kind: input, shape index: {}]
  %s16 = inlined_call_operand.vmem [shape: f32[9,128,128], index: 16, kind: input, shape index: {}]
  %s17 = inlined_call_operand.vmem [shape: f32[1,128], index: 17, kind: input, shape index: {}]
  %s18 = inlined_call_operand.vmem [shape: f32[1,128], index: 18, kind: input, shape index: {}]
  %s19 = inlined_call_operand.vmem [shape: f32[4,96,96], index: 19, kind: input, shape index: {}]
  %s20 = inlined_call_operand.vmem [shape: f32[1,96], index: 20, kind: input, shape index: {}]
  %s21 = inlined_call_operand.vmem [shape: f32[1,96], index: 21, kind: input, shape index: {}]
  %s22 = inlined_call_operand.vmem [shape: f32[1,32], index: 22, kind: input, shape index: {}]
  %s23 = inlined_call_operand.<no memory space> [shape: f32[1,1], index: 23, kind: input, shape index: {}]
  %s24 = inlined_call_operand.vmem [shape: f32[2,1,1], index: 24, kind: output, shape index: {0}]
  %s25 = inlined_call_operand.hbm [shape: f32[2,1,32], index: 25, kind: output, shape index: {1}]
  %26 = xla_tuple %s24, %s25
  %s27 = sld [smem:[#allocation0]]
  $region137: #{baseline_classifier_forward.1} parent=0
    _
  %s29 = ssub.s32 1, %s27
  %s30 = scalar_select 0, %s29, %s27
  %v31 = vstv %s23
  %32 = vst [vmem:[#allocation10] sm:$0x1] %v31
  $region1: #{baseline_classifier_forward.1} parent=0
    #allocation11 [shape = 'u8[1024]{0}', space=vmem, size = 0x400, scoped, tag = 'output window, operand 1']
    #allocation12 [shape = 's32[2]{0}', space=sflag, size = 0x8, scoped, tag = 'scoped memory for baseline_classifier_forward.1']
    %33 = vsyncpa [#allocation12], 0
    %s34 = scalar_lea.sflag [#allocation12], 1
    %35 = vsyncpa %s34, 0
    loop: start=0, step=1, limit=4
    $region2: #{baseline_classifier_forward.1} parent=1 // loop_pre_header
      _
    $region3: #{baseline_classifier_forward.1} parent=1 // loop_header
      %s37 = sphi 0, %s41
      %p38 = scmp.ge.s32.totalorder %s37, 4
      %s47 = sphi 0, %s49
      %s50 = sphi 0, %s47
      %s51 = sphi 0, %s50
      %s67 = sphi 0, %s51
      %s71 = sphi 0, %s71
      %s73 = sphi 0, %s71
      %s74 = sphi 0, %s73
      %s88 = sphi 0, %s74
      %s92 = sphi 0, %s92
      %s94 = sphi 0, %s92
      %s95 = sphi 0, %s94
      %s109 = sphi 0, %s95
      %s113 = sphi 0, %s113
      %s115 = sphi 0, %s113
      %s116 = sphi 0, %s115
      %s130 = sphi 0, %s116
      %s134 = sphi 0, %s134
      %s136 = sphi 0, %s134
      %s137 = sphi 0, %s136
      %s151 = sphi 0, %s137
      %s155 = sphi 0, %s155
      %s157 = sphi 0, %s155
      %s158 = sphi 0, %s157
      %s172 = sphi 0, %s158
      %s176 = sphi 0, %s176
      %s178 = sphi 0, %s176
      %s179 = sphi 0, %s178
      %s193 = sphi 0, %s179
      %s197 = sphi 0, %s197
      %s199 = sphi 0, %s197
      %s200 = sphi 0, %s199
      %s214 = sphi 0, %s200
      %s218 = sphi 0, %s218
      %s220 = sphi 0, %s218
      %s221 = sphi 0, %s220
      %s235 = sphi 0, %s221
      %s239 = sphi 0, %s239
      %s241 = sphi 0, %s239
      %s242 = sphi 0, %s241
      %s256 = sphi 0, %s242
      %s260 = sphi 0, %s260
      %s262 = sphi 0, %s260
      %s263 = sphi 0, %s262
      %s277 = sphi 0, %s263
      %s281 = sphi 0, %s281
      %s283 = sphi 0, %s281
      %s284 = sphi 0, %s283
      %s298 = sphi 0, %s284
      %s302 = sphi 0, %s302
      %s304 = sphi 0, %s302
      %s305 = sphi 0, %s304
      %s319 = sphi 0, %s305
      %s323 = sphi 0, %s323
      %s325 = sphi 0, %s323
      %s326 = sphi 0, %s325
      %s340 = sphi 0, %s326
      %s344 = sphi 0, %s344
      %s346 = sphi 0, %s344
      %s347 = sphi 0, %s346
      %s361 = sphi 0, %s347
      %s365 = sphi 0, %s365
      %s367 = sphi 0, %s365
      %s368 = sphi 0, %s367
      %s382 = sphi 0, %s368
      %s386 = sphi 0, %s386
      %s388 = sphi 0, %s386
      %s389 = sphi 0, %s388
      %s403 = sphi 0, %s389
      %s407 = sphi 0, %s407
      %s409 = sphi 0, %s407
      %s410 = sphi 0, %s409
      %s424 = sphi 0, %s410
      %s428 = sphi 0, %s428
      %s430 = sphi 0, %s428
      %s431 = sphi 0, %s430
      %s445 = sphi 0, %s431
      %s449 = sphi 0, %s449
      %s451 = sphi 0, %s449
      %s452 = sphi 0, %s451
      %s466 = sphi 0, %s452
      %s470 = sphi 0, %s470
      %s472 = sphi 0, %s470
      %s473 = sphi 0, %s472
      %s487 = sphi 0, %s473
      %s491 = sphi 0, %s491
      %s493 = sphi 0, %s491
      %s494 = sphi 0, %s493
      %s508 = sphi 0, %s494
      %s512 = sphi 0, %s512
      %s514 = sphi 0, %s512
      %s515 = sphi 0, %s514
      %s529 = sphi 0, %s515
      %s533 = sphi 0, %s533
      %s535 = sphi 0, %s533
      %s536 = sphi 0, %s535
      %s550 = sphi 0, %s536
      %s556 = sphi 0, %s558
      %s559 = sphi 0, %s556
      %s560 = sphi 0, %s559
      %s576 = sphi 0, %s560
      %s582 = sphi 0, %s584
      %s585 = sphi 0, %s582
      %s586 = sphi 0, %s585
      %s602 = sphi 0, %s586
    $region4: #{baseline_classifier_forward.1} parent=1 // loop_header_branch
      %40 = sbr.rel (%p38) target = $region8
    $region5: #{baseline_classifier_forward.1} parent=1 // loop_body
      %s42 = ssub.s32 %s37, 1
      %s43 = ssub.s32 %s37, 2
      %s44 = sadd.s32 %s37, 1
      %s45 = ssub.s32 %s37, %s44
      %p46 = scmp.eq.s32.totalorder %s45, 0
      %s48 = sadd.s32 %s47, 1
      %s49 = scalar_select %p46, %s47, %s48
      %p52 = pneg %p46
      %p53 = scmp.eq.s32.totalorder %s37, 1
      %p54 = por %p52, %p53
      %p55 = scmp.ne.s32.totalorder %s47, %s50
      %p56 = scmp.eq.s32.totalorder %s37, 0
      %p57 = por %p55, %p56
      %p58 = scmp.ne.s32.totalorder %s47, %s50
      %p59 = scmp.eq.s32.totalorder %s42, 1
      %p60 = por %p58, %p59
      %p61 = scmp.ne.s32.totalorder %s50, %s51
      %p62 = scmp.eq.s32.totalorder %s42, 0
      %p63 = por %p61, %p62
      %p64 = scmp.ne.s32.totalorder %s50, %s51
      %p65 = scmp.eq.s32.totalorder %s43, 1
      %p66 = por %p64, %p65
      %p68 = scmp.ne.s32.totalorder %s51, %s67
      %p69 = scmp.eq.s32.totalorder %s43, 0
      %p70 = por %p68, %p69
      %s72 = sadd.s32 %s71, 1
      %p75 = scmp.eq.s32.totalorder %s37, 1
      %p76 = scmp.ne.s32.totalorder %s71, %s73
      %p77 = scmp.eq.s32.totalorder %s37, 0
      %p78 = por %p76, %p77
      %p79 = scmp.ne.s32.totalorder %s71, %s73
      %p80 = scmp.eq.s32.totalorder %s42, 1
      %p81 = por %p79, %p80
      %p82 = scmp.ne.s32.totalorder %s73, %s74
      %p83 = scmp.eq.s32.totalorder %s42, 0
      %p84 = por %p82, %p83
      %p85 = scmp.ne.s32.totalorder %s73, %s74
      %p86 = scmp.eq.s32.totalorder %s43, 1
      %p87 = por %p85, %p86
      %p89 = scmp.ne.s32.totalorder %s74, %s88
      %p90 = scmp.eq.s32.totalorder %s43, 0
      %p91 = por %p89, %p90
      %s93 = sadd.s32 %s92, 1
      %p96 = scmp.eq.s32.totalorder %s37, 1
      %p97 = scmp.ne.s32.totalorder %s92, %s94
      %p98 = scmp.eq.s32.totalorder %s37, 0
      %p99 = por %p97, %p98
      %p100 = scmp.ne.s32.totalorder %s92, %s94
      %p101 = scmp.eq.s32.totalorder %s42, 1
      %p102 = por %p100, %p101
      %p103 = scmp.ne.s32.totalorder %s94, %s95
      %p104 = scmp.eq.s32.totalorder %s42, 0
      %p105 = por %p103, %p104
      %p106 = scmp.ne.s32.totalorder %s94, %s95
      %p107 = scmp.eq.s32.totalorder %s43, 1
      %p108 = por %p106, %p107
      %p110 = scmp.ne.s32.totalorder %s95, %s109
      %p111 = scmp.eq.s32.totalorder %s43, 0
      %p112 = por %p110, %p111
      %s114 = sadd.s32 %s113, 1
      %p117 = scmp.eq.s32.totalorder %s37, 1
      %p118 = scmp.ne.s32.totalorder %s113, %s115
      %p119 = scmp.eq.s32.totalorder %s37, 0
      %p120 = por %p118, %p119
      %p121 = scmp.ne.s32.totalorder %s113, %s115
      %p122 = scmp.eq.s32.totalorder %s42, 1
      %p123 = por %p121, %p122
      %p124 = scmp.ne.s32.totalorder %s115, %s116
      %p125 = scmp.eq.s32.totalorder %s42, 0
      %p126 = por %p124, %p125
      %p127 = scmp.ne.s32.totalorder %s115, %s116
      %p128 = scmp.eq.s32.totalorder %s43, 1
      %p129 = por %p127, %p128
      %p131 = scmp.ne.s32.totalorder %s116, %s130
      %p132 = scmp.eq.s32.totalorder %s43, 0
      %p133 = por %p131, %p132
      %s135 = sadd.s32 %s134, 1
      %p138 = scmp.eq.s32.totalorder %s37, 1
      %p139 = scmp.ne.s32.totalorder %s134, %s136
      %p140 = scmp.eq.s32.totalorder %s37, 0
      %p141 = por %p139, %p140
      %p142 = scmp.ne.s32.totalorder %s134, %s136
      %p143 = scmp.eq.s32.totalorder %s42, 1
      %p144 = por %p142, %p143
      %p145 = scmp.ne.s32.totalorder %s136, %s137
      %p146 = scmp.eq.s32.totalorder %s42, 0
      %p147 = por %p145, %p146
      %p148 = scmp.ne.s32.totalorder %s136, %s137
      %p149 = scmp.eq.s32.totalorder %s43, 1
      %p150 = por %p148, %p149
      %p152 = scmp.ne.s32.totalorder %s137, %s151
      %p153 = scmp.eq.s32.totalorder %s43, 0
      %p154 = por %p152, %p153
      %s156 = sadd.s32 %s155, 1
      %p159 = scmp.eq.s32.totalorder %s37, 1
      %p160 = scmp.ne.s32.totalorder %s155, %s157
      %p161 = scmp.eq.s32.totalorder %s37, 0
      %p162 = por %p160, %p161
      %p163 = scmp.ne.s32.totalorder %s155, %s157
      %p164 = scmp.eq.s32.totalorder %s42, 1
      %p165 = por %p163, %p164
      %p166 = scmp.ne.s32.totalorder %s157, %s158
      %p167 = scmp.eq.s32.totalorder %s42, 0
      %p168 = por %p166, %p167
      %p169 = scmp.ne.s32.totalorder %s157, %s158
      %p170 = scmp.eq.s32.totalorder %s43, 1
      %p171 = por %p169, %p170
      %p173 = scmp.ne.s32.totalorder %s158, %s172
      %p174 = scmp.eq.s32.totalorder %s43, 0
      %p175 = por %p173, %p174
      %s177 = sadd.s32 %s176, 1
      %p180 = scmp.eq.s32.totalorder %s37, 1
      %p181 = scmp.ne.s32.totalorder %s176, %s178
      %p182 = scmp.eq.s32.totalorder %s37, 0
      %p183 = por %p181, %p182
      %p184 = scmp.ne.s32.totalorder %s176, %s178
      %p185 = scmp.eq.s32.totalorder %s42, 1
      %p186 = por %p184, %p185
      %p187 = scmp.ne.s32.totalorder %s178, %s179
      %p188 = scmp.eq.s32.totalorder %s42, 0
      %p189 = por %p187, %p188
      %p190 = scmp.ne.s32.totalorder %s178, %s179
      %p191 = scmp.eq.s32.totalorder %s43, 1
      %p192 = por %p190, %p191
      %p194 = scmp.ne.s32.totalorder %s179, %s193
      %p195 = scmp.eq.s32.totalorder %s43, 0
      %p196 = por %p194, %p195
      %s198 = sadd.s32 %s197, 1
      %p201 = scmp.eq.s32.totalorder %s37, 1
      %p202 = scmp.ne.s32.totalorder %s197, %s199
      %p203 = scmp.eq.s32.totalorder %s37, 0
      %p204 = por %p202, %p203
      %p205 = scmp.ne.s32.totalorder %s197, %s199
      %p206 = scmp.eq.s32.totalorder %s42, 1
      %p207 = por %p205, %p206
      %p208 = scmp.ne.s32.totalorder %s199, %s200
      %p209 = scmp.eq.s32.totalorder %s42, 0
      %p210 = por %p208, %p209
      %p211 = scmp.ne.s32.totalorder %s199, %s200
      %p212 = scmp.eq.s32.totalorder %s43, 1
      %p213 = por %p211, %p212
      %p215 = scmp.ne.s32.totalorder %s200, %s214
      %p216 = scmp.eq.s32.totalorder %s43, 0
      %p217 = por %p215, %p216
      %s219 = sadd.s32 %s218, 1
      %p222 = scmp.eq.s32.totalorder %s37, 1
      %p223 = scmp.ne.s32.totalorder %s218, %s220
      %p224 = scmp.eq.s32.totalorder %s37, 0
      %p225 = por %p223, %p224
      %p226 = scmp.ne.s32.totalorder %s218, %s220
      %p227 = scmp.eq.s32.totalorder %s42, 1
      %p228 = por %p226, %p227
      %p229 = scmp.ne.s32.totalorder %s220, %s221
      %p230 = scmp.eq.s32.totalorder %s42, 0
      %p231 = por %p229, %p230
      %p232 = scmp.ne.s32.totalorder %s220, %s221
      %p233 = scmp.eq.s32.totalorder %s43, 1
      %p234 = por %p232, %p233
      %p236 = scmp.ne.s32.totalorder %s221, %s235
      %p237 = scmp.eq.s32.totalorder %s43, 0
      %p238 = por %p236, %p237
      %s240 = sadd.s32 %s239, 1
      %p243 = scmp.eq.s32.totalorder %s37, 1
      %p244 = scmp.ne.s32.totalorder %s239, %s241
      %p245 = scmp.eq.s32.totalorder %s37, 0
      %p246 = por %p244, %p245
      %p247 = scmp.ne.s32.totalorder %s239, %s241
      %p248 = scmp.eq.s32.totalorder %s42, 1
      %p249 = por %p247, %p248
      %p250 = scmp.ne.s32.totalorder %s241, %s242
      %p251 = scmp.eq.s32.totalorder %s42, 0
      %p252 = por %p250, %p251
      %p253 = scmp.ne.s32.totalorder %s241, %s242
      %p254 = scmp.eq.s32.totalorder %s43, 1
      %p255 = por %p253, %p254
      %p257 = scmp.ne.s32.totalorder %s242, %s256
      %p258 = scmp.eq.s32.totalorder %s43, 0
      %p259 = por %p257, %p258
      %s261 = sadd.s32 %s260, 1
      %p264 = scmp.eq.s32.totalorder %s37, 1
      %p265 = scmp.ne.s32.totalorder %s260, %s262
      %p266 = scmp.eq.s32.totalorder %s37, 0
      %p267 = por %p265, %p266
      %p268 = scmp.ne.s32.totalorder %s260, %s262
      %p269 = scmp.eq.s32.totalorder %s42, 1
      %p270 = por %p268, %p269
      %p271 = scmp.ne.s32.totalorder %s262, %s263
      %p272 = scmp.eq.s32.totalorder %s42, 0
      %p273 = por %p271, %p272
      %p274 = scmp.ne.s32.totalorder %s262, %s263
      %p275 = scmp.eq.s32.totalorder %s43, 1
      %p276 = por %p274, %p275
      %p278 = scmp.ne.s32.totalorder %s263, %s277
      %p279 = scmp.eq.s32.totalorder %s43, 0
      %p280 = por %p278, %p279
      %s282 = sadd.s32 %s281, 1
      %p285 = scmp.eq.s32.totalorder %s37, 1
      %p286 = scmp.ne.s32.totalorder %s281, %s283
      %p287 = scmp.eq.s32.totalorder %s37, 0
      %p288 = por %p286, %p287
      %p289 = scmp.ne.s32.totalorder %s281, %s283
      %p290 = scmp.eq.s32.totalorder %s42, 1
      %p291 = por %p289, %p290
      %p292 = scmp.ne.s32.totalorder %s283, %s284
      %p293 = scmp.eq.s32.totalorder %s42, 0
      %p294 = por %p292, %p293
      %p295 = scmp.ne.s32.totalorder %s283, %s284
      %p296 = scmp.eq.s32.totalorder %s43, 1
      %p297 = por %p295, %p296
      %p299 = scmp.ne.s32.totalorder %s284, %s298
      %p300 = scmp.eq.s32.totalorder %s43, 0
      %p301 = por %p299, %p300
      %s303 = sadd.s32 %s302, 1
      %p306 = scmp.eq.s32.totalorder %s37, 1
      %p307 = scmp.ne.s32.totalorder %s302, %s304
      %p308 = scmp.eq.s32.totalorder %s37, 0
      %p309 = por %p307, %p308
      %p310 = scmp.ne.s32.totalorder %s302, %s304
      %p311 = scmp.eq.s32.totalorder %s42, 1
      %p312 = por %p310, %p311
      %p313 = scmp.ne.s32.totalorder %s304, %s305
      %p314 = scmp.eq.s32.totalorder %s42, 0
      %p315 = por %p313, %p314
      %p316 = scmp.ne.s32.totalorder %s304, %s305
      %p317 = scmp.eq.s32.totalorder %s43, 1
      %p318 = por %p316, %p317
      %p320 = scmp.ne.s32.totalorder %s305, %s319
      %p321 = scmp.eq.s32.totalorder %s43, 0
      %p322 = por %p320, %p321
      %s324 = sadd.s32 %s323, 1
      %p327 = scmp.eq.s32.totalorder %s37, 1
      %p328 = scmp.ne.s32.totalorder %s323, %s325
      %p329 = scmp.eq.s32.totalorder %s37, 0
      %p330 = por %p328, %p329
      %p331 = scmp.ne.s32.totalorder %s323, %s325
      %p332 = scmp.eq.s32.totalorder %s42, 1
      %p333 = por %p331, %p332
      %p334 = scmp.ne.s32.totalorder %s325, %s326
      %p335 = scmp.eq.s32.totalorder %s42, 0
      %p336 = por %p334, %p335
      %p337 = scmp.ne.s32.totalorder %s325, %s326
      %p338 = scmp.eq.s32.totalorder %s43, 1
      %p339 = por %p337, %p338
      %p341 = scmp.ne.s32.totalorder %s326, %s340
      %p342 = scmp.eq.s32.totalorder %s43, 0
      %p343 = por %p341, %p342
      %s345 = sadd.s32 %s344, 1
      %p348 = scmp.eq.s32.totalorder %s37, 1
      %p349 = scmp.ne.s32.totalorder %s344, %s346
      %p350 = scmp.eq.s32.totalorder %s37, 0
      %p351 = por %p349, %p350
      %p352 = scmp.ne.s32.totalorder %s344, %s346
      %p353 = scmp.eq.s32.totalorder %s42, 1
      %p354 = por %p352, %p353
      %p355 = scmp.ne.s32.totalorder %s346, %s347
      %p356 = scmp.eq.s32.totalorder %s42, 0
      %p357 = por %p355, %p356
      %p358 = scmp.ne.s32.totalorder %s346, %s347
      %p359 = scmp.eq.s32.totalorder %s43, 1
      %p360 = por %p358, %p359
      %p362 = scmp.ne.s32.totalorder %s347, %s361
      %p363 = scmp.eq.s32.totalorder %s43, 0
      %p364 = por %p362, %p363
      %s366 = sadd.s32 %s365, 1
      %p369 = scmp.eq.s32.totalorder %s37, 1
      %p370 = scmp.ne.s32.totalorder %s365, %s367
      %p371 = scmp.eq.s32.totalorder %s37, 0
      %p372 = por %p370, %p371
      %p373 = scmp.ne.s32.totalorder %s365, %s367
      %p374 = scmp.eq.s32.totalorder %s42, 1
      %p375 = por %p373, %p374
      %p376 = scmp.ne.s32.totalorder %s367, %s368
      %p377 = scmp.eq.s32.totalorder %s42, 0
      %p378 = por %p376, %p377
      %p379 = scmp.ne.s32.totalorder %s367, %s368
      %p380 = scmp.eq.s32.totalorder %s43, 1
      %p381 = por %p379, %p380
      %p383 = scmp.ne.s32.totalorder %s368, %s382
      %p384 = scmp.eq.s32.totalorder %s43, 0
      %p385 = por %p383, %p384
      %s387 = sadd.s32 %s386, 1
      %p390 = scmp.eq.s32.totalorder %s37, 1
      %p391 = scmp.ne.s32.totalorder %s386, %s388
      %p392 = scmp.eq.s32.totalorder %s37, 0
      %p393 = por %p391, %p392
      %p394 = scmp.ne.s32.totalorder %s386, %s388
      %p395 = scmp.eq.s32.totalorder %s42, 1
      %p396 = por %p394, %p395
      %p397 = scmp.ne.s32.totalorder %s388, %s389
      %p398 = scmp.eq.s32.totalorder %s42, 0
      %p399 = por %p397, %p398
      %p400 = scmp.ne.s32.totalorder %s388, %s389
      %p401 = scmp.eq.s32.totalorder %s43, 1
      %p402 = por %p400, %p401
      %p404 = scmp.ne.s32.totalorder %s389, %s403
      %p405 = scmp.eq.s32.totalorder %s43, 0
      %p406 = por %p404, %p405
      %s408 = sadd.s32 %s407, 1
      %p411 = scmp.eq.s32.totalorder %s37, 1
      %p412 = scmp.ne.s32.totalorder %s407, %s409
      %p413 = scmp.eq.s32.totalorder %s37, 0
      %p414 = por %p412, %p413
      %p415 = scmp.ne.s32.totalorder %s407, %s409
      %p416 = scmp.eq.s32.totalorder %s42, 1
      %p417 = por %p415, %p416
      %p418 = scmp.ne.s32.totalorder %s409, %s410
      %p419 = scmp.eq.s32.totalorder %s42, 0
      %p420 = por %p418, %p419
      %p421 = scmp.ne.s32.totalorder %s409, %s410
      %p422 = scmp.eq.s32.totalorder %s43, 1
      %p423 = por %p421, %p422
      %p425 = scmp.ne.s32.totalorder %s410, %s424
      %p426 = scmp.eq.s32.totalorder %s43, 0
      %p427 = por %p425, %p426
      %s429 = sadd.s32 %s428, 1
      %p432 = scmp.eq.s32.totalorder %s37, 1
      %p433 = scmp.ne.s32.totalorder %s428, %s430
      %p434 = scmp.eq.s32.totalorder %s37, 0
      %p435 = por %p433, %p434
      %p436 = scmp.ne.s32.totalorder %s428, %s430
      %p437 = scmp.eq.s32.totalorder %s42, 1
      %p438 = por %p436, %p437
      %p439 = scmp.ne.s32.totalorder %s430, %s431
      %p440 = scmp.eq.s32.totalorder %s42, 0
      %p441 = por %p439, %p440
      %p442 = scmp.ne.s32.totalorder %s430, %s431
      %p443 = scmp.eq.s32.totalorder %s43, 1
      %p444 = por %p442, %p443
      %p446 = scmp.ne.s32.totalorder %s431, %s445
      %p447 = scmp.eq.s32.totalorder %s43, 0
      %p448 = por %p446, %p447
      %s450 = sadd.s32 %s449, 1
      %p453 = scmp.eq.s32.totalorder %s37, 1
      %p454 = scmp.ne.s32.totalorder %s449, %s451
      %p455 = scmp.eq.s32.totalorder %s37, 0
      %p456 = por %p454, %p455
      %p457 = scmp.ne.s32.totalorder %s449, %s451
      %p458 = scmp.eq.s32.totalorder %s42, 1
      %p459 = por %p457, %p458
      %p460 = scmp.ne.s32.totalorder %s451, %s452
      %p461 = scmp.eq.s32.totalorder %s42, 0
      %p462 = por %p460, %p461
      %p463 = scmp.ne.s32.totalorder %s451, %s452
      %p464 = scmp.eq.s32.totalorder %s43, 1
      %p465 = por %p463, %p464
      %p467 = scmp.ne.s32.totalorder %s452, %s466
      %p468 = scmp.eq.s32.totalorder %s43, 0
      %p469 = por %p467, %p468
      %s471 = sadd.s32 %s470, 1
      %p474 = scmp.eq.s32.totalorder %s37, 1
      %p475 = scmp.ne.s32.totalorder %s470, %s472
      %p476 = scmp.eq.s32.totalorder %s37, 0
      %p477 = por %p475, %p476
      %p478 = scmp.ne.s32.totalorder %s470, %s472
      %p479 = scmp.eq.s32.totalorder %s42, 1
      %p480 = por %p478, %p479
      %p481 = scmp.ne.s32.totalorder %s472, %s473
      %p482 = scmp.eq.s32.totalorder %s42, 0
      %p483 = por %p481, %p482
      %p484 = scmp.ne.s32.totalorder %s472, %s473
      %p485 = scmp.eq.s32.totalorder %s43, 1
      %p486 = por %p484, %p485
      %p488 = scmp.ne.s32.totalorder %s473, %s487
      %p489 = scmp.eq.s32.totalorder %s43, 0
      %p490 = por %p488, %p489
      %s492 = sadd.s32 %s491, 1
      %p495 = scmp.eq.s32.totalorder %s37, 1
      %p496 = scmp.ne.s32.totalorder %s491, %s493
      %p497 = scmp.eq.s32.totalorder %s37, 0
      %p498 = por %p496, %p497
      %p499 = scmp.ne.s32.totalorder %s491, %s493
      %p500 = scmp.eq.s32.totalorder %s42, 1
      %p501 = por %p499, %p500
      %p502 = scmp.ne.s32.totalorder %s493, %s494
      %p503 = scmp.eq.s32.totalorder %s42, 0
      %p504 = por %p502, %p503
      %p505 = scmp.ne.s32.totalorder %s493, %s494
      %p506 = scmp.eq.s32.totalorder %s43, 1
      %p507 = por %p505, %p506
      %p509 = scmp.ne.s32.totalorder %s494, %s508
      %p510 = scmp.eq.s32.totalorder %s43, 0
      %p511 = por %p509, %p510
      %s513 = sadd.s32 %s512, 1
      %p516 = scmp.eq.s32.totalorder %s37, 1
      %p517 = scmp.ne.s32.totalorder %s512, %s514
      %p518 = scmp.eq.s32.totalorder %s37, 0
      %p519 = por %p517, %p518
      %p520 = scmp.ne.s32.totalorder %s512, %s514
      %p521 = scmp.eq.s32.totalorder %s42, 1
      %p522 = por %p520, %p521
      %p523 = scmp.ne.s32.totalorder %s514, %s515
      %p524 = scmp.eq.s32.totalorder %s42, 0
      %p525 = por %p523, %p524
      %p526 = scmp.ne.s32.totalorder %s514, %s515
      %p527 = scmp.eq.s32.totalorder %s43, 1
      %p528 = por %p526, %p527
      %p530 = scmp.ne.s32.totalorder %s515, %s529
      %p531 = scmp.eq.s32.totalorder %s43, 0
      %p532 = por %p530, %p531
      %s534 = sadd.s32 %s533, 1
      %p537 = scmp.eq.s32.totalorder %s37, 1
      %p538 = scmp.ne.s32.totalorder %s533, %s535
      %p539 = scmp.eq.s32.totalorder %s37, 0
      %p540 = por %p538, %p539
      %p541 = scmp.ne.s32.totalorder %s533, %s535
      %p542 = scmp.eq.s32.totalorder %s42, 1
      %p543 = por %p541, %p542
      %p544 = scmp.ne.s32.totalorder %s535, %s536
      %p545 = scmp.eq.s32.totalorder %s42, 0
      %p546 = por %p544, %p545
      %p547 = scmp.ne.s32.totalorder %s535, %s536
      %p548 = scmp.eq.s32.totalorder %s43, 1
      %p549 = por %p547, %p548
      %p551 = scmp.ne.s32.totalorder %s536, %s550
      %p552 = scmp.eq.s32.totalorder %s43, 0
      %p553 = por %p551, %p552
      %s554 = ssub.s32 %s37, %s44
      %p555 = scmp.eq.s32.totalorder %s554, 0
      %s557 = sadd.s32 %s556, 1
      %s558 = scalar_select %p555, %s556, %s557
      %p561 = pneg %p555
      %p562 = scmp.eq.s32.totalorder %s37, 1
      %p563 = por %p561, %p562
      %p564 = scmp.ne.s32.totalorder %s556, %s559
      %p565 = scmp.eq.s32.totalorder %s37, 0
      %p566 = por %p564, %p565
      %p567 = scmp.ne.s32.totalorder %s556, %s559
      %p568 = scmp.eq.s32.totalorder %s42, 1
      %p569 = por %p567, %p568
      %p570 = scmp.ne.s32.totalorder %s559, %s560
      %p571 = scmp.eq.s32.totalorder %s42, 0
      %p572 = por %p570, %p571
      %p573 = scmp.ne.s32.totalorder %s559, %s560
      %p574 = scmp.eq.s32.totalorder %s43, 1
      %p575 = por %p573, %p574
      %p577 = scmp.ne.s32.totalorder %s560, %s576
      %p578 = scmp.eq.s32.totalorder %s43, 0
      %p579 = por %p577, %p578
      %s580 = ssub.s32 %s37, %s44
      %p581 = scmp.eq.s32.totalorder %s580, 0
      %s583 = sadd.s32 %s582, 1
      %s584 = scalar_select %p581, %s582, %s583
      %p587 = pneg %p581
      %p588 = scmp.eq.s32.totalorder %s37, 1
      %p589 = por %p587, %p588
      %p590 = scmp.ne.s32.totalorder %s582, %s585
      %p591 = scmp.eq.s32.totalorder %s37, 0
      %p592 = por %p590, %p591
      %p593 = scmp.ne.s32.totalorder %s582, %s585
      %p594 = scmp.eq.s32.totalorder %s42, 1
      %p595 = por %p593, %p594
      %p596 = scmp.ne.s32.totalorder %s585, %s586
      %p597 = scmp.eq.s32.totalorder %s42, 0
      %p598 = por %p596, %p597
      %p599 = scmp.ne.s32.totalorder %s585, %s586
      %p600 = scmp.eq.s32.totalorder %s43, 1
      %p601 = por %p599, %p600
      %p603 = scmp.ne.s32.totalorder %s586, %s602
      %p604 = scmp.eq.s32.totalorder %s43, 0
      %p605 = por %p603, %p604
      %p606 = scmp.le.s32.totalorder 1, %s37
      %p607 = scmp.lt.s32.totalorder %s37, 3
      %p608 = pnand %p606, %p607
      %p609 = pneg %p608
      // Predicated region
      $region9: #{baseline_classifier_forward.1} parent=5 // pred_check
        _
      $region10: #{baseline_classifier_forward.1} parent=5 // pred_check_branch
        %611 = sbr.rel (%p608) target = $region12
      $region11: #{baseline_classifier_forward.1} parent=5 // pred_region
        %s612 = ssub.s32 %s37, 1
        // Predicated region
        $region13: #{baseline_classifier_forward.1} parent=11 // pred_check
          %p613 = pneg %p84
        $region14: #{baseline_classifier_forward.1} parent=11 // pred_check_branch
          %615 = sbr.rel (%p613) target = $region16
        $region15: #{baseline_classifier_forward.1} parent=11 // pred_region
          _
        $region16: #{baseline_classifier_forward.1} parent=11 // pred_fallthru
          _
        // Predicated region
        $region17: #{baseline_classifier_forward.1} parent=11 // pred_check
          %p616 = pneg %p105
        $region18: #{baseline_classifier_forward.1} parent=11 // pred_check_branch
          %618 = sbr.rel (%p616) target = $region20
        $region19: #{baseline_classifier_forward.1} parent=11 // pred_region
          _
        $region20: #{baseline_classifier_forward.1} parent=11 // pred_fallthru
          _
        // Predicated region
        $region21: #{baseline_classifier_forward.1} parent=11 // pred_check
          %p619 = pneg %p126
        $region22: #{baseline_classifier_forward.1} parent=11 // pred_check_branch
          %621 = sbr.rel (%p619) target = $region24
        $region23: #{baseline_classifier_forward.1} parent=11 // pred_region
          _
        $region24: #{baseline_classifier_forward.1} parent=11 // pred_fallthru
          _
        // Predicated region
        $region25: #{baseline_classifier_forward.1} parent=11 // pred_check
          %p622 = pneg %p147
        $region26: #{baseline_classifier_forward.1} parent=11 // pred_check_branch
          %624 = sbr.rel (%p622) target = $region28
        $region27: #{baseline_classifier_forward.1} parent=11 // pred_region
          _
        $region28: #{baseline_classifier_forward.1} parent=11 // pred_fallthru
          _
        // Predicated region
        $region29: #{baseline_classifier_forward.1} parent=11 // pred_check
          %p625 = pneg %p168
        $region30: #{baseline_classifier_forward.1} parent=11 // pred_check_branch
          %627 = sbr.rel (%p625) target = $region32
        $region31: #{baseline_classifier_forward.1} parent=11 // pred_region
          _
        $region32: #{baseline_classifier_forward.1} parent=11 // pred_fallthru
          _
        // Predicated region
        $region33: #{baseline_classifier_forward.1} parent=11 // pred_check
          %p628 = pneg %p189
        $region34: #{baseline_classifier_forward.1} parent=11 // pred_check_branch
          %630 = sbr.rel (%p628) target = $region36
        $region35: #{baseline_classifier_forward.1} parent=11 // pred_region
          _
        $region36: #{baseline_classifier_forward.1} parent=11 // pred_fallthru
          _
        // Predicated region
        $region37: #{baseline_classifier_forward.1} parent=11 // pred_check
          %p631 = pneg %p210
        $region38: #{baseline_classifier_forward.1} parent=11 // pred_check_branch
          %633 = sbr.rel (%p631) target = $region40
        $region39: #{baseline_classifier_forward.1} parent=11 // pred_region
          _
        $region40: #{baseline_classifier_forward.1} parent=11 // pred_fallthru
          _
        // Predicated region
        $region41: #{baseline_classifier_forward.1} parent=11 // pred_check
          %p634 = pneg %p231
        $region42: #{baseline_classifier_forward.1} parent=11 // pred_check_branch
          %636 = sbr.rel (%p634) target = $region44
        $region43: #{baseline_classifier_forward.1} parent=11 // pred_region
          _
        $region44: #{baseline_classifier_forward.1} parent=11 // pred_fallthru
          _
        // Predicated region
        $region45: #{baseline_classifier_forward.1} parent=11 // pred_check
          %p637 = pneg %p252
        $region46: #{baseline_classifier_forward.1} parent=11 // pred_check_branch
          %639 = sbr.rel (%p637) target = $region48
        $region47: #{baseline_classifier_forward.1} parent=11 // pred_region
          _
        $region48: #{baseline_classifier_forward.1} parent=11 // pred_fallthru
          _
        // Predicated region
        $region49: #{baseline_classifier_forward.1} parent=11 // pred_check
          %p640 = pneg %p273
        $region50: #{baseline_classifier_forward.1} parent=11 // pred_check_branch
          %642 = sbr.rel (%p640) target = $region52
        $region51: #{baseline_classifier_forward.1} parent=11 // pred_region
          _
        $region52: #{baseline_classifier_forward.1} parent=11 // pred_fallthru
          _
        // Predicated region
        $region53: #{baseline_classifier_forward.1} parent=11 // pred_check
          %p643 = pneg %p294
        $region54: #{baseline_classifier_forward.1} parent=11 // pred_check_branch
          %645 = sbr.rel (%p643) target = $region56
        $region55: #{baseline_classifier_forward.1} parent=11 // pred_region
          _
        $region56: #{baseline_classifier_forward.1} parent=11 // pred_fallthru
          _
        // Predicated region
        $region57: #{baseline_classifier_forward.1} parent=11 // pred_check
          %p646 = pneg %p315
        $region58: #{baseline_classifier_forward.1} parent=11 // pred_check_branch
          %648 = sbr.rel (%p646) target = $region60
        $region59: #{baseline_classifier_forward.1} parent=11 // pred_region
          _
        $region60: #{baseline_classifier_forward.1} parent=11 // pred_fallthru
          _
        // Predicated region
        $region61: #{baseline_classifier_forward.1} parent=11 // pred_check
          %p649 = pneg %p336
        $region62: #{baseline_classifier_forward.1} parent=11 // pred_check_branch
          %651 = sbr.rel (%p649) target = $region64
        $region63: #{baseline_classifier_forward.1} parent=11 // pred_region
          _
        $region64: #{baseline_classifier_forward.1} parent=11 // pred_fallthru
          _
        // Predicated region
        $region65: #{baseline_classifier_forward.1} parent=11 // pred_check
          %p652 = pneg %p357
        $region66: #{baseline_classifier_forward.1} parent=11 // pred_check_branch
          %654 = sbr.rel (%p652) target = $region68
        $region67: #{baseline_classifier_forward.1} parent=11 // pred_region
          _
        $region68: #{baseline_classifier_forward.1} parent=11 // pred_fallthru
          _
        // Predicated region
        $region69: #{baseline_classifier_forward.1} parent=11 // pred_check
          %p655 = pneg %p378
        $region70: #{baseline_classifier_forward.1} parent=11 // pred_check_branch
          %657 = sbr.rel (%p655) target = $region72
        $region71: #{baseline_classifier_forward.1} parent=11 // pred_region
          _
        $region72: #{baseline_classifier_forward.1} parent=11 // pred_fallthru
          _
        // Predicated region
        $region73: #{baseline_classifier_forward.1} parent=11 // pred_check
          %p658 = pneg %p399
        $region74: #{baseline_classifier_forward.1} parent=11 // pred_check_branch
          %660 = sbr.rel (%p658) target = $region76
        $region75: #{baseline_classifier_forward.1} parent=11 // pred_region
          _
        $region76: #{baseline_classifier_forward.1} parent=11 // pred_fallthru
          _
        // Predicated region
        $region77: #{baseline_classifier_forward.1} parent=11 // pred_check
          %p661 = pneg %p420
        $region78: #{baseline_classifier_forward.1} parent=11 // pred_check_branch
          %663 = sbr.rel (%p661) target = $region80
        $region79: #{baseline_classifier_forward.1} parent=11 // pred_region
          _
        $region80: #{baseline_classifier_forward.1} parent=11 // pred_fallthru
          _
        // Predicated region
        $region81: #{baseline_classifier_forward.1} parent=11 // pred_check
          %p664 = pneg %p441
        $region82: #{baseline_classifier_forward.1} parent=11 // pred_check_branch
          %666 = sbr.rel (%p664) target = $region84
        $region83: #{baseline_classifier_forward.1} parent=11 // pred_region
          _
        $region84: #{baseline_classifier_forward.1} parent=11 // pred_fallthru
          _
        // Predicated region
        $region85: #{baseline_classifier_forward.1} parent=11 // pred_check
          %p667 = pneg %p462
        $region86: #{baseline_classifier_forward.1} parent=11 // pred_check_branch
          %669 = sbr.rel (%p667) target = $region88
        $region87: #{baseline_classifier_forward.1} parent=11 // pred_region
          _
        $region88: #{baseline_classifier_forward.1} parent=11 // pred_fallthru
          _
        // Predicated region
        $region89: #{baseline_classifier_forward.1} parent=11 // pred_check
          %p670 = pneg %p483
        $region90: #{baseline_classifier_forward.1} parent=11 // pred_check_branch
          %672 = sbr.rel (%p670) target = $region92
        $region91: #{baseline_classifier_forward.1} parent=11 // pred_region
          _
        $region92: #{baseline_classifier_forward.1} parent=11 // pred_fallthru
          _
        // Predicated region
        $region93: #{baseline_classifier_forward.1} parent=11 // pred_check
          %p673 = pneg %p504
        $region94: #{baseline_classifier_forward.1} parent=11 // pred_check_branch
          %675 = sbr.rel (%p673) target = $region96
        $region95: #{baseline_classifier_forward.1} parent=11 // pred_region
          _
        $region96: #{baseline_classifier_forward.1} parent=11 // pred_fallthru
          _
        // Predicated region
        $region97: #{baseline_classifier_forward.1} parent=11 // pred_check
          %p676 = pneg %p525
        $region98: #{baseline_classifier_forward.1} parent=11 // pred_check_branch
          %678 = sbr.rel (%p676) target = $region100
        $region99: #{baseline_classifier_forward.1} parent=11 // pred_region
          _
        $region100: #{baseline_classifier_forward.1} parent=11 // pred_fallthru
          _
        // Predicated region
        $region101: #{baseline_classifier_forward.1} parent=11 // pred_check
          %p679 = pneg %p546
        $region102: #{baseline_classifier_forward.1} parent=11 // pred_check_branch
          %681 = sbr.rel (%p679) target = $region104
        $region103: #{baseline_classifier_forward.1} parent=11 // pred_region
          _
        $region104: #{baseline_classifier_forward.1} parent=11 // pred_fallthru
          _
      $region12: #{baseline_classifier_forward.1} parent=5 // pred_fallthru
        _
      %p682 = scmp.lt.s32.totalorder %s37, 2
      // Predicated region
      $region105: #{baseline_classifier_forward.1} parent=5 // pred_check
        %p683 = pneg %p682
      $region106: #{baseline_classifier_forward.1} parent=5 // pred_check_branch
        %685 = sbr.rel (%p683) target = $region108
      $region107: #{baseline_classifier_forward.1} parent=5 // pred_region
        // Predicated region
        $region109: #{baseline_classifier_forward.1} parent=107 // pred_check
          %p686 = pneg %p57
        $region110: #{baseline_classifier_forward.1} parent=107 // pred_check_branch
          %688 = sbr.rel (%p686) target = $region112
        $region111: #{baseline_classifier_forward.1} parent=107 // pred_region
          %p689 = scmp.lt.s32.totalorder %s37, 1
          %s690 = scalar_select %p689, %s37, 1
          %s691 = smul.addr %s690, 4
          %s692 = smul.addr %s691, 8
          %s693 = scalar_lea.vmem %s0, %s692
        $region112: #{baseline_classifier_forward.1} parent=107 // pred_fallthru
          _
      $region108: #{baseline_classifier_forward.1} parent=5 // pred_fallthru
        _
      %p694 = scmp.le.s32.totalorder 1, %s37
      %p695 = scmp.lt.s32.totalorder %s37, 3
      %p696 = pnand %p694, %p695
      %p697 = pneg %p696
      // Predicated region
      $region113: #{baseline_classifier_forward.1} parent=5 // pred_check
        _
      $region114: #{baseline_classifier_forward.1} parent=5 // pred_check_branch
        %699 = sbr.rel (%p696) target = $region116
      $region115: #{baseline_classifier_forward.1} parent=5 // pred_region
        %s700 = ssub.s32 %s37, 1
        %p701 = scmp.lt.s32.totalorder %s42, 1
        %s702 = scalar_select %p701, %s42, 1
        %s703 = smul.addr %s702, 4
        %s704 = smul.addr %s703, 8
        %s705 = scalar_lea.vmem %s0, %s704
        %p706 = pneg %p63
        %p707 = pneg %p60
        %p708 = pneg %p84
        %p709 = pneg %p81
        %p710 = pneg %p105
        %p711 = pneg %p102
        %p712 = pneg %p126
        %p713 = pneg %p123
        %p714 = pneg %p147
        %p715 = pneg %p144
        %p716 = pneg %p168
        %p717 = pneg %p165
        %p718 = pneg %p189
        %p719 = pneg %p186
        %p720 = pneg %p210
        %p721 = pneg %p207
        %p722 = pneg %p231
        %p723 = pneg %p228
        %p724 = pneg %p252
        %p725 = pneg %p249
        %p726 = pneg %p273
        %p727 = pneg %p270
        %p728 = pneg %p294
        %p729 = pneg %p291
        %p730 = pneg %p315
        %p731 = pneg %p312
        %p732 = pneg %p336
        %p733 = pneg %p333
        %p734 = pneg %p357
        %p735 = pneg %p354
        %p736 = pneg %p378
        %p737 = pneg %p375
        %p738 = pneg %p399
        %p739 = pneg %p396
        %p740 = pneg %p420
        %p741 = pneg %p417
        %p742 = pneg %p441
        %p743 = pneg %p438
        %p744 = pneg %p462
        %p745 = pneg %p459
        %p746 = pneg %p483
        %p747 = pneg %p480
        %p748 = pneg %p504
        %p749 = pneg %p501
        %p750 = pneg %p525
        %p751 = pneg %p522
        %p752 = pneg %p546
        %p753 = pneg %p543
        %p754 = pneg %p572
        %p755 = pneg %p569
        %p756 = scmp.lt.s32.totalorder %s42, 1
        %s757 = scalar_select %p756, %s42, 1
        %s758 = scalar_lea.vmem %s24, %s757
        %p759 = pneg %p598
        %p760 = pneg %p595
        %s761 = sand.u32 %s585, 1
        %s762 = scalar_lea.sflag [#allocation12], %s761
        %s763 = sand.u32 %s585, 1
        %s764 = scalar_lea.vmem [#allocation11], %s763
        %p765 = scmp.lt.s32.totalorder %s42, 1
        %s766 = scalar_select %p765, %s42, 1
        %s767 = smul.addr %s766, 4
        %s768 = smul.addr %s767, 8
        %s769 = scalar_lea.vmem %s0, %s768
        %p770 = scmp.lt.s32.totalorder %s42, 1
        %s771 = scalar_select %p770, %s42, 1
        %s772 = scalar_lea.vmem %s24, %s771
        %v773 = vld [vmem:[%s769] sm:$0xff]
        %v774 = vld [vmem:[%s769 + $0x8] sm:$0xff]
        %v775 = vld [vmem:[%s769 + $0x10] sm:$0xff]
        %v776 = vld [vmem:[%s769 + $0x18] sm:$0xff]
        %vm777 = vcmask 146432
        %778 = vst.msk [vmem:[#allocation2] sm:$0xff] %vm777, 0.0
        %779 = vst.msk [vmem:[#allocation2 + $0x8] sm:$0xff] %vm777, 0.0
        %780 = vst.msk [vmem:[#allocation2 + $0x10] sm:$0xff] %vm777, 0.0
        %781 = vst.msk [vmem:[#allocation2 + $0x18] sm:$0xff] %vm777, 0.0
        %vm782 = vcmask 140288
        %783 = vst.msk [vmem:[#allocation2 + $0x20] sm:$0x3] %vm782, 0.0
        %788 = vrot.lane.b32.xlu0 %v773, 1
        %v789 = vpop.permute.xlu0 %788
        %790 = vrot.lane.b32.xlu0 %v774, 1
        %v791 = vpop.permute.xlu0 %790
        %792 = vrot.lane.b32.xlu0 %v775, 1
        %v793 = vpop.permute.xlu0 %792
        %794 = vrot.lane.b32.xlu0 %v776, 1
        %v795 = vpop.permute.xlu0 %794
        %vm800 = vcmask 138248
        %801 = vst.msk [vmem:[#allocation2 + $0x1] sm:$0xff] %vm800, %v789
        %802 = vst.msk [vmem:[#allocation2 + $0x9] sm:$0xff] %vm800, %v791
        %803 = vst.msk [vmem:[#allocation2 + $0x11] sm:$0xff] %vm800, %v793
        %804 = vst.msk [vmem:[#allocation2 + $0x19] sm:$0xff] %vm800, %v795
        %v805 = vld [vmem:[#allocation2] sm:$0xff]
        %v806 = vld [vmem:[#allocation2 + $0x8] sm:$0xff]
        %v807 = vld [vmem:[#allocation2 + $0x10] sm:$0xff]
        %v808 = vld [vmem:[#allocation2 + $0x18] sm:$0xff]
        %v809 = vld [vmem:[%s1] sm:$0xff]
        %v810 = vld [vmem:[%s1 + $0x8] sm:$0xff]
        %s811 = scalar_lea.vmem %s1, 16
        %v812 = vld [vmem:[%s811] sm:$0xff]
        %v813 = vld [vmem:[%s811 + $0x8] sm:$0xff]
        %818 = vrot.lane.b32.xlu0 %v805, 127
        %v819 = vpop.permute.xlu0 %818
        %820 = vrot.lane.b32.xlu0 %v806, 127
        %v821 = vpop.permute.xlu0 %820
        %822 = vrot.lane.b32.xlu0 %v807, 127
        %v823 = vpop.permute.xlu0 %822
        %824 = vrot.lane.b32.xlu0 %v808, 127
        %v825 = vpop.permute.xlu0 %824
        %vm826 = vcmask 130048
        %v827 = vsel %vm826, %v819, 0
        %v829 = vsel %vm826, %v821, 0
        %v831 = vsel %vm826, %v823, 0
        %v833 = vsel %vm826, %v825, 0
        %835 = vmatprep.subr.mxu0 0.0
        %836 = vmatpush1.msra.mxu0 0.0
        %837 = vmatprep.subr.mxu0 0.0
        %838 = vmatpush1.msra.mxu0 0.0
        %839 = vmatprep.subr.mxu0 0.0
        %840 = vmatpush1.msra.mxu0 0.0
        %841 = vmatprep.subr.mxu0 0.0
        %842 = vmatpush1.msra.mxu0 0.0
        %843 = vmatprep.subr.mxu0 0.0
        %844 = vmatpush1.msra.mxu0 0.0
        %845 = vmatprep.subr.mxu0 0.0
        %846 = vmatpush1.msra.mxu0 0.0
        %847 = vmatprep.subr.mxu0 0.0
        %848 = vmatpush1.msra.mxu0 0.0
        %849 = vmatprep.subr.mxu0 0.0
        %850 = vmatpush1.msra.mxu0 0.0
        %851 = vmatprep.subr.mxu0 0.0
        %852 = vmatpush1.msra.mxu0 0.0
        %853 = vmatprep.subr.mxu0 0.0
        %854 = vmatpush1.msra.mxu0 0.0
        %855 = vmatprep.subr.mxu0 0.0
        %856 = vmatpush1.msra.mxu0 0.0
        %857 = vmatprep.subr.mxu0 0.0
        %858 = vmatpush1.msra.mxu0 0.0
        %859 = vmatprep.subr.mxu0 0.0
        %860 = vmatpush1.msra.mxu0 0.0
        %861 = vmatprep.subr.mxu0 0.0
        %862 = vmatpush1.msra.mxu0 0.0
        %863 = vmatprep.subr.mxu0 0.0
        %864 = vmatpush1.msra.mxu0 %v813
        %865 = vmatprep.subr.mxu0 0.0
        %866 = vmatpush1.msra.mxu0 %v812
        %867 = vmatprep.subr.mxu0 0.0
        %868 = vmatpush2.msra.mxu0 0.0
        %869 = vmatprep.subr.mxu0 0.0
        %870 = vmatpush2.msra.mxu0 0.0
        %871 = vmatprep.subr.mxu0 0.0
        %872 = vmatpush2.msra.mxu0 0.0
        %873 = vmatprep.subr.mxu0 0.0
        %874 = vmatpush2.msra.mxu0 0.0
        %875 = vmatprep.subr.mxu0 0.0
        %876 = vmatpush2.msra.mxu0 0.0
        %877 = vmatprep.subr.mxu0 0.0
        %878 = vmatpush2.msra.mxu0 0.0
        %879 = vmatprep.subr.mxu0 0.0
        %880 = vmatpush2.msra.mxu0 0.0
        %881 = vmatprep.subr.mxu0 0.0
        %882 = vmatpush2.msra.mxu0 0.0
        %883 = vmatprep.subr.mxu0 0.0
        %884 = vmatpush2.msra.mxu0 0.0
        %885 = vmatprep.subr.mxu0 0.0
        %886 = vmatpush2.msra.mxu0 0.0
        %887 = vmatprep.subr.mxu0 0.0
        %888 = vmatpush2.msra.mxu0 0.0
        %889 = vmatprep.subr.mxu0 0.0
        %890 = vmatpush2.msra.mxu0 0.0
        %891 = vmatprep.subr.mxu0 0.0
        %892 = vmatpush2.msra.mxu0 0.0
        %893 = vmatprep.subr.mxu0 0.0
        %894 = vmatpush2.msra.mxu0 0.0
        %895 = vmatprep.subr.mxu0 0.0
        %896 = vmatpush2.msra.mxu0 0.0
        %897 = vmatprep.subr.mxu0 0.0
        %898 = vmatpush2.msra.mxu0 0.0
        %899 = vmatprep.mubr.f32.mxu0 0.0
        %900 = vmatmul.mubr.f32.gmra.mxu0 %v827
        %v901 = vpop.f32.mrf.mxu0
        %v902 = vadd.f32 0.0, %v901
        %v903 = vpop.f32.mrf.mxu0
        %904 = vmatprep.mubr.f32.mxu0 0.0
        %905 = vmatmul.mubr.f32.gmra.mxu0 %v829
        %v906 = vpop.f32.mrf.mxu0
        %v907 = vadd.f32 0.0, %v906
        %v908 = vpop.f32.mrf.mxu0
        %909 = vmatprep.mubr.f32.mxu0 0.0
        %910 = vmatmul.mubr.f32.gmra.mxu0 %v831
        %v911 = vpop.f32.mrf.mxu0
        %v912 = vadd.f32 0.0, %v911
        %v913 = vpop.f32.mrf.mxu0
        %914 = vmatprep.mubr.f32.mxu0 0.0
        %915 = vmatmul.mubr.f32.gmra.mxu0 %v833
        %v916 = vpop.f32.mrf.mxu0
        %v917 = vadd.f32 0.0, %v916
        %v918 = vpop.f32.mrf.mxu0
        %919 = vdwg.mxu0
        %v920 = vsel %vm826, %v805, 0
        %v922 = vsel %vm826, %v806, 0
        %v924 = vsel %vm826, %v807, 0
        %v926 = vsel %vm826, %v808, 0
        %928 = vmatprep.subr.mxu0 0.0
        %929 = vmatpush1.msra.mxu0 0.0
        %930 = vmatprep.subr.mxu0 0.0
        %931 = vmatpush1.msra.mxu0 0.0
        %932 = vmatprep.subr.mxu0 0.0
        %933 = vmatpush1.msra.mxu0 0.0
        %934 = vmatprep.subr.mxu0 0.0
        %935 = vmatpush1.msra.mxu0 0.0
        %936 = vmatprep.subr.mxu0 0.0
        %937 = vmatpush1.msra.mxu0 0.0
        %938 = vmatprep.subr.mxu0 0.0
        %939 = vmatpush1.msra.mxu0 0.0
        %940 = vmatprep.subr.mxu0 0.0
        %941 = vmatpush1.msra.mxu0 0.0
        %942 = vmatprep.subr.mxu0 0.0
        %943 = vmatpush1.msra.mxu0 0.0
        %944 = vmatprep.subr.mxu0 0.0
        %945 = vmatpush1.msra.mxu0 0.0
        %946 = vmatprep.subr.mxu0 0.0
        %947 = vmatpush1.msra.mxu0 0.0
        %948 = vmatprep.subr.mxu0 0.0
        %949 = vmatpush1.msra.mxu0 0.0
        %950 = vmatprep.subr.mxu0 0.0
        %951 = vmatpush1.msra.mxu0 0.0
        %952 = vmatprep.subr.mxu0 0.0
        %953 = vmatpush1.msra.mxu0 0.0
        %954 = vmatprep.subr.mxu0 0.0
        %955 = vmatpush1.msra.mxu0 0.0
        %956 = vmatprep.subr.mxu0 0.0
        %957 = vmatpush1.msra.mxu0 %v810
        %958 = vmatprep.subr.mxu0 0.0
        %959 = vmatpush1.msra.mxu0 %v809
        %960 = vmatprep.subr.mxu0 0.0
        %961 = vmatpush2.msra.mxu0 0.0
        %962 = vmatprep.subr.mxu0 0.0
        %963 = vmatpush2.msra.mxu0 0.0
        %964 = vmatprep.subr.mxu0 0.0
        %965 = vmatpush2.msra.mxu0 0.0
        %966 = vmatprep.subr.mxu0 0.0
        %967 = vmatpush2.msra.mxu0 0.0
        %968 = vmatprep.subr.mxu0 0.0
        %969 = vmatpush2.msra.mxu0 0.0
        %970 = vmatprep.subr.mxu0 0.0
        %971 = vmatpush2.msra.mxu0 0.0
        %972 = vmatprep.subr.mxu0 0.0
        %973 = vmatpush2.msra.mxu0 0.0
        %974 = vmatprep.subr.mxu0 0.0
        %975 = vmatpush2.msra.mxu0 0.0
        %976 = vmatprep.subr.mxu0 0.0
        %977 = vmatpush2.msra.mxu0 0.0
        %978 = vmatprep.subr.mxu0 0.0
        %979 = vmatpush2.msra.mxu0 0.0
        %980 = vmatprep.subr.mxu0 0.0
        %981 = vmatpush2.msra.mxu0 0.0
        %982 = vmatprep.subr.mxu0 0.0
        %983 = vmatpush2.msra.mxu0 0.0
        %984 = vmatprep.subr.mxu0 0.0
        %985 = vmatpush2.msra.mxu0 0.0
        %986 = vmatprep.subr.mxu0 0.0
        %987 = vmatpush2.msra.mxu0 0.0
        %988 = vmatprep.subr.mxu0 0.0
        %989 = vmatpush2.msra.mxu0 0.0
        %990 = vmatprep.subr.mxu0 0.0
        %991 = vmatpush2.msra.mxu0 0.0
        %992 = vmatprep.mubr.f32.mxu0 0.0
        %993 = vmatmul.mubr.f32.gmra.mxu0 %v920
        %v994 = vpop.f32.mrf.mxu0
        %v995 = vadd.f32 %v902, %v994
        %v996 = vpop.f32.mrf.mxu0
        %997 = vmatprep.mubr.f32.mxu0 0.0
        %998 = vmatmul.mubr.f32.gmra.mxu0 %v922
        %v999 = vpop.f32.mrf.mxu0
        %v1000 = vadd.f32 %v907, %v999
        %v1001 = vpop.f32.mrf.mxu0
        %1002 = vmatprep.mubr.f32.mxu0 0.0
        %1003 = vmatmul.mubr.f32.gmra.mxu0 %v924
        %v1004 = vpop.f32.mrf.mxu0
        %v1005 = vadd.f32 %v912, %v1004
        %v1006 = vpop.f32.mrf.mxu0
        %1007 = vmatprep.mubr.f32.mxu0 0.0
        %1008 = vmatmul.mubr.f32.gmra.mxu0 %v926
        %v1009 = vpop.f32.mrf.mxu0
        %v1010 = vadd.f32 %v917, %v1009
        %v1011 = vpop.f32.mrf.mxu0
        %1012 = vdwg.mxu0
        %s1013 = scalar_lea.vmem %s1, 32
        %v1014 = vld [vmem:[%s1013] sm:$0xff]
        %v1015 = vld [vmem:[%s1013 + $0x8] sm:$0xff]
        %1016 = vrot.lane.b32.xlu0 %v805, 126
        %v1017 = vpop.permute.xlu0 %1016
        %1018 = vrot.lane.b32.xlu0 %v806, 126
        %v1019 = vpop.permute.xlu0 %1018
        %1020 = vrot.lane.b32.xlu0 %v807, 126
        %v1021 = vpop.permute.xlu0 %1020
        %1022 = vrot.lane.b32.xlu0 %v808, 126
        %v1023 = vpop.permute.xlu0 %1022
        %v1024 = vsel %vm826, %v1017, 0
        %v1026 = vsel %vm826, %v1019, 0
        %v1028 = vsel %vm826, %v1021, 0
        %v1030 = vsel %vm826, %v1023, 0
        %1032 = vmatprep.subr.mxu0 0.0
        %1033 = vmatpush1.msra.mxu0 0.0
        %1034 = vmatprep.subr.mxu0 0.0
        %1035 = vmatpush1.msra.mxu0 0.0
        %1036 = vmatprep.subr.mxu0 0.0
        %1037 = vmatpush1.msra.mxu0 0.0
        %1038 = vmatprep.subr.mxu0 0.0
        %1039 = vmatpush1.msra.mxu0 0.0
        %1040 = vmatprep.subr.mxu0 0.0
        %1041 = vmatpush1.msra.mxu0 0.0
        %1042 = vmatprep.subr.mxu0 0.0
        %1043 = vmatpush1.msra.mxu0 0.0
        %1044 = vmatprep.subr.mxu0 0.0
        %1045 = vmatpush1.msra.mxu0 0.0
        %1046 = vmatprep.subr.mxu0 0.0
        %1047 = vmatpush1.msra.mxu0 0.0
        %1048 = vmatprep.subr.mxu0 0.0
        %1049 = vmatpush1.msra.mxu0 0.0
        %1050 = vmatprep.subr.mxu0 0.0
        %1051 = vmatpush1.msra.mxu0 0.0
        %1052 = vmatprep.subr.mxu0 0.0
        %1053 = vmatpush1.msra.mxu0 0.0
        %1054 = vmatprep.subr.mxu0 0.0
        %1055 = vmatpush1.msra.mxu0 0.0
        %1056 = vmatprep.subr.mxu0 0.0
        %1057 = vmatpush1.msra.mxu0 0.0
        %1058 = vmatprep.subr.mxu0 0.0
        %1059 = vmatpush1.msra.mxu0 0.0
        %1060 = vmatprep.subr.mxu0 0.0
        %1061 = vmatpush1.msra.mxu0 %v1015
        %1062 = vmatprep.subr.mxu0 0.0
        %1063 = vmatpush1.msra.mxu0 %v1014
        %1064 = vmatprep.subr.mxu0 0.0
        %1065 = vmatpush2.msra.mxu0 0.0
        %1066 = vmatprep.subr.mxu0 0.0
        %1067 = vmatpush2.msra.mxu0 0.0
        %1068 = vmatprep.subr.mxu0 0.0
        %1069 = vmatpush2.msra.mxu0 0.0
        %1070 = vmatprep.subr.mxu0 0.0
        %1071 = vmatpush2.msra.mxu0 0.0
        %1072 = vmatprep.subr.mxu0 0.0
        %1073 = vmatpush2.msra.mxu0 0.0
        %1074 = vmatprep.subr.mxu0 0.0
        %1075 = vmatpush2.msra.mxu0 0.0
        %1076 = vmatprep.subr.mxu0 0.0
        %1077 = vmatpush2.msra.mxu0 0.0
        %1078 = vmatprep.subr.mxu0 0.0
        %1079 = vmatpush2.msra.mxu0 0.0
        %1080 = vmatprep.subr.mxu0 0.0
        %1081 = vmatpush2.msra.mxu0 0.0
        %1082 = vmatprep.subr.mxu0 0.0
        %1083 = vmatpush2.msra.mxu0 0.0
        %1084 = vmatprep.subr.mxu0 0.0
        %1085 = vmatpush2.msra.mxu0 0.0
        %1086 = vmatprep.subr.mxu0 0.0
        %1087 = vmatpush2.msra.mxu0 0.0
        %1088 = vmatprep.subr.mxu0 0.0
        %1089 = vmatpush2.msra.mxu0 0.0
        %1090 = vmatprep.subr.mxu0 0.0
        %1091 = vmatpush2.msra.mxu0 0.0
        %1092 = vmatprep.subr.mxu0 0.0
        %1093 = vmatpush2.msra.mxu0 0.0
        %1094 = vmatprep.subr.mxu0 0.0
        %1095 = vmatpush2.msra.mxu0 0.0
        %1096 = vmatprep.mubr.f32.mxu0 0.0
        %1097 = vmatmul.mubr.f32.gmra.mxu0 %v1024
        %v1098 = vpop.f32.mrf.mxu0
        %v1099 = vadd.f32 0.0, %v1098
        %v1100 = vpop.f32.mrf.mxu0
        %1101 = vmatprep.mubr.f32.mxu0 0.0
        %1102 = vmatmul.mubr.f32.gmra.mxu0 %v1026
        %v1103 = vpop.f32.mrf.mxu0
        %v1104 = vadd.f32 0.0, %v1103
        %v1105 = vpop.f32.mrf.mxu0
        %1106 = vmatprep.mubr.f32.mxu0 0.0
        %1107 = vmatmul.mubr.f32.gmra.mxu0 %v1028
        %v1108 = vpop.f32.mrf.mxu0
        %v1109 = vadd.f32 0.0, %v1108
        %v1110 = vpop.f32.mrf.mxu0
        %1111 = vmatprep.mubr.f32.mxu0 0.0
        %1112 = vmatmul.mubr.f32.gmra.mxu0 %v1030
        %v1113 = vpop.f32.mrf.mxu0
        %v1114 = vadd.f32 0.0, %v1113
        %v1115 = vpop.f32.mrf.mxu0
        %1116 = vdwg.mxu0
        %v1117 = vadd.f32 %v995, %v1099
        %v1118 = vadd.f32 %v1000, %v1104
        %v1119 = vadd.f32 %v1005, %v1109
        %v1120 = vadd.f32 %v1010, %v1114
        %v1121 = vld [vmem:[#allocation2 + $0x1] sm:$0xff]
        %v1122 = vld [vmem:[#allocation2 + $0x9] sm:$0xff]
        %v1123 = vld [vmem:[#allocation2 + $0x11] sm:$0xff]
        %v1124 = vld [vmem:[#allocation2 + $0x19] sm:$0xff]
        %s1125 = scalar_lea.vmem %s1, 48
        %v1126 = vld [vmem:[%s1125] sm:$0xff]
        %v1127 = vld [vmem:[%s1125 + $0x8] sm:$0xff]
        %v1129 = vsel %vm826, %v1121, 0
        %v1132 = vsel %vm826, %v1122, 0
        %v1135 = vsel %vm826, %v1123, 0
        %v1138 = vsel %vm826, %v1124, 0
        %1140 = vmatprep.subr.mxu0 0.0
        %1141 = vmatpush1.msra.mxu0 0.0
        %1142 = vmatprep.subr.mxu0 0.0
        %1143 = vmatpush1.msra.mxu0 0.0
        %1144 = vmatprep.subr.mxu0 0.0
        %1145 = vmatpush1.msra.mxu0 0.0
        %1146 = vmatprep.subr.mxu0 0.0
        %1147 = vmatpush1.msra.mxu0 0.0
        %1148 = vmatprep.subr.mxu0 0.0
        %1149 = vmatpush1.msra.mxu0 0.0
        %1150 = vmatprep.subr.mxu0 0.0
        %1151 = vmatpush1.msra.mxu0 0.0
        %1152 = vmatprep.subr.mxu0 0.0
        %1153 = vmatpush1.msra.mxu0 0.0
        %1154 = vmatprep.subr.mxu0 0.0
        %1155 = vmatpush1.msra.mxu0 0.0
        %1156 = vmatprep.subr.mxu0 0.0
        %1157 = vmatpush1.msra.mxu0 0.0
        %1158 = vmatprep.subr.mxu0 0.0
        %1159 = vmatpush1.msra.mxu0 0.0
        %1160 = vmatprep.subr.mxu0 0.0
        %1161 = vmatpush1.msra.mxu0 0.0
        %1162 = vmatprep.subr.mxu0 0.0
        %1163 = vmatpush1.msra.mxu0 0.0
        %1164 = vmatprep.subr.mxu0 0.0
        %1165 = vmatpush1.msra.mxu0 0.0
        %1166 = vmatprep.subr.mxu0 0.0
        %1167 = vmatpush1.msra.mxu0 0.0
        %1168 = vmatprep.subr.mxu0 0.0
        %1169 = vmatpush1.msra.mxu0 %v1127
        %1170 = vmatprep.subr.mxu0 0.0
        %1171 = vmatpush1.msra.mxu0 %v1126
        %1172 = vmatprep.subr.mxu0 0.0
        %1173 = vmatpush2.msra.mxu0 0.0
        %1174 = vmatprep.subr.mxu0 0.0
        %1175 = vmatpush2.msra.mxu0 0.0
        %1176 = vmatprep.subr.mxu0 0.0
        %1177 = vmatpush2.msra.mxu0 0.0
        %1178 = vmatprep.subr.mxu0 0.0
        %1179 = vmatpush2.msra.mxu0 0.0
        %1180 = vmatprep.subr.mxu0 0.0
        %1181 = vmatpush2.msra.mxu0 0.0
        %1182 = vmatprep.subr.mxu0 0.0
        %1183 = vmatpush2.msra.mxu0 0.0
        %1184 = vmatprep.subr.mxu0 0.0
        %1185 = vmatpush2.msra.mxu0 0.0
        %1186 = vmatprep.subr.mxu0 0.0
        %1187 = vmatpush2.msra.mxu0 0.0
        %1188 = vmatprep.subr.mxu0 0.0
        %1189 = vmatpush2.msra.mxu0 0.0
        %1190 = vmatprep.subr.mxu0 0.0
        %1191 = vmatpush2.msra.mxu0 0.0
        %1192 = vmatprep.subr.mxu0 0.0
        %1193 = vmatpush2.msra.mxu0 0.0
        %1194 = vmatprep.subr.mxu0 0.0
        %1195 = vmatpush2.msra.mxu0 0.0
        %1196 = vmatprep.subr.mxu0 0.0
        %1197 = vmatpush2.msra.mxu0 0.0
        %1198 = vmatprep.subr.mxu0 0.0
        %1199 = vmatpush2.msra.mxu0 0.0
        %1200 = vmatprep.subr.mxu0 0.0
        %1201 = vmatpush2.msra.mxu0 0.0
        %1202 = vmatprep.subr.mxu0 0.0
        %1203 = vmatpush2.msra.mxu0 0.0
        %1204 = vmatprep.mubr.f32.mxu0 0.0
        %1205 = vmatmul.mubr.f32.gmra.mxu0 %v1129
        %v1206 = vpop.f32.mrf.mxu0
        %v1207 = vadd.f32 0.0, %v1206
        %v1208 = vpop.f32.mrf.mxu0
        %1209 = vmatprep.mubr.f32.mxu0 0.0
        %1210 = vmatmul.mubr.f32.gmra.mxu0 %v1132
        %v1211 = vpop.f32.mrf.mxu0
        %v1212 = vadd.f32 0.0, %v1211
        %v1213 = vpop.f32.mrf.mxu0
        %1214 = vmatprep.mubr.f32.mxu0 0.0
        %1215 = vmatmul.mubr.f32.gmra.mxu0 %v1135
        %v1216 = vpop.f32.mrf.mxu0
        %v1217 = vadd.f32 0.0, %v1216
        %v1218 = vpop.f32.mrf.mxu0
        %1219 = vmatprep.mubr.f32.mxu0 0.0
        %1220 = vmatmul.mubr.f32.gmra.mxu0 %v1138
        %v1221 = vpop.f32.mrf.mxu0
        %v1222 = vadd.f32 0.0, %v1221
        %v1223 = vpop.f32.mrf.mxu0
        %1224 = vdwg.mxu0
        %v1225 = vadd.f32 %v1117, %v1207
        %v1226 = vadd.f32 %v1118, %v1212
        %v1227 = vadd.f32 %v1119, %v1217
        %v1228 = vadd.f32 %v1120, %v1222
        %s1229 = scalar_lea.vmem %s1, 64
        %v1230 = vld [vmem:[%s1229] sm:$0xff]
        %v1231 = vld [vmem:[%s1229 + $0x8] sm:$0xff]
        %1232 = vrot.lane.b32.xlu0 %v1121, 127
        %v1233 = vpop.permute.xlu0 %1232
        %1234 = vrot.lane.b32.xlu0 %v1122, 127
        %v1235 = vpop.permute.xlu0 %1234
        %1236 = vrot.lane.b32.xlu0 %v1123, 127
        %v1237 = vpop.permute.xlu0 %1236
        %1238 = vrot.lane.b32.xlu0 %v1124, 127
        %v1239 = vpop.permute.xlu0 %1238
        %v1240 = vsel %vm826, %v1233, 0
        %v1242 = vsel %vm826, %v1235, 0
        %v1244 = vsel %vm826, %v1237, 0
        %v1246 = vsel %vm826, %v1239, 0
        %1248 = vmatprep.subr.mxu0 0.0
        %1249 = vmatpush1.msra.mxu0 0.0
        %1250 = vmatprep.subr.mxu0 0.0
        %1251 = vmatpush1.msra.mxu0 0.0
        %1252 = vmatprep.subr.mxu0 0.0
        %1253 = vmatpush1.msra.mxu0 0.0
        %1254 = vmatprep.subr.mxu0 0.0
        %1255 = vmatpush1.msra.mxu0 0.0
        %1256 = vmatprep.subr.mxu0 0.0
        %1257 = vmatpush1.msra.mxu0 0.0
        %1258 = vmatprep.subr.mxu0 0.0
        %1259 = vmatpush1.msra.mxu0 0.0
        %1260 = vmatprep.subr.mxu0 0.0
        %1261 = vmatpush1.msra.mxu0 0.0
        %1262 = vmatprep.subr.mxu0 0.0
        %1263 = vmatpush1.msra.mxu0 0.0
        %1264 = vmatprep.subr.mxu0 0.0
        %1265 = vmatpush1.msra.mxu0 0.0
        %1266 = vmatprep.subr.mxu0 0.0
        %1267 = vmatpush1.msra.mxu0 0.0
        %1268 = vmatprep.subr.mxu0 0.0
        %1269 = vmatpush1.msra.mxu0 0.0
        %1270 = vmatprep.subr.mxu0 0.0
        %1271 = vmatpush1.msra.mxu0 0.0
        %1272 = vmatprep.subr.mxu0 0.0
        %1273 = vmatpush1.msra.mxu0 0.0
        %1274 = vmatprep.subr.mxu0 0.0
        %1275 = vmatpush1.msra.mxu0 0.0
        %1276 = vmatprep.subr.mxu0 0.0
        %1277 = vmatpush1.msra.mxu0 %v1231
        %1278 = vmatprep.subr.mxu0 0.0
        %1279 = vmatpush1.msra.mxu0 %v1230
        %1280 = vmatprep.subr.mxu0 0.0
        %1281 = vmatpush2.msra.mxu0 0.0
        %1282 = vmatprep.subr.mxu0 0.0
        %1283 = vmatpush2.msra.mxu0 0.0
        %1284 = vmatprep.subr.mxu0 0.0
        %1285 = vmatpush2.msra.mxu0 0.0
        %1286 = vmatprep.subr.mxu0 0.0
        %1287 = vmatpush2.msra.mxu0 0.0
        %1288 = vmatprep.subr.mxu0 0.0
        %1289 = vmatpush2.msra.mxu0 0.0
        %1290 = vmatprep.subr.mxu0 0.0
        %1291 = vmatpush2.msra.mxu0 0.0
        %1292 = vmatprep.subr.mxu0 0.0
        %1293 = vmatpush2.msra.mxu0 0.0
        %1294 = vmatprep.subr.mxu0 0.0
        %1295 = vmatpush2.msra.mxu0 0.0
        %1296 = vmatprep.subr.mxu0 0.0
        %1297 = vmatpush2.msra.mxu0 0.0
        %1298 = vmatprep.subr.mxu0 0.0
        %1299 = vmatpush2.msra.mxu0 0.0
        %1300 = vmatprep.subr.mxu0 0.0
        %1301 = vmatpush2.msra.mxu0 0.0
        %1302 = vmatprep.subr.mxu0 0.0
        %1303 = vmatpush2.msra.mxu0 0.0
        %1304 = vmatprep.subr.mxu0 0.0
        %1305 = vmatpush2.msra.mxu0 0.0
        %1306 = vmatprep.subr.mxu0 0.0
        %1307 = vmatpush2.msra.mxu0 0.0
        %1308 = vmatprep.subr.mxu0 0.0
        %1309 = vmatpush2.msra.mxu0 0.0
        %1310 = vmatprep.subr.mxu0 0.0
        %1311 = vmatpush2.msra.mxu0 0.0
        %1312 = vmatprep.mubr.f32.mxu0 0.0
        %1313 = vmatmul.mubr.f32.gmra.mxu0 %v1240
        %v1314 = vpop.f32.mrf.mxu0
        %v1315 = vadd.f32 0.0, %v1314
        %v1316 = vpop.f32.mrf.mxu0
        %1317 = vmatprep.mubr.f32.mxu0 0.0
        %1318 = vmatmul.mubr.f32.gmra.mxu0 %v1242
        %v1319 = vpop.f32.mrf.mxu0
        %v1320 = vadd.f32 0.0, %v1319
        %v1321 = vpop.f32.mrf.mxu0
        %1322 = vmatprep.mubr.f32.mxu0 0.0
        %1323 = vmatmul.mubr.f32.gmra.mxu0 %v1244
        %v1324 = vpop.f32.mrf.mxu0
        %v1325 = vadd.f32 0.0, %v1324
        %v1326 = vpop.f32.mrf.mxu0
        %1327 = vmatprep.mubr.f32.mxu0 0.0
        %1328 = vmatmul.mubr.f32.gmra.mxu0 %v1246
        %v1329 = vpop.f32.mrf.mxu0
        %v1330 = vadd.f32 0.0, %v1329
        %v1331 = vpop.f32.mrf.mxu0
        %1332 = vdwg.mxu0
        %v1333 = vadd.f32 %v1225, %v1315
        %v1334 = vadd.f32 %v1226, %v1320
        %v1335 = vadd.f32 %v1227, %v1325
        %v1336 = vadd.f32 %v1228, %v1330
        %s1337 = scalar_lea.vmem %s1, 80
        %v1338 = vld [vmem:[%s1337] sm:$0xff]
        %v1339 = vld [vmem:[%s1337 + $0x8] sm:$0xff]
        %1340 = vrot.lane.b32.xlu0 %v1121, 126
        %v1341 = vpop.permute.xlu0 %1340
        %1342 = vrot.lane.b32.xlu0 %v1122, 126
        %v1343 = vpop.permute.xlu0 %1342
        %1344 = vrot.lane.b32.xlu0 %v1123, 126
        %v1345 = vpop.permute.xlu0 %1344
        %1346 = vrot.lane.b32.xlu0 %v1124, 126
        %v1347 = vpop.permute.xlu0 %1346
        %v1348 = vsel %vm826, %v1341, 0
        %v1350 = vsel %vm826, %v1343, 0
        %v1352 = vsel %vm826, %v1345, 0
        %v1354 = vsel %vm826, %v1347, 0
        %1356 = vmatprep.subr.mxu0 0.0
        %1357 = vmatpush1.msra.mxu0 0.0
        %1358 = vmatprep.subr.mxu0 0.0
        %1359 = vmatpush1.msra.mxu0 0.0
        %1360 = vmatprep.subr.mxu0 0.0
        %1361 = vmatpush1.msra.mxu0 0.0
        %1362 = vmatprep.subr.mxu0 0.0
        %1363 = vmatpush1.msra.mxu0 0.0
        %1364 = vmatprep.subr.mxu0 0.0
        %1365 = vmatpush1.msra.mxu0 0.0
        %1366 = vmatprep.subr.mxu0 0.0
        %1367 = vmatpush1.msra.mxu0 0.0
        %1368 = vmatprep.subr.mxu0 0.0
        %1369 = vmatpush1.msra.mxu0 0.0
        %1370 = vmatprep.subr.mxu0 0.0
        %1371 = vmatpush1.msra.mxu0 0.0
        %1372 = vmatprep.subr.mxu0 0.0
        %1373 = vmatpush1.msra.mxu0 0.0
        %1374 = vmatprep.subr.mxu0 0.0
        %1375 = vmatpush1.msra.mxu0 0.0
        %1376 = vmatprep.subr.mxu0 0.0
        %1377 = vmatpush1.msra.mxu0 0.0
        %1378 = vmatprep.subr.mxu0 0.0
        %1379 = vmatpush1.msra.mxu0 0.0
        %1380 = vmatprep.subr.mxu0 0.0
        %1381 = vmatpush1.msra.mxu0 0.0
        %1382 = vmatprep.subr.mxu0 0.0
        %1383 = vmatpush1.msra.mxu0 0.0
        %1384 = vmatprep.subr.mxu0 0.0
        %1385 = vmatpush1.msra.mxu0 %v1339
        %1386 = vmatprep.subr.mxu0 0.0
        %1387 = vmatpush1.msra.mxu0 %v1338
        %1388 = vmatprep.subr.mxu0 0.0
        %1389 = vmatpush2.msra.mxu0 0.0
        %1390 = vmatprep.subr.mxu0 0.0
        %1391 = vmatpush2.msra.mxu0 0.0
        %1392 = vmatprep.subr.mxu0 0.0
        %1393 = vmatpush2.msra.mxu0 0.0
        %1394 = vmatprep.subr.mxu0 0.0
        %1395 = vmatpush2.msra.mxu0 0.0
        %1396 = vmatprep.subr.mxu0 0.0
        %1397 = vmatpush2.msra.mxu0 0.0
        %1398 = vmatprep.subr.mxu0 0.0
        %1399 = vmatpush2.msra.mxu0 0.0
        %1400 = vmatprep.subr.mxu0 0.0
        %1401 = vmatpush2.msra.mxu0 0.0
        %1402 = vmatprep.subr.mxu0 0.0
        %1403 = vmatpush2.msra.mxu0 0.0
        %1404 = vmatprep.subr.mxu0 0.0
        %1405 = vmatpush2.msra.mxu0 0.0
        %1406 = vmatprep.subr.mxu0 0.0
        %1407 = vmatpush2.msra.mxu0 0.0
        %1408 = vmatprep.subr.mxu0 0.0
        %1409 = vmatpush2.msra.mxu0 0.0
        %1410 = vmatprep.subr.mxu0 0.0
        %1411 = vmatpush2.msra.mxu0 0.0
        %1412 = vmatprep.subr.mxu0 0.0
        %1413 = vmatpush2.msra.mxu0 0.0
        %1414 = vmatprep.subr.mxu0 0.0
        %1415 = vmatpush2.msra.mxu0 0.0
        %1416 = vmatprep.subr.mxu0 0.0
        %1417 = vmatpush2.msra.mxu0 0.0
        %1418 = vmatprep.subr.mxu0 0.0
        %1419 = vmatpush2.msra.mxu0 0.0
        %1420 = vmatprep.mubr.f32.mxu0 0.0
        %1421 = vmatmul.mubr.f32.gmra.mxu0 %v1348
        %v1422 = vpop.f32.mrf.mxu0
        %v1423 = vadd.f32 0.0, %v1422
        %v1424 = vpop.f32.mrf.mxu0
        %1425 = vmatprep.mubr.f32.mxu0 0.0
        %1426 = vmatmul.mubr.f32.gmra.mxu0 %v1350
        %v1427 = vpop.f32.mrf.mxu0
        %v1428 = vadd.f32 0.0, %v1427
        %v1429 = vpop.f32.mrf.mxu0
        %1430 = vmatprep.mubr.f32.mxu0 0.0
        %1431 = vmatmul.mubr.f32.gmra.mxu0 %v1352
        %v1432 = vpop.f32.mrf.mxu0
        %v1433 = vadd.f32 0.0, %v1432
        %v1434 = vpop.f32.mrf.mxu0
        %1435 = vmatprep.mubr.f32.mxu0 0.0
        %1436 = vmatmul.mubr.f32.gmra.mxu0 %v1354
        %v1437 = vpop.f32.mrf.mxu0
        %v1438 = vadd.f32 0.0, %v1437
        %v1439 = vpop.f32.mrf.mxu0
        %1440 = vdwg.mxu0
        %v1441 = vadd.f32 %v1333, %v1423
        %v1442 = vadd.f32 %v1334, %v1428
        %v1443 = vadd.f32 %v1335, %v1433
        %v1444 = vadd.f32 %v1336, %v1438
        %v1445 = vld [vmem:[#allocation2 + $0x2] sm:$0xff]
        %v1446 = vld [vmem:[#allocation2 + $0xa] sm:$0xff]
        %v1447 = vld [vmem:[#allocation2 + $0x12] sm:$0xff]
        %v1448 = vld [vmem:[#allocation2 + $0x1a] sm:$0xff]
        %s1449 = scalar_lea.vmem %s1, 96
        %v1450 = vld [vmem:[%s1449] sm:$0xff]
        %v1451 = vld [vmem:[%s1449 + $0x8] sm:$0xff]
        %v1453 = vsel %vm826, %v1445, 0
        %v1456 = vsel %vm826, %v1446, 0
        %v1459 = vsel %vm826, %v1447, 0
        %v1462 = vsel %vm826, %v1448, 0
        %1464 = vmatprep.subr.mxu0 0.0
        %1465 = vmatpush1.msra.mxu0 0.0
        %1466 = vmatprep.subr.mxu0 0.0
        %1467 = vmatpush1.msra.mxu0 0.0
        %1468 = vmatprep.subr.mxu0 0.0
        %1469 = vmatpush1.msra.mxu0 0.0
        %1470 = vmatprep.subr.mxu0 0.0
        %1471 = vmatpush1.msra.mxu0 0.0
        %1472 = vmatprep.subr.mxu0 0.0
        %1473 = vmatpush1.msra.mxu0 0.0
        %1474 = vmatprep.subr.mxu0 0.0
        %1475 = vmatpush1.msra.mxu0 0.0
        %1476 = vmatprep.subr.mxu0 0.0
        %1477 = vmatpush1.msra.mxu0 0.0
        %1478 = vmatprep.subr.mxu0 0.0
        %1479 = vmatpush1.msra.mxu0 0.0
        %1480 = vmatprep.subr.mxu0 0.0
        %1481 = vmatpush1.msra.mxu0 0.0
        %1482 = vmatprep.subr.mxu0 0.0
        %1483 = vmatpush1.msra.mxu0 0.0
        %1484 = vmatprep.subr.mxu0 0.0
        %1485 = vmatpush1.msra.mxu0 0.0
        %1486 = vmatprep.subr.mxu0 0.0
        %1487 = vmatpush1.msra.mxu0 0.0
        %1488 = vmatprep.subr.mxu0 0.0
        %1489 = vmatpush1.msra.mxu0 0.0
        %1490 = vmatprep.subr.mxu0 0.0
        %1491 = vmatpush1.msra.mxu0 0.0
        %1492 = vmatprep.subr.mxu0 0.0
        %1493 = vmatpush1.msra.mxu0 %v1451
        %1494 = vmatprep.subr.mxu0 0.0
        %1495 = vmatpush1.msra.mxu0 %v1450
        %1496 = vmatprep.subr.mxu0 0.0
        %1497 = vmatpush2.msra.mxu0 0.0
        %1498 = vmatprep.subr.mxu0 0.0
        %1499 = vmatpush2.msra.mxu0 0.0
        %1500 = vmatprep.subr.mxu0 0.0
        %1501 = vmatpush2.msra.mxu0 0.0
        %1502 = vmatprep.subr.mxu0 0.0
        %1503 = vmatpush2.msra.mxu0 0.0
        %1504 = vmatprep.subr.mxu0 0.0
        %1505 = vmatpush2.msra.mxu0 0.0
        %1506 = vmatprep.subr.mxu0 0.0
        %1507 = vmatpush2.msra.mxu0 0.0
        %1508 = vmatprep.subr.mxu0 0.0
        %1509 = vmatpush2.msra.mxu0 0.0
        %1510 = vmatprep.subr.mxu0 0.0
        %1511 = vmatpush2.msra.mxu0 0.0
        %1512 = vmatprep.subr.mxu0 0.0
        %1513 = vmatpush2.msra.mxu0 0.0
        %1514 = vmatprep.subr.mxu0 0.0
        %1515 = vmatpush2.msra.mxu0 0.0
        %1516 = vmatprep.subr.mxu0 0.0
        %1517 = vmatpush2.msra.mxu0 0.0
        %1518 = vmatprep.subr.mxu0 0.0
        %1519 = vmatpush2.msra.mxu0 0.0
        %1520 = vmatprep.subr.mxu0 0.0
        %1521 = vmatpush2.msra.mxu0 0.0
        %1522 = vmatprep.subr.mxu0 0.0
        %1523 = vmatpush2.msra.mxu0 0.0
        %1524 = vmatprep.subr.mxu0 0.0
        %1525 = vmatpush2.msra.mxu0 0.0
        %1526 = vmatprep.subr.mxu0 0.0
        %1527 = vmatpush2.msra.mxu0 0.0
        %1528 = vmatprep.mubr.f32.mxu0 0.0
        %1529 = vmatmul.mubr.f32.gmra.mxu0 %v1453
        %v1530 = vpop.f32.mrf.mxu0
        %v1531 = vadd.f32 0.0, %v1530
        %v1532 = vpop.f32.mrf.mxu0
        %1533 = vmatprep.mubr.f32.mxu0 0.0
        %1534 = vmatmul.mubr.f32.gmra.mxu0 %v1456
        %v1535 = vpop.f32.mrf.mxu0
        %v1536 = vadd.f32 0.0, %v1535
        %v1537 = vpop.f32.mrf.mxu0
        %1538 = vmatprep.mubr.f32.mxu0 0.0
        %1539 = vmatmul.mubr.f32.gmra.mxu0 %v1459
        %v1540 = vpop.f32.mrf.mxu0
        %v1541 = vadd.f32 0.0, %v1540
        %v1542 = vpop.f32.mrf.mxu0
        %1543 = vmatprep.mubr.f32.mxu0 0.0
        %1544 = vmatmul.mubr.f32.gmra.mxu0 %v1462
        %v1545 = vpop.f32.mrf.mxu0
        %v1546 = vadd.f32 0.0, %v1545
        %v1547 = vpop.f32.mrf.mxu0
        %1548 = vdwg.mxu0
        %v1549 = vadd.f32 %v1441, %v1531
        %v1550 = vadd.f32 %v1442, %v1536
        %v1551 = vadd.f32 %v1443, %v1541
        %v1552 = vadd.f32 %v1444, %v1546
        %s1553 = scalar_lea.vmem %s1, 112
        %v1554 = vld [vmem:[%s1553] sm:$0xff]
        %v1555 = vld [vmem:[%s1553 + $0x8] sm:$0xff]
        %1556 = vrot.lane.b32.xlu0 %v1445, 127
        %v1557 = vpop.permute.xlu0 %1556
        %1558 = vrot.lane.b32.xlu0 %v1446, 127
        %v1559 = vpop.permute.xlu0 %1558
        %1560 = vrot.lane.b32.xlu0 %v1447, 127
        %v1561 = vpop.permute.xlu0 %1560
        %1562 = vrot.lane.b32.xlu0 %v1448, 127
        %v1563 = vpop.permute.xlu0 %1562
        %v1564 = vsel %vm826, %v1557, 0
        %v1566 = vsel %vm826, %v1559, 0
        %v1568 = vsel %vm826, %v1561, 0
        %v1570 = vsel %vm826, %v1563, 0
        %1572 = vmatprep.subr.mxu0 0.0
        %1573 = vmatpush1.msra.mxu0 0.0
        %1574 = vmatprep.subr.mxu0 0.0
        %1575 = vmatpush1.msra.mxu0 0.0
        %1576 = vmatprep.subr.mxu0 0.0
        %1577 = vmatpush1.msra.mxu0 0.0
        %1578 = vmatprep.subr.mxu0 0.0
        %1579 = vmatpush1.msra.mxu0 0.0
        %1580 = vmatprep.subr.mxu0 0.0
        %1581 = vmatpush1.msra.mxu0 0.0
        %1582 = vmatprep.subr.mxu0 0.0
        %1583 = vmatpush1.msra.mxu0 0.0
        %1584 = vmatprep.subr.mxu0 0.0
        %1585 = vmatpush1.msra.mxu0 0.0
        %1586 = vmatprep.subr.mxu0 0.0
        %1587 = vmatpush1.msra.mxu0 0.0
        %1588 = vmatprep.subr.mxu0 0.0
        %1589 = vmatpush1.msra.mxu0 0.0
        %1590 = vmatprep.subr.mxu0 0.0
        %1591 = vmatpush1.msra.mxu0 0.0
        %1592 = vmatprep.subr.mxu0 0.0
        %1593 = vmatpush1.msra.mxu0 0.0
        %1594 = vmatprep.subr.mxu0 0.0
        %1595 = vmatpush1.msra.mxu0 0.0
        %1596 = vmatprep.subr.mxu0 0.0
        %1597 = vmatpush1.msra.mxu0 0.0
        %1598 = vmatprep.subr.mxu0 0.0
        %1599 = vmatpush1.msra.mxu0 0.0
        %1600 = vmatprep.subr.mxu0 0.0
        %1601 = vmatpush1.msra.mxu0 %v1555
        %1602 = vmatprep.subr.mxu0 0.0
        %1603 = vmatpush1.msra.mxu0 %v1554
        %1604 = vmatprep.subr.mxu0 0.0
        %1605 = vmatpush2.msra.mxu0 0.0
        %1606 = vmatprep.subr.mxu0 0.0
        %1607 = vmatpush2.msra.mxu0 0.0
        %1608 = vmatprep.subr.mxu0 0.0
        %1609 = vmatpush2.msra.mxu0 0.0
        %1610 = vmatprep.subr.mxu0 0.0
        %1611 = vmatpush2.msra.mxu0 0.0
        %1612 = vmatprep.subr.mxu0 0.0
        %1613 = vmatpush2.msra.mxu0 0.0
        %1614 = vmatprep.subr.mxu0 0.0
        %1615 = vmatpush2.msra.mxu0 0.0
        %1616 = vmatprep.subr.mxu0 0.0
        %1617 = vmatpush2.msra.mxu0 0.0
        %1618 = vmatprep.subr.mxu0 0.0
        %1619 = vmatpush2.msra.mxu0 0.0
        %1620 = vmatprep.subr.mxu0 0.0
        %1621 = vmatpush2.msra.mxu0 0.0
        %1622 = vmatprep.subr.mxu0 0.0
        %1623 = vmatpush2.msra.mxu0 0.0
        %1624 = vmatprep.subr.mxu0 0.0
        %1625 = vmatpush2.msra.mxu0 0.0
        %1626 = vmatprep.subr.mxu0 0.0
        %1627 = vmatpush2.msra.mxu0 0.0
        %1628 = vmatprep.subr.mxu0 0.0
        %1629 = vmatpush2.msra.mxu0 0.0
        %1630 = vmatprep.subr.mxu0 0.0
        %1631 = vmatpush2.msra.mxu0 0.0
        %1632 = vmatprep.subr.mxu0 0.0
        %1633 = vmatpush2.msra.mxu0 0.0
        %1634 = vmatprep.subr.mxu0 0.0
        %1635 = vmatpush2.msra.mxu0 0.0
        %1636 = vmatprep.mubr.f32.mxu0 0.0
        %1637 = vmatmul.mubr.f32.gmra.mxu0 %v1564
        %v1638 = vpop.f32.mrf.mxu0
        %v1639 = vadd.f32 0.0, %v1638
        %v1640 = vpop.f32.mrf.mxu0
        %1641 = vmatprep.mubr.f32.mxu0 0.0
        %1642 = vmatmul.mubr.f32.gmra.mxu0 %v1566
        %v1643 = vpop.f32.mrf.mxu0
        %v1644 = vadd.f32 0.0, %v1643
        %v1645 = vpop.f32.mrf.mxu0
        %1646 = vmatprep.mubr.f32.mxu0 0.0
        %1647 = vmatmul.mubr.f32.gmra.mxu0 %v1568
        %v1648 = vpop.f32.mrf.mxu0
        %v1649 = vadd.f32 0.0, %v1648
        %v1650 = vpop.f32.mrf.mxu0
        %1651 = vmatprep.mubr.f32.mxu0 0.0
        %1652 = vmatmul.mubr.f32.gmra.mxu0 %v1570
        %v1653 = vpop.f32.mrf.mxu0
        %v1654 = vadd.f32 0.0, %v1653
        %v1655 = vpop.f32.mrf.mxu0
        %1656 = vdwg.mxu0
        %v1657 = vadd.f32 %v1549, %v1639
        %v1658 = vadd.f32 %v1550, %v1644
        %v1659 = vadd.f32 %v1551, %v1649
        %v1660 = vadd.f32 %v1552, %v1654
        %s1661 = scalar_lea.vmem %s1, 128
        %v1662 = vld [vmem:[%s1661] sm:$0xff]
        %v1663 = vld [vmem:[%s1661 + $0x8] sm:$0xff]
        %1664 = vrot.lane.b32.xlu0 %v1445, 126
        %v1665 = vpop.permute.xlu0 %1664
        %1666 = vrot.lane.b32.xlu0 %v1446, 126
        %v1667 = vpop.permute.xlu0 %1666
        %1668 = vrot.lane.b32.xlu0 %v1447, 126
        %v1669 = vpop.permute.xlu0 %1668
        %1670 = vrot.lane.b32.xlu0 %v1448, 126
        %v1671 = vpop.permute.xlu0 %1670
        %v1672 = vsel %vm826, %v1665, 0
        %v1674 = vsel %vm826, %v1667, 0
        %v1676 = vsel %vm826, %v1669, 0
        %v1678 = vsel %vm826, %v1671, 0
        %1680 = vmatprep.subr.mxu0 0.0
        %1681 = vmatpush1.msra.mxu0 0.0
        %1682 = vmatprep.subr.mxu0 0.0
        %1683 = vmatpush1.msra.mxu0 0.0
        %1684 = vmatprep.subr.mxu0 0.0
        %1685 = vmatpush1.msra.mxu0 0.0
        %1686 = vmatprep.subr.mxu0 0.0
        %1687 = vmatpush1.msra.mxu0 0.0
        %1688 = vmatprep.subr.mxu0 0.0
        %1689 = vmatpush1.msra.mxu0 0.0
        %1690 = vmatprep.subr.mxu0 0.0
        %1691 = vmatpush1.msra.mxu0 0.0
        %1692 = vmatprep.subr.mxu0 0.0
        %1693 = vmatpush1.msra.mxu0 0.0
        %1694 = vmatprep.subr.mxu0 0.0
        %1695 = vmatpush1.msra.mxu0 0.0
        %1696 = vmatprep.subr.mxu0 0.0
        %1697 = vmatpush1.msra.mxu0 0.0
        %1698 = vmatprep.subr.mxu0 0.0
        %1699 = vmatpush1.msra.mxu0 0.0
        %1700 = vmatprep.subr.mxu0 0.0
        %1701 = vmatpush1.msra.mxu0 0.0
        %1702 = vmatprep.subr.mxu0 0.0
        %1703 = vmatpush1.msra.mxu0 0.0
        %1704 = vmatprep.subr.mxu0 0.0
        %1705 = vmatpush1.msra.mxu0 0.0
        %1706 = vmatprep.subr.mxu0 0.0
        %1707 = vmatpush1.msra.mxu0 0.0
        %1708 = vmatprep.subr.mxu0 0.0
        %1709 = vmatpush1.msra.mxu0 %v1663
        %1710 = vmatprep.subr.mxu0 0.0
        %1711 = vmatpush1.msra.mxu0 %v1662
        %1712 = vmatprep.subr.mxu0 0.0
        %1713 = vmatpush2.msra.mxu0 0.0
        %1714 = vmatprep.subr.mxu0 0.0
        %1715 = vmatpush2.msra.mxu0 0.0
        %1716 = vmatprep.subr.mxu0 0.0
        %1717 = vmatpush2.msra.mxu0 0.0
        %1718 = vmatprep.subr.mxu0 0.0
        %1719 = vmatpush2.msra.mxu0 0.0
        %1720 = vmatprep.subr.mxu0 0.0
        %1721 = vmatpush2.msra.mxu0 0.0
        %1722 = vmatprep.subr.mxu0 0.0
        %1723 = vmatpush2.msra.mxu0 0.0
        %1724 = vmatprep.subr.mxu0 0.0
        %1725 = vmatpush2.msra.mxu0 0.0
        %1726 = vmatprep.subr.mxu0 0.0
        %1727 = vmatpush2.msra.mxu0 0.0
        %1728 = vmatprep.subr.mxu0 0.0
        %1729 = vmatpush2.msra.mxu0 0.0
        %1730 = vmatprep.subr.mxu0 0.0
        %1731 = vmatpush2.msra.mxu0 0.0
        %1732 = vmatprep.subr.mxu0 0.0
        %1733 = vmatpush2.msra.mxu0 0.0
        %1734 = vmatprep.subr.mxu0 0.0
        %1735 = vmatpush2.msra.mxu0 0.0
        %1736 = vmatprep.subr.mxu0 0.0
        %1737 = vmatpush2.msra.mxu0 0.0
        %1738 = vmatprep.subr.mxu0 0.0
        %1739 = vmatpush2.msra.mxu0 0.0
        %1740 = vmatprep.subr.mxu0 0.0
        %1741 = vmatpush2.msra.mxu0 0.0
        %1742 = vmatprep.subr.mxu0 0.0
        %1743 = vmatpush2.msra.mxu0 0.0
        %1744 = vmatprep.mubr.f32.mxu0 0.0
        %1745 = vmatmul.mubr.f32.gmra.mxu0 %v1672
        %v1746 = vpop.f32.mrf.mxu0
        %v1747 = vadd.f32 0.0, %v1746
        %v1748 = vpop.f32.mrf.mxu0
        %1749 = vmatprep.mubr.f32.mxu0 0.0
        %1750 = vmatmul.mubr.f32.gmra.mxu0 %v1674
        %v1751 = vpop.f32.mrf.mxu0
        %v1752 = vadd.f32 0.0, %v1751
        %v1753 = vpop.f32.mrf.mxu0
        %1754 = vmatprep.mubr.f32.mxu0 0.0
        %1755 = vmatmul.mubr.f32.gmra.mxu0 %v1676
        %v1756 = vpop.f32.mrf.mxu0
        %v1757 = vadd.f32 0.0, %v1756
        %v1758 = vpop.f32.mrf.mxu0
        %1759 = vmatprep.mubr.f32.mxu0 0.0
        %1760 = vmatmul.mubr.f32.gmra.mxu0 %v1678
        %v1761 = vpop.f32.mrf.mxu0
        %v1762 = vadd.f32 0.0, %v1761
        %v1763 = vpop.f32.mrf.mxu0
        %1764 = vdwg.mxu0
        %v1765 = vadd.f32 %v1657, %v1747
        %v1766 = vadd.f32 %v1658, %v1752
        %v1767 = vadd.f32 %v1659, %v1757
        %v1768 = vadd.f32 %v1660, %v1762
        %v1769 = vld [vmem:[%s2] sm:$0x1]
        %v1771 = vlaneseq
        %v1772 = vshrl.u32 %v1771, 7
        %v1773 = vsub.s32 0, %v1772
        %v1774 = vrot.slane %v1769, %v1773
        %v1776 = vmul.f32 %v1765, %v1774
        %v1777 = vmul.f32 %v1766, %v1774
        %v1778 = vmul.f32 %v1767, %v1774
        %v1779 = vmul.f32 %v1768, %v1774
        %v1780 = vld [vmem:[%s3] sm:$0x1]
        %v1782 = vlaneseq
        %v1783 = vshrl.u32 %v1782, 7
        %v1784 = vsub.s32 0, %v1783
        %v1785 = vrot.slane %v1780, %v1784
        %v1787 = vadd.f32 %v1776, %v1785
        %v1788 = vadd.f32 %v1777, %v1785
        %v1789 = vadd.f32 %v1778, %v1785
        %v1790 = vadd.f32 %v1779, %v1785
        %v1791 = vmax.f32 %v1787, 0.0
        %v1792 = vmax.f32 %v1788, 0.0
        %v1793 = vmax.f32 %v1789, 0.0
        %v1794 = vmax.f32 %v1790, 0.0
        %vm1795 = vcmask 326656
        %1796 = vst.msk [vmem:[#allocation3] sm:$0xff] %vm1795, 0.0
        %1797 = vst.msk [vmem:[#allocation3 + $0x8] sm:$0xff] %vm1795, 0.0
        %vm1798 = vcmask 320512
        %1799 = vst.msk [vmem:[#allocation3 + $0x10] sm:$0x3] %vm1798, 0.0
        %v1801 = vrot.slane %v1791, 1
        %v1803 = vmax.f32 %v1791, %v1801
        %vm1804 = vcmask 516096
        %1805 = vst.msk [vmem:[#allocation9] sm:$0x1] %vm1804, %v1803
        %vm1806 = vcmask 518146
        %1807 = vst.msk [vmem:[#allocation9 - $0x1] sm:$0x4] %vm1806, %v1803
        %vm1808 = vcmask 520196
        %1809 = vst.msk [vmem:[#allocation9 - $0x2] sm:$0x10] %vm1808, %v1803
        %vm1810 = vcmask 522246
        %1811 = vst.msk [vmem:[#allocation9 - $0x3] sm:$0x40] %vm1810, %v1803
        %v1813 = vrot.slane %v1792, 1
        %v1815 = vmax.f32 %v1792, %v1813
        %1816 = vst.msk [vmem:[#allocation9 + $0x4] sm:$0x1] %vm1804, %v1815
        %1817 = vst.msk [vmem:[#allocation9 + $0x3] sm:$0x4] %vm1806, %v1815
        %1818 = vst.msk [vmem:[#allocation9 + $0x2] sm:$0x10] %vm1808, %v1815
        %1819 = vst.msk [vmem:[#allocation9 + $0x1] sm:$0x40] %vm1810, %v1815
        %v1821 = vrot.slane %v1793, 1
        %v1823 = vmax.f32 %v1793, %v1821
        %1824 = vst.msk [vmem:[#allocation9 + $0x8] sm:$0x1] %vm1804, %v1823
        %1825 = vst.msk [vmem:[#allocation9 + $0x7] sm:$0x4] %vm1806, %v1823
        %1826 = vst.msk [vmem:[#allocation9 + $0x6] sm:$0x10] %vm1808, %v1823
        %1827 = vst.msk [vmem:[#allocation9 + $0x5] sm:$0x40] %vm1810, %v1823
        %v1829 = vrot.slane %v1794, 1
        %v1831 = vmax.f32 %v1794, %v1829
        %1832 = vst.msk [vmem:[#allocation9 + $0xc] sm:$0x1] %vm1804, %v1831
        %1833 = vst.msk [vmem:[#allocation9 + $0xb] sm:$0x4] %vm1806, %v1831
        %1834 = vst.msk [vmem:[#allocation9 + $0xa] sm:$0x10] %vm1808, %v1831
        %1835 = vst.msk [vmem:[#allocation9 + $0x9] sm:$0x40] %vm1810, %v1831
        %v1836 = vld [vmem:[#allocation9] sm:$0xff]
        %v1837 = vld [vmem:[#allocation9 + $0x8] sm:$0xff]
        %1840 = vrot.lane.b32.xlu0 %v1836, 124
        %v1841 = vpop.permute.xlu0 %1840
        %1842 = vrot.lane.b32.xlu0 %v1837, 124
        %v1843 = vpop.permute.xlu0 %1842
        %v1846 = vmax.f32 %v1836, %v1841
        %v1847 = vmax.f32 %v1837, %v1843
        %1850 = vrot.lane.b32.xlu0 %v1846, 4
        %v1851 = vpop.permute.xlu0 %1850
        %1852 = vrot.lane.b32.xlu0 %v1847, 4
        %v1853 = vpop.permute.xlu0 %1852
        %vm1856 = vcmask 64544
        %1857 = vst.msk [vmem:[#allocation3 + $0x1] sm:$0xff] %vm1856, %v1851
        %1858 = vst.msk [vmem:[#allocation3 + $0x9] sm:$0xff] %vm1856, %v1853
        %vm1859 = vcmask 97344
        %1860 = vst.msk [vmem:[#allocation3 + $0x1] sm:$0xff] %vm1859, %v1846
        %1861 = vst.msk [vmem:[#allocation3 + $0x9] sm:$0xff] %vm1859, %v1847
        %1862 = vrot.lane.b32.xlu0 %v1846, 124
        %v1863 = vpop.permute.xlu0 %1862
        %1864 = vrot.lane.b32.xlu0 %v1847, 124
        %v1865 = vpop.permute.xlu0 %1864
        %vm1868 = vcmask 130144
        %1869 = vst.msk [vmem:[#allocation3 + $0x1] sm:$0xff] %vm1868, %v1863
        %1870 = vst.msk [vmem:[#allocation3 + $0x9] sm:$0xff] %vm1868, %v1865
        %1871 = vrot.lane.b32.xlu0 %v1846, 120
        %v1872 = vpop.permute.xlu0 %1871
        %1873 = vrot.lane.b32.xlu0 %v1847, 120
        %v1874 = vpop.permute.xlu0 %1873
        %vm1877 = vcmask 162944
        %1878 = vst.msk [vmem:[#allocation3 + $0x1] sm:$0xff] %vm1877, %v1872
        %1879 = vst.msk [vmem:[#allocation3 + $0x9] sm:$0xff] %vm1877, %v1874
        %1880 = vrot.lane.b32.xlu0 %v1846, 116
        %v1881 = vpop.permute.xlu0 %1880
        %1882 = vrot.lane.b32.xlu0 %v1847, 116
        %v1883 = vpop.permute.xlu0 %1882
        %vm1886 = vcmask 195744
        %1887 = vst.msk [vmem:[#allocation3 + $0x1] sm:$0xff] %vm1886, %v1881
        %1888 = vst.msk [vmem:[#allocation3 + $0x9] sm:$0xff] %vm1886, %v1883
        %1889 = vrot.lane.b32.xlu0 %v1846, 112
        %v1890 = vpop.permute.xlu0 %1889
        %1891 = vrot.lane.b32.xlu0 %v1847, 112
        %v1892 = vpop.permute.xlu0 %1891
        %vm1895 = vcmask 228544
        %1896 = vst.msk [vmem:[#allocation3 + $0x1] sm:$0xff] %vm1895, %v1890
        %1897 = vst.msk [vmem:[#allocation3 + $0x9] sm:$0xff] %vm1895, %v1892
        %1898 = vrot.lane.b32.xlu0 %v1846, 108
        %v1899 = vpop.permute.xlu0 %1898
        %1900 = vrot.lane.b32.xlu0 %v1847, 108
        %v1901 = vpop.permute.xlu0 %1900
        %vm1904 = vcmask 261344
        %1905 = vst.msk [vmem:[#allocation3 + $0x1] sm:$0xff] %vm1904, %v1899
        %1906 = vst.msk [vmem:[#allocation3 + $0x9] sm:$0xff] %vm1904, %v1901
        %1907 = vrot.lane.b32.xlu0 %v1846, 104
        %v1908 = vpop.permute.xlu0 %1907
        %1909 = vrot.lane.b32.xlu0 %v1847, 104
        %v1910 = vpop.permute.xlu0 %1909
        %vm1913 = vcmask 294144
        %1914 = vst.msk [vmem:[#allocation3 + $0x1] sm:$0xff] %vm1913, %v1908
        %1915 = vst.msk [vmem:[#allocation3 + $0x9] sm:$0xff] %vm1913, %v1910
        %v1916 = vld [vmem:[#allocation3] sm:$0xff]
        %v1917 = vld [vmem:[#allocation3 + $0x8] sm:$0xff]
        %v1918 = vld [vmem:[%s4] sm:$0xff]
        %v1919 = vld [vmem:[%s4 + $0x8] sm:$0xff]
        %v1920 = vld [vmem:[%s4 + $0x10] sm:$0xff]
        %v1921 = vld [vmem:[%s4 + $0x18] sm:$0xff]
        %s1922 = scalar_lea.vmem %s4, 32
        %v1923 = vld [vmem:[%s1922] sm:$0xff]
        %v1924 = vld [vmem:[%s1922 + $0x8] sm:$0xff]
        %v1925 = vld [vmem:[%s1922 + $0x10] sm:$0xff]
        %v1926 = vld [vmem:[%s1922 + $0x18] sm:$0xff]
        %1929 = vrot.lane.b32.xlu0 %v1916, 124
        %v1930 = vpop.permute.xlu0 %1929
        %1931 = vrot.lane.b32.xlu0 %v1917, 124
        %v1932 = vpop.permute.xlu0 %1931
        %vm1933 = vcmask 261120
        %v1934 = vsel %vm1933, %v1930, 0
        %v1936 = vsel %vm1933, %v1932, 0
        %1938 = vmatprep.subr.mxu0 0.0
        %1939 = vmatpush1.msra.mxu0 0.0
        %1940 = vmatprep.subr.mxu0 0.0
        %1941 = vmatpush1.msra.mxu0 0.0
        %1942 = vmatprep.subr.mxu0 0.0
        %1943 = vmatpush1.msra.mxu0 0.0
        %1944 = vmatprep.subr.mxu0 0.0
        %1945 = vmatpush1.msra.mxu0 0.0
        %1946 = vmatprep.subr.mxu0 0.0
        %1947 = vmatpush1.msra.mxu0 0.0
        %1948 = vmatprep.subr.mxu0 0.0
        %1949 = vmatpush1.msra.mxu0 0.0
        %1950 = vmatprep.subr.mxu0 0.0
        %1951 = vmatpush1.msra.mxu0 0.0
        %1952 = vmatprep.subr.mxu0 0.0
        %1953 = vmatpush1.msra.mxu0 0.0
        %1954 = vmatprep.subr.mxu0 0.0
        %1955 = vmatpush1.msra.mxu0 0.0
        %1956 = vmatprep.subr.mxu0 0.0
        %1957 = vmatpush1.msra.mxu0 0.0
        %1958 = vmatprep.subr.mxu0 0.0
        %1959 = vmatpush1.msra.mxu0 0.0
        %1960 = vmatprep.subr.mxu0 0.0
        %1961 = vmatpush1.msra.mxu0 0.0
        %1962 = vmatprep.subr.mxu0 0.0
        %1963 = vmatpush1.msra.mxu0 %v1926
        %1964 = vmatprep.subr.mxu0 0.0
        %1965 = vmatpush1.msra.mxu0 %v1925
        %1966 = vmatprep.subr.mxu0 0.0
        %1967 = vmatpush1.msra.mxu0 %v1924
        %1968 = vmatprep.subr.mxu0 0.0
        %1969 = vmatpush1.msra.mxu0 %v1923
        %1970 = vmatprep.subr.mxu0 0.0
        %1971 = vmatpush2.msra.mxu0 0.0
        %1972 = vmatprep.subr.mxu0 0.0
        %1973 = vmatpush2.msra.mxu0 0.0
        %1974 = vmatprep.subr.mxu0 0.0
        %1975 = vmatpush2.msra.mxu0 0.0
        %1976 = vmatprep.subr.mxu0 0.0
        %1977 = vmatpush2.msra.mxu0 0.0
        %1978 = vmatprep.subr.mxu0 0.0
        %1979 = vmatpush2.msra.mxu0 0.0
        %1980 = vmatprep.subr.mxu0 0.0
        %1981 = vmatpush2.msra.mxu0 0.0
        %1982 = vmatprep.subr.mxu0 0.0
        %1983 = vmatpush2.msra.mxu0 0.0
        %1984 = vmatprep.subr.mxu0 0.0
        %1985 = vmatpush2.msra.mxu0 0.0
        %1986 = vmatprep.subr.mxu0 0.0
        %1987 = vmatpush2.msra.mxu0 0.0
        %1988 = vmatprep.subr.mxu0 0.0
        %1989 = vmatpush2.msra.mxu0 0.0
        %1990 = vmatprep.subr.mxu0 0.0
        %1991 = vmatpush2.msra.mxu0 0.0
        %1992 = vmatprep.subr.mxu0 0.0
        %1993 = vmatpush2.msra.mxu0 0.0
        %1994 = vmatprep.subr.mxu0 0.0
        %1995 = vmatpush2.msra.mxu0 0.0
        %1996 = vmatprep.subr.mxu0 0.0
        %1997 = vmatpush2.msra.mxu0 0.0
        %1998 = vmatprep.subr.mxu0 0.0
        %1999 = vmatpush2.msra.mxu0 0.0
        %2000 = vmatprep.subr.mxu0 0.0
        %2001 = vmatpush2.msra.mxu0 0.0
        %2002 = vmatprep.mubr.f32.mxu0 0.0
        %2003 = vmatmul.mubr.f32.gmra.mxu0 %v1934
        %v2004 = vpop.f32.mrf.mxu0
        %v2005 = vadd.f32 0.0, %v2004
        %v2006 = vpop.f32.mrf.mxu0
        %2007 = vmatprep.mubr.f32.mxu0 0.0
        %2008 = vmatmul.mubr.f32.gmra.mxu0 %v1936
        %v2009 = vpop.f32.mrf.mxu0
        %v2010 = vadd.f32 0.0, %v2009
        %v2011 = vpop.f32.mrf.mxu0
        %2012 = vdwg.mxu0
        %v2013 = vsel %vm1933, %v1916, 0
        %v2015 = vsel %vm1933, %v1917, 0
        %2017 = vmatprep.subr.mxu0 0.0
        %2018 = vmatpush1.msra.mxu0 0.0
        %2019 = vmatprep.subr.mxu0 0.0
        %2020 = vmatpush1.msra.mxu0 0.0
        %2021 = vmatprep.subr.mxu0 0.0
        %2022 = vmatpush1.msra.mxu0 0.0
        %2023 = vmatprep.subr.mxu0 0.0
        %2024 = vmatpush1.msra.mxu0 0.0
        %2025 = vmatprep.subr.mxu0 0.0
        %2026 = vmatpush1.msra.mxu0 0.0
        %2027 = vmatprep.subr.mxu0 0.0
        %2028 = vmatpush1.msra.mxu0 0.0
        %2029 = vmatprep.subr.mxu0 0.0
        %2030 = vmatpush1.msra.mxu0 0.0
        %2031 = vmatprep.subr.mxu0 0.0
        %2032 = vmatpush1.msra.mxu0 0.0
        %2033 = vmatprep.subr.mxu0 0.0
        %2034 = vmatpush1.msra.mxu0 0.0
        %2035 = vmatprep.subr.mxu0 0.0
        %2036 = vmatpush1.msra.mxu0 0.0
        %2037 = vmatprep.subr.mxu0 0.0
        %2038 = vmatpush1.msra.mxu0 0.0
        %2039 = vmatprep.subr.mxu0 0.0
        %2040 = vmatpush1.msra.mxu0 0.0
        %2041 = vmatprep.subr.mxu0 0.0
        %2042 = vmatpush1.msra.mxu0 %v1921
        %2043 = vmatprep.subr.mxu0 0.0
        %2044 = vmatpush1.msra.mxu0 %v1920
        %2045 = vmatprep.subr.mxu0 0.0
        %2046 = vmatpush1.msra.mxu0 %v1919
        %2047 = vmatprep.subr.mxu0 0.0
        %2048 = vmatpush1.msra.mxu0 %v1918
        %2049 = vmatprep.subr.mxu0 0.0
        %2050 = vmatpush2.msra.mxu0 0.0
        %2051 = vmatprep.subr.mxu0 0.0
        %2052 = vmatpush2.msra.mxu0 0.0
        %2053 = vmatprep.subr.mxu0 0.0
        %2054 = vmatpush2.msra.mxu0 0.0
        %2055 = vmatprep.subr.mxu0 0.0
        %2056 = vmatpush2.msra.mxu0 0.0
        %2057 = vmatprep.subr.mxu0 0.0
        %2058 = vmatpush2.msra.mxu0 0.0
        %2059 = vmatprep.subr.mxu0 0.0
        %2060 = vmatpush2.msra.mxu0 0.0
        %2061 = vmatprep.subr.mxu0 0.0
        %2062 = vmatpush2.msra.mxu0 0.0
        %2063 = vmatprep.subr.mxu0 0.0
        %2064 = vmatpush2.msra.mxu0 0.0
        %2065 = vmatprep.subr.mxu0 0.0
        %2066 = vmatpush2.msra.mxu0 0.0
        %2067 = vmatprep.subr.mxu0 0.0
        %2068 = vmatpush2.msra.mxu0 0.0
        %2069 = vmatprep.subr.mxu0 0.0
        %2070 = vmatpush2.msra.mxu0 0.0
        %2071 = vmatprep.subr.mxu0 0.0
        %2072 = vmatpush2.msra.mxu0 0.0
        %2073 = vmatprep.subr.mxu0 0.0
        %2074 = vmatpush2.msra.mxu0 0.0
        %2075 = vmatprep.subr.mxu0 0.0
        %2076 = vmatpush2.msra.mxu0 0.0
        %2077 = vmatprep.subr.mxu0 0.0
        %2078 = vmatpush2.msra.mxu0 0.0
        %2079 = vmatprep.subr.mxu0 0.0
        %2080 = vmatpush2.msra.mxu0 0.0
        %2081 = vmatprep.mubr.f32.mxu0 0.0
        %2082 = vmatmul.mubr.f32.gmra.mxu0 %v2013
        %v2083 = vpop.f32.mrf.mxu0
        %v2084 = vadd.f32 %v2005, %v2083
        %v2085 = vpop.f32.mrf.mxu0
        %2086 = vmatprep.mubr.f32.mxu0 0.0
        %2087 = vmatmul.mubr.f32.gmra.mxu0 %v2015
        %v2088 = vpop.f32.mrf.mxu0
        %v2089 = vadd.f32 %v2010, %v2088
        %v2090 = vpop.f32.mrf.mxu0
        %2091 = vdwg.mxu0
        %s2092 = scalar_lea.vmem %s4, 64
        %v2093 = vld [vmem:[%s2092] sm:$0xff]
        %v2094 = vld [vmem:[%s2092 + $0x8] sm:$0xff]
        %v2095 = vld [vmem:[%s2092 + $0x10] sm:$0xff]
        %v2096 = vld [vmem:[%s2092 + $0x18] sm:$0xff]
        %2097 = vrot.lane.b32.xlu0 %v1916, 120
        %v2098 = vpop.permute.xlu0 %2097
        %2099 = vrot.lane.b32.xlu0 %v1917, 120
        %v2100 = vpop.permute.xlu0 %2099
        %v2101 = vsel %vm1933, %v2098, 0
        %v2103 = vsel %vm1933, %v2100, 0
        %2105 = vmatprep.subr.mxu0 0.0
        %2106 = vmatpush1.msra.mxu0 0.0
        %2107 = vmatprep.subr.mxu0 0.0
        %2108 = vmatpush1.msra.mxu0 0.0
        %2109 = vmatprep.subr.mxu0 0.0
        %2110 = vmatpush1.msra.mxu0 0.0
        %2111 = vmatprep.subr.mxu0 0.0
        %2112 = vmatpush1.msra.mxu0 0.0
        %2113 = vmatprep.subr.mxu0 0.0
        %2114 = vmatpush1.msra.mxu0 0.0
        %2115 = vmatprep.subr.mxu0 0.0
        %2116 = vmatpush1.msra.mxu0 0.0
        %2117 = vmatprep.subr.mxu0 0.0
        %2118 = vmatpush1.msra.mxu0 0.0
        %2119 = vmatprep.subr.mxu0 0.0
        %2120 = vmatpush1.msra.mxu0 0.0
        %2121 = vmatprep.subr.mxu0 0.0
        %2122 = vmatpush1.msra.mxu0 0.0
        %2123 = vmatprep.subr.mxu0 0.0
        %2124 = vmatpush1.msra.mxu0 0.0
        %2125 = vmatprep.subr.mxu0 0.0
        %2126 = vmatpush1.msra.mxu0 0.0
        %2127 = vmatprep.subr.mxu0 0.0
        %2128 = vmatpush1.msra.mxu0 0.0
        %2129 = vmatprep.subr.mxu0 0.0
        %2130 = vmatpush1.msra.mxu0 %v2096
        %2131 = vmatprep.subr.mxu0 0.0
        %2132 = vmatpush1.msra.mxu0 %v2095
        %2133 = vmatprep.subr.mxu0 0.0
        %2134 = vmatpush1.msra.mxu0 %v2094
        %2135 = vmatprep.subr.mxu0 0.0
        %2136 = vmatpush1.msra.mxu0 %v2093
        %2137 = vmatprep.subr.mxu0 0.0
        %2138 = vmatpush2.msra.mxu0 0.0
        %2139 = vmatprep.subr.mxu0 0.0
        %2140 = vmatpush2.msra.mxu0 0.0
        %2141 = vmatprep.subr.mxu0 0.0
        %2142 = vmatpush2.msra.mxu0 0.0
        %2143 = vmatprep.subr.mxu0 0.0
        %2144 = vmatpush2.msra.mxu0 0.0
        %2145 = vmatprep.subr.mxu0 0.0
        %2146 = vmatpush2.msra.mxu0 0.0
        %2147 = vmatprep.subr.mxu0 0.0
        %2148 = vmatpush2.msra.mxu0 0.0
        %2149 = vmatprep.subr.mxu0 0.0
        %2150 = vmatpush2.msra.mxu0 0.0
        %2151 = vmatprep.subr.mxu0 0.0
        %2152 = vmatpush2.msra.mxu0 0.0
        %2153 = vmatprep.subr.mxu0 0.0
        %2154 = vmatpush2.msra.mxu0 0.0
        %2155 = vmatprep.subr.mxu0 0.0
        %2156 = vmatpush2.msra.mxu0 0.0
        %2157 = vmatprep.subr.mxu0 0.0
        %2158 = vmatpush2.msra.mxu0 0.0
        %2159 = vmatprep.subr.mxu0 0.0
        %2160 = vmatpush2.msra.mxu0 0.0
        %2161 = vmatprep.subr.mxu0 0.0
        %2162 = vmatpush2.msra.mxu0 0.0
        %2163 = vmatprep.subr.mxu0 0.0
        %2164 = vmatpush2.msra.mxu0 0.0
        %2165 = vmatprep.subr.mxu0 0.0
        %2166 = vmatpush2.msra.mxu0 0.0
        %2167 = vmatprep.subr.mxu0 0.0
        %2168 = vmatpush2.msra.mxu0 0.0
        %2169 = vmatprep.mubr.f32.mxu0 0.0
        %2170 = vmatmul.mubr.f32.gmra.mxu0 %v2101
        %v2171 = vpop.f32.mrf.mxu0
        %v2172 = vadd.f32 0.0, %v2171
        %v2173 = vpop.f32.mrf.mxu0
        %2174 = vmatprep.mubr.f32.mxu0 0.0
        %2175 = vmatmul.mubr.f32.gmra.mxu0 %v2103
        %v2176 = vpop.f32.mrf.mxu0
        %v2177 = vadd.f32 0.0, %v2176
        %v2178 = vpop.f32.mrf.mxu0
        %2179 = vdwg.mxu0
        %v2180 = vadd.f32 %v2084, %v2172
        %v2181 = vadd.f32 %v2089, %v2177
        %v2182 = vld [vmem:[#allocation3 + $0x1] sm:$0xff]
        %v2183 = vld [vmem:[#allocation3 + $0x9] sm:$0xff]
        %s2184 = scalar_lea.vmem %s4, 96
        %v2185 = vld [vmem:[%s2184] sm:$0xff]
        %v2186 = vld [vmem:[%s2184 + $0x8] sm:$0xff]
        %v2187 = vld [vmem:[%s2184 + $0x10] sm:$0xff]
        %v2188 = vld [vmem:[%s2184 + $0x18] sm:$0xff]
        %v2190 = vsel %vm1933, %v2182, 0
        %v2193 = vsel %vm1933, %v2183, 0
        %2195 = vmatprep.subr.mxu0 0.0
        %2196 = vmatpush1.msra.mxu0 0.0
        %2197 = vmatprep.subr.mxu0 0.0
        %2198 = vmatpush1.msra.mxu0 0.0
        %2199 = vmatprep.subr.mxu0 0.0
        %2200 = vmatpush1.msra.mxu0 0.0
        %2201 = vmatprep.subr.mxu0 0.0
        %2202 = vmatpush1.msra.mxu0 0.0
        %2203 = vmatprep.subr.mxu0 0.0
        %2204 = vmatpush1.msra.mxu0 0.0
        %2205 = vmatprep.subr.mxu0 0.0
        %2206 = vmatpush1.msra.mxu0 0.0
        %2207 = vmatprep.subr.mxu0 0.0
        %2208 = vmatpush1.msra.mxu0 0.0
        %2209 = vmatprep.subr.mxu0 0.0
        %2210 = vmatpush1.msra.mxu0 0.0
        %2211 = vmatprep.subr.mxu0 0.0
        %2212 = vmatpush1.msra.mxu0 0.0
        %2213 = vmatprep.subr.mxu0 0.0
        %2214 = vmatpush1.msra.mxu0 0.0
        %2215 = vmatprep.subr.mxu0 0.0
        %2216 = vmatpush1.msra.mxu0 0.0
        %2217 = vmatprep.subr.mxu0 0.0
        %2218 = vmatpush1.msra.mxu0 0.0
        %2219 = vmatprep.subr.mxu0 0.0
        %2220 = vmatpush1.msra.mxu0 %v2188
        %2221 = vmatprep.subr.mxu0 0.0
        %2222 = vmatpush1.msra.mxu0 %v2187
        %2223 = vmatprep.subr.mxu0 0.0
        %2224 = vmatpush1.msra.mxu0 %v2186
        %2225 = vmatprep.subr.mxu0 0.0
        %2226 = vmatpush1.msra.mxu0 %v2185
        %2227 = vmatprep.subr.mxu0 0.0
        %2228 = vmatpush2.msra.mxu0 0.0
        %2229 = vmatprep.subr.mxu0 0.0
        %2230 = vmatpush2.msra.mxu0 0.0
        %2231 = vmatprep.subr.mxu0 0.0
        %2232 = vmatpush2.msra.mxu0 0.0
        %2233 = vmatprep.subr.mxu0 0.0
        %2234 = vmatpush2.msra.mxu0 0.0
        %2235 = vmatprep.subr.mxu0 0.0
        %2236 = vmatpush2.msra.mxu0 0.0
        %2237 = vmatprep.subr.mxu0 0.0
        %2238 = vmatpush2.msra.mxu0 0.0
        %2239 = vmatprep.subr.mxu0 0.0
        %2240 = vmatpush2.msra.mxu0 0.0
        %2241 = vmatprep.subr.mxu0 0.0
        %2242 = vmatpush2.msra.mxu0 0.0
        %2243 = vmatprep.subr.mxu0 0.0
        %2244 = vmatpush2.msra.mxu0 0.0
        %2245 = vmatprep.subr.mxu0 0.0
        %2246 = vmatpush2.msra.mxu0 0.0
        %2247 = vmatprep.subr.mxu0 0.0
        %2248 = vmatpush2.msra.mxu0 0.0
        %2249 = vmatprep.subr.mxu0 0.0
        %2250 = vmatpush2.msra.mxu0 0.0
        %2251 = vmatprep.subr.mxu0 0.0
        %2252 = vmatpush2.msra.mxu0 0.0
        %2253 = vmatprep.subr.mxu0 0.0
        %2254 = vmatpush2.msra.mxu0 0.0
        %2255 = vmatprep.subr.mxu0 0.0
        %2256 = vmatpush2.msra.mxu0 0.0
        %2257 = vmatprep.subr.mxu0 0.0
        %2258 = vmatpush2.msra.mxu0 0.0
        %2259 = vmatprep.mubr.f32.mxu0 0.0
        %2260 = vmatmul.mubr.f32.gmra.mxu0 %v2190
        %v2261 = vpop.f32.mrf.mxu0
        %v2262 = vadd.f32 0.0, %v2261
        %v2263 = vpop.f32.mrf.mxu0
        %2264 = vmatprep.mubr.f32.mxu0 0.0
        %2265 = vmatmul.mubr.f32.gmra.mxu0 %v2193
        %v2266 = vpop.f32.mrf.mxu0
        %v2267 = vadd.f32 0.0, %v2266
        %v2268 = vpop.f32.mrf.mxu0
        %2269 = vdwg.mxu0
        %v2270 = vadd.f32 %v2180, %v2262
        %v2271 = vadd.f32 %v2181, %v2267
        %s2272 = scalar_lea.vmem %s4, 128
        %v2273 = vld [vmem:[%s2272] sm:$0xff]
        %v2274 = vld [vmem:[%s2272 + $0x8] sm:$0xff]
        %v2275 = vld [vmem:[%s2272 + $0x10] sm:$0xff]
        %v2276 = vld [vmem:[%s2272 + $0x18] sm:$0xff]
        %2277 = vrot.lane.b32.xlu0 %v2182, 124
        %v2278 = vpop.permute.xlu0 %2277
        %2279 = vrot.lane.b32.xlu0 %v2183, 124
        %v2280 = vpop.permute.xlu0 %2279
        %v2281 = vsel %vm1933, %v2278, 0
        %v2283 = vsel %vm1933, %v2280, 0
        %2285 = vmatprep.subr.mxu0 0.0
        %2286 = vmatpush1.msra.mxu0 0.0
        %2287 = vmatprep.subr.mxu0 0.0
        %2288 = vmatpush1.msra.mxu0 0.0
        %2289 = vmatprep.subr.mxu0 0.0
        %2290 = vmatpush1.msra.mxu0 0.0
        %2291 = vmatprep.subr.mxu0 0.0
        %2292 = vmatpush1.msra.mxu0 0.0
        %2293 = vmatprep.subr.mxu0 0.0
        %2294 = vmatpush1.msra.mxu0 0.0
        %2295 = vmatprep.subr.mxu0 0.0
        %2296 = vmatpush1.msra.mxu0 0.0
        %2297 = vmatprep.subr.mxu0 0.0
        %2298 = vmatpush1.msra.mxu0 0.0
        %2299 = vmatprep.subr.mxu0 0.0
        %2300 = vmatpush1.msra.mxu0 0.0
        %2301 = vmatprep.subr.mxu0 0.0
        %2302 = vmatpush1.msra.mxu0 0.0
        %2303 = vmatprep.subr.mxu0 0.0
        %2304 = vmatpush1.msra.mxu0 0.0
        %2305 = vmatprep.subr.mxu0 0.0
        %2306 = vmatpush1.msra.mxu0 0.0
        %2307 = vmatprep.subr.mxu0 0.0
        %2308 = vmatpush1.msra.mxu0 0.0
        %2309 = vmatprep.subr.mxu0 0.0
        %2310 = vmatpush1.msra.mxu0 %v2276
        %2311 = vmatprep.subr.mxu0 0.0
        %2312 = vmatpush1.msra.mxu0 %v2275
        %2313 = vmatprep.subr.mxu0 0.0
        %2314 = vmatpush1.msra.mxu0 %v2274
        %2315 = vmatprep.subr.mxu0 0.0
        %2316 = vmatpush1.msra.mxu0 %v2273
        %2317 = vmatprep.subr.mxu0 0.0
        %2318 = vmatpush2.msra.mxu0 0.0
        %2319 = vmatprep.subr.mxu0 0.0
        %2320 = vmatpush2.msra.mxu0 0.0
        %2321 = vmatprep.subr.mxu0 0.0
        %2322 = vmatpush2.msra.mxu0 0.0
        %2323 = vmatprep.subr.mxu0 0.0
        %2324 = vmatpush2.msra.mxu0 0.0
        %2325 = vmatprep.subr.mxu0 0.0
        %2326 = vmatpush2.msra.mxu0 0.0
        %2327 = vmatprep.subr.mxu0 0.0
        %2328 = vmatpush2.msra.mxu0 0.0
        %2329 = vmatprep.subr.mxu0 0.0
        %2330 = vmatpush2.msra.mxu0 0.0
        %2331 = vmatprep.subr.mxu0 0.0
        %2332 = vmatpush2.msra.mxu0 0.0
        %2333 = vmatprep.subr.mxu0 0.0
        %2334 = vmatpush2.msra.mxu0 0.0
        %2335 = vmatprep.subr.mxu0 0.0
        %2336 = vmatpush2.msra.mxu0 0.0
        %2337 = vmatprep.subr.mxu0 0.0
        %2338 = vmatpush2.msra.mxu0 0.0
        %2339 = vmatprep.subr.mxu0 0.0
        %2340 = vmatpush2.msra.mxu0 0.0
        %2341 = vmatprep.subr.mxu0 0.0
        %2342 = vmatpush2.msra.mxu0 0.0
        %2343 = vmatprep.subr.mxu0 0.0
        %2344 = vmatpush2.msra.mxu0 0.0
        %2345 = vmatprep.subr.mxu0 0.0
        %2346 = vmatpush2.msra.mxu0 0.0
        %2347 = vmatprep.subr.mxu0 0.0
        %2348 = vmatpush2.msra.mxu0 0.0
        %2349 = vmatprep.mubr.f32.mxu0 0.0
        %2350 = vmatmul.mubr.f32.gmra.mxu0 %v2281
        %v2351 = vpop.f32.mrf.mxu0
        %v2352 = vadd.f32 0.0, %v2351
        %v2353 = vpop.f32.mrf.mxu0
        %2354 = vmatprep.mubr.f32.mxu0 0.0
        %2355 = vmatmul.mubr.f32.gmra.mxu0 %v2283
        %v2356 = vpop.f32.mrf.mxu0
        %v2357 = vadd.f32 0.0, %v2356
        %v2358 = vpop.f32.mrf.mxu0
        %2359 = vdwg.mxu0
        %v2360 = vadd.f32 %v2270, %v2352
        %v2361 = vadd.f32 %v2271, %v2357
        %s2362 = scalar_lea.vmem %s4, 160
        %v2363 = vld [vmem:[%s2362] sm:$0xff]
        %v2364 = vld [vmem:[%s2362 + $0x8] sm:$0xff]
        %v2365 = vld [vmem:[%s2362 + $0x10] sm:$0xff]
        %v2366 = vld [vmem:[%s2362 + $0x18] sm:$0xff]
        %2367 = vrot.lane.b32.xlu0 %v2182, 120
        %v2368 = vpop.permute.xlu0 %2367
        %2369 = vrot.lane.b32.xlu0 %v2183, 120
        %v2370 = vpop.permute.xlu0 %2369
        %v2371 = vsel %vm1933, %v2368, 0
        %v2373 = vsel %vm1933, %v2370, 0
        %2375 = vmatprep.subr.mxu0 0.0
        %2376 = vmatpush1.msra.mxu0 0.0
        %2377 = vmatprep.subr.mxu0 0.0
        %2378 = vmatpush1.msra.mxu0 0.0
        %2379 = vmatprep.subr.mxu0 0.0
        %2380 = vmatpush1.msra.mxu0 0.0
        %2381 = vmatprep.subr.mxu0 0.0
        %2382 = vmatpush1.msra.mxu0 0.0
        %2383 = vmatprep.subr.mxu0 0.0
        %2384 = vmatpush1.msra.mxu0 0.0
        %2385 = vmatprep.subr.mxu0 0.0
        %2386 = vmatpush1.msra.mxu0 0.0
        %2387 = vmatprep.subr.mxu0 0.0
        %2388 = vmatpush1.msra.mxu0 0.0
        %2389 = vmatprep.subr.mxu0 0.0
        %2390 = vmatpush1.msra.mxu0 0.0
        %2391 = vmatprep.subr.mxu0 0.0
        %2392 = vmatpush1.msra.mxu0 0.0
        %2393 = vmatprep.subr.mxu0 0.0
        %2394 = vmatpush1.msra.mxu0 0.0
        %2395 = vmatprep.subr.mxu0 0.0
        %2396 = vmatpush1.msra.mxu0 0.0
        %2397 = vmatprep.subr.mxu0 0.0
        %2398 = vmatpush1.msra.mxu0 0.0
        %2399 = vmatprep.subr.mxu0 0.0
        %2400 = vmatpush1.msra.mxu0 %v2366
        %2401 = vmatprep.subr.mxu0 0.0
        %2402 = vmatpush1.msra.mxu0 %v2365
        %2403 = vmatprep.subr.mxu0 0.0
        %2404 = vmatpush1.msra.mxu0 %v2364
        %2405 = vmatprep.subr.mxu0 0.0
        %2406 = vmatpush1.msra.mxu0 %v2363
        %2407 = vmatprep.subr.mxu0 0.0
        %2408 = vmatpush2.msra.mxu0 0.0
        %2409 = vmatprep.subr.mxu0 0.0
        %2410 = vmatpush2.msra.mxu0 0.0
        %2411 = vmatprep.subr.mxu0 0.0
        %2412 = vmatpush2.msra.mxu0 0.0
        %2413 = vmatprep.subr.mxu0 0.0
        %2414 = vmatpush2.msra.mxu0 0.0
        %2415 = vmatprep.subr.mxu0 0.0
        %2416 = vmatpush2.msra.mxu0 0.0
        %2417 = vmatprep.subr.mxu0 0.0
        %2418 = vmatpush2.msra.mxu0 0.0
        %2419 = vmatprep.subr.mxu0 0.0
        %2420 = vmatpush2.msra.mxu0 0.0
        %2421 = vmatprep.subr.mxu0 0.0
        %2422 = vmatpush2.msra.mxu0 0.0
        %2423 = vmatprep.subr.mxu0 0.0
        %2424 = vmatpush2.msra.mxu0 0.0
        %2425 = vmatprep.subr.mxu0 0.0
        %2426 = vmatpush2.msra.mxu0 0.0
        %2427 = vmatprep.subr.mxu0 0.0
        %2428 = vmatpush2.msra.mxu0 0.0
        %2429 = vmatprep.subr.mxu0 0.0
        %2430 = vmatpush2.msra.mxu0 0.0
        %2431 = vmatprep.subr.mxu0 0.0
        %2432 = vmatpush2.msra.mxu0 0.0
        %2433 = vmatprep.subr.mxu0 0.0
        %2434 = vmatpush2.msra.mxu0 0.0
        %2435 = vmatprep.subr.mxu0 0.0
        %2436 = vmatpush2.msra.mxu0 0.0
        %2437 = vmatprep.subr.mxu0 0.0
        %2438 = vmatpush2.msra.mxu0 0.0
        %2439 = vmatprep.mubr.f32.mxu0 0.0
        %2440 = vmatmul.mubr.f32.gmra.mxu0 %v2371
        %v2441 = vpop.f32.mrf.mxu0
        %v2442 = vadd.f32 0.0, %v2441
        %v2443 = vpop.f32.mrf.mxu0
        %2444 = vmatprep.mubr.f32.mxu0 0.0
        %2445 = vmatmul.mubr.f32.gmra.mxu0 %v2373
        %v2446 = vpop.f32.mrf.mxu0
        %v2447 = vadd.f32 0.0, %v2446
        %v2448 = vpop.f32.mrf.mxu0
        %2449 = vdwg.mxu0
        %v2450 = vadd.f32 %v2360, %v2442
        %v2451 = vadd.f32 %v2361, %v2447
        %v2452 = vld [vmem:[#allocation3 + $0x2] sm:$0xff]
        %v2453 = vld [vmem:[#allocation3 + $0xa] sm:$0xff]
        %s2454 = scalar_lea.vmem %s4, 192
        %v2455 = vld [vmem:[%s2454] sm:$0xff]
        %v2456 = vld [vmem:[%s2454 + $0x8] sm:$0xff]
        %v2457 = vld [vmem:[%s2454 + $0x10] sm:$0xff]
        %v2458 = vld [vmem:[%s2454 + $0x18] sm:$0xff]
        %v2460 = vsel %vm1933, %v2452, 0
        %v2463 = vsel %vm1933, %v2453, 0
        %2465 = vmatprep.subr.mxu0 0.0
        %2466 = vmatpush1.msra.mxu0 0.0
        %2467 = vmatprep.subr.mxu0 0.0
        %2468 = vmatpush1.msra.mxu0 0.0
        %2469 = vmatprep.subr.mxu0 0.0
        %2470 = vmatpush1.msra.mxu0 0.0
        %2471 = vmatprep.subr.mxu0 0.0
        %2472 = vmatpush1.msra.mxu0 0.0
        %2473 = vmatprep.subr.mxu0 0.0
        %2474 = vmatpush1.msra.mxu0 0.0
        %2475 = vmatprep.subr.mxu0 0.0
        %2476 = vmatpush1.msra.mxu0 0.0
        %2477 = vmatprep.subr.mxu0 0.0
        %2478 = vmatpush1.msra.mxu0 0.0
        %2479 = vmatprep.subr.mxu0 0.0
        %2480 = vmatpush1.msra.mxu0 0.0
        %2481 = vmatprep.subr.mxu0 0.0
        %2482 = vmatpush1.msra.mxu0 0.0
        %2483 = vmatprep.subr.mxu0 0.0
        %2484 = vmatpush1.msra.mxu0 0.0
        %2485 = vmatprep.subr.mxu0 0.0
        %2486 = vmatpush1.msra.mxu0 0.0
        %2487 = vmatprep.subr.mxu0 0.0
        %2488 = vmatpush1.msra.mxu0 0.0
        %2489 = vmatprep.subr.mxu0 0.0
        %2490 = vmatpush1.msra.mxu0 %v2458
        %2491 = vmatprep.subr.mxu0 0.0
        %2492 = vmatpush1.msra.mxu0 %v2457
        %2493 = vmatprep.subr.mxu0 0.0
        %2494 = vmatpush1.msra.mxu0 %v2456
        %2495 = vmatprep.subr.mxu0 0.0
        %2496 = vmatpush1.msra.mxu0 %v2455
        %2497 = vmatprep.subr.mxu0 0.0
        %2498 = vmatpush2.msra.mxu0 0.0
        %2499 = vmatprep.subr.mxu0 0.0
        %2500 = vmatpush2.msra.mxu0 0.0
        %2501 = vmatprep.subr.mxu0 0.0
        %2502 = vmatpush2.msra.mxu0 0.0
        %2503 = vmatprep.subr.mxu0 0.0
        %2504 = vmatpush2.msra.mxu0 0.0
        %2505 = vmatprep.subr.mxu0 0.0
        %2506 = vmatpush2.msra.mxu0 0.0
        %2507 = vmatprep.subr.mxu0 0.0
        %2508 = vmatpush2.msra.mxu0 0.0
        %2509 = vmatprep.subr.mxu0 0.0
        %2510 = vmatpush2.msra.mxu0 0.0
        %2511 = vmatprep.subr.mxu0 0.0
        %2512 = vmatpush2.msra.mxu0 0.0
        %2513 = vmatprep.subr.mxu0 0.0
        %2514 = vmatpush2.msra.mxu0 0.0
        %2515 = vmatprep.subr.mxu0 0.0
        %2516 = vmatpush2.msra.mxu0 0.0
        %2517 = vmatprep.subr.mxu0 0.0
        %2518 = vmatpush2.msra.mxu0 0.0
        %2519 = vmatprep.subr.mxu0 0.0
        %2520 = vmatpush2.msra.mxu0 0.0
        %2521 = vmatprep.subr.mxu0 0.0
        %2522 = vmatpush2.msra.mxu0 0.0
        %2523 = vmatprep.subr.mxu0 0.0
        %2524 = vmatpush2.msra.mxu0 0.0
        %2525 = vmatprep.subr.mxu0 0.0
        %2526 = vmatpush2.msra.mxu0 0.0
        %2527 = vmatprep.subr.mxu0 0.0
        %2528 = vmatpush2.msra.mxu0 0.0
        %2529 = vmatprep.mubr.f32.mxu0 0.0
        %2530 = vmatmul.mubr.f32.gmra.mxu0 %v2460
        %v2531 = vpop.f32.mrf.mxu0
        %v2532 = vadd.f32 0.0, %v2531
        %v2533 = vpop.f32.mrf.mxu0
        %2534 = vmatprep.mubr.f32.mxu0 0.0
        %2535 = vmatmul.mubr.f32.gmra.mxu0 %v2463
        %v2536 = vpop.f32.mrf.mxu0
        %v2537 = vadd.f32 0.0, %v2536
        %v2538 = vpop.f32.mrf.mxu0
        %2539 = vdwg.mxu0
        %v2540 = vadd.f32 %v2450, %v2532
        %v2541 = vadd.f32 %v2451, %v2537
        %s2542 = scalar_lea.vmem %s4, 224
        %v2543 = vld [vmem:[%s2542] sm:$0xff]
        %v2544 = vld [vmem:[%s2542 + $0x8] sm:$0xff]
        %v2545 = vld [vmem:[%s2542 + $0x10] sm:$0xff]
        %v2546 = vld [vmem:[%s2542 + $0x18] sm:$0xff]
        %2547 = vrot.lane.b32.xlu0 %v2452, 124
        %v2548 = vpop.permute.xlu0 %2547
        %2549 = vrot.lane.b32.xlu0 %v2453, 124
        %v2550 = vpop.permute.xlu0 %2549
        %v2551 = vsel %vm1933, %v2548, 0
        %v2553 = vsel %vm1933, %v2550, 0
        %2555 = vmatprep.subr.mxu0 0.0
        %2556 = vmatpush1.msra.mxu0 0.0
        %2557 = vmatprep.subr.mxu0 0.0
        %2558 = vmatpush1.msra.mxu0 0.0
        %2559 = vmatprep.subr.mxu0 0.0
        %2560 = vmatpush1.msra.mxu0 0.0
        %2561 = vmatprep.subr.mxu0 0.0
        %2562 = vmatpush1.msra.mxu0 0.0
        %2563 = vmatprep.subr.mxu0 0.0
        %2564 = vmatpush1.msra.mxu0 0.0
        %2565 = vmatprep.subr.mxu0 0.0
        %2566 = vmatpush1.msra.mxu0 0.0
        %2567 = vmatprep.subr.mxu0 0.0
        %2568 = vmatpush1.msra.mxu0 0.0
        %2569 = vmatprep.subr.mxu0 0.0
        %2570 = vmatpush1.msra.mxu0 0.0
        %2571 = vmatprep.subr.mxu0 0.0
        %2572 = vmatpush1.msra.mxu0 0.0
        %2573 = vmatprep.subr.mxu0 0.0
        %2574 = vmatpush1.msra.mxu0 0.0
        %2575 = vmatprep.subr.mxu0 0.0
        %2576 = vmatpush1.msra.mxu0 0.0
        %2577 = vmatprep.subr.mxu0 0.0
        %2578 = vmatpush1.msra.mxu0 0.0
        %2579 = vmatprep.subr.mxu0 0.0
        %2580 = vmatpush1.msra.mxu0 %v2546
        %2581 = vmatprep.subr.mxu0 0.0
        %2582 = vmatpush1.msra.mxu0 %v2545
        %2583 = vmatprep.subr.mxu0 0.0
        %2584 = vmatpush1.msra.mxu0 %v2544
        %2585 = vmatprep.subr.mxu0 0.0
        %2586 = vmatpush1.msra.mxu0 %v2543
        %2587 = vmatprep.subr.mxu0 0.0
        %2588 = vmatpush2.msra.mxu0 0.0
        %2589 = vmatprep.subr.mxu0 0.0
        %2590 = vmatpush2.msra.mxu0 0.0
        %2591 = vmatprep.subr.mxu0 0.0
        %2592 = vmatpush2.msra.mxu0 0.0
        %2593 = vmatprep.subr.mxu0 0.0
        %2594 = vmatpush2.msra.mxu0 0.0
        %2595 = vmatprep.subr.mxu0 0.0
        %2596 = vmatpush2.msra.mxu0 0.0
        %2597 = vmatprep.subr.mxu0 0.0
        %2598 = vmatpush2.msra.mxu0 0.0
        %2599 = vmatprep.subr.mxu0 0.0
        %2600 = vmatpush2.msra.mxu0 0.0
        %2601 = vmatprep.subr.mxu0 0.0
        %2602 = vmatpush2.msra.mxu0 0.0
        %2603 = vmatprep.subr.mxu0 0.0
        %2604 = vmatpush2.msra.mxu0 0.0
        %2605 = vmatprep.subr.mxu0 0.0
        %2606 = vmatpush2.msra.mxu0 0.0
        %2607 = vmatprep.subr.mxu0 0.0
        %2608 = vmatpush2.msra.mxu0 0.0
        %2609 = vmatprep.subr.mxu0 0.0
        %2610 = vmatpush2.msra.mxu0 0.0
        %2611 = vmatprep.subr.mxu0 0.0
        %2612 = vmatpush2.msra.mxu0 0.0
        %2613 = vmatprep.subr.mxu0 0.0
        %2614 = vmatpush2.msra.mxu0 0.0
        %2615 = vmatprep.subr.mxu0 0.0
        %2616 = vmatpush2.msra.mxu0 0.0
        %2617 = vmatprep.subr.mxu0 0.0
        %2618 = vmatpush2.msra.mxu0 0.0
        %2619 = vmatprep.mubr.f32.mxu0 0.0
        %2620 = vmatmul.mubr.f32.gmra.mxu0 %v2551
        %v2621 = vpop.f32.mrf.mxu0
        %v2622 = vadd.f32 0.0, %v2621
        %v2623 = vpop.f32.mrf.mxu0
        %2624 = vmatprep.mubr.f32.mxu0 0.0
        %2625 = vmatmul.mubr.f32.gmra.mxu0 %v2553
        %v2626 = vpop.f32.mrf.mxu0
        %v2627 = vadd.f32 0.0, %v2626
        %v2628 = vpop.f32.mrf.mxu0
        %2629 = vdwg.mxu0
        %v2630 = vadd.f32 %v2540, %v2622
        %v2631 = vadd.f32 %v2541, %v2627
        %s2632 = scalar_lea.vmem %s4, 256
        %v2633 = vld [vmem:[%s2632] sm:$0xff]
        %v2634 = vld [vmem:[%s2632 + $0x8] sm:$0xff]
        %v2635 = vld [vmem:[%s2632 + $0x10] sm:$0xff]
        %v2636 = vld [vmem:[%s2632 + $0x18] sm:$0xff]
        %2637 = vrot.lane.b32.xlu0 %v2452, 120
        %v2638 = vpop.permute.xlu0 %2637
        %2639 = vrot.lane.b32.xlu0 %v2453, 120
        %v2640 = vpop.permute.xlu0 %2639
        %v2641 = vsel %vm1933, %v2638, 0
        %v2643 = vsel %vm1933, %v2640, 0
        %2645 = vmatprep.subr.mxu0 0.0
        %2646 = vmatpush1.msra.mxu0 0.0
        %2647 = vmatprep.subr.mxu0 0.0
        %2648 = vmatpush1.msra.mxu0 0.0
        %2649 = vmatprep.subr.mxu0 0.0
        %2650 = vmatpush1.msra.mxu0 0.0
        %2651 = vmatprep.subr.mxu0 0.0
        %2652 = vmatpush1.msra.mxu0 0.0
        %2653 = vmatprep.subr.mxu0 0.0
        %2654 = vmatpush1.msra.mxu0 0.0
        %2655 = vmatprep.subr.mxu0 0.0
        %2656 = vmatpush1.msra.mxu0 0.0
        %2657 = vmatprep.subr.mxu0 0.0
        %2658 = vmatpush1.msra.mxu0 0.0
        %2659 = vmatprep.subr.mxu0 0.0
        %2660 = vmatpush1.msra.mxu0 0.0
        %2661 = vmatprep.subr.mxu0 0.0
        %2662 = vmatpush1.msra.mxu0 0.0
        %2663 = vmatprep.subr.mxu0 0.0
        %2664 = vmatpush1.msra.mxu0 0.0
        %2665 = vmatprep.subr.mxu0 0.0
        %2666 = vmatpush1.msra.mxu0 0.0
        %2667 = vmatprep.subr.mxu0 0.0
        %2668 = vmatpush1.msra.mxu0 0.0
        %2669 = vmatprep.subr.mxu0 0.0
        %2670 = vmatpush1.msra.mxu0 %v2636
        %2671 = vmatprep.subr.mxu0 0.0
        %2672 = vmatpush1.msra.mxu0 %v2635
        %2673 = vmatprep.subr.mxu0 0.0
        %2674 = vmatpush1.msra.mxu0 %v2634
        %2675 = vmatprep.subr.mxu0 0.0
        %2676 = vmatpush1.msra.mxu0 %v2633
        %2677 = vmatprep.subr.mxu0 0.0
        %2678 = vmatpush2.msra.mxu0 0.0
        %2679 = vmatprep.subr.mxu0 0.0
        %2680 = vmatpush2.msra.mxu0 0.0
        %2681 = vmatprep.subr.mxu0 0.0
        %2682 = vmatpush2.msra.mxu0 0.0
        %2683 = vmatprep.subr.mxu0 0.0
        %2684 = vmatpush2.msra.mxu0 0.0
        %2685 = vmatprep.subr.mxu0 0.0
        %2686 = vmatpush2.msra.mxu0 0.0
        %2687 = vmatprep.subr.mxu0 0.0
        %2688 = vmatpush2.msra.mxu0 0.0
        %2689 = vmatprep.subr.mxu0 0.0
        %2690 = vmatpush2.msra.mxu0 0.0
        %2691 = vmatprep.subr.mxu0 0.0
        %2692 = vmatpush2.msra.mxu0 0.0
        %2693 = vmatprep.subr.mxu0 0.0
        %2694 = vmatpush2.msra.mxu0 0.0
        %2695 = vmatprep.subr.mxu0 0.0
        %2696 = vmatpush2.msra.mxu0 0.0
        %2697 = vmatprep.subr.mxu0 0.0
        %2698 = vmatpush2.msra.mxu0 0.0
        %2699 = vmatprep.subr.mxu0 0.0
        %2700 = vmatpush2.msra.mxu0 0.0
        %2701 = vmatprep.subr.mxu0 0.0
        %2702 = vmatpush2.msra.mxu0 0.0
        %2703 = vmatprep.subr.mxu0 0.0
        %2704 = vmatpush2.msra.mxu0 0.0
        %2705 = vmatprep.subr.mxu0 0.0
        %2706 = vmatpush2.msra.mxu0 0.0
        %2707 = vmatprep.subr.mxu0 0.0
        %2708 = vmatpush2.msra.mxu0 0.0
        %2709 = vmatprep.mubr.f32.mxu0 0.0
        %2710 = vmatmul.mubr.f32.gmra.mxu0 %v2641
        %v2711 = vpop.f32.mrf.mxu0
        %v2712 = vadd.f32 0.0, %v2711
        %v2713 = vpop.f32.mrf.mxu0
        %2714 = vmatprep.mubr.f32.mxu0 0.0
        %2715 = vmatmul.mubr.f32.gmra.mxu0 %v2643
        %v2716 = vpop.f32.mrf.mxu0
        %v2717 = vadd.f32 0.0, %v2716
        %v2718 = vpop.f32.mrf.mxu0
        %2719 = vdwg.mxu0
        %v2720 = vadd.f32 %v2630, %v2712
        %v2721 = vadd.f32 %v2631, %v2717
        %v2722 = vld [vmem:[%s5] sm:$0x1]
        %v2724 = vlaneseq
        %v2725 = vshrl.u32 %v2724, 7
        %v2726 = vsub.s32 0, %v2725
        %v2727 = vrot.slane %v2722, %v2726
        %v2729 = vmul.f32 %v2720, %v2727
        %v2730 = vmul.f32 %v2721, %v2727
        %v2731 = vld [vmem:[%s6] sm:$0x1]
        %v2733 = vlaneseq
        %v2734 = vshrl.u32 %v2733, 7
        %v2735 = vsub.s32 0, %v2734
        %v2736 = vrot.slane %v2731, %v2735
        %v2738 = vadd.f32 %v2729, %v2736
        %v2739 = vadd.f32 %v2730, %v2736
        %v2740 = vmax.f32 %v2738, 0.0
        %v2741 = vmax.f32 %v2739, 0.0
        %vm2742 = vcmask 392192
        %2743 = vst.msk [vmem:[#allocation4] sm:$0xff] %vm2742, 0.0
        %vm2744 = vcmask 386048
        %2745 = vst.msk [vmem:[#allocation4 + $0x8] sm:$0x3] %vm2744, 0.0
        %v2747 = vrot.slane %v2740, 1
        %v2749 = vmax.f32 %v2740, %v2747
        %2750 = vst.msk [vmem:[#allocation9] sm:$0x1] %vm1804, %v2749
        %2751 = vst.msk [vmem:[#allocation9 - $0x1] sm:$0x4] %vm1806, %v2749
        %2752 = vst.msk [vmem:[#allocation9 - $0x2] sm:$0x10] %vm1808, %v2749
        %2753 = vst.msk [vmem:[#allocation9 - $0x3] sm:$0x40] %vm1810, %v2749
        %v2755 = vrot.slane %v2741, 1
        %v2757 = vmax.f32 %v2741, %v2755
        %2758 = vst.msk [vmem:[#allocation9 + $0x4] sm:$0x1] %vm1804, %v2757
        %2759 = vst.msk [vmem:[#allocation9 + $0x3] sm:$0x4] %vm1806, %v2757
        %2760 = vst.msk [vmem:[#allocation9 + $0x2] sm:$0x10] %vm1808, %v2757
        %2761 = vst.msk [vmem:[#allocation9 + $0x1] sm:$0x40] %vm1810, %v2757
        %v2762 = vld [vmem:[#allocation9] sm:$0xff]
        %2764 = vrot.lane.b32.xlu0 %v2762, 120
        %v2765 = vpop.permute.xlu0 %2764
        %v2767 = vmax.f32 %v2762, %v2765
        %2769 = vrot.lane.b32.xlu0 %v2767, 8
        %v2770 = vpop.permute.xlu0 %2769
        %vm2772 = vcmask 130112
        %2773 = vst.msk [vmem:[#allocation4 + $0x1] sm:$0xff] %vm2772, %v2770
        %vm2774 = vcmask 195712
        %2775 = vst.msk [vmem:[#allocation4 + $0x1] sm:$0xff] %vm2774, %v2767
        %2776 = vrot.lane.b32.xlu0 %v2767, 120
        %v2777 = vpop.permute.xlu0 %2776
        %vm2779 = vcmask 261312
        %2780 = vst.msk [vmem:[#allocation4 + $0x1] sm:$0xff] %vm2779, %v2777
        %2781 = vrot.lane.b32.xlu0 %v2767, 112
        %v2782 = vpop.permute.xlu0 %2781
        %vm2784 = vcmask 326912
        %2785 = vst.msk [vmem:[#allocation4 + $0x1] sm:$0xff] %vm2784, %v2782
        %v2786 = vld [vmem:[#allocation4] sm:$0xff]
        %v2787 = vld [vmem:[%s7] sm:$0xff]
        %v2788 = vld [vmem:[%s7 + $0x8] sm:$0xff]
        %v2789 = vld [vmem:[%s7 + $0x10] sm:$0xff]
        %v2790 = vld [vmem:[%s7 + $0x18] sm:$0xff]
        %s2791 = scalar_lea.vmem %s7, 32
        %v2792 = vld [vmem:[%s2791] sm:$0xff]
        %v2793 = vld [vmem:[%s2791 + $0x8] sm:$0xff]
        %v2794 = vld [vmem:[%s2791 + $0x10] sm:$0xff]
        %v2795 = vld [vmem:[%s2791 + $0x18] sm:$0xff]
        %2797 = vrot.lane.b32.xlu0 %v2786, 120
        %v2798 = vpop.permute.xlu0 %2797
        %v2799 = vsel %vm1933, %v2798, 0
        %2801 = vmatprep.subr.mxu0 0.0
        %2802 = vmatpush1.msra.mxu0 0.0
        %2803 = vmatprep.subr.mxu0 0.0
        %2804 = vmatpush1.msra.mxu0 0.0
        %2805 = vmatprep.subr.mxu0 0.0
        %2806 = vmatpush1.msra.mxu0 0.0
        %2807 = vmatprep.subr.mxu0 0.0
        %2808 = vmatpush1.msra.mxu0 0.0
        %2809 = vmatprep.subr.mxu0 0.0
        %2810 = vmatpush1.msra.mxu0 0.0
        %2811 = vmatprep.subr.mxu0 0.0
        %2812 = vmatpush1.msra.mxu0 0.0
        %2813 = vmatprep.subr.mxu0 0.0
        %2814 = vmatpush1.msra.mxu0 0.0
        %2815 = vmatprep.subr.mxu0 0.0
        %2816 = vmatpush1.msra.mxu0 0.0
        %2817 = vmatprep.subr.mxu0 0.0
        %2818 = vmatpush1.msra.mxu0 0.0
        %2819 = vmatprep.subr.mxu0 0.0
        %2820 = vmatpush1.msra.mxu0 0.0
        %2821 = vmatprep.subr.mxu0 0.0
        %2822 = vmatpush1.msra.mxu0 0.0
        %2823 = vmatprep.subr.mxu0 0.0
        %2824 = vmatpush1.msra.mxu0 0.0
        %2825 = vmatprep.subr.mxu0 0.0
        %2826 = vmatpush1.msra.mxu0 %v2795
        %2827 = vmatprep.subr.mxu0 0.0
        %2828 = vmatpush1.msra.mxu0 %v2794
        %2829 = vmatprep.subr.mxu0 0.0
        %2830 = vmatpush1.msra.mxu0 %v2793
        %2831 = vmatprep.subr.mxu0 0.0
        %2832 = vmatpush1.msra.mxu0 %v2792
        %2833 = vmatprep.subr.mxu0 0.0
        %2834 = vmatpush2.msra.mxu0 0.0
        %2835 = vmatprep.subr.mxu0 0.0
        %2836 = vmatpush2.msra.mxu0 0.0
        %2837 = vmatprep.subr.mxu0 0.0
        %2838 = vmatpush2.msra.mxu0 0.0
        %2839 = vmatprep.subr.mxu0 0.0
        %2840 = vmatpush2.msra.mxu0 0.0
        %2841 = vmatprep.subr.mxu0 0.0
        %2842 = vmatpush2.msra.mxu0 0.0
        %2843 = vmatprep.subr.mxu0 0.0
        %2844 = vmatpush2.msra.mxu0 0.0
        %2845 = vmatprep.subr.mxu0 0.0
        %2846 = vmatpush2.msra.mxu0 0.0
        %2847 = vmatprep.subr.mxu0 0.0
        %2848 = vmatpush2.msra.mxu0 0.0
        %2849 = vmatprep.subr.mxu0 0.0
        %2850 = vmatpush2.msra.mxu0 0.0
        %2851 = vmatprep.subr.mxu0 0.0
        %2852 = vmatpush2.msra.mxu0 0.0
        %2853 = vmatprep.subr.mxu0 0.0
        %2854 = vmatpush2.msra.mxu0 0.0
        %2855 = vmatprep.subr.mxu0 0.0
        %2856 = vmatpush2.msra.mxu0 0.0
        %2857 = vmatprep.subr.mxu0 0.0
        %2858 = vmatpush2.msra.mxu0 0.0
        %2859 = vmatprep.subr.mxu0 0.0
        %2860 = vmatpush2.msra.mxu0 0.0
        %2861 = vmatprep.subr.mxu0 0.0
        %2862 = vmatpush2.msra.mxu0 0.0
        %2863 = vmatprep.subr.mxu0 0.0
        %2864 = vmatpush2.msra.mxu0 0.0
        %2865 = vmatprep.mubr.f32.mxu0 0.0
        %2866 = vmatmul.mubr.f32.gmra.mxu0 %v2799
        %v2867 = vpop.f32.mrf.mxu0
        %v2868 = vadd.f32 0.0, %v2867
        %v2869 = vpop.f32.mrf.mxu0
        %2870 = vdwg.mxu0
        %v2871 = vsel %vm1933, %v2786, 0
        %2873 = vmatprep.subr.mxu0 0.0
        %2874 = vmatpush1.msra.mxu0 0.0
        %2875 = vmatprep.subr.mxu0 0.0
        %2876 = vmatpush1.msra.mxu0 0.0
        %2877 = vmatprep.subr.mxu0 0.0
        %2878 = vmatpush1.msra.mxu0 0.0
        %2879 = vmatprep.subr.mxu0 0.0
        %2880 = vmatpush1.msra.mxu0 0.0
        %2881 = vmatprep.subr.mxu0 0.0
        %2882 = vmatpush1.msra.mxu0 0.0
        %2883 = vmatprep.subr.mxu0 0.0
        %2884 = vmatpush1.msra.mxu0 0.0
        %2885 = vmatprep.subr.mxu0 0.0
        %2886 = vmatpush1.msra.mxu0 0.0
        %2887 = vmatprep.subr.mxu0 0.0
        %2888 = vmatpush1.msra.mxu0 0.0
        %2889 = vmatprep.subr.mxu0 0.0
        %2890 = vmatpush1.msra.mxu0 0.0
        %2891 = vmatprep.subr.mxu0 0.0
        %2892 = vmatpush1.msra.mxu0 0.0
        %2893 = vmatprep.subr.mxu0 0.0
        %2894 = vmatpush1.msra.mxu0 0.0
        %2895 = vmatprep.subr.mxu0 0.0
        %2896 = vmatpush1.msra.mxu0 0.0
        %2897 = vmatprep.subr.mxu0 0.0
        %2898 = vmatpush1.msra.mxu0 %v2790
        %2899 = vmatprep.subr.mxu0 0.0
        %2900 = vmatpush1.msra.mxu0 %v2789
        %2901 = vmatprep.subr.mxu0 0.0
        %2902 = vmatpush1.msra.mxu0 %v2788
        %2903 = vmatprep.subr.mxu0 0.0
        %2904 = vmatpush1.msra.mxu0 %v2787
        %2905 = vmatprep.subr.mxu0 0.0
        %2906 = vmatpush2.msra.mxu0 0.0
        %2907 = vmatprep.subr.mxu0 0.0
        %2908 = vmatpush2.msra.mxu0 0.0
        %2909 = vmatprep.subr.mxu0 0.0
        %2910 = vmatpush2.msra.mxu0 0.0
        %2911 = vmatprep.subr.mxu0 0.0
        %2912 = vmatpush2.msra.mxu0 0.0
        %2913 = vmatprep.subr.mxu0 0.0
        %2914 = vmatpush2.msra.mxu0 0.0
        %2915 = vmatprep.subr.mxu0 0.0
        %2916 = vmatpush2.msra.mxu0 0.0
        %2917 = vmatprep.subr.mxu0 0.0
        %2918 = vmatpush2.msra.mxu0 0.0
        %2919 = vmatprep.subr.mxu0 0.0
        %2920 = vmatpush2.msra.mxu0 0.0
        %2921 = vmatprep.subr.mxu0 0.0
        %2922 = vmatpush2.msra.mxu0 0.0
        %2923 = vmatprep.subr.mxu0 0.0
        %2924 = vmatpush2.msra.mxu0 0.0
        %2925 = vmatprep.subr.mxu0 0.0
        %2926 = vmatpush2.msra.mxu0 0.0
        %2927 = vmatprep.subr.mxu0 0.0
        %2928 = vmatpush2.msra.mxu0 0.0
        %2929 = vmatprep.subr.mxu0 0.0
        %2930 = vmatpush2.msra.mxu0 0.0
        %2931 = vmatprep.subr.mxu0 0.0
        %2932 = vmatpush2.msra.mxu0 0.0
        %2933 = vmatprep.subr.mxu0 0.0
        %2934 = vmatpush2.msra.mxu0 0.0
        %2935 = vmatprep.subr.mxu0 0.0
        %2936 = vmatpush2.msra.mxu0 0.0
        %2937 = vmatprep.mubr.f32.mxu0 0.0
        %2938 = vmatmul.mubr.f32.gmra.mxu0 %v2871
        %v2939 = vpop.f32.mrf.mxu0
        %v2940 = vadd.f32 %v2868, %v2939
        %v2941 = vpop.f32.mrf.mxu0
        %2942 = vdwg.mxu0
        %s2943 = scalar_lea.vmem %s7, 64
        %v2944 = vld [vmem:[%s2943] sm:$0xff]
        %v2945 = vld [vmem:[%s2943 + $0x8] sm:$0xff]
        %v2946 = vld [vmem:[%s2943 + $0x10] sm:$0xff]
        %v2947 = vld [vmem:[%s2943 + $0x18] sm:$0xff]
        %2948 = vrot.lane.b32.xlu0 %v2786, 112
        %v2949 = vpop.permute.xlu0 %2948
        %v2950 = vsel %vm1933, %v2949, 0
        %2952 = vmatprep.subr.mxu0 0.0
        %2953 = vmatpush1.msra.mxu0 0.0
        %2954 = vmatprep.subr.mxu0 0.0
        %2955 = vmatpush1.msra.mxu0 0.0
        %2956 = vmatprep.subr.mxu0 0.0
        %2957 = vmatpush1.msra.mxu0 0.0
        %2958 = vmatprep.subr.mxu0 0.0
        %2959 = vmatpush1.msra.mxu0 0.0
        %2960 = vmatprep.subr.mxu0 0.0
        %2961 = vmatpush1.msra.mxu0 0.0
        %2962 = vmatprep.subr.mxu0 0.0
        %2963 = vmatpush1.msra.mxu0 0.0
        %2964 = vmatprep.subr.mxu0 0.0
        %2965 = vmatpush1.msra.mxu0 0.0
        %2966 = vmatprep.subr.mxu0 0.0
        %2967 = vmatpush1.msra.mxu0 0.0
        %2968 = vmatprep.subr.mxu0 0.0
        %2969 = vmatpush1.msra.mxu0 0.0
        %2970 = vmatprep.subr.mxu0 0.0
        %2971 = vmatpush1.msra.mxu0 0.0
        %2972 = vmatprep.subr.mxu0 0.0
        %2973 = vmatpush1.msra.mxu0 0.0
        %2974 = vmatprep.subr.mxu0 0.0
        %2975 = vmatpush1.msra.mxu0 0.0
        %2976 = vmatprep.subr.mxu0 0.0
        %2977 = vmatpush1.msra.mxu0 %v2947
        %2978 = vmatprep.subr.mxu0 0.0
        %2979 = vmatpush1.msra.mxu0 %v2946
        %2980 = vmatprep.subr.mxu0 0.0
        %2981 = vmatpush1.msra.mxu0 %v2945
        %2982 = vmatprep.subr.mxu0 0.0
        %2983 = vmatpush1.msra.mxu0 %v2944
        %2984 = vmatprep.subr.mxu0 0.0
        %2985 = vmatpush2.msra.mxu0 0.0
        %2986 = vmatprep.subr.mxu0 0.0
        %2987 = vmatpush2.msra.mxu0 0.0
        %2988 = vmatprep.subr.mxu0 0.0
        %2989 = vmatpush2.msra.mxu0 0.0
        %2990 = vmatprep.subr.mxu0 0.0
        %2991 = vmatpush2.msra.mxu0 0.0
        %2992 = vmatprep.subr.mxu0 0.0
        %2993 = vmatpush2.msra.mxu0 0.0
        %2994 = vmatprep.subr.mxu0 0.0
        %2995 = vmatpush2.msra.mxu0 0.0
        %2996 = vmatprep.subr.mxu0 0.0
        %2997 = vmatpush2.msra.mxu0 0.0
        %2998 = vmatprep.subr.mxu0 0.0
        %2999 = vmatpush2.msra.mxu0 0.0
        %3000 = vmatprep.subr.mxu0 0.0
        %3001 = vmatpush2.msra.mxu0 0.0
        %3002 = vmatprep.subr.mxu0 0.0
        %3003 = vmatpush2.msra.mxu0 0.0
        %3004 = vmatprep.subr.mxu0 0.0
        %3005 = vmatpush2.msra.mxu0 0.0
        %3006 = vmatprep.subr.mxu0 0.0
        %3007 = vmatpush2.msra.mxu0 0.0
        %3008 = vmatprep.subr.mxu0 0.0
        %3009 = vmatpush2.msra.mxu0 0.0
        %3010 = vmatprep.subr.mxu0 0.0
        %3011 = vmatpush2.msra.mxu0 0.0
        %3012 = vmatprep.subr.mxu0 0.0
        %3013 = vmatpush2.msra.mxu0 0.0
        %3014 = vmatprep.subr.mxu0 0.0
        %3015 = vmatpush2.msra.mxu0 0.0
        %3016 = vmatprep.mubr.f32.mxu0 0.0
        %3017 = vmatmul.mubr.f32.gmra.mxu0 %v2950
        %v3018 = vpop.f32.mrf.mxu0
        %v3019 = vadd.f32 0.0, %v3018
        %v3020 = vpop.f32.mrf.mxu0
        %3021 = vdwg.mxu0
        %v3022 = vadd.f32 %v2940, %v3019
        %v3023 = vld [vmem:[#allocation4 + $0x1] sm:$0xff]
        %s3024 = scalar_lea.vmem %s7, 96
        %v3025 = vld [vmem:[%s3024] sm:$0xff]
        %v3026 = vld [vmem:[%s3024 + $0x8] sm:$0xff]
        %v3027 = vld [vmem:[%s3024 + $0x10] sm:$0xff]
        %v3028 = vld [vmem:[%s3024 + $0x18] sm:$0xff]
        %v3030 = vsel %vm1933, %v3023, 0
        %3032 = vmatprep.subr.mxu0 0.0
        %3033 = vmatpush1.msra.mxu0 0.0
        %3034 = vmatprep.subr.mxu0 0.0
        %3035 = vmatpush1.msra.mxu0 0.0
        %3036 = vmatprep.subr.mxu0 0.0
        %3037 = vmatpush1.msra.mxu0 0.0
        %3038 = vmatprep.subr.mxu0 0.0
        %3039 = vmatpush1.msra.mxu0 0.0
        %3040 = vmatprep.subr.mxu0 0.0
        %3041 = vmatpush1.msra.mxu0 0.0
        %3042 = vmatprep.subr.mxu0 0.0
        %3043 = vmatpush1.msra.mxu0 0.0
        %3044 = vmatprep.subr.mxu0 0.0
        %3045 = vmatpush1.msra.mxu0 0.0
        %3046 = vmatprep.subr.mxu0 0.0
        %3047 = vmatpush1.msra.mxu0 0.0
        %3048 = vmatprep.subr.mxu0 0.0
        %3049 = vmatpush1.msra.mxu0 0.0
        %3050 = vmatprep.subr.mxu0 0.0
        %3051 = vmatpush1.msra.mxu0 0.0
        %3052 = vmatprep.subr.mxu0 0.0
        %3053 = vmatpush1.msra.mxu0 0.0
        %3054 = vmatprep.subr.mxu0 0.0
        %3055 = vmatpush1.msra.mxu0 0.0
        %3056 = vmatprep.subr.mxu0 0.0
        %3057 = vmatpush1.msra.mxu0 %v3028
        %3058 = vmatprep.subr.mxu0 0.0
        %3059 = vmatpush1.msra.mxu0 %v3027
        %3060 = vmatprep.subr.mxu0 0.0
        %3061 = vmatpush1.msra.mxu0 %v3026
        %3062 = vmatprep.subr.mxu0 0.0
        %3063 = vmatpush1.msra.mxu0 %v3025
        %3064 = vmatprep.subr.mxu0 0.0
        %3065 = vmatpush2.msra.mxu0 0.0
        %3066 = vmatprep.subr.mxu0 0.0
        %3067 = vmatpush2.msra.mxu0 0.0
        %3068 = vmatprep.subr.mxu0 0.0
        %3069 = vmatpush2.msra.mxu0 0.0
        %3070 = vmatprep.subr.mxu0 0.0
        %3071 = vmatpush2.msra.mxu0 0.0
        %3072 = vmatprep.subr.mxu0 0.0
        %3073 = vmatpush2.msra.mxu0 0.0
        %3074 = vmatprep.subr.mxu0 0.0
        %3075 = vmatpush2.msra.mxu0 0.0
        %3076 = vmatprep.subr.mxu0 0.0
        %3077 = vmatpush2.msra.mxu0 0.0
        %3078 = vmatprep.subr.mxu0 0.0
        %3079 = vmatpush2.msra.mxu0 0.0
        %3080 = vmatprep.subr.mxu0 0.0
        %3081 = vmatpush2.msra.mxu0 0.0
        %3082 = vmatprep.subr.mxu0 0.0
        %3083 = vmatpush2.msra.mxu0 0.0
        %3084 = vmatprep.subr.mxu0 0.0
        %3085 = vmatpush2.msra.mxu0 0.0
        %3086 = vmatprep.subr.mxu0 0.0
        %3087 = vmatpush2.msra.mxu0 0.0
        %3088 = vmatprep.subr.mxu0 0.0
        %3089 = vmatpush2.msra.mxu0 0.0
        %3090 = vmatprep.subr.mxu0 0.0
        %3091 = vmatpush2.msra.mxu0 0.0
        %3092 = vmatprep.subr.mxu0 0.0
        %3093 = vmatpush2.msra.mxu0 0.0
        %3094 = vmatprep.subr.mxu0 0.0
        %3095 = vmatpush2.msra.mxu0 0.0
        %3096 = vmatprep.mubr.f32.mxu0 0.0
        %3097 = vmatmul.mubr.f32.gmra.mxu0 %v3030
        %v3098 = vpop.f32.mrf.mxu0
        %v3099 = vadd.f32 0.0, %v3098
        %v3100 = vpop.f32.mrf.mxu0
        %3101 = vdwg.mxu0
        %v3102 = vadd.f32 %v3022, %v3099
        %s3103 = scalar_lea.vmem %s7, 128
        %v3104 = vld [vmem:[%s3103] sm:$0xff]
        %v3105 = vld [vmem:[%s3103 + $0x8] sm:$0xff]
        %v3106 = vld [vmem:[%s3103 + $0x10] sm:$0xff]
        %v3107 = vld [vmem:[%s3103 + $0x18] sm:$0xff]
        %3108 = vrot.lane.b32.xlu0 %v3023, 120
        %v3109 = vpop.permute.xlu0 %3108
        %v3110 = vsel %vm1933, %v3109, 0
        %3112 = vmatprep.subr.mxu0 0.0
        %3113 = vmatpush1.msra.mxu0 0.0
        %3114 = vmatprep.subr.mxu0 0.0
        %3115 = vmatpush1.msra.mxu0 0.0
        %3116 = vmatprep.subr.mxu0 0.0
        %3117 = vmatpush1.msra.mxu0 0.0
        %3118 = vmatprep.subr.mxu0 0.0
        %3119 = vmatpush1.msra.mxu0 0.0
        %3120 = vmatprep.subr.mxu0 0.0
        %3121 = vmatpush1.msra.mxu0 0.0
        %3122 = vmatprep.subr.mxu0 0.0
        %3123 = vmatpush1.msra.mxu0 0.0
        %3124 = vmatprep.subr.mxu0 0.0
        %3125 = vmatpush1.msra.mxu0 0.0
        %3126 = vmatprep.subr.mxu0 0.0
        %3127 = vmatpush1.msra.mxu0 0.0
        %3128 = vmatprep.subr.mxu0 0.0
        %3129 = vmatpush1.msra.mxu0 0.0
        %3130 = vmatprep.subr.mxu0 0.0
        %3131 = vmatpush1.msra.mxu0 0.0
        %3132 = vmatprep.subr.mxu0 0.0
        %3133 = vmatpush1.msra.mxu0 0.0
        %3134 = vmatprep.subr.mxu0 0.0
        %3135 = vmatpush1.msra.mxu0 0.0
        %3136 = vmatprep.subr.mxu0 0.0
        %3137 = vmatpush1.msra.mxu0 %v3107
        %3138 = vmatprep.subr.mxu0 0.0
        %3139 = vmatpush1.msra.mxu0 %v3106
        %3140 = vmatprep.subr.mxu0 0.0
        %3141 = vmatpush1.msra.mxu0 %v3105
        %3142 = vmatprep.subr.mxu0 0.0
        %3143 = vmatpush1.msra.mxu0 %v3104
        %3144 = vmatprep.subr.mxu0 0.0
        %3145 = vmatpush2.msra.mxu0 0.0
        %3146 = vmatprep.subr.mxu0 0.0
        %3147 = vmatpush2.msra.mxu0 0.0
        %3148 = vmatprep.subr.mxu0 0.0
        %3149 = vmatpush2.msra.mxu0 0.0
        %3150 = vmatprep.subr.mxu0 0.0
        %3151 = vmatpush2.msra.mxu0 0.0
        %3152 = vmatprep.subr.mxu0 0.0
        %3153 = vmatpush2.msra.mxu0 0.0
        %3154 = vmatprep.subr.mxu0 0.0
        %3155 = vmatpush2.msra.mxu0 0.0
        %3156 = vmatprep.subr.mxu0 0.0
        %3157 = vmatpush2.msra.mxu0 0.0
        %3158 = vmatprep.subr.mxu0 0.0
        %3159 = vmatpush2.msra.mxu0 0.0
        %3160 = vmatprep.subr.mxu0 0.0
        %3161 = vmatpush2.msra.mxu0 0.0
        %3162 = vmatprep.subr.mxu0 0.0
        %3163 = vmatpush2.msra.mxu0 0.0
        %3164 = vmatprep.subr.mxu0 0.0
        %3165 = vmatpush2.msra.mxu0 0.0
        %3166 = vmatprep.subr.mxu0 0.0
        %3167 = vmatpush2.msra.mxu0 0.0
        %3168 = vmatprep.subr.mxu0 0.0
        %3169 = vmatpush2.msra.mxu0 0.0
        %3170 = vmatprep.subr.mxu0 0.0
        %3171 = vmatpush2.msra.mxu0 0.0
        %3172 = vmatprep.subr.mxu0 0.0
        %3173 = vmatpush2.msra.mxu0 0.0
        %3174 = vmatprep.subr.mxu0 0.0
        %3175 = vmatpush2.msra.mxu0 0.0
        %3176 = vmatprep.mubr.f32.mxu0 0.0
        %3177 = vmatmul.mubr.f32.gmra.mxu0 %v3110
        %v3178 = vpop.f32.mrf.mxu0
        %v3179 = vadd.f32 0.0, %v3178
        %v3180 = vpop.f32.mrf.mxu0
        %3181 = vdwg.mxu0
        %v3182 = vadd.f32 %v3102, %v3179
        %s3183 = scalar_lea.vmem %s7, 160
        %v3184 = vld [vmem:[%s3183] sm:$0xff]
        %v3185 = vld [vmem:[%s3183 + $0x8] sm:$0xff]
        %v3186 = vld [vmem:[%s3183 + $0x10] sm:$0xff]
        %v3187 = vld [vmem:[%s3183 + $0x18] sm:$0xff]
        %3188 = vrot.lane.b32.xlu0 %v3023, 112
        %v3189 = vpop.permute.xlu0 %3188
        %v3190 = vsel %vm1933, %v3189, 0
        %3192 = vmatprep.subr.mxu0 0.0
        %3193 = vmatpush1.msra.mxu0 0.0
        %3194 = vmatprep.subr.mxu0 0.0
        %3195 = vmatpush1.msra.mxu0 0.0
        %3196 = vmatprep.subr.mxu0 0.0
        %3197 = vmatpush1.msra.mxu0 0.0
        %3198 = vmatprep.subr.mxu0 0.0
        %3199 = vmatpush1.msra.mxu0 0.0
        %3200 = vmatprep.subr.mxu0 0.0
        %3201 = vmatpush1.msra.mxu0 0.0
        %3202 = vmatprep.subr.mxu0 0.0
        %3203 = vmatpush1.msra.mxu0 0.0
        %3204 = vmatprep.subr.mxu0 0.0
        %3205 = vmatpush1.msra.mxu0 0.0
        %3206 = vmatprep.subr.mxu0 0.0
        %3207 = vmatpush1.msra.mxu0 0.0
        %3208 = vmatprep.subr.mxu0 0.0
        %3209 = vmatpush1.msra.mxu0 0.0
        %3210 = vmatprep.subr.mxu0 0.0
        %3211 = vmatpush1.msra.mxu0 0.0
        %3212 = vmatprep.subr.mxu0 0.0
        %3213 = vmatpush1.msra.mxu0 0.0
        %3214 = vmatprep.subr.mxu0 0.0
        %3215 = vmatpush1.msra.mxu0 0.0
        %3216 = vmatprep.subr.mxu0 0.0
        %3217 = vmatpush1.msra.mxu0 %v3187
        %3218 = vmatprep.subr.mxu0 0.0
        %3219 = vmatpush1.msra.mxu0 %v3186
        %3220 = vmatprep.subr.mxu0 0.0
        %3221 = vmatpush1.msra.mxu0 %v3185
        %3222 = vmatprep.subr.mxu0 0.0
        %3223 = vmatpush1.msra.mxu0 %v3184
        %3224 = vmatprep.subr.mxu0 0.0
        %3225 = vmatpush2.msra.mxu0 0.0
        %3226 = vmatprep.subr.mxu0 0.0
        %3227 = vmatpush2.msra.mxu0 0.0
        %3228 = vmatprep.subr.mxu0 0.0
        %3229 = vmatpush2.msra.mxu0 0.0
        %3230 = vmatprep.subr.mxu0 0.0
        %3231 = vmatpush2.msra.mxu0 0.0
        %3232 = vmatprep.subr.mxu0 0.0
        %3233 = vmatpush2.msra.mxu0 0.0
        %3234 = vmatprep.subr.mxu0 0.0
        %3235 = vmatpush2.msra.mxu0 0.0
        %3236 = vmatprep.subr.mxu0 0.0
        %3237 = vmatpush2.msra.mxu0 0.0
        %3238 = vmatprep.subr.mxu0 0.0
        %3239 = vmatpush2.msra.mxu0 0.0
        %3240 = vmatprep.subr.mxu0 0.0
        %3241 = vmatpush2.msra.mxu0 0.0
        %3242 = vmatprep.subr.mxu0 0.0
        %3243 = vmatpush2.msra.mxu0 0.0
        %3244 = vmatprep.subr.mxu0 0.0
        %3245 = vmatpush2.msra.mxu0 0.0
        %3246 = vmatprep.subr.mxu0 0.0
        %3247 = vmatpush2.msra.mxu0 0.0
        %3248 = vmatprep.subr.mxu0 0.0
        %3249 = vmatpush2.msra.mxu0 0.0
        %3250 = vmatprep.subr.mxu0 0.0
        %3251 = vmatpush2.msra.mxu0 0.0
        %3252 = vmatprep.subr.mxu0 0.0
        %3253 = vmatpush2.msra.mxu0 0.0
        %3254 = vmatprep.subr.mxu0 0.0
        %3255 = vmatpush2.msra.mxu0 0.0
        %3256 = vmatprep.mubr.f32.mxu0 0.0
        %3257 = vmatmul.mubr.f32.gmra.mxu0 %v3190
        %v3258 = vpop.f32.mrf.mxu0
        %v3259 = vadd.f32 0.0, %v3258
        %v3260 = vpop.f32.mrf.mxu0
        %3261 = vdwg.mxu0
        %v3262 = vadd.f32 %v3182, %v3259
        %v3263 = vld [vmem:[#allocation4 + $0x2] sm:$0xff]
        %s3264 = scalar_lea.vmem %s7, 192
        %v3265 = vld [vmem:[%s3264] sm:$0xff]
        %v3266 = vld [vmem:[%s3264 + $0x8] sm:$0xff]
        %v3267 = vld [vmem:[%s3264 + $0x10] sm:$0xff]
        %v3268 = vld [vmem:[%s3264 + $0x18] sm:$0xff]
        %v3270 = vsel %vm1933, %v3263, 0
        %3272 = vmatprep.subr.mxu0 0.0
        %3273 = vmatpush1.msra.mxu0 0.0
        %3274 = vmatprep.subr.mxu0 0.0
        %3275 = vmatpush1.msra.mxu0 0.0
        %3276 = vmatprep.subr.mxu0 0.0
        %3277 = vmatpush1.msra.mxu0 0.0
        %3278 = vmatprep.subr.mxu0 0.0
        %3279 = vmatpush1.msra.mxu0 0.0
        %3280 = vmatprep.subr.mxu0 0.0
        %3281 = vmatpush1.msra.mxu0 0.0
        %3282 = vmatprep.subr.mxu0 0.0
        %3283 = vmatpush1.msra.mxu0 0.0
        %3284 = vmatprep.subr.mxu0 0.0
        %3285 = vmatpush1.msra.mxu0 0.0
        %3286 = vmatprep.subr.mxu0 0.0
        %3287 = vmatpush1.msra.mxu0 0.0
        %3288 = vmatprep.subr.mxu0 0.0
        %3289 = vmatpush1.msra.mxu0 0.0
        %3290 = vmatprep.subr.mxu0 0.0
        %3291 = vmatpush1.msra.mxu0 0.0
        %3292 = vmatprep.subr.mxu0 0.0
        %3293 = vmatpush1.msra.mxu0 0.0
        %3294 = vmatprep.subr.mxu0 0.0
        %3295 = vmatpush1.msra.mxu0 0.0
        %3296 = vmatprep.subr.mxu0 0.0
        %3297 = vmatpush1.msra.mxu0 %v3268
        %3298 = vmatprep.subr.mxu0 0.0
        %3299 = vmatpush1.msra.mxu0 %v3267
        %3300 = vmatprep.subr.mxu0 0.0
        %3301 = vmatpush1.msra.mxu0 %v3266
        %3302 = vmatprep.subr.mxu0 0.0
        %3303 = vmatpush1.msra.mxu0 %v3265
        %3304 = vmatprep.subr.mxu0 0.0
        %3305 = vmatpush2.msra.mxu0 0.0
        %3306 = vmatprep.subr.mxu0 0.0
        %3307 = vmatpush2.msra.mxu0 0.0
        %3308 = vmatprep.subr.mxu0 0.0
        %3309 = vmatpush2.msra.mxu0 0.0
        %3310 = vmatprep.subr.mxu0 0.0
        %3311 = vmatpush2.msra.mxu0 0.0
        %3312 = vmatprep.subr.mxu0 0.0
        %3313 = vmatpush2.msra.mxu0 0.0
        %3314 = vmatprep.subr.mxu0 0.0
        %3315 = vmatpush2.msra.mxu0 0.0
        %3316 = vmatprep.subr.mxu0 0.0
        %3317 = vmatpush2.msra.mxu0 0.0
        %3318 = vmatprep.subr.mxu0 0.0
        %3319 = vmatpush2.msra.mxu0 0.0
        %3320 = vmatprep.subr.mxu0 0.0
        %3321 = vmatpush2.msra.mxu0 0.0
        %3322 = vmatprep.subr.mxu0 0.0
        %3323 = vmatpush2.msra.mxu0 0.0
        %3324 = vmatprep.subr.mxu0 0.0
        %3325 = vmatpush2.msra.mxu0 0.0
        %3326 = vmatprep.subr.mxu0 0.0
        %3327 = vmatpush2.msra.mxu0 0.0
        %3328 = vmatprep.subr.mxu0 0.0
        %3329 = vmatpush2.msra.mxu0 0.0
        %3330 = vmatprep.subr.mxu0 0.0
        %3331 = vmatpush2.msra.mxu0 0.0
        %3332 = vmatprep.subr.mxu0 0.0
        %3333 = vmatpush2.msra.mxu0 0.0
        %3334 = vmatprep.subr.mxu0 0.0
        %3335 = vmatpush2.msra.mxu0 0.0
        %3336 = vmatprep.mubr.f32.mxu0 0.0
        %3337 = vmatmul.mubr.f32.gmra.mxu0 %v3270
        %v3338 = vpop.f32.mrf.mxu0
        %v3339 = vadd.f32 0.0, %v3338
        %v3340 = vpop.f32.mrf.mxu0
        %3341 = vdwg.mxu0
        %v3342 = vadd.f32 %v3262, %v3339
        %s3343 = scalar_lea.vmem %s7, 224
        %v3344 = vld [vmem:[%s3343] sm:$0xff]
        %v3345 = vld [vmem:[%s3343 + $0x8] sm:$0xff]
        %v3346 = vld [vmem:[%s3343 + $0x10] sm:$0xff]
        %v3347 = vld [vmem:[%s3343 + $0x18] sm:$0xff]
        %3348 = vrot.lane.b32.xlu0 %v3263, 120
        %v3349 = vpop.permute.xlu0 %3348
        %v3350 = vsel %vm1933, %v3349, 0
        %3352 = vmatprep.subr.mxu0 0.0
        %3353 = vmatpush1.msra.mxu0 0.0
        %3354 = vmatprep.subr.mxu0 0.0
        %3355 = vmatpush1.msra.mxu0 0.0
        %3356 = vmatprep.subr.mxu0 0.0
        %3357 = vmatpush1.msra.mxu0 0.0
        %3358 = vmatprep.subr.mxu0 0.0
        %3359 = vmatpush1.msra.mxu0 0.0
        %3360 = vmatprep.subr.mxu0 0.0
        %3361 = vmatpush1.msra.mxu0 0.0
        %3362 = vmatprep.subr.mxu0 0.0
        %3363 = vmatpush1.msra.mxu0 0.0
        %3364 = vmatprep.subr.mxu0 0.0
        %3365 = vmatpush1.msra.mxu0 0.0
        %3366 = vmatprep.subr.mxu0 0.0
        %3367 = vmatpush1.msra.mxu0 0.0
        %3368 = vmatprep.subr.mxu0 0.0
        %3369 = vmatpush1.msra.mxu0 0.0
        %3370 = vmatprep.subr.mxu0 0.0
        %3371 = vmatpush1.msra.mxu0 0.0
        %3372 = vmatprep.subr.mxu0 0.0
        %3373 = vmatpush1.msra.mxu0 0.0
        %3374 = vmatprep.subr.mxu0 0.0
        %3375 = vmatpush1.msra.mxu0 0.0
        %3376 = vmatprep.subr.mxu0 0.0
        %3377 = vmatpush1.msra.mxu0 %v3347
        %3378 = vmatprep.subr.mxu0 0.0
        %3379 = vmatpush1.msra.mxu0 %v3346
        %3380 = vmatprep.subr.mxu0 0.0
        %3381 = vmatpush1.msra.mxu0 %v3345
        %3382 = vmatprep.subr.mxu0 0.0
        %3383 = vmatpush1.msra.mxu0 %v3344
        %3384 = vmatprep.subr.mxu0 0.0
        %3385 = vmatpush2.msra.mxu0 0.0
        %3386 = vmatprep.subr.mxu0 0.0
        %3387 = vmatpush2.msra.mxu0 0.0
        %3388 = vmatprep.subr.mxu0 0.0
        %3389 = vmatpush2.msra.mxu0 0.0
        %3390 = vmatprep.subr.mxu0 0.0
        %3391 = vmatpush2.msra.mxu0 0.0
        %3392 = vmatprep.subr.mxu0 0.0
        %3393 = vmatpush2.msra.mxu0 0.0
        %3394 = vmatprep.subr.mxu0 0.0
        %3395 = vmatpush2.msra.mxu0 0.0
        %3396 = vmatprep.subr.mxu0 0.0
        %3397 = vmatpush2.msra.mxu0 0.0
        %3398 = vmatprep.subr.mxu0 0.0
        %3399 = vmatpush2.msra.mxu0 0.0
        %3400 = vmatprep.subr.mxu0 0.0
        %3401 = vmatpush2.msra.mxu0 0.0
        %3402 = vmatprep.subr.mxu0 0.0
        %3403 = vmatpush2.msra.mxu0 0.0
        %3404 = vmatprep.subr.mxu0 0.0
        %3405 = vmatpush2.msra.mxu0 0.0
        %3406 = vmatprep.subr.mxu0 0.0
        %3407 = vmatpush2.msra.mxu0 0.0
        %3408 = vmatprep.subr.mxu0 0.0
        %3409 = vmatpush2.msra.mxu0 0.0
        %3410 = vmatprep.subr.mxu0 0.0
        %3411 = vmatpush2.msra.mxu0 0.0
        %3412 = vmatprep.subr.mxu0 0.0
        %3413 = vmatpush2.msra.mxu0 0.0
        %3414 = vmatprep.subr.mxu0 0.0
        %3415 = vmatpush2.msra.mxu0 0.0
        %3416 = vmatprep.mubr.f32.mxu0 0.0
        %3417 = vmatmul.mubr.f32.gmra.mxu0 %v3350
        %v3418 = vpop.f32.mrf.mxu0
        %v3419 = vadd.f32 0.0, %v3418
        %v3420 = vpop.f32.mrf.mxu0
        %3421 = vdwg.mxu0
        %v3422 = vadd.f32 %v3342, %v3419
        %s3423 = scalar_lea.vmem %s7, 256
        %v3424 = vld [vmem:[%s3423] sm:$0xff]
        %v3425 = vld [vmem:[%s3423 + $0x8] sm:$0xff]
        %v3426 = vld [vmem:[%s3423 + $0x10] sm:$0xff]
        %v3427 = vld [vmem:[%s3423 + $0x18] sm:$0xff]
        %3428 = vrot.lane.b32.xlu0 %v3263, 112
        %v3429 = vpop.permute.xlu0 %3428
        %v3430 = vsel %vm1933, %v3429, 0
        %3432 = vmatprep.subr.mxu0 0.0
        %3433 = vmatpush1.msra.mxu0 0.0
        %3434 = vmatprep.subr.mxu0 0.0
        %3435 = vmatpush1.msra.mxu0 0.0
        %3436 = vmatprep.subr.mxu0 0.0
        %3437 = vmatpush1.msra.mxu0 0.0
        %3438 = vmatprep.subr.mxu0 0.0
        %3439 = vmatpush1.msra.mxu0 0.0
        %3440 = vmatprep.subr.mxu0 0.0
        %3441 = vmatpush1.msra.mxu0 0.0
        %3442 = vmatprep.subr.mxu0 0.0
        %3443 = vmatpush1.msra.mxu0 0.0
        %3444 = vmatprep.subr.mxu0 0.0
        %3445 = vmatpush1.msra.mxu0 0.0
        %3446 = vmatprep.subr.mxu0 0.0
        %3447 = vmatpush1.msra.mxu0 0.0
        %3448 = vmatprep.subr.mxu0 0.0
        %3449 = vmatpush1.msra.mxu0 0.0
        %3450 = vmatprep.subr.mxu0 0.0
        %3451 = vmatpush1.msra.mxu0 0.0
        %3452 = vmatprep.subr.mxu0 0.0
        %3453 = vmatpush1.msra.mxu0 0.0
        %3454 = vmatprep.subr.mxu0 0.0
        %3455 = vmatpush1.msra.mxu0 0.0
        %3456 = vmatprep.subr.mxu0 0.0
        %3457 = vmatpush1.msra.mxu0 %v3427
        %3458 = vmatprep.subr.mxu0 0.0
        %3459 = vmatpush1.msra.mxu0 %v3426
        %3460 = vmatprep.subr.mxu0 0.0
        %3461 = vmatpush1.msra.mxu0 %v3425
        %3462 = vmatprep.subr.mxu0 0.0
        %3463 = vmatpush1.msra.mxu0 %v3424
        %3464 = vmatprep.subr.mxu0 0.0
        %3465 = vmatpush2.msra.mxu0 0.0
        %3466 = vmatprep.subr.mxu0 0.0
        %3467 = vmatpush2.msra.mxu0 0.0
        %3468 = vmatprep.subr.mxu0 0.0
        %3469 = vmatpush2.msra.mxu0 0.0
        %3470 = vmatprep.subr.mxu0 0.0
        %3471 = vmatpush2.msra.mxu0 0.0
        %3472 = vmatprep.subr.mxu0 0.0
        %3473 = vmatpush2.msra.mxu0 0.0
        %3474 = vmatprep.subr.mxu0 0.0
        %3475 = vmatpush2.msra.mxu0 0.0
        %3476 = vmatprep.subr.mxu0 0.0
        %3477 = vmatpush2.msra.mxu0 0.0
        %3478 = vmatprep.subr.mxu0 0.0
        %3479 = vmatpush2.msra.mxu0 0.0
        %3480 = vmatprep.subr.mxu0 0.0
        %3481 = vmatpush2.msra.mxu0 0.0
        %3482 = vmatprep.subr.mxu0 0.0
        %3483 = vmatpush2.msra.mxu0 0.0
        %3484 = vmatprep.subr.mxu0 0.0
        %3485 = vmatpush2.msra.mxu0 0.0
        %3486 = vmatprep.subr.mxu0 0.0
        %3487 = vmatpush2.msra.mxu0 0.0
        %3488 = vmatprep.subr.mxu0 0.0
        %3489 = vmatpush2.msra.mxu0 0.0
        %3490 = vmatprep.subr.mxu0 0.0
        %3491 = vmatpush2.msra.mxu0 0.0
        %3492 = vmatprep.subr.mxu0 0.0
        %3493 = vmatpush2.msra.mxu0 0.0
        %3494 = vmatprep.subr.mxu0 0.0
        %3495 = vmatpush2.msra.mxu0 0.0
        %3496 = vmatprep.mubr.f32.mxu0 0.0
        %3497 = vmatmul.mubr.f32.gmra.mxu0 %v3430
        %v3498 = vpop.f32.mrf.mxu0
        %v3499 = vadd.f32 0.0, %v3498
        %v3500 = vpop.f32.mrf.mxu0
        %3501 = vdwg.mxu0
        %v3502 = vadd.f32 %v3422, %v3499
        %v3503 = vld [vmem:[%s8] sm:$0x1]
        %v3505 = vlaneseq
        %v3506 = vshrl.u32 %v3505, 7
        %v3507 = vsub.s32 0, %v3506
        %v3508 = vrot.slane %v3503, %v3507
        %v3510 = vmul.f32 %v3502, %v3508
        %v3511 = vld [vmem:[%s9] sm:$0x1]
        %v3513 = vlaneseq
        %v3514 = vshrl.u32 %v3513, 7
        %v3515 = vsub.s32 0, %v3514
        %v3516 = vrot.slane %v3511, %v3515
        %v3518 = vadd.f32 %v3510, %v3516
        %v3519 = vmax.f32 %v3518, 0.0
        %vm3520 = vcmask 785408
        %3521 = vst.msk [vmem:[#allocation5] sm:$0xff] %vm3520, 0.0
        %vm3522 = vcmask 779264
        %3523 = vst.msk [vmem:[#allocation5 + $0x8] sm:$0x3] %vm3522, 0.0
        %3525 = vrot.lane.b32.xlu0 %v3519, 16
        %v3526 = vpop.permute.xlu0 %3525
        %vm3528 = vcmask 654464
        %3529 = vst.msk [vmem:[#allocation5 + $0x1] sm:$0xff] %vm3528, %v3526
        %v3530 = vld [vmem:[#allocation5] sm:$0xff]
        %v3531 = vld [vmem:[%s10] sm:$0xff]
        %v3532 = vld [vmem:[%s10 + $0x8] sm:$0xff]
        %v3533 = vld [vmem:[%s10 + $0x10] sm:$0xff]
        %v3534 = vld [vmem:[%s10 + $0x18] sm:$0xff]
        %v3535 = vld [vmem:[%s10 + $0x20] sm:$0xff]
        %v3536 = vld [vmem:[%s10 + $0x28] sm:$0xff]
        %v3537 = vld [vmem:[%s10 + $0x30] sm:$0xff]
        %v3538 = vld [vmem:[%s10 + $0x38] sm:$0xff]
        %s3539 = scalar_lea.vmem %s10, 64
        %v3540 = vld [vmem:[%s3539] sm:$0xff]
        %v3541 = vld [vmem:[%s3539 + $0x8] sm:$0xff]
        %v3542 = vld [vmem:[%s3539 + $0x10] sm:$0xff]
        %v3543 = vld [vmem:[%s3539 + $0x18] sm:$0xff]
        %v3544 = vld [vmem:[%s3539 + $0x20] sm:$0xff]
        %v3545 = vld [vmem:[%s3539 + $0x28] sm:$0xff]
        %v3546 = vld [vmem:[%s3539 + $0x30] sm:$0xff]
        %v3547 = vld [vmem:[%s3539 + $0x38] sm:$0xff]
        %3549 = vrot.lane.b32.xlu0 %v3530, 112
        %v3550 = vpop.permute.xlu0 %3549
        %vm3551 = vcmask 523264
        %v3552 = vsel %vm3551, %v3550, 0
        %3554 = vmatprep.subr.mxu0 0.0
        %3555 = vmatpush1.msra.mxu0 0.0
        %3556 = vmatprep.subr.mxu0 0.0
        %3557 = vmatpush1.msra.mxu0 0.0
        %3558 = vmatprep.subr.mxu0 0.0
        %3559 = vmatpush1.msra.mxu0 0.0
        %3560 = vmatprep.subr.mxu0 0.0
        %3561 = vmatpush1.msra.mxu0 0.0
        %3562 = vmatprep.subr.mxu0 0.0
        %3563 = vmatpush1.msra.mxu0 0.0
        %3564 = vmatprep.subr.mxu0 0.0
        %3565 = vmatpush1.msra.mxu0 0.0
        %3566 = vmatprep.subr.mxu0 0.0
        %3567 = vmatpush1.msra.mxu0 0.0
        %3568 = vmatprep.subr.mxu0 0.0
        %3569 = vmatpush1.msra.mxu0 0.0
        %3570 = vmatprep.subr.mxu0 0.0
        %3571 = vmatpush1.msra.mxu0 %v3547
        %3572 = vmatprep.subr.mxu0 0.0
        %3573 = vmatpush1.msra.mxu0 %v3546
        %3574 = vmatprep.subr.mxu0 0.0
        %3575 = vmatpush1.msra.mxu0 %v3545
        %3576 = vmatprep.subr.mxu0 0.0
        %3577 = vmatpush1.msra.mxu0 %v3544
        %3578 = vmatprep.subr.mxu0 0.0
        %3579 = vmatpush1.msra.mxu0 %v3543
        %3580 = vmatprep.subr.mxu0 0.0
        %3581 = vmatpush1.msra.mxu0 %v3542
        %3582 = vmatprep.subr.mxu0 0.0
        %3583 = vmatpush1.msra.mxu0 %v3541
        %3584 = vmatprep.subr.mxu0 0.0
        %3585 = vmatpush1.msra.mxu0 %v3540
        %3586 = vmatprep.subr.mxu0 0.0
        %3587 = vmatpush2.msra.mxu0 0.0
        %3588 = vmatprep.subr.mxu0 0.0
        %3589 = vmatpush2.msra.mxu0 0.0
        %3590 = vmatprep.subr.mxu0 0.0
        %3591 = vmatpush2.msra.mxu0 0.0
        %3592 = vmatprep.subr.mxu0 0.0
        %3593 = vmatpush2.msra.mxu0 0.0
        %3594 = vmatprep.subr.mxu0 0.0
        %3595 = vmatpush2.msra.mxu0 0.0
        %3596 = vmatprep.subr.mxu0 0.0
        %3597 = vmatpush2.msra.mxu0 0.0
        %3598 = vmatprep.subr.mxu0 0.0
        %3599 = vmatpush2.msra.mxu0 0.0
        %3600 = vmatprep.subr.mxu0 0.0
        %3601 = vmatpush2.msra.mxu0 0.0
        %3602 = vmatprep.subr.mxu0 0.0
        %3603 = vmatpush2.msra.mxu0 0.0
        %3604 = vmatprep.subr.mxu0 0.0
        %3605 = vmatpush2.msra.mxu0 0.0
        %3606 = vmatprep.subr.mxu0 0.0
        %3607 = vmatpush2.msra.mxu0 0.0
        %3608 = vmatprep.subr.mxu0 0.0
        %3609 = vmatpush2.msra.mxu0 0.0
        %3610 = vmatprep.subr.mxu0 0.0
        %3611 = vmatpush2.msra.mxu0 0.0
        %3612 = vmatprep.subr.mxu0 0.0
        %3613 = vmatpush2.msra.mxu0 0.0
        %3614 = vmatprep.subr.mxu0 0.0
        %3615 = vmatpush2.msra.mxu0 0.0
        %3616 = vmatprep.subr.mxu0 0.0
        %3617 = vmatpush2.msra.mxu0 0.0
        %3618 = vmatprep.mubr.f32.mxu0 0.0
        %3619 = vmatmul.mubr.f32.gmra.mxu0 %v3552
        %v3620 = vpop.f32.mrf.mxu0
        %v3621 = vadd.f32 0.0, %v3620
        %v3622 = vpop.f32.mrf.mxu0
        %3623 = vdwg.mxu0
        %v3624 = vsel %vm3551, %v3530, 0
        %3626 = vmatprep.subr.mxu0 0.0
        %3627 = vmatpush1.msra.mxu0 0.0
        %3628 = vmatprep.subr.mxu0 0.0
        %3629 = vmatpush1.msra.mxu0 0.0
        %3630 = vmatprep.subr.mxu0 0.0
        %3631 = vmatpush1.msra.mxu0 0.0
        %3632 = vmatprep.subr.mxu0 0.0
        %3633 = vmatpush1.msra.mxu0 0.0
        %3634 = vmatprep.subr.mxu0 0.0
        %3635 = vmatpush1.msra.mxu0 0.0
        %3636 = vmatprep.subr.mxu0 0.0
        %3637 = vmatpush1.msra.mxu0 0.0
        %3638 = vmatprep.subr.mxu0 0.0
        %3639 = vmatpush1.msra.mxu0 0.0
        %3640 = vmatprep.subr.mxu0 0.0
        %3641 = vmatpush1.msra.mxu0 0.0
        %3642 = vmatprep.subr.mxu0 0.0
        %3643 = vmatpush1.msra.mxu0 %v3538
        %3644 = vmatprep.subr.mxu0 0.0
        %3645 = vmatpush1.msra.mxu0 %v3537
        %3646 = vmatprep.subr.mxu0 0.0
        %3647 = vmatpush1.msra.mxu0 %v3536
        %3648 = vmatprep.subr.mxu0 0.0
        %3649 = vmatpush1.msra.mxu0 %v3535
        %3650 = vmatprep.subr.mxu0 0.0
        %3651 = vmatpush1.msra.mxu0 %v3534
        %3652 = vmatprep.subr.mxu0 0.0
        %3653 = vmatpush1.msra.mxu0 %v3533
        %3654 = vmatprep.subr.mxu0 0.0
        %3655 = vmatpush1.msra.mxu0 %v3532
        %3656 = vmatprep.subr.mxu0 0.0
        %3657 = vmatpush1.msra.mxu0 %v3531
        %3658 = vmatprep.subr.mxu0 0.0
        %3659 = vmatpush2.msra.mxu0 0.0
        %3660 = vmatprep.subr.mxu0 0.0
        %3661 = vmatpush2.msra.mxu0 0.0
        %3662 = vmatprep.subr.mxu0 0.0
        %3663 = vmatpush2.msra.mxu0 0.0
        %3664 = vmatprep.subr.mxu0 0.0
        %3665 = vmatpush2.msra.mxu0 0.0
        %3666 = vmatprep.subr.mxu0 0.0
        %3667 = vmatpush2.msra.mxu0 0.0
        %3668 = vmatprep.subr.mxu0 0.0
        %3669 = vmatpush2.msra.mxu0 0.0
        %3670 = vmatprep.subr.mxu0 0.0
        %3671 = vmatpush2.msra.mxu0 0.0
        %3672 = vmatprep.subr.mxu0 0.0
        %3673 = vmatpush2.msra.mxu0 0.0
        %3674 = vmatprep.subr.mxu0 0.0
        %3675 = vmatpush2.msra.mxu0 0.0
        %3676 = vmatprep.subr.mxu0 0.0
        %3677 = vmatpush2.msra.mxu0 0.0
        %3678 = vmatprep.subr.mxu0 0.0
        %3679 = vmatpush2.msra.mxu0 0.0
        %3680 = vmatprep.subr.mxu0 0.0
        %3681 = vmatpush2.msra.mxu0 0.0
        %3682 = vmatprep.subr.mxu0 0.0
        %3683 = vmatpush2.msra.mxu0 0.0
        %3684 = vmatprep.subr.mxu0 0.0
        %3685 = vmatpush2.msra.mxu0 0.0
        %3686 = vmatprep.subr.mxu0 0.0
        %3687 = vmatpush2.msra.mxu0 0.0
        %3688 = vmatprep.subr.mxu0 0.0
        %3689 = vmatpush2.msra.mxu0 0.0
        %3690 = vmatprep.mubr.f32.mxu0 0.0
        %3691 = vmatmul.mubr.f32.gmra.mxu0 %v3624
        %v3692 = vpop.f32.mrf.mxu0
        %v3693 = vadd.f32 %v3621, %v3692
        %v3694 = vpop.f32.mrf.mxu0
        %3695 = vdwg.mxu0
        %s3696 = scalar_lea.vmem %s10, 128
        %v3697 = vld [vmem:[%s3696] sm:$0xff]
        %v3698 = vld [vmem:[%s3696 + $0x8] sm:$0xff]
        %v3699 = vld [vmem:[%s3696 + $0x10] sm:$0xff]
        %v3700 = vld [vmem:[%s3696 + $0x18] sm:$0xff]
        %v3701 = vld [vmem:[%s3696 + $0x20] sm:$0xff]
        %v3702 = vld [vmem:[%s3696 + $0x28] sm:$0xff]
        %v3703 = vld [vmem:[%s3696 + $0x30] sm:$0xff]
        %v3704 = vld [vmem:[%s3696 + $0x38] sm:$0xff]
        %3705 = vrot.lane.b32.xlu0 %v3530, 96
        %v3706 = vpop.permute.xlu0 %3705
        %v3707 = vsel %vm3551, %v3706, 0
        %3709 = vmatprep.subr.mxu0 0.0
        %3710 = vmatpush1.msra.mxu0 0.0
        %3711 = vmatprep.subr.mxu0 0.0
        %3712 = vmatpush1.msra.mxu0 0.0
        %3713 = vmatprep.subr.mxu0 0.0
        %3714 = vmatpush1.msra.mxu0 0.0
        %3715 = vmatprep.subr.mxu0 0.0
        %3716 = vmatpush1.msra.mxu0 0.0
        %3717 = vmatprep.subr.mxu0 0.0
        %3718 = vmatpush1.msra.mxu0 0.0
        %3719 = vmatprep.subr.mxu0 0.0
        %3720 = vmatpush1.msra.mxu0 0.0
        %3721 = vmatprep.subr.mxu0 0.0
        %3722 = vmatpush1.msra.mxu0 0.0
        %3723 = vmatprep.subr.mxu0 0.0
        %3724 = vmatpush1.msra.mxu0 0.0
        %3725 = vmatprep.subr.mxu0 0.0
        %3726 = vmatpush1.msra.mxu0 %v3704
        %3727 = vmatprep.subr.mxu0 0.0
        %3728 = vmatpush1.msra.mxu0 %v3703
        %3729 = vmatprep.subr.mxu0 0.0
        %3730 = vmatpush1.msra.mxu0 %v3702
        %3731 = vmatprep.subr.mxu0 0.0
        %3732 = vmatpush1.msra.mxu0 %v3701
        %3733 = vmatprep.subr.mxu0 0.0
        %3734 = vmatpush1.msra.mxu0 %v3700
        %3735 = vmatprep.subr.mxu0 0.0
        %3736 = vmatpush1.msra.mxu0 %v3699
        %3737 = vmatprep.subr.mxu0 0.0
        %3738 = vmatpush1.msra.mxu0 %v3698
        %3739 = vmatprep.subr.mxu0 0.0
        %3740 = vmatpush1.msra.mxu0 %v3697
        %3741 = vmatprep.subr.mxu0 0.0
        %3742 = vmatpush2.msra.mxu0 0.0
        %3743 = vmatprep.subr.mxu0 0.0
        %3744 = vmatpush2.msra.mxu0 0.0
        %3745 = vmatprep.subr.mxu0 0.0
        %3746 = vmatpush2.msra.mxu0 0.0
        %3747 = vmatprep.subr.mxu0 0.0
        %3748 = vmatpush2.msra.mxu0 0.0
        %3749 = vmatprep.subr.mxu0 0.0
        %3750 = vmatpush2.msra.mxu0 0.0
        %3751 = vmatprep.subr.mxu0 0.0
        %3752 = vmatpush2.msra.mxu0 0.0
        %3753 = vmatprep.subr.mxu0 0.0
        %3754 = vmatpush2.msra.mxu0 0.0
        %3755 = vmatprep.subr.mxu0 0.0
        %3756 = vmatpush2.msra.mxu0 0.0
        %3757 = vmatprep.subr.mxu0 0.0
        %3758 = vmatpush2.msra.mxu0 0.0
        %3759 = vmatprep.subr.mxu0 0.0
        %3760 = vmatpush2.msra.mxu0 0.0
        %3761 = vmatprep.subr.mxu0 0.0
        %3762 = vmatpush2.msra.mxu0 0.0
        %3763 = vmatprep.subr.mxu0 0.0
        %3764 = vmatpush2.msra.mxu0 0.0
        %3765 = vmatprep.subr.mxu0 0.0
        %3766 = vmatpush2.msra.mxu0 0.0
        %3767 = vmatprep.subr.mxu0 0.0
        %3768 = vmatpush2.msra.mxu0 0.0
        %3769 = vmatprep.subr.mxu0 0.0
        %3770 = vmatpush2.msra.mxu0 0.0
        %3771 = vmatprep.subr.mxu0 0.0
        %3772 = vmatpush2.msra.mxu0 0.0
        %3773 = vmatprep.mubr.f32.mxu0 0.0
        %3774 = vmatmul.mubr.f32.gmra.mxu0 %v3707
        %v3775 = vpop.f32.mrf.mxu0
        %v3776 = vadd.f32 0.0, %v3775
        %v3777 = vpop.f32.mrf.mxu0
        %3778 = vdwg.mxu0
        %v3779 = vadd.f32 %v3693, %v3776
        %v3780 = vld [vmem:[#allocation5 + $0x1] sm:$0xff]
        %s3781 = scalar_lea.vmem %s10, 192
        %v3782 = vld [vmem:[%s3781] sm:$0xff]
        %v3783 = vld [vmem:[%s3781 + $0x8] sm:$0xff]
        %v3784 = vld [vmem:[%s3781 + $0x10] sm:$0xff]
        %v3785 = vld [vmem:[%s3781 + $0x18] sm:$0xff]
        %v3786 = vld [vmem:[%s3781 + $0x20] sm:$0xff]
        %v3787 = vld [vmem:[%s3781 + $0x28] sm:$0xff]
        %v3788 = vld [vmem:[%s3781 + $0x30] sm:$0xff]
        %v3789 = vld [vmem:[%s3781 + $0x38] sm:$0xff]
        %v3791 = vsel %vm3551, %v3780, 0
        %3793 = vmatprep.subr.mxu0 0.0
        %3794 = vmatpush1.msra.mxu0 0.0
        %3795 = vmatprep.subr.mxu0 0.0
        %3796 = vmatpush1.msra.mxu0 0.0
        %3797 = vmatprep.subr.mxu0 0.0
        %3798 = vmatpush1.msra.mxu0 0.0
        %3799 = vmatprep.subr.mxu0 0.0
        %3800 = vmatpush1.msra.mxu0 0.0
        %3801 = vmatprep.subr.mxu0 0.0
        %3802 = vmatpush1.msra.mxu0 0.0
        %3803 = vmatprep.subr.mxu0 0.0
        %3804 = vmatpush1.msra.mxu0 0.0
        %3805 = vmatprep.subr.mxu0 0.0
        %3806 = vmatpush1.msra.mxu0 0.0
        %3807 = vmatprep.subr.mxu0 0.0
        %3808 = vmatpush1.msra.mxu0 0.0
        %3809 = vmatprep.subr.mxu0 0.0
        %3810 = vmatpush1.msra.mxu0 %v3789
        %3811 = vmatprep.subr.mxu0 0.0
        %3812 = vmatpush1.msra.mxu0 %v3788
        %3813 = vmatprep.subr.mxu0 0.0
        %3814 = vmatpush1.msra.mxu0 %v3787
        %3815 = vmatprep.subr.mxu0 0.0
        %3816 = vmatpush1.msra.mxu0 %v3786
        %3817 = vmatprep.subr.mxu0 0.0
        %3818 = vmatpush1.msra.mxu0 %v3785
        %3819 = vmatprep.subr.mxu0 0.0
        %3820 = vmatpush1.msra.mxu0 %v3784
        %3821 = vmatprep.subr.mxu0 0.0
        %3822 = vmatpush1.msra.mxu0 %v3783
        %3823 = vmatprep.subr.mxu0 0.0
        %3824 = vmatpush1.msra.mxu0 %v3782
        %3825 = vmatprep.subr.mxu0 0.0
        %3826 = vmatpush2.msra.mxu0 0.0
        %3827 = vmatprep.subr.mxu0 0.0
        %3828 = vmatpush2.msra.mxu0 0.0
        %3829 = vmatprep.subr.mxu0 0.0
        %3830 = vmatpush2.msra.mxu0 0.0
        %3831 = vmatprep.subr.mxu0 0.0
        %3832 = vmatpush2.msra.mxu0 0.0
        %3833 = vmatprep.subr.mxu0 0.0
        %3834 = vmatpush2.msra.mxu0 0.0
        %3835 = vmatprep.subr.mxu0 0.0
        %3836 = vmatpush2.msra.mxu0 0.0
        %3837 = vmatprep.subr.mxu0 0.0
        %3838 = vmatpush2.msra.mxu0 0.0
        %3839 = vmatprep.subr.mxu0 0.0
        %3840 = vmatpush2.msra.mxu0 0.0
        %3841 = vmatprep.subr.mxu0 0.0
        %3842 = vmatpush2.msra.mxu0 0.0
        %3843 = vmatprep.subr.mxu0 0.0
        %3844 = vmatpush2.msra.mxu0 0.0
        %3845 = vmatprep.subr.mxu0 0.0
        %3846 = vmatpush2.msra.mxu0 0.0
        %3847 = vmatprep.subr.mxu0 0.0
        %3848 = vmatpush2.msra.mxu0 0.0
        %3849 = vmatprep.subr.mxu0 0.0
        %3850 = vmatpush2.msra.mxu0 0.0
        %3851 = vmatprep.subr.mxu0 0.0
        %3852 = vmatpush2.msra.mxu0 0.0
        %3853 = vmatprep.subr.mxu0 0.0
        %3854 = vmatpush2.msra.mxu0 0.0
        %3855 = vmatprep.subr.mxu0 0.0
        %3856 = vmatpush2.msra.mxu0 0.0
        %3857 = vmatprep.mubr.f32.mxu0 0.0
        %3858 = vmatmul.mubr.f32.gmra.mxu0 %v3791
        %v3859 = vpop.f32.mrf.mxu0
        %v3860 = vadd.f32 0.0, %v3859
        %v3861 = vpop.f32.mrf.mxu0
        %3862 = vdwg.mxu0
        %v3863 = vadd.f32 %v3779, %v3860
        %s3864 = scalar_lea.vmem %s10, 256
        %v3865 = vld [vmem:[%s3864] sm:$0xff]
        %v3866 = vld [vmem:[%s3864 + $0x8] sm:$0xff]
        %v3867 = vld [vmem:[%s3864 + $0x10] sm:$0xff]
        %v3868 = vld [vmem:[%s3864 + $0x18] sm:$0xff]
        %v3869 = vld [vmem:[%s3864 + $0x20] sm:$0xff]
        %v3870 = vld [vmem:[%s3864 + $0x28] sm:$0xff]
        %v3871 = vld [vmem:[%s3864 + $0x30] sm:$0xff]
        %v3872 = vld [vmem:[%s3864 + $0x38] sm:$0xff]
        %3873 = vrot.lane.b32.xlu0 %v3780, 112
        %v3874 = vpop.permute.xlu0 %3873
        %v3875 = vsel %vm3551, %v3874, 0
        %3877 = vmatprep.subr.mxu0 0.0
        %3878 = vmatpush1.msra.mxu0 0.0
        %3879 = vmatprep.subr.mxu0 0.0
        %3880 = vmatpush1.msra.mxu0 0.0
        %3881 = vmatprep.subr.mxu0 0.0
        %3882 = vmatpush1.msra.mxu0 0.0
        %3883 = vmatprep.subr.mxu0 0.0
        %3884 = vmatpush1.msra.mxu0 0.0
        %3885 = vmatprep.subr.mxu0 0.0
        %3886 = vmatpush1.msra.mxu0 0.0
        %3887 = vmatprep.subr.mxu0 0.0
        %3888 = vmatpush1.msra.mxu0 0.0
        %3889 = vmatprep.subr.mxu0 0.0
        %3890 = vmatpush1.msra.mxu0 0.0
        %3891 = vmatprep.subr.mxu0 0.0
        %3892 = vmatpush1.msra.mxu0 0.0
        %3893 = vmatprep.subr.mxu0 0.0
        %3894 = vmatpush1.msra.mxu0 %v3872
        %3895 = vmatprep.subr.mxu0 0.0
        %3896 = vmatpush1.msra.mxu0 %v3871
        %3897 = vmatprep.subr.mxu0 0.0
        %3898 = vmatpush1.msra.mxu0 %v3870
        %3899 = vmatprep.subr.mxu0 0.0
        %3900 = vmatpush1.msra.mxu0 %v3869
        %3901 = vmatprep.subr.mxu0 0.0
        %3902 = vmatpush1.msra.mxu0 %v3868
        %3903 = vmatprep.subr.mxu0 0.0
        %3904 = vmatpush1.msra.mxu0 %v3867
        %3905 = vmatprep.subr.mxu0 0.0
        %3906 = vmatpush1.msra.mxu0 %v3866
        %3907 = vmatprep.subr.mxu0 0.0
        %3908 = vmatpush1.msra.mxu0 %v3865
        %3909 = vmatprep.subr.mxu0 0.0
        %3910 = vmatpush2.msra.mxu0 0.0
        %3911 = vmatprep.subr.mxu0 0.0
        %3912 = vmatpush2.msra.mxu0 0.0
        %3913 = vmatprep.subr.mxu0 0.0
        %3914 = vmatpush2.msra.mxu0 0.0
        %3915 = vmatprep.subr.mxu0 0.0
        %3916 = vmatpush2.msra.mxu0 0.0
        %3917 = vmatprep.subr.mxu0 0.0
        %3918 = vmatpush2.msra.mxu0 0.0
        %3919 = vmatprep.subr.mxu0 0.0
        %3920 = vmatpush2.msra.mxu0 0.0
        %3921 = vmatprep.subr.mxu0 0.0
        %3922 = vmatpush2.msra.mxu0 0.0
        %3923 = vmatprep.subr.mxu0 0.0
        %3924 = vmatpush2.msra.mxu0 0.0
        %3925 = vmatprep.subr.mxu0 0.0
        %3926 = vmatpush2.msra.mxu0 0.0
        %3927 = vmatprep.subr.mxu0 0.0
        %3928 = vmatpush2.msra.mxu0 0.0
        %3929 = vmatprep.subr.mxu0 0.0
        %3930 = vmatpush2.msra.mxu0 0.0
        %3931 = vmatprep.subr.mxu0 0.0
        %3932 = vmatpush2.msra.mxu0 0.0
        %3933 = vmatprep.subr.mxu0 0.0
        %3934 = vmatpush2.msra.mxu0 0.0
        %3935 = vmatprep.subr.mxu0 0.0
        %3936 = vmatpush2.msra.mxu0 0.0
        %3937 = vmatprep.subr.mxu0 0.0
        %3938 = vmatpush2.msra.mxu0 0.0
        %3939 = vmatprep.subr.mxu0 0.0
        %3940 = vmatpush2.msra.mxu0 0.0
        %3941 = vmatprep.mubr.f32.mxu0 0.0
        %3942 = vmatmul.mubr.f32.gmra.mxu0 %v3875
        %v3943 = vpop.f32.mrf.mxu0
        %v3944 = vadd.f32 0.0, %v3943
        %v3945 = vpop.f32.mrf.mxu0
        %3946 = vdwg.mxu0
        %v3947 = vadd.f32 %v3863, %v3944
        %s3948 = scalar_lea.vmem %s10, 320
        %v3949 = vld [vmem:[%s3948] sm:$0xff]
        %v3950 = vld [vmem:[%s3948 + $0x8] sm:$0xff]
        %v3951 = vld [vmem:[%s3948 + $0x10] sm:$0xff]
        %v3952 = vld [vmem:[%s3948 + $0x18] sm:$0xff]
        %v3953 = vld [vmem:[%s3948 + $0x20] sm:$0xff]
        %v3954 = vld [vmem:[%s3948 + $0x28] sm:$0xff]
        %v3955 = vld [vmem:[%s3948 + $0x30] sm:$0xff]
        %v3956 = vld [vmem:[%s3948 + $0x38] sm:$0xff]
        %3957 = vrot.lane.b32.xlu0 %v3780, 96
        %v3958 = vpop.permute.xlu0 %3957
        %v3959 = vsel %vm3551, %v3958, 0
        %3961 = vmatprep.subr.mxu0 0.0
        %3962 = vmatpush1.msra.mxu0 0.0
        %3963 = vmatprep.subr.mxu0 0.0
        %3964 = vmatpush1.msra.mxu0 0.0
        %3965 = vmatprep.subr.mxu0 0.0
        %3966 = vmatpush1.msra.mxu0 0.0
        %3967 = vmatprep.subr.mxu0 0.0
        %3968 = vmatpush1.msra.mxu0 0.0
        %3969 = vmatprep.subr.mxu0 0.0
        %3970 = vmatpush1.msra.mxu0 0.0
        %3971 = vmatprep.subr.mxu0 0.0
        %3972 = vmatpush1.msra.mxu0 0.0
        %3973 = vmatprep.subr.mxu0 0.0
        %3974 = vmatpush1.msra.mxu0 0.0
        %3975 = vmatprep.subr.mxu0 0.0
        %3976 = vmatpush1.msra.mxu0 0.0
        %3977 = vmatprep.subr.mxu0 0.0
        %3978 = vmatpush1.msra.mxu0 %v3956
        %3979 = vmatprep.subr.mxu0 0.0
        %3980 = vmatpush1.msra.mxu0 %v3955
        %3981 = vmatprep.subr.mxu0 0.0
        %3982 = vmatpush1.msra.mxu0 %v3954
        %3983 = vmatprep.subr.mxu0 0.0
        %3984 = vmatpush1.msra.mxu0 %v3953
        %3985 = vmatprep.subr.mxu0 0.0
        %3986 = vmatpush1.msra.mxu0 %v3952
        %3987 = vmatprep.subr.mxu0 0.0
        %3988 = vmatpush1.msra.mxu0 %v3951
        %3989 = vmatprep.subr.mxu0 0.0
        %3990 = vmatpush1.msra.mxu0 %v3950
        %3991 = vmatprep.subr.mxu0 0.0
        %3992 = vmatpush1.msra.mxu0 %v3949
        %3993 = vmatprep.subr.mxu0 0.0
        %3994 = vmatpush2.msra.mxu0 0.0
        %3995 = vmatprep.subr.mxu0 0.0
        %3996 = vmatpush2.msra.mxu0 0.0
        %3997 = vmatprep.subr.mxu0 0.0
        %3998 = vmatpush2.msra.mxu0 0.0
        %3999 = vmatprep.subr.mxu0 0.0
        %4000 = vmatpush2.msra.mxu0 0.0
        %4001 = vmatprep.subr.mxu0 0.0
        %4002 = vmatpush2.msra.mxu0 0.0
        %4003 = vmatprep.subr.mxu0 0.0
        %4004 = vmatpush2.msra.mxu0 0.0
        %4005 = vmatprep.subr.mxu0 0.0
        %4006 = vmatpush2.msra.mxu0 0.0
        %4007 = vmatprep.subr.mxu0 0.0
        %4008 = vmatpush2.msra.mxu0 0.0
        %4009 = vmatprep.subr.mxu0 0.0
        %4010 = vmatpush2.msra.mxu0 0.0
        %4011 = vmatprep.subr.mxu0 0.0
        %4012 = vmatpush2.msra.mxu0 0.0
        %4013 = vmatprep.subr.mxu0 0.0
        %4014 = vmatpush2.msra.mxu0 0.0
        %4015 = vmatprep.subr.mxu0 0.0
        %4016 = vmatpush2.msra.mxu0 0.0
        %4017 = vmatprep.subr.mxu0 0.0
        %4018 = vmatpush2.msra.mxu0 0.0
        %4019 = vmatprep.subr.mxu0 0.0
        %4020 = vmatpush2.msra.mxu0 0.0
        %4021 = vmatprep.subr.mxu0 0.0
        %4022 = vmatpush2.msra.mxu0 0.0
        %4023 = vmatprep.subr.mxu0 0.0
        %4024 = vmatpush2.msra.mxu0 0.0
        %4025 = vmatprep.mubr.f32.mxu0 0.0
        %4026 = vmatmul.mubr.f32.gmra.mxu0 %v3959
        %v4027 = vpop.f32.mrf.mxu0
        %v4028 = vadd.f32 0.0, %v4027
        %v4029 = vpop.f32.mrf.mxu0
        %4030 = vdwg.mxu0
        %v4031 = vadd.f32 %v3947, %v4028
        %v4032 = vld [vmem:[#allocation5 + $0x2] sm:$0xff]
        %s4033 = scalar_lea.vmem %s10, 384
        %v4034 = vld [vmem:[%s4033] sm:$0xff]
        %v4035 = vld [vmem:[%s4033 + $0x8] sm:$0xff]
        %v4036 = vld [vmem:[%s4033 + $0x10] sm:$0xff]
        %v4037 = vld [vmem:[%s4033 + $0x18] sm:$0xff]
        %v4038 = vld [vmem:[%s4033 + $0x20] sm:$0xff]
        %v4039 = vld [vmem:[%s4033 + $0x28] sm:$0xff]
        %v4040 = vld [vmem:[%s4033 + $0x30] sm:$0xff]
        %v4041 = vld [vmem:[%s4033 + $0x38] sm:$0xff]
        %v4043 = vsel %vm3551, %v4032, 0
        %4045 = vmatprep.subr.mxu0 0.0
        %4046 = vmatpush1.msra.mxu0 0.0
        %4047 = vmatprep.subr.mxu0 0.0
        %4048 = vmatpush1.msra.mxu0 0.0
        %4049 = vmatprep.subr.mxu0 0.0
        %4050 = vmatpush1.msra.mxu0 0.0
        %4051 = vmatprep.subr.mxu0 0.0
        %4052 = vmatpush1.msra.mxu0 0.0
        %4053 = vmatprep.subr.mxu0 0.0
        %4054 = vmatpush1.msra.mxu0 0.0
        %4055 = vmatprep.subr.mxu0 0.0
        %4056 = vmatpush1.msra.mxu0 0.0
        %4057 = vmatprep.subr.mxu0 0.0
        %4058 = vmatpush1.msra.mxu0 0.0
        %4059 = vmatprep.subr.mxu0 0.0
        %4060 = vmatpush1.msra.mxu0 0.0
        %4061 = vmatprep.subr.mxu0 0.0
        %4062 = vmatpush1.msra.mxu0 %v4041
        %4063 = vmatprep.subr.mxu0 0.0
        %4064 = vmatpush1.msra.mxu0 %v4040
        %4065 = vmatprep.subr.mxu0 0.0
        %4066 = vmatpush1.msra.mxu0 %v4039
        %4067 = vmatprep.subr.mxu0 0.0
        %4068 = vmatpush1.msra.mxu0 %v4038
        %4069 = vmatprep.subr.mxu0 0.0
        %4070 = vmatpush1.msra.mxu0 %v4037
        %4071 = vmatprep.subr.mxu0 0.0
        %4072 = vmatpush1.msra.mxu0 %v4036
        %4073 = vmatprep.subr.mxu0 0.0
        %4074 = vmatpush1.msra.mxu0 %v4035
        %4075 = vmatprep.subr.mxu0 0.0
        %4076 = vmatpush1.msra.mxu0 %v4034
        %4077 = vmatprep.subr.mxu0 0.0
        %4078 = vmatpush2.msra.mxu0 0.0
        %4079 = vmatprep.subr.mxu0 0.0
        %4080 = vmatpush2.msra.mxu0 0.0
        %4081 = vmatprep.subr.mxu0 0.0
        %4082 = vmatpush2.msra.mxu0 0.0
        %4083 = vmatprep.subr.mxu0 0.0
        %4084 = vmatpush2.msra.mxu0 0.0
        %4085 = vmatprep.subr.mxu0 0.0
        %4086 = vmatpush2.msra.mxu0 0.0
        %4087 = vmatprep.subr.mxu0 0.0
        %4088 = vmatpush2.msra.mxu0 0.0
        %4089 = vmatprep.subr.mxu0 0.0
        %4090 = vmatpush2.msra.mxu0 0.0
        %4091 = vmatprep.subr.mxu0 0.0
        %4092 = vmatpush2.msra.mxu0 0.0
        %4093 = vmatprep.subr.mxu0 0.0
        %4094 = vmatpush2.msra.mxu0 0.0
        %4095 = vmatprep.subr.mxu0 0.0
        %4096 = vmatpush2.msra.mxu0 0.0
        %4097 = vmatprep.subr.mxu0 0.0
        %4098 = vmatpush2.msra.mxu0 0.0
        %4099 = vmatprep.subr.mxu0 0.0
        %4100 = vmatpush2.msra.mxu0 0.0
        %4101 = vmatprep.subr.mxu0 0.0
        %4102 = vmatpush2.msra.mxu0 0.0
        %4103 = vmatprep.subr.mxu0 0.0
        %4104 = vmatpush2.msra.mxu0 0.0
        %4105 = vmatprep.subr.mxu0 0.0
        %4106 = vmatpush2.msra.mxu0 0.0
        %4107 = vmatprep.subr.mxu0 0.0
        %4108 = vmatpush2.msra.mxu0 0.0
        %4109 = vmatprep.mubr.f32.mxu0 0.0
        %4110 = vmatmul.mubr.f32.gmra.mxu0 %v4043
        %v4111 = vpop.f32.mrf.mxu0
        %v4112 = vadd.f32 0.0, %v4111
        %v4113 = vpop.f32.mrf.mxu0
        %4114 = vdwg.mxu0
        %v4115 = vadd.f32 %v4031, %v4112
        %s4116 = scalar_lea.vmem %s10, 448
        %v4117 = vld [vmem:[%s4116] sm:$0xff]
        %v4118 = vld [vmem:[%s4116 + $0x8] sm:$0xff]
        %v4119 = vld [vmem:[%s4116 + $0x10] sm:$0xff]
        %v4120 = vld [vmem:[%s4116 + $0x18] sm:$0xff]
        %v4121 = vld [vmem:[%s4116 + $0x20] sm:$0xff]
        %v4122 = vld [vmem:[%s4116 + $0x28] sm:$0xff]
        %v4123 = vld [vmem:[%s4116 + $0x30] sm:$0xff]
        %v4124 = vld [vmem:[%s4116 + $0x38] sm:$0xff]
        %4125 = vrot.lane.b32.xlu0 %v4032, 112
        %v4126 = vpop.permute.xlu0 %4125
        %v4127 = vsel %vm3551, %v4126, 0
        %4129 = vmatprep.subr.mxu0 0.0
        %4130 = vmatpush1.msra.mxu0 0.0
        %4131 = vmatprep.subr.mxu0 0.0
        %4132 = vmatpush1.msra.mxu0 0.0
        %4133 = vmatprep.subr.mxu0 0.0
        %4134 = vmatpush1.msra.mxu0 0.0
        %4135 = vmatprep.subr.mxu0 0.0
        %4136 = vmatpush1.msra.mxu0 0.0
        %4137 = vmatprep.subr.mxu0 0.0
        %4138 = vmatpush1.msra.mxu0 0.0
        %4139 = vmatprep.subr.mxu0 0.0
        %4140 = vmatpush1.msra.mxu0 0.0
        %4141 = vmatprep.subr.mxu0 0.0
        %4142 = vmatpush1.msra.mxu0 0.0
        %4143 = vmatprep.subr.mxu0 0.0
        %4144 = vmatpush1.msra.mxu0 0.0
        %4145 = vmatprep.subr.mxu0 0.0
        %4146 = vmatpush1.msra.mxu0 %v4124
        %4147 = vmatprep.subr.mxu0 0.0
        %4148 = vmatpush1.msra.mxu0 %v4123
        %4149 = vmatprep.subr.mxu0 0.0
        %4150 = vmatpush1.msra.mxu0 %v4122
        %4151 = vmatprep.subr.mxu0 0.0
        %4152 = vmatpush1.msra.mxu0 %v4121
        %4153 = vmatprep.subr.mxu0 0.0
        %4154 = vmatpush1.msra.mxu0 %v4120
        %4155 = vmatprep.subr.mxu0 0.0
        %4156 = vmatpush1.msra.mxu0 %v4119
        %4157 = vmatprep.subr.mxu0 0.0
        %4158 = vmatpush1.msra.mxu0 %v4118
        %4159 = vmatprep.subr.mxu0 0.0
        %4160 = vmatpush1.msra.mxu0 %v4117
        %4161 = vmatprep.subr.mxu0 0.0
        %4162 = vmatpush2.msra.mxu0 0.0
        %4163 = vmatprep.subr.mxu0 0.0
        %4164 = vmatpush2.msra.mxu0 0.0
        %4165 = vmatprep.subr.mxu0 0.0
        %4166 = vmatpush2.msra.mxu0 0.0
        %4167 = vmatprep.subr.mxu0 0.0
        %4168 = vmatpush2.msra.mxu0 0.0
        %4169 = vmatprep.subr.mxu0 0.0
        %4170 = vmatpush2.msra.mxu0 0.0
        %4171 = vmatprep.subr.mxu0 0.0
        %4172 = vmatpush2.msra.mxu0 0.0
        %4173 = vmatprep.subr.mxu0 0.0
        %4174 = vmatpush2.msra.mxu0 0.0
        %4175 = vmatprep.subr.mxu0 0.0
        %4176 = vmatpush2.msra.mxu0 0.0
        %4177 = vmatprep.subr.mxu0 0.0
        %4178 = vmatpush2.msra.mxu0 0.0
        %4179 = vmatprep.subr.mxu0 0.0
        %4180 = vmatpush2.msra.mxu0 0.0
        %4181 = vmatprep.subr.mxu0 0.0
        %4182 = vmatpush2.msra.mxu0 0.0
        %4183 = vmatprep.subr.mxu0 0.0
        %4184 = vmatpush2.msra.mxu0 0.0
        %4185 = vmatprep.subr.mxu0 0.0
        %4186 = vmatpush2.msra.mxu0 0.0
        %4187 = vmatprep.subr.mxu0 0.0
        %4188 = vmatpush2.msra.mxu0 0.0
        %4189 = vmatprep.subr.mxu0 0.0
        %4190 = vmatpush2.msra.mxu0 0.0
        %4191 = vmatprep.subr.mxu0 0.0
        %4192 = vmatpush2.msra.mxu0 0.0
        %4193 = vmatprep.mubr.f32.mxu0 0.0
        %4194 = vmatmul.mubr.f32.gmra.mxu0 %v4127
        %v4195 = vpop.f32.mrf.mxu0
        %v4196 = vadd.f32 0.0, %v4195
        %v4197 = vpop.f32.mrf.mxu0
        %4198 = vdwg.mxu0
        %v4199 = vadd.f32 %v4115, %v4196
        %s4200 = scalar_lea.vmem %s10, 512
        %v4201 = vld [vmem:[%s4200] sm:$0xff]
        %v4202 = vld [vmem:[%s4200 + $0x8] sm:$0xff]
        %v4203 = vld [vmem:[%s4200 + $0x10] sm:$0xff]
        %v4204 = vld [vmem:[%s4200 + $0x18] sm:$0xff]
        %v4205 = vld [vmem:[%s4200 + $0x20] sm:$0xff]
        %v4206 = vld [vmem:[%s4200 + $0x28] sm:$0xff]
        %v4207 = vld [vmem:[%s4200 + $0x30] sm:$0xff]
        %v4208 = vld [vmem:[%s4200 + $0x38] sm:$0xff]
        %4209 = vrot.lane.b32.xlu0 %v4032, 96
        %v4210 = vpop.permute.xlu0 %4209
        %v4211 = vsel %vm3551, %v4210, 0
        %4213 = vmatprep.subr.mxu0 0.0
        %4214 = vmatpush1.msra.mxu0 0.0
        %4215 = vmatprep.subr.mxu0 0.0
        %4216 = vmatpush1.msra.mxu0 0.0
        %4217 = vmatprep.subr.mxu0 0.0
        %4218 = vmatpush1.msra.mxu0 0.0
        %4219 = vmatprep.subr.mxu0 0.0
        %4220 = vmatpush1.msra.mxu0 0.0
        %4221 = vmatprep.subr.mxu0 0.0
        %4222 = vmatpush1.msra.mxu0 0.0
        %4223 = vmatprep.subr.mxu0 0.0
        %4224 = vmatpush1.msra.mxu0 0.0
        %4225 = vmatprep.subr.mxu0 0.0
        %4226 = vmatpush1.msra.mxu0 0.0
        %4227 = vmatprep.subr.mxu0 0.0
        %4228 = vmatpush1.msra.mxu0 0.0
        %4229 = vmatprep.subr.mxu0 0.0
        %4230 = vmatpush1.msra.mxu0 %v4208
        %4231 = vmatprep.subr.mxu0 0.0
        %4232 = vmatpush1.msra.mxu0 %v4207
        %4233 = vmatprep.subr.mxu0 0.0
        %4234 = vmatpush1.msra.mxu0 %v4206
        %4235 = vmatprep.subr.mxu0 0.0
        %4236 = vmatpush1.msra.mxu0 %v4205
        %4237 = vmatprep.subr.mxu0 0.0
        %4238 = vmatpush1.msra.mxu0 %v4204
        %4239 = vmatprep.subr.mxu0 0.0
        %4240 = vmatpush1.msra.mxu0 %v4203
        %4241 = vmatprep.subr.mxu0 0.0
        %4242 = vmatpush1.msra.mxu0 %v4202
        %4243 = vmatprep.subr.mxu0 0.0
        %4244 = vmatpush1.msra.mxu0 %v4201
        %4245 = vmatprep.subr.mxu0 0.0
        %4246 = vmatpush2.msra.mxu0 0.0
        %4247 = vmatprep.subr.mxu0 0.0
        %4248 = vmatpush2.msra.mxu0 0.0
        %4249 = vmatprep.subr.mxu0 0.0
        %4250 = vmatpush2.msra.mxu0 0.0
        %4251 = vmatprep.subr.mxu0 0.0
        %4252 = vmatpush2.msra.mxu0 0.0
        %4253 = vmatprep.subr.mxu0 0.0
        %4254 = vmatpush2.msra.mxu0 0.0
        %4255 = vmatprep.subr.mxu0 0.0
        %4256 = vmatpush2.msra.mxu0 0.0
        %4257 = vmatprep.subr.mxu0 0.0
        %4258 = vmatpush2.msra.mxu0 0.0
        %4259 = vmatprep.subr.mxu0 0.0
        %4260 = vmatpush2.msra.mxu0 0.0
        %4261 = vmatprep.subr.mxu0 0.0
        %4262 = vmatpush2.msra.mxu0 0.0
        %4263 = vmatprep.subr.mxu0 0.0
        %4264 = vmatpush2.msra.mxu0 0.0
        %4265 = vmatprep.subr.mxu0 0.0
        %4266 = vmatpush2.msra.mxu0 0.0
        %4267 = vmatprep.subr.mxu0 0.0
        %4268 = vmatpush2.msra.mxu0 0.0
        %4269 = vmatprep.subr.mxu0 0.0
        %4270 = vmatpush2.msra.mxu0 0.0
        %4271 = vmatprep.subr.mxu0 0.0
        %4272 = vmatpush2.msra.mxu0 0.0
        %4273 = vmatprep.subr.mxu0 0.0
        %4274 = vmatpush2.msra.mxu0 0.0
        %4275 = vmatprep.subr.mxu0 0.0
        %4276 = vmatpush2.msra.mxu0 0.0
        %4277 = vmatprep.mubr.f32.mxu0 0.0
        %4278 = vmatmul.mubr.f32.gmra.mxu0 %v4211
        %v4279 = vpop.f32.mrf.mxu0
        %v4280 = vadd.f32 0.0, %v4279
        %v4281 = vpop.f32.mrf.mxu0
        %4282 = vdwg.mxu0
        %v4283 = vadd.f32 %v4199, %v4280
        %v4284 = vld [vmem:[%s11] sm:$0x1]
        %v4286 = vlaneseq
        %v4287 = vshrl.u32 %v4286, 7
        %v4288 = vsub.s32 0, %v4287
        %v4289 = vrot.slane %v4284, %v4288
        %v4291 = vmul.f32 %v4283, %v4289
        %v4292 = vld [vmem:[%s12] sm:$0x1]
        %v4294 = vlaneseq
        %v4295 = vshrl.u32 %v4294, 7
        %v4296 = vsub.s32 0, %v4295
        %v4297 = vrot.slane %v4292, %v4296
        %v4299 = vadd.f32 %v4291, %v4297
        %v4300 = vmax.f32 %v4299, 0.0
        %vm4301 = vcmask 783360
        %4302 = vst.msk [vmem:[#allocation6] sm:$0x3f] %vm4301, 0.0
        %v4304 = vrot.slane %v4300, 1
        %v4306 = vmax.f32 %v4300, %v4304
        %4308 = vrot.lane.b32.xlu0 %v4306, 16
        %v4309 = vpop.permute.xlu0 %4308
        %vm4311 = vcmask 647296
        %4312 = vst.msk [vmem:[#allocation6 + $0x1] sm:$0x1] %vm4311, %v4309
        %vm4313 = vcmask 649346
        %4314 = vst.msk [vmem:[#allocation6] sm:$0x4] %vm4313, %v4309
        %vm4315 = vcmask 651396
        %4316 = vst.msk [vmem:[#allocation6 - $0x1] sm:$0x10] %vm4315, %v4309
        %vm4317 = vcmask 653446
        %4318 = vst.msk [vmem:[#allocation6 - $0x2] sm:$0x40] %vm4317, %v4309
        %v4319 = vld [vmem:[#allocation6] sm:$0xf]
        %v4320 = vld [vmem:[%s13] sm:$0xff]
        %v4321 = vld [vmem:[%s13 + $0x8] sm:$0xff]
        %v4322 = vld [vmem:[%s13 + $0x10] sm:$0xff]
        %v4323 = vld [vmem:[%s13 + $0x18] sm:$0xff]
        %v4324 = vld [vmem:[%s13 + $0x20] sm:$0xff]
        %v4325 = vld [vmem:[%s13 + $0x28] sm:$0xff]
        %v4326 = vld [vmem:[%s13 + $0x30] sm:$0xff]
        %v4327 = vld [vmem:[%s13 + $0x38] sm:$0xff]
        %s4328 = scalar_lea.vmem %s13, 64
        %v4329 = vld [vmem:[%s4328] sm:$0xff]
        %v4330 = vld [vmem:[%s4328 + $0x8] sm:$0xff]
        %v4331 = vld [vmem:[%s4328 + $0x10] sm:$0xff]
        %v4332 = vld [vmem:[%s4328 + $0x18] sm:$0xff]
        %v4333 = vld [vmem:[%s4328 + $0x20] sm:$0xff]
        %v4334 = vld [vmem:[%s4328 + $0x28] sm:$0xff]
        %v4335 = vld [vmem:[%s4328 + $0x30] sm:$0xff]
        %v4336 = vld [vmem:[%s4328 + $0x38] sm:$0xff]
        %4338 = vrot.lane.b32.xlu0 %v4319, 112
        %v4339 = vpop.permute.xlu0 %4338
        %v4340 = vsel %vm3551, %v4339, 0
        %4342 = vmatprep.subr.mxu0 0.0
        %4343 = vmatpush1.msra.mxu0 0.0
        %4344 = vmatprep.subr.mxu0 0.0
        %4345 = vmatpush1.msra.mxu0 0.0
        %4346 = vmatprep.subr.mxu0 0.0
        %4347 = vmatpush1.msra.mxu0 0.0
        %4348 = vmatprep.subr.mxu0 0.0
        %4349 = vmatpush1.msra.mxu0 0.0
        %4350 = vmatprep.subr.mxu0 0.0
        %4351 = vmatpush1.msra.mxu0 0.0
        %4352 = vmatprep.subr.mxu0 0.0
        %4353 = vmatpush1.msra.mxu0 0.0
        %4354 = vmatprep.subr.mxu0 0.0
        %4355 = vmatpush1.msra.mxu0 0.0
        %4356 = vmatprep.subr.mxu0 0.0
        %4357 = vmatpush1.msra.mxu0 0.0
        %4358 = vmatprep.subr.mxu0 0.0
        %4359 = vmatpush1.msra.mxu0 %v4336
        %4360 = vmatprep.subr.mxu0 0.0
        %4361 = vmatpush1.msra.mxu0 %v4335
        %4362 = vmatprep.subr.mxu0 0.0
        %4363 = vmatpush1.msra.mxu0 %v4334
        %4364 = vmatprep.subr.mxu0 0.0
        %4365 = vmatpush1.msra.mxu0 %v4333
        %4366 = vmatprep.subr.mxu0 0.0
        %4367 = vmatpush1.msra.mxu0 %v4332
        %4368 = vmatprep.subr.mxu0 0.0
        %4369 = vmatpush1.msra.mxu0 %v4331
        %4370 = vmatprep.subr.mxu0 0.0
        %4371 = vmatpush1.msra.mxu0 %v4330
        %4372 = vmatprep.subr.mxu0 0.0
        %4373 = vmatpush1.msra.mxu0 %v4329
        %4374 = vmatprep.subr.mxu0 0.0
        %4375 = vmatpush2.msra.mxu0 0.0
        %4376 = vmatprep.subr.mxu0 0.0
        %4377 = vmatpush2.msra.mxu0 0.0
        %4378 = vmatprep.subr.mxu0 0.0
        %4379 = vmatpush2.msra.mxu0 0.0
        %4380 = vmatprep.subr.mxu0 0.0
        %4381 = vmatpush2.msra.mxu0 0.0
        %4382 = vmatprep.subr.mxu0 0.0
        %4383 = vmatpush2.msra.mxu0 0.0
        %4384 = vmatprep.subr.mxu0 0.0
        %4385 = vmatpush2.msra.mxu0 0.0
        %4386 = vmatprep.subr.mxu0 0.0
        %4387 = vmatpush2.msra.mxu0 0.0
        %4388 = vmatprep.subr.mxu0 0.0
        %4389 = vmatpush2.msra.mxu0 0.0
        %4390 = vmatprep.subr.mxu0 0.0
        %4391 = vmatpush2.msra.mxu0 0.0
        %4392 = vmatprep.subr.mxu0 0.0
        %4393 = vmatpush2.msra.mxu0 0.0
        %4394 = vmatprep.subr.mxu0 0.0
        %4395 = vmatpush2.msra.mxu0 0.0
        %4396 = vmatprep.subr.mxu0 0.0
        %4397 = vmatpush2.msra.mxu0 0.0
        %4398 = vmatprep.subr.mxu0 0.0
        %4399 = vmatpush2.msra.mxu0 0.0
        %4400 = vmatprep.subr.mxu0 0.0
        %4401 = vmatpush2.msra.mxu0 0.0
        %4402 = vmatprep.subr.mxu0 0.0
        %4403 = vmatpush2.msra.mxu0 0.0
        %4404 = vmatprep.subr.mxu0 0.0
        %4405 = vmatpush2.msra.mxu0 0.0
        %4406 = vmatprep.mubr.f32.mxu0 0.0
        %4407 = vmatmul.mubr.f32.gmra.mxu0 %v4340
        %v4408 = vpop.f32.mrf.mxu0
        %v4409 = vadd.f32 0.0, %v4408
        %v4410 = vpop.f32.mrf.mxu0
        %4411 = vdwg.mxu0
        %v4412 = vsel %vm3551, %v4319, 0
        %4414 = vmatprep.subr.mxu0 0.0
        %4415 = vmatpush1.msra.mxu0 0.0
        %4416 = vmatprep.subr.mxu0 0.0
        %4417 = vmatpush1.msra.mxu0 0.0
        %4418 = vmatprep.subr.mxu0 0.0
        %4419 = vmatpush1.msra.mxu0 0.0
        %4420 = vmatprep.subr.mxu0 0.0
        %4421 = vmatpush1.msra.mxu0 0.0
        %4422 = vmatprep.subr.mxu0 0.0
        %4423 = vmatpush1.msra.mxu0 0.0
        %4424 = vmatprep.subr.mxu0 0.0
        %4425 = vmatpush1.msra.mxu0 0.0
        %4426 = vmatprep.subr.mxu0 0.0
        %4427 = vmatpush1.msra.mxu0 0.0
        %4428 = vmatprep.subr.mxu0 0.0
        %4429 = vmatpush1.msra.mxu0 0.0
        %4430 = vmatprep.subr.mxu0 0.0
        %4431 = vmatpush1.msra.mxu0 %v4327
        %4432 = vmatprep.subr.mxu0 0.0
        %4433 = vmatpush1.msra.mxu0 %v4326
        %4434 = vmatprep.subr.mxu0 0.0
        %4435 = vmatpush1.msra.mxu0 %v4325
        %4436 = vmatprep.subr.mxu0 0.0
        %4437 = vmatpush1.msra.mxu0 %v4324
        %4438 = vmatprep.subr.mxu0 0.0
        %4439 = vmatpush1.msra.mxu0 %v4323
        %4440 = vmatprep.subr.mxu0 0.0
        %4441 = vmatpush1.msra.mxu0 %v4322
        %4442 = vmatprep.subr.mxu0 0.0
        %4443 = vmatpush1.msra.mxu0 %v4321
        %4444 = vmatprep.subr.mxu0 0.0
        %4445 = vmatpush1.msra.mxu0 %v4320
        %4446 = vmatprep.subr.mxu0 0.0
        %4447 = vmatpush2.msra.mxu0 0.0
        %4448 = vmatprep.subr.mxu0 0.0
        %4449 = vmatpush2.msra.mxu0 0.0
        %4450 = vmatprep.subr.mxu0 0.0
        %4451 = vmatpush2.msra.mxu0 0.0
        %4452 = vmatprep.subr.mxu0 0.0
        %4453 = vmatpush2.msra.mxu0 0.0
        %4454 = vmatprep.subr.mxu0 0.0
        %4455 = vmatpush2.msra.mxu0 0.0
        %4456 = vmatprep.subr.mxu0 0.0
        %4457 = vmatpush2.msra.mxu0 0.0
        %4458 = vmatprep.subr.mxu0 0.0
        %4459 = vmatpush2.msra.mxu0 0.0
        %4460 = vmatprep.subr.mxu0 0.0
        %4461 = vmatpush2.msra.mxu0 0.0
        %4462 = vmatprep.subr.mxu0 0.0
        %4463 = vmatpush2.msra.mxu0 0.0
        %4464 = vmatprep.subr.mxu0 0.0
        %4465 = vmatpush2.msra.mxu0 0.0
        %4466 = vmatprep.subr.mxu0 0.0
        %4467 = vmatpush2.msra.mxu0 0.0
        %4468 = vmatprep.subr.mxu0 0.0
        %4469 = vmatpush2.msra.mxu0 0.0
        %4470 = vmatprep.subr.mxu0 0.0
        %4471 = vmatpush2.msra.mxu0 0.0
        %4472 = vmatprep.subr.mxu0 0.0
        %4473 = vmatpush2.msra.mxu0 0.0
        %4474 = vmatprep.subr.mxu0 0.0
        %4475 = vmatpush2.msra.mxu0 0.0
        %4476 = vmatprep.subr.mxu0 0.0
        %4477 = vmatpush2.msra.mxu0 0.0
        %4478 = vmatprep.mubr.f32.mxu0 0.0
        %4479 = vmatmul.mubr.f32.gmra.mxu0 %v4412
        %v4480 = vpop.f32.mrf.mxu0
        %v4481 = vadd.f32 %v4409, %v4480
        %v4482 = vpop.f32.mrf.mxu0
        %4483 = vdwg.mxu0
        %s4484 = scalar_lea.vmem %s13, 128
        %v4485 = vld [vmem:[%s4484] sm:$0xff]
        %v4486 = vld [vmem:[%s4484 + $0x8] sm:$0xff]
        %v4487 = vld [vmem:[%s4484 + $0x10] sm:$0xff]
        %v4488 = vld [vmem:[%s4484 + $0x18] sm:$0xff]
        %v4489 = vld [vmem:[%s4484 + $0x20] sm:$0xff]
        %v4490 = vld [vmem:[%s4484 + $0x28] sm:$0xff]
        %v4491 = vld [vmem:[%s4484 + $0x30] sm:$0xff]
        %v4492 = vld [vmem:[%s4484 + $0x38] sm:$0xff]
        %4493 = vrot.lane.b32.xlu0 %v4319, 96
        %v4494 = vpop.permute.xlu0 %4493
        %v4495 = vsel %vm3551, %v4494, 0
        %4497 = vmatprep.subr.mxu0 0.0
        %4498 = vmatpush1.msra.mxu0 0.0
        %4499 = vmatprep.subr.mxu0 0.0
        %4500 = vmatpush1.msra.mxu0 0.0
        %4501 = vmatprep.subr.mxu0 0.0
        %4502 = vmatpush1.msra.mxu0 0.0
        %4503 = vmatprep.subr.mxu0 0.0
        %4504 = vmatpush1.msra.mxu0 0.0
        %4505 = vmatprep.subr.mxu0 0.0
        %4506 = vmatpush1.msra.mxu0 0.0
        %4507 = vmatprep.subr.mxu0 0.0
        %4508 = vmatpush1.msra.mxu0 0.0
        %4509 = vmatprep.subr.mxu0 0.0
        %4510 = vmatpush1.msra.mxu0 0.0
        %4511 = vmatprep.subr.mxu0 0.0
        %4512 = vmatpush1.msra.mxu0 0.0
        %4513 = vmatprep.subr.mxu0 0.0
        %4514 = vmatpush1.msra.mxu0 %v4492
        %4515 = vmatprep.subr.mxu0 0.0
        %4516 = vmatpush1.msra.mxu0 %v4491
        %4517 = vmatprep.subr.mxu0 0.0
        %4518 = vmatpush1.msra.mxu0 %v4490
        %4519 = vmatprep.subr.mxu0 0.0
        %4520 = vmatpush1.msra.mxu0 %v4489
        %4521 = vmatprep.subr.mxu0 0.0
        %4522 = vmatpush1.msra.mxu0 %v4488
        %4523 = vmatprep.subr.mxu0 0.0
        %4524 = vmatpush1.msra.mxu0 %v4487
        %4525 = vmatprep.subr.mxu0 0.0
        %4526 = vmatpush1.msra.mxu0 %v4486
        %4527 = vmatprep.subr.mxu0 0.0
        %4528 = vmatpush1.msra.mxu0 %v4485
        %4529 = vmatprep.subr.mxu0 0.0
        %4530 = vmatpush2.msra.mxu0 0.0
        %4531 = vmatprep.subr.mxu0 0.0
        %4532 = vmatpush2.msra.mxu0 0.0
        %4533 = vmatprep.subr.mxu0 0.0
        %4534 = vmatpush2.msra.mxu0 0.0
        %4535 = vmatprep.subr.mxu0 0.0
        %4536 = vmatpush2.msra.mxu0 0.0
        %4537 = vmatprep.subr.mxu0 0.0
        %4538 = vmatpush2.msra.mxu0 0.0
        %4539 = vmatprep.subr.mxu0 0.0
        %4540 = vmatpush2.msra.mxu0 0.0
        %4541 = vmatprep.subr.mxu0 0.0
        %4542 = vmatpush2.msra.mxu0 0.0
        %4543 = vmatprep.subr.mxu0 0.0
        %4544 = vmatpush2.msra.mxu0 0.0
        %4545 = vmatprep.subr.mxu0 0.0
        %4546 = vmatpush2.msra.mxu0 0.0
        %4547 = vmatprep.subr.mxu0 0.0
        %4548 = vmatpush2.msra.mxu0 0.0
        %4549 = vmatprep.subr.mxu0 0.0
        %4550 = vmatpush2.msra.mxu0 0.0
        %4551 = vmatprep.subr.mxu0 0.0
        %4552 = vmatpush2.msra.mxu0 0.0
        %4553 = vmatprep.subr.mxu0 0.0
        %4554 = vmatpush2.msra.mxu0 0.0
        %4555 = vmatprep.subr.mxu0 0.0
        %4556 = vmatpush2.msra.mxu0 0.0
        %4557 = vmatprep.subr.mxu0 0.0
        %4558 = vmatpush2.msra.mxu0 0.0
        %4559 = vmatprep.subr.mxu0 0.0
        %4560 = vmatpush2.msra.mxu0 0.0
        %4561 = vmatprep.mubr.f32.mxu0 0.0
        %4562 = vmatmul.mubr.f32.gmra.mxu0 %v4495
        %v4563 = vpop.f32.mrf.mxu0
        %v4564 = vadd.f32 0.0, %v4563
        %v4565 = vpop.f32.mrf.mxu0
        %4566 = vdwg.mxu0
        %v4567 = vadd.f32 %v4481, %v4564
        %v4568 = vld [vmem:[#allocation6 + $0x1] sm:$0xf]
        %s4569 = scalar_lea.vmem %s13, 192
        %v4570 = vld [vmem:[%s4569] sm:$0xff]
        %v4571 = vld [vmem:[%s4569 + $0x8] sm:$0xff]
        %v4572 = vld [vmem:[%s4569 + $0x10] sm:$0xff]
        %v4573 = vld [vmem:[%s4569 + $0x18] sm:$0xff]
        %v4574 = vld [vmem:[%s4569 + $0x20] sm:$0xff]
        %v4575 = vld [vmem:[%s4569 + $0x28] sm:$0xff]
        %v4576 = vld [vmem:[%s4569 + $0x30] sm:$0xff]
        %v4577 = vld [vmem:[%s4569 + $0x38] sm:$0xff]
        %v4579 = vsel %vm3551, %v4568, 0
        %4581 = vmatprep.subr.mxu0 0.0
        %4582 = vmatpush1.msra.mxu0 0.0
        %4583 = vmatprep.subr.mxu0 0.0
        %4584 = vmatpush1.msra.mxu0 0.0
        %4585 = vmatprep.subr.mxu0 0.0
        %4586 = vmatpush1.msra.mxu0 0.0
        %4587 = vmatprep.subr.mxu0 0.0
        %4588 = vmatpush1.msra.mxu0 0.0
        %4589 = vmatprep.subr.mxu0 0.0
        %4590 = vmatpush1.msra.mxu0 0.0
        %4591 = vmatprep.subr.mxu0 0.0
        %4592 = vmatpush1.msra.mxu0 0.0
        %4593 = vmatprep.subr.mxu0 0.0
        %4594 = vmatpush1.msra.mxu0 0.0
        %4595 = vmatprep.subr.mxu0 0.0
        %4596 = vmatpush1.msra.mxu0 0.0
        %4597 = vmatprep.subr.mxu0 0.0
        %4598 = vmatpush1.msra.mxu0 %v4577
        %4599 = vmatprep.subr.mxu0 0.0
        %4600 = vmatpush1.msra.mxu0 %v4576
        %4601 = vmatprep.subr.mxu0 0.0
        %4602 = vmatpush1.msra.mxu0 %v4575
        %4603 = vmatprep.subr.mxu0 0.0
        %4604 = vmatpush1.msra.mxu0 %v4574
        %4605 = vmatprep.subr.mxu0 0.0
        %4606 = vmatpush1.msra.mxu0 %v4573
        %4607 = vmatprep.subr.mxu0 0.0
        %4608 = vmatpush1.msra.mxu0 %v4572
        %4609 = vmatprep.subr.mxu0 0.0
        %4610 = vmatpush1.msra.mxu0 %v4571
        %4611 = vmatprep.subr.mxu0 0.0
        %4612 = vmatpush1.msra.mxu0 %v4570
        %4613 = vmatprep.subr.mxu0 0.0
        %4614 = vmatpush2.msra.mxu0 0.0
        %4615 = vmatprep.subr.mxu0 0.0
        %4616 = vmatpush2.msra.mxu0 0.0
        %4617 = vmatprep.subr.mxu0 0.0
        %4618 = vmatpush2.msra.mxu0 0.0
        %4619 = vmatprep.subr.mxu0 0.0
        %4620 = vmatpush2.msra.mxu0 0.0
        %4621 = vmatprep.subr.mxu0 0.0
        %4622 = vmatpush2.msra.mxu0 0.0
        %4623 = vmatprep.subr.mxu0 0.0
        %4624 = vmatpush2.msra.mxu0 0.0
        %4625 = vmatprep.subr.mxu0 0.0
        %4626 = vmatpush2.msra.mxu0 0.0
        %4627 = vmatprep.subr.mxu0 0.0
        %4628 = vmatpush2.msra.mxu0 0.0
        %4629 = vmatprep.subr.mxu0 0.0
        %4630 = vmatpush2.msra.mxu0 0.0
        %4631 = vmatprep.subr.mxu0 0.0
        %4632 = vmatpush2.msra.mxu0 0.0
        %4633 = vmatprep.subr.mxu0 0.0
        %4634 = vmatpush2.msra.mxu0 0.0
        %4635 = vmatprep.subr.mxu0 0.0
        %4636 = vmatpush2.msra.mxu0 0.0
        %4637 = vmatprep.subr.mxu0 0.0
        %4638 = vmatpush2.msra.mxu0 0.0
        %4639 = vmatprep.subr.mxu0 0.0
        %4640 = vmatpush2.msra.mxu0 0.0
        %4641 = vmatprep.subr.mxu0 0.0
        %4642 = vmatpush2.msra.mxu0 0.0
        %4643 = vmatprep.subr.mxu0 0.0
        %4644 = vmatpush2.msra.mxu0 0.0
        %4645 = vmatprep.mubr.f32.mxu0 0.0
        %4646 = vmatmul.mubr.f32.gmra.mxu0 %v4579
        %v4647 = vpop.f32.mrf.mxu0
        %v4648 = vadd.f32 0.0, %v4647
        %v4649 = vpop.f32.mrf.mxu0
        %4650 = vdwg.mxu0
        %v4651 = vadd.f32 %v4567, %v4648
        %s4652 = scalar_lea.vmem %s13, 256
        %v4653 = vld [vmem:[%s4652] sm:$0xff]
        %v4654 = vld [vmem:[%s4652 + $0x8] sm:$0xff]
        %v4655 = vld [vmem:[%s4652 + $0x10] sm:$0xff]
        %v4656 = vld [vmem:[%s4652 + $0x18] sm:$0xff]
        %v4657 = vld [vmem:[%s4652 + $0x20] sm:$0xff]
        %v4658 = vld [vmem:[%s4652 + $0x28] sm:$0xff]
        %v4659 = vld [vmem:[%s4652 + $0x30] sm:$0xff]
        %v4660 = vld [vmem:[%s4652 + $0x38] sm:$0xff]
        %4661 = vrot.lane.b32.xlu0 %v4568, 112
        %v4662 = vpop.permute.xlu0 %4661
        %v4663 = vsel %vm3551, %v4662, 0
        %4665 = vmatprep.subr.mxu0 0.0
        %4666 = vmatpush1.msra.mxu0 0.0
        %4667 = vmatprep.subr.mxu0 0.0
        %4668 = vmatpush1.msra.mxu0 0.0
        %4669 = vmatprep.subr.mxu0 0.0
        %4670 = vmatpush1.msra.mxu0 0.0
        %4671 = vmatprep.subr.mxu0 0.0
        %4672 = vmatpush1.msra.mxu0 0.0
        %4673 = vmatprep.subr.mxu0 0.0
        %4674 = vmatpush1.msra.mxu0 0.0
        %4675 = vmatprep.subr.mxu0 0.0
        %4676 = vmatpush1.msra.mxu0 0.0
        %4677 = vmatprep.subr.mxu0 0.0
        %4678 = vmatpush1.msra.mxu0 0.0
        %4679 = vmatprep.subr.mxu0 0.0
        %4680 = vmatpush1.msra.mxu0 0.0
        %4681 = vmatprep.subr.mxu0 0.0
        %4682 = vmatpush1.msra.mxu0 %v4660
        %4683 = vmatprep.subr.mxu0 0.0
        %4684 = vmatpush1.msra.mxu0 %v4659
        %4685 = vmatprep.subr.mxu0 0.0
        %4686 = vmatpush1.msra.mxu0 %v4658
        %4687 = vmatprep.subr.mxu0 0.0
        %4688 = vmatpush1.msra.mxu0 %v4657
        %4689 = vmatprep.subr.mxu0 0.0
        %4690 = vmatpush1.msra.mxu0 %v4656
        %4691 = vmatprep.subr.mxu0 0.0
        %4692 = vmatpush1.msra.mxu0 %v4655
        %4693 = vmatprep.subr.mxu0 0.0
        %4694 = vmatpush1.msra.mxu0 %v4654
        %4695 = vmatprep.subr.mxu0 0.0
        %4696 = vmatpush1.msra.mxu0 %v4653
        %4697 = vmatprep.subr.mxu0 0.0
        %4698 = vmatpush2.msra.mxu0 0.0
        %4699 = vmatprep.subr.mxu0 0.0
        %4700 = vmatpush2.msra.mxu0 0.0
        %4701 = vmatprep.subr.mxu0 0.0
        %4702 = vmatpush2.msra.mxu0 0.0
        %4703 = vmatprep.subr.mxu0 0.0
        %4704 = vmatpush2.msra.mxu0 0.0
        %4705 = vmatprep.subr.mxu0 0.0
        %4706 = vmatpush2.msra.mxu0 0.0
        %4707 = vmatprep.subr.mxu0 0.0
        %4708 = vmatpush2.msra.mxu0 0.0
        %4709 = vmatprep.subr.mxu0 0.0
        %4710 = vmatpush2.msra.mxu0 0.0
        %4711 = vmatprep.subr.mxu0 0.0
        %4712 = vmatpush2.msra.mxu0 0.0
        %4713 = vmatprep.subr.mxu0 0.0
        %4714 = vmatpush2.msra.mxu0 0.0
        %4715 = vmatprep.subr.mxu0 0.0
        %4716 = vmatpush2.msra.mxu0 0.0
        %4717 = vmatprep.subr.mxu0 0.0
        %4718 = vmatpush2.msra.mxu0 0.0
        %4719 = vmatprep.subr.mxu0 0.0
        %4720 = vmatpush2.msra.mxu0 0.0
        %4721 = vmatprep.subr.mxu0 0.0
        %4722 = vmatpush2.msra.mxu0 0.0
        %4723 = vmatprep.subr.mxu0 0.0
        %4724 = vmatpush2.msra.mxu0 0.0
        %4725 = vmatprep.subr.mxu0 0.0
        %4726 = vmatpush2.msra.mxu0 0.0
        %4727 = vmatprep.subr.mxu0 0.0
        %4728 = vmatpush2.msra.mxu0 0.0
        %4729 = vmatprep.mubr.f32.mxu0 0.0
        %4730 = vmatmul.mubr.f32.gmra.mxu0 %v4663
        %v4731 = vpop.f32.mrf.mxu0
        %v4732 = vadd.f32 0.0, %v4731
        %v4733 = vpop.f32.mrf.mxu0
        %4734 = vdwg.mxu0
        %v4735 = vadd.f32 %v4651, %v4732
        %s4736 = scalar_lea.vmem %s13, 320
        %v4737 = vld [vmem:[%s4736] sm:$0xff]
        %v4738 = vld [vmem:[%s4736 + $0x8] sm:$0xff]
        %v4739 = vld [vmem:[%s4736 + $0x10] sm:$0xff]
        %v4740 = vld [vmem:[%s4736 + $0x18] sm:$0xff]
        %v4741 = vld [vmem:[%s4736 + $0x20] sm:$0xff]
        %v4742 = vld [vmem:[%s4736 + $0x28] sm:$0xff]
        %v4743 = vld [vmem:[%s4736 + $0x30] sm:$0xff]
        %v4744 = vld [vmem:[%s4736 + $0x38] sm:$0xff]
        %4745 = vrot.lane.b32.xlu0 %v4568, 96
        %v4746 = vpop.permute.xlu0 %4745
        %v4747 = vsel %vm3551, %v4746, 0
        %4749 = vmatprep.subr.mxu0 0.0
        %4750 = vmatpush1.msra.mxu0 0.0
        %4751 = vmatprep.subr.mxu0 0.0
        %4752 = vmatpush1.msra.mxu0 0.0
        %4753 = vmatprep.subr.mxu0 0.0
        %4754 = vmatpush1.msra.mxu0 0.0
        %4755 = vmatprep.subr.mxu0 0.0
        %4756 = vmatpush1.msra.mxu0 0.0
        %4757 = vmatprep.subr.mxu0 0.0
        %4758 = vmatpush1.msra.mxu0 0.0
        %4759 = vmatprep.subr.mxu0 0.0
        %4760 = vmatpush1.msra.mxu0 0.0
        %4761 = vmatprep.subr.mxu0 0.0
        %4762 = vmatpush1.msra.mxu0 0.0
        %4763 = vmatprep.subr.mxu0 0.0
        %4764 = vmatpush1.msra.mxu0 0.0
        %4765 = vmatprep.subr.mxu0 0.0
        %4766 = vmatpush1.msra.mxu0 %v4744
        %4767 = vmatprep.subr.mxu0 0.0
        %4768 = vmatpush1.msra.mxu0 %v4743
        %4769 = vmatprep.subr.mxu0 0.0
        %4770 = vmatpush1.msra.mxu0 %v4742
        %4771 = vmatprep.subr.mxu0 0.0
        %4772 = vmatpush1.msra.mxu0 %v4741
        %4773 = vmatprep.subr.mxu0 0.0
        %4774 = vmatpush1.msra.mxu0 %v4740
        %4775 = vmatprep.subr.mxu0 0.0
        %4776 = vmatpush1.msra.mxu0 %v4739
        %4777 = vmatprep.subr.mxu0 0.0
        %4778 = vmatpush1.msra.mxu0 %v4738
        %4779 = vmatprep.subr.mxu0 0.0
        %4780 = vmatpush1.msra.mxu0 %v4737
        %4781 = vmatprep.subr.mxu0 0.0
        %4782 = vmatpush2.msra.mxu0 0.0
        %4783 = vmatprep.subr.mxu0 0.0
        %4784 = vmatpush2.msra.mxu0 0.0
        %4785 = vmatprep.subr.mxu0 0.0
        %4786 = vmatpush2.msra.mxu0 0.0
        %4787 = vmatprep.subr.mxu0 0.0
        %4788 = vmatpush2.msra.mxu0 0.0
        %4789 = vmatprep.subr.mxu0 0.0
        %4790 = vmatpush2.msra.mxu0 0.0
        %4791 = vmatprep.subr.mxu0 0.0
        %4792 = vmatpush2.msra.mxu0 0.0
        %4793 = vmatprep.subr.mxu0 0.0
        %4794 = vmatpush2.msra.mxu0 0.0
        %4795 = vmatprep.subr.mxu0 0.0
        %4796 = vmatpush2.msra.mxu0 0.0
        %4797 = vmatprep.subr.mxu0 0.0
        %4798 = vmatpush2.msra.mxu0 0.0
        %4799 = vmatprep.subr.mxu0 0.0
        %4800 = vmatpush2.msra.mxu0 0.0
        %4801 = vmatprep.subr.mxu0 0.0
        %4802 = vmatpush2.msra.mxu0 0.0
        %4803 = vmatprep.subr.mxu0 0.0
        %4804 = vmatpush2.msra.mxu0 0.0
        %4805 = vmatprep.subr.mxu0 0.0
        %4806 = vmatpush2.msra.mxu0 0.0
        %4807 = vmatprep.subr.mxu0 0.0
        %4808 = vmatpush2.msra.mxu0 0.0
        %4809 = vmatprep.subr.mxu0 0.0
        %4810 = vmatpush2.msra.mxu0 0.0
        %4811 = vmatprep.subr.mxu0 0.0
        %4812 = vmatpush2.msra.mxu0 0.0
        %4813 = vmatprep.mubr.f32.mxu0 0.0
        %4814 = vmatmul.mubr.f32.gmra.mxu0 %v4747
        %v4815 = vpop.f32.mrf.mxu0
        %v4816 = vadd.f32 0.0, %v4815
        %v4817 = vpop.f32.mrf.mxu0
        %4818 = vdwg.mxu0
        %v4819 = vadd.f32 %v4735, %v4816
        %v4820 = vld [vmem:[#allocation6 + $0x2] sm:$0xf]
        %s4821 = scalar_lea.vmem %s13, 384
        %v4822 = vld [vmem:[%s4821] sm:$0xff]
        %v4823 = vld [vmem:[%s4821 + $0x8] sm:$0xff]
        %v4824 = vld [vmem:[%s4821 + $0x10] sm:$0xff]
        %v4825 = vld [vmem:[%s4821 + $0x18] sm:$0xff]
        %v4826 = vld [vmem:[%s4821 + $0x20] sm:$0xff]
        %v4827 = vld [vmem:[%s4821 + $0x28] sm:$0xff]
        %v4828 = vld [vmem:[%s4821 + $0x30] sm:$0xff]
        %v4829 = vld [vmem:[%s4821 + $0x38] sm:$0xff]
        %v4831 = vsel %vm3551, %v4820, 0
        %4833 = vmatprep.subr.mxu0 0.0
        %4834 = vmatpush1.msra.mxu0 0.0
        %4835 = vmatprep.subr.mxu0 0.0
        %4836 = vmatpush1.msra.mxu0 0.0
        %4837 = vmatprep.subr.mxu0 0.0
        %4838 = vmatpush1.msra.mxu0 0.0
        %4839 = vmatprep.subr.mxu0 0.0
        %4840 = vmatpush1.msra.mxu0 0.0
        %4841 = vmatprep.subr.mxu0 0.0
        %4842 = vmatpush1.msra.mxu0 0.0
        %4843 = vmatprep.subr.mxu0 0.0
        %4844 = vmatpush1.msra.mxu0 0.0
        %4845 = vmatprep.subr.mxu0 0.0
        %4846 = vmatpush1.msra.mxu0 0.0
        %4847 = vmatprep.subr.mxu0 0.0
        %4848 = vmatpush1.msra.mxu0 0.0
        %4849 = vmatprep.subr.mxu0 0.0
        %4850 = vmatpush1.msra.mxu0 %v4829
        %4851 = vmatprep.subr.mxu0 0.0
        %4852 = vmatpush1.msra.mxu0 %v4828
        %4853 = vmatprep.subr.mxu0 0.0
        %4854 = vmatpush1.msra.mxu0 %v4827
        %4855 = vmatprep.subr.mxu0 0.0
        %4856 = vmatpush1.msra.mxu0 %v4826
        %4857 = vmatprep.subr.mxu0 0.0
        %4858 = vmatpush1.msra.mxu0 %v4825
        %4859 = vmatprep.subr.mxu0 0.0
        %4860 = vmatpush1.msra.mxu0 %v4824
        %4861 = vmatprep.subr.mxu0 0.0
        %4862 = vmatpush1.msra.mxu0 %v4823
        %4863 = vmatprep.subr.mxu0 0.0
        %4864 = vmatpush1.msra.mxu0 %v4822
        %4865 = vmatprep.subr.mxu0 0.0
        %4866 = vmatpush2.msra.mxu0 0.0
        %4867 = vmatprep.subr.mxu0 0.0
        %4868 = vmatpush2.msra.mxu0 0.0
        %4869 = vmatprep.subr.mxu0 0.0
        %4870 = vmatpush2.msra.mxu0 0.0
        %4871 = vmatprep.subr.mxu0 0.0
        %4872 = vmatpush2.msra.mxu0 0.0
        %4873 = vmatprep.subr.mxu0 0.0
        %4874 = vmatpush2.msra.mxu0 0.0
        %4875 = vmatprep.subr.mxu0 0.0
        %4876 = vmatpush2.msra.mxu0 0.0
        %4877 = vmatprep.subr.mxu0 0.0
        %4878 = vmatpush2.msra.mxu0 0.0
        %4879 = vmatprep.subr.mxu0 0.0
        %4880 = vmatpush2.msra.mxu0 0.0
        %4881 = vmatprep.subr.mxu0 0.0
        %4882 = vmatpush2.msra.mxu0 0.0
        %4883 = vmatprep.subr.mxu0 0.0
        %4884 = vmatpush2.msra.mxu0 0.0
        %4885 = vmatprep.subr.mxu0 0.0
        %4886 = vmatpush2.msra.mxu0 0.0
        %4887 = vmatprep.subr.mxu0 0.0
        %4888 = vmatpush2.msra.mxu0 0.0
        %4889 = vmatprep.subr.mxu0 0.0
        %4890 = vmatpush2.msra.mxu0 0.0
        %4891 = vmatprep.subr.mxu0 0.0
        %4892 = vmatpush2.msra.mxu0 0.0
        %4893 = vmatprep.subr.mxu0 0.0
        %4894 = vmatpush2.msra.mxu0 0.0
        %4895 = vmatprep.subr.mxu0 0.0
        %4896 = vmatpush2.msra.mxu0 0.0
        %4897 = vmatprep.mubr.f32.mxu0 0.0
        %4898 = vmatmul.mubr.f32.gmra.mxu0 %v4831
        %v4899 = vpop.f32.mrf.mxu0
        %v4900 = vadd.f32 0.0, %v4899
        %v4901 = vpop.f32.mrf.mxu0
        %4902 = vdwg.mxu0
        %v4903 = vadd.f32 %v4819, %v4900
        %s4904 = scalar_lea.vmem %s13, 448
        %v4905 = vld [vmem:[%s4904] sm:$0xff]
        %v4906 = vld [vmem:[%s4904 + $0x8] sm:$0xff]
        %v4907 = vld [vmem:[%s4904 + $0x10] sm:$0xff]
        %v4908 = vld [vmem:[%s4904 + $0x18] sm:$0xff]
        %v4909 = vld [vmem:[%s4904 + $0x20] sm:$0xff]
        %v4910 = vld [vmem:[%s4904 + $0x28] sm:$0xff]
        %v4911 = vld [vmem:[%s4904 + $0x30] sm:$0xff]
        %v4912 = vld [vmem:[%s4904 + $0x38] sm:$0xff]
        %4913 = vrot.lane.b32.xlu0 %v4820, 112
        %v4914 = vpop.permute.xlu0 %4913
        %v4915 = vsel %vm3551, %v4914, 0
        %4917 = vmatprep.subr.mxu0 0.0
        %4918 = vmatpush1.msra.mxu0 0.0
        %4919 = vmatprep.subr.mxu0 0.0
        %4920 = vmatpush1.msra.mxu0 0.0
        %4921 = vmatprep.subr.mxu0 0.0
        %4922 = vmatpush1.msra.mxu0 0.0
        %4923 = vmatprep.subr.mxu0 0.0
        %4924 = vmatpush1.msra.mxu0 0.0
        %4925 = vmatprep.subr.mxu0 0.0
        %4926 = vmatpush1.msra.mxu0 0.0
        %4927 = vmatprep.subr.mxu0 0.0
        %4928 = vmatpush1.msra.mxu0 0.0
        %4929 = vmatprep.subr.mxu0 0.0
        %4930 = vmatpush1.msra.mxu0 0.0
        %4931 = vmatprep.subr.mxu0 0.0
        %4932 = vmatpush1.msra.mxu0 0.0
        %4933 = vmatprep.subr.mxu0 0.0
        %4934 = vmatpush1.msra.mxu0 %v4912
        %4935 = vmatprep.subr.mxu0 0.0
        %4936 = vmatpush1.msra.mxu0 %v4911
        %4937 = vmatprep.subr.mxu0 0.0
        %4938 = vmatpush1.msra.mxu0 %v4910
        %4939 = vmatprep.subr.mxu0 0.0
        %4940 = vmatpush1.msra.mxu0 %v4909
        %4941 = vmatprep.subr.mxu0 0.0
        %4942 = vmatpush1.msra.mxu0 %v4908
        %4943 = vmatprep.subr.mxu0 0.0
        %4944 = vmatpush1.msra.mxu0 %v4907
        %4945 = vmatprep.subr.mxu0 0.0
        %4946 = vmatpush1.msra.mxu0 %v4906
        %4947 = vmatprep.subr.mxu0 0.0
        %4948 = vmatpush1.msra.mxu0 %v4905
        %4949 = vmatprep.subr.mxu0 0.0
        %4950 = vmatpush2.msra.mxu0 0.0
        %4951 = vmatprep.subr.mxu0 0.0
        %4952 = vmatpush2.msra.mxu0 0.0
        %4953 = vmatprep.subr.mxu0 0.0
        %4954 = vmatpush2.msra.mxu0 0.0
        %4955 = vmatprep.subr.mxu0 0.0
        %4956 = vmatpush2.msra.mxu0 0.0
        %4957 = vmatprep.subr.mxu0 0.0
        %4958 = vmatpush2.msra.mxu0 0.0
        %4959 = vmatprep.subr.mxu0 0.0
        %4960 = vmatpush2.msra.mxu0 0.0
        %4961 = vmatprep.subr.mxu0 0.0
        %4962 = vmatpush2.msra.mxu0 0.0
        %4963 = vmatprep.subr.mxu0 0.0
        %4964 = vmatpush2.msra.mxu0 0.0
        %4965 = vmatprep.subr.mxu0 0.0
        %4966 = vmatpush2.msra.mxu0 0.0
        %4967 = vmatprep.subr.mxu0 0.0
        %4968 = vmatpush2.msra.mxu0 0.0
        %4969 = vmatprep.subr.mxu0 0.0
        %4970 = vmatpush2.msra.mxu0 0.0
        %4971 = vmatprep.subr.mxu0 0.0
        %4972 = vmatpush2.msra.mxu0 0.0
        %4973 = vmatprep.subr.mxu0 0.0
        %4974 = vmatpush2.msra.mxu0 0.0
        %4975 = vmatprep.subr.mxu0 0.0
        %4976 = vmatpush2.msra.mxu0 0.0
        %4977 = vmatprep.subr.mxu0 0.0
        %4978 = vmatpush2.msra.mxu0 0.0
        %4979 = vmatprep.subr.mxu0 0.0
        %4980 = vmatpush2.msra.mxu0 0.0
        %4981 = vmatprep.mubr.f32.mxu0 0.0
        %4982 = vmatmul.mubr.f32.gmra.mxu0 %v4915
        %v4983 = vpop.f32.mrf.mxu0
        %v4984 = vadd.f32 0.0, %v4983
        %v4985 = vpop.f32.mrf.mxu0
        %4986 = vdwg.mxu0
        %v4987 = vadd.f32 %v4903, %v4984
        %s4988 = scalar_lea.vmem %s13, 512
        %v4989 = vld [vmem:[%s4988] sm:$0xff]
        %v4990 = vld [vmem:[%s4988 + $0x8] sm:$0xff]
        %v4991 = vld [vmem:[%s4988 + $0x10] sm:$0xff]
        %v4992 = vld [vmem:[%s4988 + $0x18] sm:$0xff]
        %v4993 = vld [vmem:[%s4988 + $0x20] sm:$0xff]
        %v4994 = vld [vmem:[%s4988 + $0x28] sm:$0xff]
        %v4995 = vld [vmem:[%s4988 + $0x30] sm:$0xff]
        %v4996 = vld [vmem:[%s4988 + $0x38] sm:$0xff]
        %4997 = vrot.lane.b32.xlu0 %v4820, 96
        %v4998 = vpop.permute.xlu0 %4997
        %v4999 = vsel %vm3551, %v4998, 0
        %5001 = vmatprep.subr.mxu0 0.0
        %5002 = vmatpush1.msra.mxu0 0.0
        %5003 = vmatprep.subr.mxu0 0.0
        %5004 = vmatpush1.msra.mxu0 0.0
        %5005 = vmatprep.subr.mxu0 0.0
        %5006 = vmatpush1.msra.mxu0 0.0
        %5007 = vmatprep.subr.mxu0 0.0
        %5008 = vmatpush1.msra.mxu0 0.0
        %5009 = vmatprep.subr.mxu0 0.0
        %5010 = vmatpush1.msra.mxu0 0.0
        %5011 = vmatprep.subr.mxu0 0.0
        %5012 = vmatpush1.msra.mxu0 0.0
        %5013 = vmatprep.subr.mxu0 0.0
        %5014 = vmatpush1.msra.mxu0 0.0
        %5015 = vmatprep.subr.mxu0 0.0
        %5016 = vmatpush1.msra.mxu0 0.0
        %5017 = vmatprep.subr.mxu0 0.0
        %5018 = vmatpush1.msra.mxu0 %v4996
        %5019 = vmatprep.subr.mxu0 0.0
        %5020 = vmatpush1.msra.mxu0 %v4995
        %5021 = vmatprep.subr.mxu0 0.0
        %5022 = vmatpush1.msra.mxu0 %v4994
        %5023 = vmatprep.subr.mxu0 0.0
        %5024 = vmatpush1.msra.mxu0 %v4993
        %5025 = vmatprep.subr.mxu0 0.0
        %5026 = vmatpush1.msra.mxu0 %v4992
        %5027 = vmatprep.subr.mxu0 0.0
        %5028 = vmatpush1.msra.mxu0 %v4991
        %5029 = vmatprep.subr.mxu0 0.0
        %5030 = vmatpush1.msra.mxu0 %v4990
        %5031 = vmatprep.subr.mxu0 0.0
        %5032 = vmatpush1.msra.mxu0 %v4989
        %5033 = vmatprep.subr.mxu0 0.0
        %5034 = vmatpush2.msra.mxu0 0.0
        %5035 = vmatprep.subr.mxu0 0.0
        %5036 = vmatpush2.msra.mxu0 0.0
        %5037 = vmatprep.subr.mxu0 0.0
        %5038 = vmatpush2.msra.mxu0 0.0
        %5039 = vmatprep.subr.mxu0 0.0
        %5040 = vmatpush2.msra.mxu0 0.0
        %5041 = vmatprep.subr.mxu0 0.0
        %5042 = vmatpush2.msra.mxu0 0.0
        %5043 = vmatprep.subr.mxu0 0.0
        %5044 = vmatpush2.msra.mxu0 0.0
        %5045 = vmatprep.subr.mxu0 0.0
        %5046 = vmatpush2.msra.mxu0 0.0
        %5047 = vmatprep.subr.mxu0 0.0
        %5048 = vmatpush2.msra.mxu0 0.0
        %5049 = vmatprep.subr.mxu0 0.0
        %5050 = vmatpush2.msra.mxu0 0.0
        %5051 = vmatprep.subr.mxu0 0.0
        %5052 = vmatpush2.msra.mxu0 0.0
        %5053 = vmatprep.subr.mxu0 0.0
        %5054 = vmatpush2.msra.mxu0 0.0
        %5055 = vmatprep.subr.mxu0 0.0
        %5056 = vmatpush2.msra.mxu0 0.0
        %5057 = vmatprep.subr.mxu0 0.0
        %5058 = vmatpush2.msra.mxu0 0.0
        %5059 = vmatprep.subr.mxu0 0.0
        %5060 = vmatpush2.msra.mxu0 0.0
        %5061 = vmatprep.subr.mxu0 0.0
        %5062 = vmatpush2.msra.mxu0 0.0
        %5063 = vmatprep.subr.mxu0 0.0
        %5064 = vmatpush2.msra.mxu0 0.0
        %5065 = vmatprep.mubr.f32.mxu0 0.0
        %5066 = vmatmul.mubr.f32.gmra.mxu0 %v4999
        %v5067 = vpop.f32.mrf.mxu0
        %v5068 = vadd.f32 0.0, %v5067
        %v5069 = vpop.f32.mrf.mxu0
        %5070 = vdwg.mxu0
        %v5071 = vadd.f32 %v4987, %v5068
        %v5072 = vld [vmem:[%s14] sm:$0x1]
        %v5074 = vlaneseq
        %v5075 = vshrl.u32 %v5074, 7
        %v5076 = vsub.s32 0, %v5075
        %v5077 = vrot.slane %v5072, %v5076
        %v5079 = vmul.f32 %v5071, %v5077
        %v5080 = vld [vmem:[%s15] sm:$0x1]
        %v5082 = vlaneseq
        %v5083 = vshrl.u32 %v5082, 7
        %v5084 = vsub.s32 0, %v5083
        %v5085 = vrot.slane %v5080, %v5084
        %v5087 = vadd.f32 %v5079, %v5085
        %v5088 = vmax.f32 %v5087, 0.0
        %5089 = vst [vmem:[#allocation7] sm:$0x3f] 0.0
        %vm5090 = vcmask 521216
        %5091 = vst.msk [vmem:[#allocation7 + $0x8] sm:$0x3f] %vm5090, 0.0
        %v5093 = vrot.slane %v5088, 7
        %5094 = vrot.lane.b32.xlu0 %v5093, 32
        %v5095 = vpop.permute.xlu0 %5094
        %vm5097 = vcmask 1044737
        %5098 = vst.msk [vmem:[#allocation7] sm:$0x1e] %vm5097, %v5095
        %vm5099 = vcmask 258049
        %5100 = vst.msk [vmem:[#allocation7 + $0x8] sm:$0x1e] %vm5099, %v5095
        %v5101 = vld [vmem:[#allocation7] sm:$0xf]
        %v5102 = vld [vmem:[%s16] sm:$0xff]
        %v5103 = vld [vmem:[%s16 + $0x8] sm:$0xff]
        %v5104 = vld [vmem:[%s16 + $0x10] sm:$0xff]
        %v5105 = vld [vmem:[%s16 + $0x18] sm:$0xff]
        %v5106 = vld [vmem:[%s16 + $0x20] sm:$0xff]
        %v5107 = vld [vmem:[%s16 + $0x28] sm:$0xff]
        %v5108 = vld [vmem:[%s16 + $0x30] sm:$0xff]
        %v5109 = vld [vmem:[%s16 + $0x38] sm:$0xff]
        %v5110 = vld [vmem:[%s16 + $0x40] sm:$0xff]
        %v5111 = vld [vmem:[%s16 + $0x48] sm:$0xff]
        %v5112 = vld [vmem:[%s16 + $0x50] sm:$0xff]
        %v5113 = vld [vmem:[%s16 + $0x58] sm:$0xff]
        %v5114 = vld [vmem:[%s16 + $0x60] sm:$0xff]
        %v5115 = vld [vmem:[%s16 + $0x68] sm:$0xff]
        %v5116 = vld [vmem:[%s16 + $0x70] sm:$0xff]
        %v5117 = vld [vmem:[%s16 + $0x78] sm:$0xff]
        %v5118 = vld [vmem:[#allocation7 + $0x8] sm:$0xf]
        %s5119 = scalar_lea.vmem %s16, 128
        %v5120 = vld [vmem:[%s5119] sm:$0xff]
        %v5121 = vld [vmem:[%s5119 + $0x8] sm:$0xff]
        %v5122 = vld [vmem:[%s5119 + $0x10] sm:$0xff]
        %v5123 = vld [vmem:[%s5119 + $0x18] sm:$0xff]
        %v5124 = vld [vmem:[%s5119 + $0x20] sm:$0xff]
        %v5125 = vld [vmem:[%s5119 + $0x28] sm:$0xff]
        %v5126 = vld [vmem:[%s5119 + $0x30] sm:$0xff]
        %v5127 = vld [vmem:[%s5119 + $0x38] sm:$0xff]
        %v5128 = vld [vmem:[%s5119 + $0x40] sm:$0xff]
        %v5129 = vld [vmem:[%s5119 + $0x48] sm:$0xff]
        %v5130 = vld [vmem:[%s5119 + $0x50] sm:$0xff]
        %v5131 = vld [vmem:[%s5119 + $0x58] sm:$0xff]
        %v5132 = vld [vmem:[%s5119 + $0x60] sm:$0xff]
        %v5133 = vld [vmem:[%s5119 + $0x68] sm:$0xff]
        %v5134 = vld [vmem:[%s5119 + $0x70] sm:$0xff]
        %v5135 = vld [vmem:[%s5119 + $0x78] sm:$0xff]
        %5138 = vrot.lane.b32.xlu0 %v5101, 96
        %v5139 = vpop.permute.xlu0 %5138
        %5140 = vrot.lane.b32.xlu0 %v5118, 96
        %v5141 = vpop.permute.xlu0 %5140
        %v5142 = vsel %vm3520, %v5139, %v5141
        %5144 = vmatprep.subr.mxu0 0.0
        %5145 = vmatpush1.msra.mxu0 %v5135
        %5146 = vmatprep.subr.mxu0 0.0
        %5147 = vmatpush1.msra.mxu0 %v5134
        %5148 = vmatprep.subr.mxu0 0.0
        %5149 = vmatpush1.msra.mxu0 %v5133
        %5150 = vmatprep.subr.mxu0 0.0
        %5151 = vmatpush1.msra.mxu0 %v5132
        %5152 = vmatprep.subr.mxu0 0.0
        %5153 = vmatpush1.msra.mxu0 %v5131
        %5154 = vmatprep.subr.mxu0 0.0
        %5155 = vmatpush1.msra.mxu0 %v5130
        %5156 = vmatprep.subr.mxu0 0.0
        %5157 = vmatpush1.msra.mxu0 %v5129
        %5158 = vmatprep.subr.mxu0 0.0
        %5159 = vmatpush1.msra.mxu0 %v5128
        %5160 = vmatprep.subr.mxu0 0.0
        %5161 = vmatpush1.msra.mxu0 %v5127
        %5162 = vmatprep.subr.mxu0 0.0
        %5163 = vmatpush1.msra.mxu0 %v5126
        %5164 = vmatprep.subr.mxu0 0.0
        %5165 = vmatpush1.msra.mxu0 %v5125
        %5166 = vmatprep.subr.mxu0 0.0
        %5167 = vmatpush1.msra.mxu0 %v5124
        %5168 = vmatprep.subr.mxu0 0.0
        %5169 = vmatpush1.msra.mxu0 %v5123
        %5170 = vmatprep.subr.mxu0 0.0
        %5171 = vmatpush1.msra.mxu0 %v5122
        %5172 = vmatprep.subr.mxu0 0.0
        %5173 = vmatpush1.msra.mxu0 %v5121
        %5174 = vmatprep.subr.mxu0 0.0
        %5175 = vmatpush1.msra.mxu0 %v5120
        %5176 = vmatprep.subr.mxu0 0.0
        %5177 = vmatpush2.msra.mxu0 0.0
        %5178 = vmatprep.subr.mxu0 0.0
        %5179 = vmatpush2.msra.mxu0 0.0
        %5180 = vmatprep.subr.mxu0 0.0
        %5181 = vmatpush2.msra.mxu0 0.0
        %5182 = vmatprep.subr.mxu0 0.0
        %5183 = vmatpush2.msra.mxu0 0.0
        %5184 = vmatprep.subr.mxu0 0.0
        %5185 = vmatpush2.msra.mxu0 0.0
        %5186 = vmatprep.subr.mxu0 0.0
        %5187 = vmatpush2.msra.mxu0 0.0
        %5188 = vmatprep.subr.mxu0 0.0
        %5189 = vmatpush2.msra.mxu0 0.0
        %5190 = vmatprep.subr.mxu0 0.0
        %5191 = vmatpush2.msra.mxu0 0.0
        %5192 = vmatprep.subr.mxu0 0.0
        %5193 = vmatpush2.msra.mxu0 0.0
        %5194 = vmatprep.subr.mxu0 0.0
        %5195 = vmatpush2.msra.mxu0 0.0
        %5196 = vmatprep.subr.mxu0 0.0
        %5197 = vmatpush2.msra.mxu0 0.0
        %5198 = vmatprep.subr.mxu0 0.0
        %5199 = vmatpush2.msra.mxu0 0.0
        %5200 = vmatprep.subr.mxu0 0.0
        %5201 = vmatpush2.msra.mxu0 0.0
        %5202 = vmatprep.subr.mxu0 0.0
        %5203 = vmatpush2.msra.mxu0 0.0
        %5204 = vmatprep.subr.mxu0 0.0
        %5205 = vmatpush2.msra.mxu0 0.0
        %5206 = vmatprep.subr.mxu0 0.0
        %5207 = vmatpush2.msra.mxu0 0.0
        %5208 = vmatprep.mubr.f32.mxu0 0.0
        %5209 = vmatmul.mubr.f32.gmra.mxu0 %v5142
        %v5210 = vpop.f32.mrf.mxu0
        %v5211 = vadd.f32 0.0, %v5210
        %v5212 = vpop.f32.mrf.mxu0
        %5213 = vdwg.mxu0
        %5214 = vmatprep.subr.mxu0 0.0
        %5215 = vmatpush1.msra.mxu0 %v5117
        %5216 = vmatprep.subr.mxu0 0.0
        %5217 = vmatpush1.msra.mxu0 %v5116
        %5218 = vmatprep.subr.mxu0 0.0
        %5219 = vmatpush1.msra.mxu0 %v5115
        %5220 = vmatprep.subr.mxu0 0.0
        %5221 = vmatpush1.msra.mxu0 %v5114
        %5222 = vmatprep.subr.mxu0 0.0
        %5223 = vmatpush1.msra.mxu0 %v5113
        %5224 = vmatprep.subr.mxu0 0.0
        %5225 = vmatpush1.msra.mxu0 %v5112
        %5226 = vmatprep.subr.mxu0 0.0
        %5227 = vmatpush1.msra.mxu0 %v5111
        %5228 = vmatprep.subr.mxu0 0.0
        %5229 = vmatpush1.msra.mxu0 %v5110
        %5230 = vmatprep.subr.mxu0 0.0
        %5231 = vmatpush1.msra.mxu0 %v5109
        %5232 = vmatprep.subr.mxu0 0.0
        %5233 = vmatpush1.msra.mxu0 %v5108
        %5234 = vmatprep.subr.mxu0 0.0
        %5235 = vmatpush1.msra.mxu0 %v5107
        %5236 = vmatprep.subr.mxu0 0.0
        %5237 = vmatpush1.msra.mxu0 %v5106
        %5238 = vmatprep.subr.mxu0 0.0
        %5239 = vmatpush1.msra.mxu0 %v5105
        %5240 = vmatprep.subr.mxu0 0.0
        %5241 = vmatpush1.msra.mxu0 %v5104
        %5242 = vmatprep.subr.mxu0 0.0
        %5243 = vmatpush1.msra.mxu0 %v5103
        %5244 = vmatprep.subr.mxu0 0.0
        %5245 = vmatpush1.msra.mxu0 %v5102
        %5246 = vmatprep.subr.mxu0 0.0
        %5247 = vmatpush2.msra.mxu0 0.0
        %5248 = vmatprep.subr.mxu0 0.0
        %5249 = vmatpush2.msra.mxu0 0.0
        %5250 = vmatprep.subr.mxu0 0.0
        %5251 = vmatpush2.msra.mxu0 0.0
        %5252 = vmatprep.subr.mxu0 0.0
        %5253 = vmatpush2.msra.mxu0 0.0
        %5254 = vmatprep.subr.mxu0 0.0
        %5255 = vmatpush2.msra.mxu0 0.0
        %5256 = vmatprep.subr.mxu0 0.0
        %5257 = vmatpush2.msra.mxu0 0.0
        %5258 = vmatprep.subr.mxu0 0.0
        %5259 = vmatpush2.msra.mxu0 0.0
        %5260 = vmatprep.subr.mxu0 0.0
        %5261 = vmatpush2.msra.mxu0 0.0
        %5262 = vmatprep.subr.mxu0 0.0
        %5263 = vmatpush2.msra.mxu0 0.0
        %5264 = vmatprep.subr.mxu0 0.0
        %5265 = vmatpush2.msra.mxu0 0.0
        %5266 = vmatprep.subr.mxu0 0.0
        %5267 = vmatpush2.msra.mxu0 0.0
        %5268 = vmatprep.subr.mxu0 0.0
        %5269 = vmatpush2.msra.mxu0 0.0
        %5270 = vmatprep.subr.mxu0 0.0
        %5271 = vmatpush2.msra.mxu0 0.0
        %5272 = vmatprep.subr.mxu0 0.0
        %5273 = vmatpush2.msra.mxu0 0.0
        %5274 = vmatprep.subr.mxu0 0.0
        %5275 = vmatpush2.msra.mxu0 0.0
        %5276 = vmatprep.subr.mxu0 0.0
        %5277 = vmatpush2.msra.mxu0 0.0
        %5278 = vmatprep.mubr.f32.mxu0 0.0
        %5279 = vmatmul.mubr.f32.gmra.mxu0 %v5101
        %v5280 = vpop.f32.mrf.mxu0
        %v5281 = vadd.f32 %v5211, %v5280
        %v5282 = vpop.f32.mrf.mxu0
        %5283 = vdwg.mxu0
        %s5284 = scalar_lea.vmem %s16, 256
        %v5285 = vld [vmem:[%s5284] sm:$0xff]
        %v5286 = vld [vmem:[%s5284 + $0x8] sm:$0xff]
        %v5287 = vld [vmem:[%s5284 + $0x10] sm:$0xff]
        %v5288 = vld [vmem:[%s5284 + $0x18] sm:$0xff]
        %v5289 = vld [vmem:[%s5284 + $0x20] sm:$0xff]
        %v5290 = vld [vmem:[%s5284 + $0x28] sm:$0xff]
        %v5291 = vld [vmem:[%s5284 + $0x30] sm:$0xff]
        %v5292 = vld [vmem:[%s5284 + $0x38] sm:$0xff]
        %v5293 = vld [vmem:[%s5284 + $0x40] sm:$0xff]
        %v5294 = vld [vmem:[%s5284 + $0x48] sm:$0xff]
        %v5295 = vld [vmem:[%s5284 + $0x50] sm:$0xff]
        %v5296 = vld [vmem:[%s5284 + $0x58] sm:$0xff]
        %v5297 = vld [vmem:[%s5284 + $0x60] sm:$0xff]
        %v5298 = vld [vmem:[%s5284 + $0x68] sm:$0xff]
        %v5299 = vld [vmem:[%s5284 + $0x70] sm:$0xff]
        %v5300 = vld [vmem:[%s5284 + $0x78] sm:$0xff]
        %5301 = vrot.lane.b32.xlu0 %v5101, 64
        %v5302 = vpop.permute.xlu0 %5301
        %5303 = vrot.lane.b32.xlu0 %v5118, 64
        %v5304 = vpop.permute.xlu0 %5303
        %v5305 = vsel %vm3551, %v5302, %v5304
        %5307 = vmatprep.subr.mxu0 0.0
        %5308 = vmatpush1.msra.mxu0 %v5300
        %5309 = vmatprep.subr.mxu0 0.0
        %5310 = vmatpush1.msra.mxu0 %v5299
        %5311 = vmatprep.subr.mxu0 0.0
        %5312 = vmatpush1.msra.mxu0 %v5298
        %5313 = vmatprep.subr.mxu0 0.0
        %5314 = vmatpush1.msra.mxu0 %v5297
        %5315 = vmatprep.subr.mxu0 0.0
        %5316 = vmatpush1.msra.mxu0 %v5296
        %5317 = vmatprep.subr.mxu0 0.0
        %5318 = vmatpush1.msra.mxu0 %v5295
        %5319 = vmatprep.subr.mxu0 0.0
        %5320 = vmatpush1.msra.mxu0 %v5294
        %5321 = vmatprep.subr.mxu0 0.0
        %5322 = vmatpush1.msra.mxu0 %v5293
        %5323 = vmatprep.subr.mxu0 0.0
        %5324 = vmatpush1.msra.mxu0 %v5292
        %5325 = vmatprep.subr.mxu0 0.0
        %5326 = vmatpush1.msra.mxu0 %v5291
        %5327 = vmatprep.subr.mxu0 0.0
        %5328 = vmatpush1.msra.mxu0 %v5290
        %5329 = vmatprep.subr.mxu0 0.0
        %5330 = vmatpush1.msra.mxu0 %v5289
        %5331 = vmatprep.subr.mxu0 0.0
        %5332 = vmatpush1.msra.mxu0 %v5288
        %5333 = vmatprep.subr.mxu0 0.0
        %5334 = vmatpush1.msra.mxu0 %v5287
        %5335 = vmatprep.subr.mxu0 0.0
        %5336 = vmatpush1.msra.mxu0 %v5286
        %5337 = vmatprep.subr.mxu0 0.0
        %5338 = vmatpush1.msra.mxu0 %v5285
        %5339 = vmatprep.subr.mxu0 0.0
        %5340 = vmatpush2.msra.mxu0 0.0
        %5341 = vmatprep.subr.mxu0 0.0
        %5342 = vmatpush2.msra.mxu0 0.0
        %5343 = vmatprep.subr.mxu0 0.0
        %5344 = vmatpush2.msra.mxu0 0.0
        %5345 = vmatprep.subr.mxu0 0.0
        %5346 = vmatpush2.msra.mxu0 0.0
        %5347 = vmatprep.subr.mxu0 0.0
        %5348 = vmatpush2.msra.mxu0 0.0
        %5349 = vmatprep.subr.mxu0 0.0
        %5350 = vmatpush2.msra.mxu0 0.0
        %5351 = vmatprep.subr.mxu0 0.0
        %5352 = vmatpush2.msra.mxu0 0.0
        %5353 = vmatprep.subr.mxu0 0.0
        %5354 = vmatpush2.msra.mxu0 0.0
        %5355 = vmatprep.subr.mxu0 0.0
        %5356 = vmatpush2.msra.mxu0 0.0
        %5357 = vmatprep.subr.mxu0 0.0
        %5358 = vmatpush2.msra.mxu0 0.0
        %5359 = vmatprep.subr.mxu0 0.0
        %5360 = vmatpush2.msra.mxu0 0.0
        %5361 = vmatprep.subr.mxu0 0.0
        %5362 = vmatpush2.msra.mxu0 0.0
        %5363 = vmatprep.subr.mxu0 0.0
        %5364 = vmatpush2.msra.mxu0 0.0
        %5365 = vmatprep.subr.mxu0 0.0
        %5366 = vmatpush2.msra.mxu0 0.0
        %5367 = vmatprep.subr.mxu0 0.0
        %5368 = vmatpush2.msra.mxu0 0.0
        %5369 = vmatprep.subr.mxu0 0.0
        %5370 = vmatpush2.msra.mxu0 0.0
        %5371 = vmatprep.mubr.f32.mxu0 0.0
        %5372 = vmatmul.mubr.f32.gmra.mxu0 %v5305
        %v5373 = vpop.f32.mrf.mxu0
        %v5374 = vadd.f32 0.0, %v5373
        %v5375 = vpop.f32.mrf.mxu0
        %5376 = vdwg.mxu0
        %v5377 = vadd.f32 %v5281, %v5374
        %v5378 = vld [vmem:[#allocation7] sm:$0x1e]
        %s5379 = scalar_lea.vmem %s16, 384
        %v5380 = vld [vmem:[%s5379] sm:$0xff]
        %v5381 = vld [vmem:[%s5379 + $0x8] sm:$0xff]
        %v5382 = vld [vmem:[%s5379 + $0x10] sm:$0xff]
        %v5383 = vld [vmem:[%s5379 + $0x18] sm:$0xff]
        %v5384 = vld [vmem:[%s5379 + $0x20] sm:$0xff]
        %v5385 = vld [vmem:[%s5379 + $0x28] sm:$0xff]
        %v5386 = vld [vmem:[%s5379 + $0x30] sm:$0xff]
        %v5387 = vld [vmem:[%s5379 + $0x38] sm:$0xff]
        %v5388 = vld [vmem:[%s5379 + $0x40] sm:$0xff]
        %v5389 = vld [vmem:[%s5379 + $0x48] sm:$0xff]
        %v5390 = vld [vmem:[%s5379 + $0x50] sm:$0xff]
        %v5391 = vld [vmem:[%s5379 + $0x58] sm:$0xff]
        %v5392 = vld [vmem:[%s5379 + $0x60] sm:$0xff]
        %v5393 = vld [vmem:[%s5379 + $0x68] sm:$0xff]
        %v5394 = vld [vmem:[%s5379 + $0x70] sm:$0xff]
        %v5395 = vld [vmem:[%s5379 + $0x78] sm:$0xff]
        %v5397 = vrot.slane %v5378, 1
        %5399 = vmatprep.subr.mxu0 0.0
        %5400 = vmatpush1.msra.mxu0 %v5395
        %5401 = vmatprep.subr.mxu0 0.0
        %5402 = vmatpush1.msra.mxu0 %v5394
        %5403 = vmatprep.subr.mxu0 0.0
        %5404 = vmatpush1.msra.mxu0 %v5393
        %5405 = vmatprep.subr.mxu0 0.0
        %5406 = vmatpush1.msra.mxu0 %v5392
        %5407 = vmatprep.subr.mxu0 0.0
        %5408 = vmatpush1.msra.mxu0 %v5391
        %5409 = vmatprep.subr.mxu0 0.0
        %5410 = vmatpush1.msra.mxu0 %v5390
        %5411 = vmatprep.subr.mxu0 0.0
        %5412 = vmatpush1.msra.mxu0 %v5389
        %5413 = vmatprep.subr.mxu0 0.0
        %5414 = vmatpush1.msra.mxu0 %v5388
        %5415 = vmatprep.subr.mxu0 0.0
        %5416 = vmatpush1.msra.mxu0 %v5387
        %5417 = vmatprep.subr.mxu0 0.0
        %5418 = vmatpush1.msra.mxu0 %v5386
        %5419 = vmatprep.subr.mxu0 0.0
        %5420 = vmatpush1.msra.mxu0 %v5385
        %5421 = vmatprep.subr.mxu0 0.0
        %5422 = vmatpush1.msra.mxu0 %v5384
        %5423 = vmatprep.subr.mxu0 0.0
        %5424 = vmatpush1.msra.mxu0 %v5383
        %5425 = vmatprep.subr.mxu0 0.0
        %5426 = vmatpush1.msra.mxu0 %v5382
        %5427 = vmatprep.subr.mxu0 0.0
        %5428 = vmatpush1.msra.mxu0 %v5381
        %5429 = vmatprep.subr.mxu0 0.0
        %5430 = vmatpush1.msra.mxu0 %v5380
        %5431 = vmatprep.subr.mxu0 0.0
        %5432 = vmatpush2.msra.mxu0 0.0
        %5433 = vmatprep.subr.mxu0 0.0
        %5434 = vmatpush2.msra.mxu0 0.0
        %5435 = vmatprep.subr.mxu0 0.0
        %5436 = vmatpush2.msra.mxu0 0.0
        %5437 = vmatprep.subr.mxu0 0.0
        %5438 = vmatpush2.msra.mxu0 0.0
        %5439 = vmatprep.subr.mxu0 0.0
        %5440 = vmatpush2.msra.mxu0 0.0
        %5441 = vmatprep.subr.mxu0 0.0
        %5442 = vmatpush2.msra.mxu0 0.0
        %5443 = vmatprep.subr.mxu0 0.0
        %5444 = vmatpush2.msra.mxu0 0.0
        %5445 = vmatprep.subr.mxu0 0.0
        %5446 = vmatpush2.msra.mxu0 0.0
        %5447 = vmatprep.subr.mxu0 0.0
        %5448 = vmatpush2.msra.mxu0 0.0
        %5449 = vmatprep.subr.mxu0 0.0
        %5450 = vmatpush2.msra.mxu0 0.0
        %5451 = vmatprep.subr.mxu0 0.0
        %5452 = vmatpush2.msra.mxu0 0.0
        %5453 = vmatprep.subr.mxu0 0.0
        %5454 = vmatpush2.msra.mxu0 0.0
        %5455 = vmatprep.subr.mxu0 0.0
        %5456 = vmatpush2.msra.mxu0 0.0
        %5457 = vmatprep.subr.mxu0 0.0
        %5458 = vmatpush2.msra.mxu0 0.0
        %5459 = vmatprep.subr.mxu0 0.0
        %5460 = vmatpush2.msra.mxu0 0.0
        %5461 = vmatprep.subr.mxu0 0.0
        %5462 = vmatpush2.msra.mxu0 0.0
        %5463 = vmatprep.mubr.f32.mxu0 0.0
        %5464 = vmatmul.mubr.f32.gmra.mxu0 %v5397
        %v5465 = vpop.f32.mrf.mxu0
        %v5466 = vadd.f32 0.0, %v5465
        %v5467 = vpop.f32.mrf.mxu0
        %5468 = vdwg.mxu0
        %v5469 = vadd.f32 %v5377, %v5466
        %v5470 = vld [vmem:[#allocation7] sm:$0x1e]
        %v5471 = vld [vmem:[#allocation7 + $0x8] sm:$0x1e]
        %s5472 = scalar_lea.vmem %s16, 512
        %v5473 = vld [vmem:[%s5472] sm:$0xff]
        %v5474 = vld [vmem:[%s5472 + $0x8] sm:$0xff]
        %v5475 = vld [vmem:[%s5472 + $0x10] sm:$0xff]
        %v5476 = vld [vmem:[%s5472 + $0x18] sm:$0xff]
        %v5477 = vld [vmem:[%s5472 + $0x20] sm:$0xff]
        %v5478 = vld [vmem:[%s5472 + $0x28] sm:$0xff]
        %v5479 = vld [vmem:[%s5472 + $0x30] sm:$0xff]
        %v5480 = vld [vmem:[%s5472 + $0x38] sm:$0xff]
        %v5481 = vld [vmem:[%s5472 + $0x40] sm:$0xff]
        %v5482 = vld [vmem:[%s5472 + $0x48] sm:$0xff]
        %v5483 = vld [vmem:[%s5472 + $0x50] sm:$0xff]
        %v5484 = vld [vmem:[%s5472 + $0x58] sm:$0xff]
        %v5485 = vld [vmem:[%s5472 + $0x60] sm:$0xff]
        %v5486 = vld [vmem:[%s5472 + $0x68] sm:$0xff]
        %v5487 = vld [vmem:[%s5472 + $0x70] sm:$0xff]
        %v5488 = vld [vmem:[%s5472 + $0x78] sm:$0xff]
        %v5491 = vrot.slane %v5470, 1
        %v5492 = vrot.slane %v5471, 1
        %5493 = vrot.lane.b32.xlu0 %v5491, 96
        %v5494 = vpop.permute.xlu0 %5493
        %5495 = vrot.lane.b32.xlu0 %v5492, 96
        %v5496 = vpop.permute.xlu0 %5495
        %v5497 = vsel %vm3520, %v5494, %v5496
        %5499 = vmatprep.subr.mxu0 0.0
        %5500 = vmatpush1.msra.mxu0 %v5488
        %5501 = vmatprep.subr.mxu0 0.0
        %5502 = vmatpush1.msra.mxu0 %v5487
        %5503 = vmatprep.subr.mxu0 0.0
        %5504 = vmatpush1.msra.mxu0 %v5486
        %5505 = vmatprep.subr.mxu0 0.0
        %5506 = vmatpush1.msra.mxu0 %v5485
        %5507 = vmatprep.subr.mxu0 0.0
        %5508 = vmatpush1.msra.mxu0 %v5484
        %5509 = vmatprep.subr.mxu0 0.0
        %5510 = vmatpush1.msra.mxu0 %v5483
        %5511 = vmatprep.subr.mxu0 0.0
        %5512 = vmatpush1.msra.mxu0 %v5482
        %5513 = vmatprep.subr.mxu0 0.0
        %5514 = vmatpush1.msra.mxu0 %v5481
        %5515 = vmatprep.subr.mxu0 0.0
        %5516 = vmatpush1.msra.mxu0 %v5480
        %5517 = vmatprep.subr.mxu0 0.0
        %5518 = vmatpush1.msra.mxu0 %v5479
        %5519 = vmatprep.subr.mxu0 0.0
        %5520 = vmatpush1.msra.mxu0 %v5478
        %5521 = vmatprep.subr.mxu0 0.0
        %5522 = vmatpush1.msra.mxu0 %v5477
        %5523 = vmatprep.subr.mxu0 0.0
        %5524 = vmatpush1.msra.mxu0 %v5476
        %5525 = vmatprep.subr.mxu0 0.0
        %5526 = vmatpush1.msra.mxu0 %v5475
        %5527 = vmatprep.subr.mxu0 0.0
        %5528 = vmatpush1.msra.mxu0 %v5474
        %5529 = vmatprep.subr.mxu0 0.0
        %5530 = vmatpush1.msra.mxu0 %v5473
        %5531 = vmatprep.subr.mxu0 0.0
        %5532 = vmatpush2.msra.mxu0 0.0
        %5533 = vmatprep.subr.mxu0 0.0
        %5534 = vmatpush2.msra.mxu0 0.0
        %5535 = vmatprep.subr.mxu0 0.0
        %5536 = vmatpush2.msra.mxu0 0.0
        %5537 = vmatprep.subr.mxu0 0.0
        %5538 = vmatpush2.msra.mxu0 0.0
        %5539 = vmatprep.subr.mxu0 0.0
        %5540 = vmatpush2.msra.mxu0 0.0
        %5541 = vmatprep.subr.mxu0 0.0
        %5542 = vmatpush2.msra.mxu0 0.0
        %5543 = vmatprep.subr.mxu0 0.0
        %5544 = vmatpush2.msra.mxu0 0.0
        %5545 = vmatprep.subr.mxu0 0.0
        %5546 = vmatpush2.msra.mxu0 0.0
        %5547 = vmatprep.subr.mxu0 0.0
        %5548 = vmatpush2.msra.mxu0 0.0
        %5549 = vmatprep.subr.mxu0 0.0
        %5550 = vmatpush2.msra.mxu0 0.0
        %5551 = vmatprep.subr.mxu0 0.0
        %5552 = vmatpush2.msra.mxu0 0.0
        %5553 = vmatprep.subr.mxu0 0.0
        %5554 = vmatpush2.msra.mxu0 0.0
        %5555 = vmatprep.subr.mxu0 0.0
        %5556 = vmatpush2.msra.mxu0 0.0
        %5557 = vmatprep.subr.mxu0 0.0
        %5558 = vmatpush2.msra.mxu0 0.0
        %5559 = vmatprep.subr.mxu0 0.0
        %5560 = vmatpush2.msra.mxu0 0.0
        %5561 = vmatprep.subr.mxu0 0.0
        %5562 = vmatpush2.msra.mxu0 0.0
        %5563 = vmatprep.mubr.f32.mxu0 0.0
        %5564 = vmatmul.mubr.f32.gmra.mxu0 %v5497
        %v5565 = vpop.f32.mrf.mxu0
        %v5566 = vadd.f32 0.0, %v5565
        %v5567 = vpop.f32.mrf.mxu0
        %5568 = vdwg.mxu0
        %v5569 = vadd.f32 %v5469, %v5566
        %s5570 = scalar_lea.vmem %s16, 640
        %v5571 = vld [vmem:[%s5570] sm:$0xff]
        %v5572 = vld [vmem:[%s5570 + $0x8] sm:$0xff]
        %v5573 = vld [vmem:[%s5570 + $0x10] sm:$0xff]
        %v5574 = vld [vmem:[%s5570 + $0x18] sm:$0xff]
        %v5575 = vld [vmem:[%s5570 + $0x20] sm:$0xff]
        %v5576 = vld [vmem:[%s5570 + $0x28] sm:$0xff]
        %v5577 = vld [vmem:[%s5570 + $0x30] sm:$0xff]
        %v5578 = vld [vmem:[%s5570 + $0x38] sm:$0xff]
        %v5579 = vld [vmem:[%s5570 + $0x40] sm:$0xff]
        %v5580 = vld [vmem:[%s5570 + $0x48] sm:$0xff]
        %v5581 = vld [vmem:[%s5570 + $0x50] sm:$0xff]
        %v5582 = vld [vmem:[%s5570 + $0x58] sm:$0xff]
        %v5583 = vld [vmem:[%s5570 + $0x60] sm:$0xff]
        %v5584 = vld [vmem:[%s5570 + $0x68] sm:$0xff]
        %v5585 = vld [vmem:[%s5570 + $0x70] sm:$0xff]
        %v5586 = vld [vmem:[%s5570 + $0x78] sm:$0xff]
        %5587 = vrot.lane.b32.xlu0 %v5491, 64
        %v5588 = vpop.permute.xlu0 %5587
        %5589 = vrot.lane.b32.xlu0 %v5492, 64
        %v5590 = vpop.permute.xlu0 %5589
        %v5591 = vsel %vm3551, %v5588, %v5590
        %5593 = vmatprep.subr.mxu0 0.0
        %5594 = vmatpush1.msra.mxu0 %v5586
        %5595 = vmatprep.subr.mxu0 0.0
        %5596 = vmatpush1.msra.mxu0 %v5585
        %5597 = vmatprep.subr.mxu0 0.0
        %5598 = vmatpush1.msra.mxu0 %v5584
        %5599 = vmatprep.subr.mxu0 0.0
        %5600 = vmatpush1.msra.mxu0 %v5583
        %5601 = vmatprep.subr.mxu0 0.0
        %5602 = vmatpush1.msra.mxu0 %v5582
        %5603 = vmatprep.subr.mxu0 0.0
        %5604 = vmatpush1.msra.mxu0 %v5581
        %5605 = vmatprep.subr.mxu0 0.0
        %5606 = vmatpush1.msra.mxu0 %v5580
        %5607 = vmatprep.subr.mxu0 0.0
        %5608 = vmatpush1.msra.mxu0 %v5579
        %5609 = vmatprep.subr.mxu0 0.0
        %5610 = vmatpush1.msra.mxu0 %v5578
        %5611 = vmatprep.subr.mxu0 0.0
        %5612 = vmatpush1.msra.mxu0 %v5577
        %5613 = vmatprep.subr.mxu0 0.0
        %5614 = vmatpush1.msra.mxu0 %v5576
        %5615 = vmatprep.subr.mxu0 0.0
        %5616 = vmatpush1.msra.mxu0 %v5575
        %5617 = vmatprep.subr.mxu0 0.0
        %5618 = vmatpush1.msra.mxu0 %v5574
        %5619 = vmatprep.subr.mxu0 0.0
        %5620 = vmatpush1.msra.mxu0 %v5573
        %5621 = vmatprep.subr.mxu0 0.0
        %5622 = vmatpush1.msra.mxu0 %v5572
        %5623 = vmatprep.subr.mxu0 0.0
        %5624 = vmatpush1.msra.mxu0 %v5571
        %5625 = vmatprep.subr.mxu0 0.0
        %5626 = vmatpush2.msra.mxu0 0.0
        %5627 = vmatprep.subr.mxu0 0.0
        %5628 = vmatpush2.msra.mxu0 0.0
        %5629 = vmatprep.subr.mxu0 0.0
        %5630 = vmatpush2.msra.mxu0 0.0
        %5631 = vmatprep.subr.mxu0 0.0
        %5632 = vmatpush2.msra.mxu0 0.0
        %5633 = vmatprep.subr.mxu0 0.0
        %5634 = vmatpush2.msra.mxu0 0.0
        %5635 = vmatprep.subr.mxu0 0.0
        %5636 = vmatpush2.msra.mxu0 0.0
        %5637 = vmatprep.subr.mxu0 0.0
        %5638 = vmatpush2.msra.mxu0 0.0
        %5639 = vmatprep.subr.mxu0 0.0
        %5640 = vmatpush2.msra.mxu0 0.0
        %5641 = vmatprep.subr.mxu0 0.0
        %5642 = vmatpush2.msra.mxu0 0.0
        %5643 = vmatprep.subr.mxu0 0.0
        %5644 = vmatpush2.msra.mxu0 0.0
        %5645 = vmatprep.subr.mxu0 0.0
        %5646 = vmatpush2.msra.mxu0 0.0
        %5647 = vmatprep.subr.mxu0 0.0
        %5648 = vmatpush2.msra.mxu0 0.0
        %5649 = vmatprep.subr.mxu0 0.0
        %5650 = vmatpush2.msra.mxu0 0.0
        %5651 = vmatprep.subr.mxu0 0.0
        %5652 = vmatpush2.msra.mxu0 0.0
        %5653 = vmatprep.subr.mxu0 0.0
        %5654 = vmatpush2.msra.mxu0 0.0
        %5655 = vmatprep.subr.mxu0 0.0
        %5656 = vmatpush2.msra.mxu0 0.0
        %5657 = vmatprep.mubr.f32.mxu0 0.0
        %5658 = vmatmul.mubr.f32.gmra.mxu0 %v5591
        %v5659 = vpop.f32.mrf.mxu0
        %v5660 = vadd.f32 0.0, %v5659
        %v5661 = vpop.f32.mrf.mxu0
        %5662 = vdwg.mxu0
        %v5663 = vadd.f32 %v5569, %v5660
        %v5664 = vld [vmem:[#allocation7] sm:$0x3c]
        %s5665 = scalar_lea.vmem %s16, 768
        %v5666 = vld [vmem:[%s5665] sm:$0xff]
        %v5667 = vld [vmem:[%s5665 + $0x8] sm:$0xff]
        %v5668 = vld [vmem:[%s5665 + $0x10] sm:$0xff]
        %v5669 = vld [vmem:[%s5665 + $0x18] sm:$0xff]
        %v5670 = vld [vmem:[%s5665 + $0x20] sm:$0xff]
        %v5671 = vld [vmem:[%s5665 + $0x28] sm:$0xff]
        %v5672 = vld [vmem:[%s5665 + $0x30] sm:$0xff]
        %v5673 = vld [vmem:[%s5665 + $0x38] sm:$0xff]
        %v5674 = vld [vmem:[%s5665 + $0x40] sm:$0xff]
        %v5675 = vld [vmem:[%s5665 + $0x48] sm:$0xff]
        %v5676 = vld [vmem:[%s5665 + $0x50] sm:$0xff]
        %v5677 = vld [vmem:[%s5665 + $0x58] sm:$0xff]
        %v5678 = vld [vmem:[%s5665 + $0x60] sm:$0xff]
        %v5679 = vld [vmem:[%s5665 + $0x68] sm:$0xff]
        %v5680 = vld [vmem:[%s5665 + $0x70] sm:$0xff]
        %v5681 = vld [vmem:[%s5665 + $0x78] sm:$0xff]
        %v5683 = vrot.slane %v5664, 2
        %5685 = vmatprep.subr.mxu0 0.0
        %5686 = vmatpush1.msra.mxu0 %v5681
        %5687 = vmatprep.subr.mxu0 0.0
        %5688 = vmatpush1.msra.mxu0 %v5680
        %5689 = vmatprep.subr.mxu0 0.0
        %5690 = vmatpush1.msra.mxu0 %v5679
        %5691 = vmatprep.subr.mxu0 0.0
        %5692 = vmatpush1.msra.mxu0 %v5678
        %5693 = vmatprep.subr.mxu0 0.0
        %5694 = vmatpush1.msra.mxu0 %v5677
        %5695 = vmatprep.subr.mxu0 0.0
        %5696 = vmatpush1.msra.mxu0 %v5676
        %5697 = vmatprep.subr.mxu0 0.0
        %5698 = vmatpush1.msra.mxu0 %v5675
        %5699 = vmatprep.subr.mxu0 0.0
        %5700 = vmatpush1.msra.mxu0 %v5674
        %5701 = vmatprep.subr.mxu0 0.0
        %5702 = vmatpush1.msra.mxu0 %v5673
        %5703 = vmatprep.subr.mxu0 0.0
        %5704 = vmatpush1.msra.mxu0 %v5672
        %5705 = vmatprep.subr.mxu0 0.0
        %5706 = vmatpush1.msra.mxu0 %v5671
        %5707 = vmatprep.subr.mxu0 0.0
        %5708 = vmatpush1.msra.mxu0 %v5670
        %5709 = vmatprep.subr.mxu0 0.0
        %5710 = vmatpush1.msra.mxu0 %v5669
        %5711 = vmatprep.subr.mxu0 0.0
        %5712 = vmatpush1.msra.mxu0 %v5668
        %5713 = vmatprep.subr.mxu0 0.0
        %5714 = vmatpush1.msra.mxu0 %v5667
        %5715 = vmatprep.subr.mxu0 0.0
        %5716 = vmatpush1.msra.mxu0 %v5666
        %5717 = vmatprep.subr.mxu0 0.0
        %5718 = vmatpush2.msra.mxu0 0.0
        %5719 = vmatprep.subr.mxu0 0.0
        %5720 = vmatpush2.msra.mxu0 0.0
        %5721 = vmatprep.subr.mxu0 0.0
        %5722 = vmatpush2.msra.mxu0 0.0
        %5723 = vmatprep.subr.mxu0 0.0
        %5724 = vmatpush2.msra.mxu0 0.0
        %5725 = vmatprep.subr.mxu0 0.0
        %5726 = vmatpush2.msra.mxu0 0.0
        %5727 = vmatprep.subr.mxu0 0.0
        %5728 = vmatpush2.msra.mxu0 0.0
        %5729 = vmatprep.subr.mxu0 0.0
        %5730 = vmatpush2.msra.mxu0 0.0
        %5731 = vmatprep.subr.mxu0 0.0
        %5732 = vmatpush2.msra.mxu0 0.0
        %5733 = vmatprep.subr.mxu0 0.0
        %5734 = vmatpush2.msra.mxu0 0.0
        %5735 = vmatprep.subr.mxu0 0.0
        %5736 = vmatpush2.msra.mxu0 0.0
        %5737 = vmatprep.subr.mxu0 0.0
        %5738 = vmatpush2.msra.mxu0 0.0
        %5739 = vmatprep.subr.mxu0 0.0
        %5740 = vmatpush2.msra.mxu0 0.0
        %5741 = vmatprep.subr.mxu0 0.0
        %5742 = vmatpush2.msra.mxu0 0.0
        %5743 = vmatprep.subr.mxu0 0.0
        %5744 = vmatpush2.msra.mxu0 0.0
        %5745 = vmatprep.subr.mxu0 0.0
        %5746 = vmatpush2.msra.mxu0 0.0
        %5747 = vmatprep.subr.mxu0 0.0
        %5748 = vmatpush2.msra.mxu0 0.0
        %5749 = vmatprep.mubr.f32.mxu0 0.0
        %5750 = vmatmul.mubr.f32.gmra.mxu0 %v5683
        %v5751 = vpop.f32.mrf.mxu0
        %v5752 = vadd.f32 0.0, %v5751
        %v5753 = vpop.f32.mrf.mxu0
        %5754 = vdwg.mxu0
        %v5755 = vadd.f32 %v5663, %v5752
        %v5756 = vld [vmem:[#allocation7] sm:$0x3c]
        %v5757 = vld [vmem:[#allocation7 + $0x8] sm:$0x3c]
        %s5758 = scalar_lea.vmem %s16, 896
        %v5759 = vld [vmem:[%s5758] sm:$0xff]
        %v5760 = vld [vmem:[%s5758 + $0x8] sm:$0xff]
        %v5761 = vld [vmem:[%s5758 + $0x10] sm:$0xff]
        %v5762 = vld [vmem:[%s5758 + $0x18] sm:$0xff]
        %v5763 = vld [vmem:[%s5758 + $0x20] sm:$0xff]
        %v5764 = vld [vmem:[%s5758 + $0x28] sm:$0xff]
        %v5765 = vld [vmem:[%s5758 + $0x30] sm:$0xff]
        %v5766 = vld [vmem:[%s5758 + $0x38] sm:$0xff]
        %v5767 = vld [vmem:[%s5758 + $0x40] sm:$0xff]
        %v5768 = vld [vmem:[%s5758 + $0x48] sm:$0xff]
        %v5769 = vld [vmem:[%s5758 + $0x50] sm:$0xff]
        %v5770 = vld [vmem:[%s5758 + $0x58] sm:$0xff]
        %v5771 = vld [vmem:[%s5758 + $0x60] sm:$0xff]
        %v5772 = vld [vmem:[%s5758 + $0x68] sm:$0xff]
        %v5773 = vld [vmem:[%s5758 + $0x70] sm:$0xff]
        %v5774 = vld [vmem:[%s5758 + $0x78] sm:$0xff]
        %v5777 = vrot.slane %v5756, 2
        %v5778 = vrot.slane %v5757, 2
        %5779 = vrot.lane.b32.xlu0 %v5777, 96
        %v5780 = vpop.permute.xlu0 %5779
        %5781 = vrot.lane.b32.xlu0 %v5778, 96
        %v5782 = vpop.permute.xlu0 %5781
        %v5783 = vsel %vm3520, %v5780, %v5782
        %5785 = vmatprep.subr.mxu0 0.0
        %5786 = vmatpush1.msra.mxu0 %v5774
        %5787 = vmatprep.subr.mxu0 0.0
        %5788 = vmatpush1.msra.mxu0 %v5773
        %5789 = vmatprep.subr.mxu0 0.0
        %5790 = vmatpush1.msra.mxu0 %v5772
        %5791 = vmatprep.subr.mxu0 0.0
        %5792 = vmatpush1.msra.mxu0 %v5771
        %5793 = vmatprep.subr.mxu0 0.0
        %5794 = vmatpush1.msra.mxu0 %v5770
        %5795 = vmatprep.subr.mxu0 0.0
        %5796 = vmatpush1.msra.mxu0 %v5769
        %5797 = vmatprep.subr.mxu0 0.0
        %5798 = vmatpush1.msra.mxu0 %v5768
        %5799 = vmatprep.subr.mxu0 0.0
        %5800 = vmatpush1.msra.mxu0 %v5767
        %5801 = vmatprep.subr.mxu0 0.0
        %5802 = vmatpush1.msra.mxu0 %v5766
        %5803 = vmatprep.subr.mxu0 0.0
        %5804 = vmatpush1.msra.mxu0 %v5765
        %5805 = vmatprep.subr.mxu0 0.0
        %5806 = vmatpush1.msra.mxu0 %v5764
        %5807 = vmatprep.subr.mxu0 0.0
        %5808 = vmatpush1.msra.mxu0 %v5763
        %5809 = vmatprep.subr.mxu0 0.0
        %5810 = vmatpush1.msra.mxu0 %v5762
        %5811 = vmatprep.subr.mxu0 0.0
        %5812 = vmatpush1.msra.mxu0 %v5761
        %5813 = vmatprep.subr.mxu0 0.0
        %5814 = vmatpush1.msra.mxu0 %v5760
        %5815 = vmatprep.subr.mxu0 0.0
        %5816 = vmatpush1.msra.mxu0 %v5759
        %5817 = vmatprep.subr.mxu0 0.0
        %5818 = vmatpush2.msra.mxu0 0.0
        %5819 = vmatprep.subr.mxu0 0.0
        %5820 = vmatpush2.msra.mxu0 0.0
        %5821 = vmatprep.subr.mxu0 0.0
        %5822 = vmatpush2.msra.mxu0 0.0
        %5823 = vmatprep.subr.mxu0 0.0
        %5824 = vmatpush2.msra.mxu0 0.0
        %5825 = vmatprep.subr.mxu0 0.0
        %5826 = vmatpush2.msra.mxu0 0.0
        %5827 = vmatprep.subr.mxu0 0.0
        %5828 = vmatpush2.msra.mxu0 0.0
        %5829 = vmatprep.subr.mxu0 0.0
        %5830 = vmatpush2.msra.mxu0 0.0
        %5831 = vmatprep.subr.mxu0 0.0
        %5832 = vmatpush2.msra.mxu0 0.0
        %5833 = vmatprep.subr.mxu0 0.0
        %5834 = vmatpush2.msra.mxu0 0.0
        %5835 = vmatprep.subr.mxu0 0.0
        %5836 = vmatpush2.msra.mxu0 0.0
        %5837 = vmatprep.subr.mxu0 0.0
        %5838 = vmatpush2.msra.mxu0 0.0
        %5839 = vmatprep.subr.mxu0 0.0
        %5840 = vmatpush2.msra.mxu0 0.0
        %5841 = vmatprep.subr.mxu0 0.0
        %5842 = vmatpush2.msra.mxu0 0.0
        %5843 = vmatprep.subr.mxu0 0.0
        %5844 = vmatpush2.msra.mxu0 0.0
        %5845 = vmatprep.subr.mxu0 0.0
        %5846 = vmatpush2.msra.mxu0 0.0
        %5847 = vmatprep.subr.mxu0 0.0
        %5848 = vmatpush2.msra.mxu0 0.0
        %5849 = vmatprep.mubr.f32.mxu0 0.0
        %5850 = vmatmul.mubr.f32.gmra.mxu0 %v5783
        %v5851 = vpop.f32.mrf.mxu0
        %v5852 = vadd.f32 0.0, %v5851
        %v5853 = vpop.f32.mrf.mxu0
        %5854 = vdwg.mxu0
        %v5855 = vadd.f32 %v5755, %v5852
        %s5856 = scalar_lea.vmem %s16, 1024
        %v5857 = vld [vmem:[%s5856] sm:$0xff]
        %v5858 = vld [vmem:[%s5856 + $0x8] sm:$0xff]
        %v5859 = vld [vmem:[%s5856 + $0x10] sm:$0xff]
        %v5860 = vld [vmem:[%s5856 + $0x18] sm:$0xff]
        %v5861 = vld [vmem:[%s5856 + $0x20] sm:$0xff]
        %v5862 = vld [vmem:[%s5856 + $0x28] sm:$0xff]
        %v5863 = vld [vmem:[%s5856 + $0x30] sm:$0xff]
        %v5864 = vld [vmem:[%s5856 + $0x38] sm:$0xff]
        %v5865 = vld [vmem:[%s5856 + $0x40] sm:$0xff]
        %v5866 = vld [vmem:[%s5856 + $0x48] sm:$0xff]
        %v5867 = vld [vmem:[%s5856 + $0x50] sm:$0xff]
        %v5868 = vld [vmem:[%s5856 + $0x58] sm:$0xff]
        %v5869 = vld [vmem:[%s5856 + $0x60] sm:$0xff]
        %v5870 = vld [vmem:[%s5856 + $0x68] sm:$0xff]
        %v5871 = vld [vmem:[%s5856 + $0x70] sm:$0xff]
        %v5872 = vld [vmem:[%s5856 + $0x78] sm:$0xff]
        %5873 = vrot.lane.b32.xlu0 %v5777, 64
        %v5874 = vpop.permute.xlu0 %5873
        %5875 = vrot.lane.b32.xlu0 %v5778, 64
        %v5876 = vpop.permute.xlu0 %5875
        %v5877 = vsel %vm3551, %v5874, %v5876
        %5879 = vmatprep.subr.mxu0 0.0
        %5880 = vmatpush1.msra.mxu0 %v5872
        %5881 = vmatprep.subr.mxu0 0.0
        %5882 = vmatpush1.msra.mxu0 %v5871
        %5883 = vmatprep.subr.mxu0 0.0
        %5884 = vmatpush1.msra.mxu0 %v5870
        %5885 = vmatprep.subr.mxu0 0.0
        %5886 = vmatpush1.msra.mxu0 %v5869
        %5887 = vmatprep.subr.mxu0 0.0
        %5888 = vmatpush1.msra.mxu0 %v5868
        %5889 = vmatprep.subr.mxu0 0.0
        %5890 = vmatpush1.msra.mxu0 %v5867
        %5891 = vmatprep.subr.mxu0 0.0
        %5892 = vmatpush1.msra.mxu0 %v5866
        %5893 = vmatprep.subr.mxu0 0.0
        %5894 = vmatpush1.msra.mxu0 %v5865
        %5895 = vmatprep.subr.mxu0 0.0
        %5896 = vmatpush1.msra.mxu0 %v5864
        %5897 = vmatprep.subr.mxu0 0.0
        %5898 = vmatpush1.msra.mxu0 %v5863
        %5899 = vmatprep.subr.mxu0 0.0
        %5900 = vmatpush1.msra.mxu0 %v5862
        %5901 = vmatprep.subr.mxu0 0.0
        %5902 = vmatpush1.msra.mxu0 %v5861
        %5903 = vmatprep.subr.mxu0 0.0
        %5904 = vmatpush1.msra.mxu0 %v5860
        %5905 = vmatprep.subr.mxu0 0.0
        %5906 = vmatpush1.msra.mxu0 %v5859
        %5907 = vmatprep.subr.mxu0 0.0
        %5908 = vmatpush1.msra.mxu0 %v5858
        %5909 = vmatprep.subr.mxu0 0.0
        %5910 = vmatpush1.msra.mxu0 %v5857
        %5911 = vmatprep.subr.mxu0 0.0
        %5912 = vmatpush2.msra.mxu0 0.0
        %5913 = vmatprep.subr.mxu0 0.0
        %5914 = vmatpush2.msra.mxu0 0.0
        %5915 = vmatprep.subr.mxu0 0.0
        %5916 = vmatpush2.msra.mxu0 0.0
        %5917 = vmatprep.subr.mxu0 0.0
        %5918 = vmatpush2.msra.mxu0 0.0
        %5919 = vmatprep.subr.mxu0 0.0
        %5920 = vmatpush2.msra.mxu0 0.0
        %5921 = vmatprep.subr.mxu0 0.0
        %5922 = vmatpush2.msra.mxu0 0.0
        %5923 = vmatprep.subr.mxu0 0.0
        %5924 = vmatpush2.msra.mxu0 0.0
        %5925 = vmatprep.subr.mxu0 0.0
        %5926 = vmatpush2.msra.mxu0 0.0
        %5927 = vmatprep.subr.mxu0 0.0
        %5928 = vmatpush2.msra.mxu0 0.0
        %5929 = vmatprep.subr.mxu0 0.0
        %5930 = vmatpush2.msra.mxu0 0.0
        %5931 = vmatprep.subr.mxu0 0.0
        %5932 = vmatpush2.msra.mxu0 0.0
        %5933 = vmatprep.subr.mxu0 0.0
        %5934 = vmatpush2.msra.mxu0 0.0
        %5935 = vmatprep.subr.mxu0 0.0
        %5936 = vmatpush2.msra.mxu0 0.0
        %5937 = vmatprep.subr.mxu0 0.0
        %5938 = vmatpush2.msra.mxu0 0.0
        %5939 = vmatprep.subr.mxu0 0.0
        %5940 = vmatpush2.msra.mxu0 0.0
        %5941 = vmatprep.subr.mxu0 0.0
        %5942 = vmatpush2.msra.mxu0 0.0
        %5943 = vmatprep.mubr.f32.mxu0 0.0
        %5944 = vmatmul.mubr.f32.gmra.mxu0 %v5877
        %v5945 = vpop.f32.mrf.mxu0
        %v5946 = vadd.f32 0.0, %v5945
        %v5947 = vpop.f32.mrf.mxu0
        %5948 = vdwg.mxu0
        %v5949 = vadd.f32 %v5855, %v5946
        %v5950 = vld [vmem:[%s17] sm:$0x1]
        %v5952 = vlaneseq
        %v5953 = vshrl.u32 %v5952, 7
        %v5954 = vsub.s32 0, %v5953
        %v5955 = vrot.slane %v5950, %v5954
        %v5957 = vmul.f32 %v5949, %v5955
        %v5958 = vld [vmem:[%s18] sm:$0x1]
        %v5960 = vlaneseq
        %v5961 = vshrl.u32 %v5960, 7
        %v5962 = vsub.s32 0, %v5961
        %v5963 = vrot.slane %v5958, %v5962
        %v5965 = vadd.f32 %v5957, %v5963
        %v5966 = vmax.f32 %v5965, 0.0
        %v5968 = vrot.slane %v5966, 1
        %v5970 = vmax.f32 %v5966, %v5968
        %5971 = vst [vmem:[#allocation8] sm:$0x1] %v5970
        %5972 = vst [vmem:[#allocation8 - $0x1] sm:$0x4] %v5970
        %v5973 = vld [vmem:[#allocation8] sm:$0x1]
        %v5974 = vld [vmem:[%s19] sm:$0xff]
        %v5975 = vld [vmem:[%s19 + $0x8] sm:$0xff]
        %v5976 = vld [vmem:[%s19 + $0x10] sm:$0xff]
        %v5977 = vld [vmem:[%s19 + $0x18] sm:$0xff]
        %v5978 = vld [vmem:[%s19 + $0x20] sm:$0xff]
        %v5979 = vld [vmem:[%s19 + $0x28] sm:$0xff]
        %v5980 = vld [vmem:[%s19 + $0x30] sm:$0xff]
        %v5981 = vld [vmem:[%s19 + $0x38] sm:$0xff]
        %v5982 = vld [vmem:[%s19 + $0x40] sm:$0xff]
        %v5983 = vld [vmem:[%s19 + $0x48] sm:$0xff]
        %v5984 = vld [vmem:[%s19 + $0x50] sm:$0xff]
        %v5985 = vld [vmem:[%s19 + $0x58] sm:$0xff]
        %s5986 = scalar_lea.vmem %s19, 96
        %v5987 = vld [vmem:[%s5986] sm:$0xff]
        %v5988 = vld [vmem:[%s5986 + $0x8] sm:$0xff]
        %v5989 = vld [vmem:[%s5986 + $0x10] sm:$0xff]
        %v5990 = vld [vmem:[%s5986 + $0x18] sm:$0xff]
        %v5991 = vld [vmem:[%s5986 + $0x20] sm:$0xff]
        %v5992 = vld [vmem:[%s5986 + $0x28] sm:$0xff]
        %v5993 = vld [vmem:[%s5986 + $0x30] sm:$0xff]
        %v5994 = vld [vmem:[%s5986 + $0x38] sm:$0xff]
        %v5995 = vld [vmem:[%s5986 + $0x40] sm:$0xff]
        %v5996 = vld [vmem:[%s5986 + $0x48] sm:$0xff]
        %v5997 = vld [vmem:[%s5986 + $0x50] sm:$0xff]
        %v5998 = vld [vmem:[%s5986 + $0x58] sm:$0xff]
        %6000 = vrot.lane.b32.xlu0 %v5973, 96
        %v6001 = vpop.permute.xlu0 %6000
        %v6002 = vsel %vm3520, %v6001, 0
        %6004 = vmatprep.subr.mxu0 0.0
        %6005 = vmatpush1.msra.mxu0 0.0
        %6006 = vmatprep.subr.mxu0 0.0
        %6007 = vmatpush1.msra.mxu0 0.0
        %6008 = vmatprep.subr.mxu0 0.0
        %6009 = vmatpush1.msra.mxu0 0.0
        %6010 = vmatprep.subr.mxu0 0.0
        %6011 = vmatpush1.msra.mxu0 0.0
        %6012 = vmatprep.subr.mxu0 0.0
        %6013 = vmatpush1.msra.mxu0 %v5998
        %6014 = vmatprep.subr.mxu0 0.0
        %6015 = vmatpush1.msra.mxu0 %v5997
        %6016 = vmatprep.subr.mxu0 0.0
        %6017 = vmatpush1.msra.mxu0 %v5996
        %6018 = vmatprep.subr.mxu0 0.0
        %6019 = vmatpush1.msra.mxu0 %v5995
        %6020 = vmatprep.subr.mxu0 0.0
        %6021 = vmatpush1.msra.mxu0 %v5994
        %6022 = vmatprep.subr.mxu0 0.0
        %6023 = vmatpush1.msra.mxu0 %v5993
        %6024 = vmatprep.subr.mxu0 0.0
        %6025 = vmatpush1.msra.mxu0 %v5992
        %6026 = vmatprep.subr.mxu0 0.0
        %6027 = vmatpush1.msra.mxu0 %v5991
        %6028 = vmatprep.subr.mxu0 0.0
        %6029 = vmatpush1.msra.mxu0 %v5990
        %6030 = vmatprep.subr.mxu0 0.0
        %6031 = vmatpush1.msra.mxu0 %v5989
        %6032 = vmatprep.subr.mxu0 0.0
        %6033 = vmatpush1.msra.mxu0 %v5988
        %6034 = vmatprep.subr.mxu0 0.0
        %6035 = vmatpush1.msra.mxu0 %v5987
        %6036 = vmatprep.subr.mxu0 0.0
        %6037 = vmatpush2.msra.mxu0 0.0
        %6038 = vmatprep.subr.mxu0 0.0
        %6039 = vmatpush2.msra.mxu0 0.0
        %6040 = vmatprep.subr.mxu0 0.0
        %6041 = vmatpush2.msra.mxu0 0.0
        %6042 = vmatprep.subr.mxu0 0.0
        %6043 = vmatpush2.msra.mxu0 0.0
        %6044 = vmatprep.subr.mxu0 0.0
        %6045 = vmatpush2.msra.mxu0 0.0
        %6046 = vmatprep.subr.mxu0 0.0
        %6047 = vmatpush2.msra.mxu0 0.0
        %6048 = vmatprep.subr.mxu0 0.0
        %6049 = vmatpush2.msra.mxu0 0.0
        %6050 = vmatprep.subr.mxu0 0.0
        %6051 = vmatpush2.msra.mxu0 0.0
        %6052 = vmatprep.subr.mxu0 0.0
        %6053 = vmatpush2.msra.mxu0 0.0
        %6054 = vmatprep.subr.mxu0 0.0
        %6055 = vmatpush2.msra.mxu0 0.0
        %6056 = vmatprep.subr.mxu0 0.0
        %6057 = vmatpush2.msra.mxu0 0.0
        %6058 = vmatprep.subr.mxu0 0.0
        %6059 = vmatpush2.msra.mxu0 0.0
        %6060 = vmatprep.subr.mxu0 0.0
        %6061 = vmatpush2.msra.mxu0 0.0
        %6062 = vmatprep.subr.mxu0 0.0
        %6063 = vmatpush2.msra.mxu0 0.0
        %6064 = vmatprep.subr.mxu0 0.0
        %6065 = vmatpush2.msra.mxu0 0.0
        %6066 = vmatprep.subr.mxu0 0.0
        %6067 = vmatpush2.msra.mxu0 0.0
        %6068 = vmatprep.mubr.f32.mxu0 0.0
        %6069 = vmatmul.mubr.f32.gmra.mxu0 %v6002
        %v6070 = vpop.f32.mrf.mxu0
        %v6071 = vadd.f32 0.0, %v6070
        %v6072 = vpop.f32.mrf.mxu0
        %6073 = vdwg.mxu0
        %v6074 = vsel %vm3520, %v5973, 0
        %6076 = vmatprep.subr.mxu0 0.0
        %6077 = vmatpush1.msra.mxu0 0.0
        %6078 = vmatprep.subr.mxu0 0.0
        %6079 = vmatpush1.msra.mxu0 0.0
        %6080 = vmatprep.subr.mxu0 0.0
        %6081 = vmatpush1.msra.mxu0 0.0
        %6082 = vmatprep.subr.mxu0 0.0
        %6083 = vmatpush1.msra.mxu0 0.0
        %6084 = vmatprep.subr.mxu0 0.0
        %6085 = vmatpush1.msra.mxu0 %v5985
        %6086 = vmatprep.subr.mxu0 0.0
        %6087 = vmatpush1.msra.mxu0 %v5984
        %6088 = vmatprep.subr.mxu0 0.0
        %6089 = vmatpush1.msra.mxu0 %v5983
        %6090 = vmatprep.subr.mxu0 0.0
        %6091 = vmatpush1.msra.mxu0 %v5982
        %6092 = vmatprep.subr.mxu0 0.0
        %6093 = vmatpush1.msra.mxu0 %v5981
        %6094 = vmatprep.subr.mxu0 0.0
        %6095 = vmatpush1.msra.mxu0 %v5980
        %6096 = vmatprep.subr.mxu0 0.0
        %6097 = vmatpush1.msra.mxu0 %v5979
        %6098 = vmatprep.subr.mxu0 0.0
        %6099 = vmatpush1.msra.mxu0 %v5978
        %6100 = vmatprep.subr.mxu0 0.0
        %6101 = vmatpush1.msra.mxu0 %v5977
        %6102 = vmatprep.subr.mxu0 0.0
        %6103 = vmatpush1.msra.mxu0 %v5976
        %6104 = vmatprep.subr.mxu0 0.0
        %6105 = vmatpush1.msra.mxu0 %v5975
        %6106 = vmatprep.subr.mxu0 0.0
        %6107 = vmatpush1.msra.mxu0 %v5974
        %6108 = vmatprep.subr.mxu0 0.0
        %6109 = vmatpush2.msra.mxu0 0.0
        %6110 = vmatprep.subr.mxu0 0.0
        %6111 = vmatpush2.msra.mxu0 0.0
        %6112 = vmatprep.subr.mxu0 0.0
        %6113 = vmatpush2.msra.mxu0 0.0
        %6114 = vmatprep.subr.mxu0 0.0
        %6115 = vmatpush2.msra.mxu0 0.0
        %6116 = vmatprep.subr.mxu0 0.0
        %6117 = vmatpush2.msra.mxu0 0.0
        %6118 = vmatprep.subr.mxu0 0.0
        %6119 = vmatpush2.msra.mxu0 0.0
        %6120 = vmatprep.subr.mxu0 0.0
        %6121 = vmatpush2.msra.mxu0 0.0
        %6122 = vmatprep.subr.mxu0 0.0
        %6123 = vmatpush2.msra.mxu0 0.0
        %6124 = vmatprep.subr.mxu0 0.0
        %6125 = vmatpush2.msra.mxu0 0.0
        %6126 = vmatprep.subr.mxu0 0.0
        %6127 = vmatpush2.msra.mxu0 0.0
        %6128 = vmatprep.subr.mxu0 0.0
        %6129 = vmatpush2.msra.mxu0 0.0
        %6130 = vmatprep.subr.mxu0 0.0
        %6131 = vmatpush2.msra.mxu0 0.0
        %6132 = vmatprep.subr.mxu0 0.0
        %6133 = vmatpush2.msra.mxu0 0.0
        %6134 = vmatprep.subr.mxu0 0.0
        %6135 = vmatpush2.msra.mxu0 0.0
        %6136 = vmatprep.subr.mxu0 0.0
        %6137 = vmatpush2.msra.mxu0 0.0
        %6138 = vmatprep.subr.mxu0 0.0
        %6139 = vmatpush2.msra.mxu0 0.0
        %6140 = vmatprep.mubr.f32.mxu0 0.0
        %6141 = vmatmul.mubr.f32.gmra.mxu0 %v6074
        %v6142 = vpop.f32.mrf.mxu0
        %v6143 = vadd.f32 %v6071, %v6142
        %v6144 = vpop.f32.mrf.mxu0
        %6145 = vdwg.mxu0
        %v6146 = vld [vmem:[#allocation8 + $0x1] sm:$0x1]
        %s6147 = scalar_lea.vmem %s19, 192
        %v6148 = vld [vmem:[%s6147] sm:$0xff]
        %v6149 = vld [vmem:[%s6147 + $0x8] sm:$0xff]
        %v6150 = vld [vmem:[%s6147 + $0x10] sm:$0xff]
        %v6151 = vld [vmem:[%s6147 + $0x18] sm:$0xff]
        %v6152 = vld [vmem:[%s6147 + $0x20] sm:$0xff]
        %v6153 = vld [vmem:[%s6147 + $0x28] sm:$0xff]
        %v6154 = vld [vmem:[%s6147 + $0x30] sm:$0xff]
        %v6155 = vld [vmem:[%s6147 + $0x38] sm:$0xff]
        %v6156 = vld [vmem:[%s6147 + $0x40] sm:$0xff]
        %v6157 = vld [vmem:[%s6147 + $0x48] sm:$0xff]
        %v6158 = vld [vmem:[%s6147 + $0x50] sm:$0xff]
        %v6159 = vld [vmem:[%s6147 + $0x58] sm:$0xff]
        %v6161 = vsel %vm3520, %v6146, 0
        %6163 = vmatprep.subr.mxu0 0.0
        %6164 = vmatpush1.msra.mxu0 0.0
        %6165 = vmatprep.subr.mxu0 0.0
        %6166 = vmatpush1.msra.mxu0 0.0
        %6167 = vmatprep.subr.mxu0 0.0
        %6168 = vmatpush1.msra.mxu0 0.0
        %6169 = vmatprep.subr.mxu0 0.0
        %6170 = vmatpush1.msra.mxu0 0.0
        %6171 = vmatprep.subr.mxu0 0.0
        %6172 = vmatpush1.msra.mxu0 %v6159
        %6173 = vmatprep.subr.mxu0 0.0
        %6174 = vmatpush1.msra.mxu0 %v6158
        %6175 = vmatprep.subr.mxu0 0.0
        %6176 = vmatpush1.msra.mxu0 %v6157
        %6177 = vmatprep.subr.mxu0 0.0
        %6178 = vmatpush1.msra.mxu0 %v6156
        %6179 = vmatprep.subr.mxu0 0.0
        %6180 = vmatpush1.msra.mxu0 %v6155
        %6181 = vmatprep.subr.mxu0 0.0
        %6182 = vmatpush1.msra.mxu0 %v6154
        %6183 = vmatprep.subr.mxu0 0.0
        %6184 = vmatpush1.msra.mxu0 %v6153
        %6185 = vmatprep.subr.mxu0 0.0
        %6186 = vmatpush1.msra.mxu0 %v6152
        %6187 = vmatprep.subr.mxu0 0.0
        %6188 = vmatpush1.msra.mxu0 %v6151
        %6189 = vmatprep.subr.mxu0 0.0
        %6190 = vmatpush1.msra.mxu0 %v6150
        %6191 = vmatprep.subr.mxu0 0.0
        %6192 = vmatpush1.msra.mxu0 %v6149
        %6193 = vmatprep.subr.mxu0 0.0
        %6194 = vmatpush1.msra.mxu0 %v6148
        %6195 = vmatprep.subr.mxu0 0.0
        %6196 = vmatpush2.msra.mxu0 0.0
        %6197 = vmatprep.subr.mxu0 0.0
        %6198 = vmatpush2.msra.mxu0 0.0
        %6199 = vmatprep.subr.mxu0 0.0
        %6200 = vmatpush2.msra.mxu0 0.0
        %6201 = vmatprep.subr.mxu0 0.0
        %6202 = vmatpush2.msra.mxu0 0.0
        %6203 = vmatprep.subr.mxu0 0.0
        %6204 = vmatpush2.msra.mxu0 0.0
        %6205 = vmatprep.subr.mxu0 0.0
        %6206 = vmatpush2.msra.mxu0 0.0
        %6207 = vmatprep.subr.mxu0 0.0
        %6208 = vmatpush2.msra.mxu0 0.0
        %6209 = vmatprep.subr.mxu0 0.0
        %6210 = vmatpush2.msra.mxu0 0.0
        %6211 = vmatprep.subr.mxu0 0.0
        %6212 = vmatpush2.msra.mxu0 0.0
        %6213 = vmatprep.subr.mxu0 0.0
        %6214 = vmatpush2.msra.mxu0 0.0
        %6215 = vmatprep.subr.mxu0 0.0
        %6216 = vmatpush2.msra.mxu0 0.0
        %6217 = vmatprep.subr.mxu0 0.0
        %6218 = vmatpush2.msra.mxu0 0.0
        %6219 = vmatprep.subr.mxu0 0.0
        %6220 = vmatpush2.msra.mxu0 0.0
        %6221 = vmatprep.subr.mxu0 0.0
        %6222 = vmatpush2.msra.mxu0 0.0
        %6223 = vmatprep.subr.mxu0 0.0
        %6224 = vmatpush2.msra.mxu0 0.0
        %6225 = vmatprep.subr.mxu0 0.0
        %6226 = vmatpush2.msra.mxu0 0.0
        %6227 = vmatprep.mubr.f32.mxu0 0.0
        %6228 = vmatmul.mubr.f32.gmra.mxu0 %v6161
        %v6229 = vpop.f32.mrf.mxu0
        %v6230 = vadd.f32 0.0, %v6229
        %v6231 = vpop.f32.mrf.mxu0
        %6232 = vdwg.mxu0
        %v6233 = vadd.f32 %v6143, %v6230
        %s6234 = scalar_lea.vmem %s19, 288
        %v6235 = vld [vmem:[%s6234] sm:$0xff]
        %v6236 = vld [vmem:[%s6234 + $0x8] sm:$0xff]
        %v6237 = vld [vmem:[%s6234 + $0x10] sm:$0xff]
        %v6238 = vld [vmem:[%s6234 + $0x18] sm:$0xff]
        %v6239 = vld [vmem:[%s6234 + $0x20] sm:$0xff]
        %v6240 = vld [vmem:[%s6234 + $0x28] sm:$0xff]
        %v6241 = vld [vmem:[%s6234 + $0x30] sm:$0xff]
        %v6242 = vld [vmem:[%s6234 + $0x38] sm:$0xff]
        %v6243 = vld [vmem:[%s6234 + $0x40] sm:$0xff]
        %v6244 = vld [vmem:[%s6234 + $0x48] sm:$0xff]
        %v6245 = vld [vmem:[%s6234 + $0x50] sm:$0xff]
        %v6246 = vld [vmem:[%s6234 + $0x58] sm:$0xff]
        %6247 = vrot.lane.b32.xlu0 %v6146, 96
        %v6248 = vpop.permute.xlu0 %6247
        %v6249 = vsel %vm3520, %v6248, 0
        %6251 = vmatprep.subr.mxu0 0.0
        %6252 = vmatpush1.msra.mxu0 0.0
        %6253 = vmatprep.subr.mxu0 0.0
        %6254 = vmatpush1.msra.mxu0 0.0
        %6255 = vmatprep.subr.mxu0 0.0
        %6256 = vmatpush1.msra.mxu0 0.0
        %6257 = vmatprep.subr.mxu0 0.0
        %6258 = vmatpush1.msra.mxu0 0.0
        %6259 = vmatprep.subr.mxu0 0.0
        %6260 = vmatpush1.msra.mxu0 %v6246
        %6261 = vmatprep.subr.mxu0 0.0
        %6262 = vmatpush1.msra.mxu0 %v6245
        %6263 = vmatprep.subr.mxu0 0.0
        %6264 = vmatpush1.msra.mxu0 %v6244
        %6265 = vmatprep.subr.mxu0 0.0
        %6266 = vmatpush1.msra.mxu0 %v6243
        %6267 = vmatprep.subr.mxu0 0.0
        %6268 = vmatpush1.msra.mxu0 %v6242
        %6269 = vmatprep.subr.mxu0 0.0
        %6270 = vmatpush1.msra.mxu0 %v6241
        %6271 = vmatprep.subr.mxu0 0.0
        %6272 = vmatpush1.msra.mxu0 %v6240
        %6273 = vmatprep.subr.mxu0 0.0
        %6274 = vmatpush1.msra.mxu0 %v6239
        %6275 = vmatprep.subr.mxu0 0.0
        %6276 = vmatpush1.msra.mxu0 %v6238
        %6277 = vmatprep.subr.mxu0 0.0
        %6278 = vmatpush1.msra.mxu0 %v6237
        %6279 = vmatprep.subr.mxu0 0.0
        %6280 = vmatpush1.msra.mxu0 %v6236
        %6281 = vmatprep.subr.mxu0 0.0
        %6282 = vmatpush1.msra.mxu0 %v6235
        %6283 = vmatprep.subr.mxu0 0.0
        %6284 = vmatpush2.msra.mxu0 0.0
        %6285 = vmatprep.subr.mxu0 0.0
        %6286 = vmatpush2.msra.mxu0 0.0
        %6287 = vmatprep.subr.mxu0 0.0
        %6288 = vmatpush2.msra.mxu0 0.0
        %6289 = vmatprep.subr.mxu0 0.0
        %6290 = vmatpush2.msra.mxu0 0.0
        %6291 = vmatprep.subr.mxu0 0.0
        %6292 = vmatpush2.msra.mxu0 0.0
        %6293 = vmatprep.subr.mxu0 0.0
        %6294 = vmatpush2.msra.mxu0 0.0
        %6295 = vmatprep.subr.mxu0 0.0
        %6296 = vmatpush2.msra.mxu0 0.0
        %6297 = vmatprep.subr.mxu0 0.0
        %6298 = vmatpush2.msra.mxu0 0.0
        %6299 = vmatprep.subr.mxu0 0.0
        %6300 = vmatpush2.msra.mxu0 0.0
        %6301 = vmatprep.subr.mxu0 0.0
        %6302 = vmatpush2.msra.mxu0 0.0
        %6303 = vmatprep.subr.mxu0 0.0
        %6304 = vmatpush2.msra.mxu0 0.0
        %6305 = vmatprep.subr.mxu0 0.0
        %6306 = vmatpush2.msra.mxu0 0.0
        %6307 = vmatprep.subr.mxu0 0.0
        %6308 = vmatpush2.msra.mxu0 0.0
        %6309 = vmatprep.subr.mxu0 0.0
        %6310 = vmatpush2.msra.mxu0 0.0
        %6311 = vmatprep.subr.mxu0 0.0
        %6312 = vmatpush2.msra.mxu0 0.0
        %6313 = vmatprep.subr.mxu0 0.0
        %6314 = vmatpush2.msra.mxu0 0.0
        %6315 = vmatprep.mubr.f32.mxu0 0.0
        %6316 = vmatmul.mubr.f32.gmra.mxu0 %v6249
        %v6317 = vpop.f32.mrf.mxu0
        %v6318 = vadd.f32 0.0, %v6317
        %v6319 = vpop.f32.mrf.mxu0
        %6320 = vdwg.mxu0
        %v6321 = vadd.f32 %v6233, %v6318
        %v6322 = vld [vmem:[%s20] sm:$0x1]
        %v6323 = vmul.f32 %v6321, %v6322
        %v6324 = vld [vmem:[%s21] sm:$0x1]
        %v6325 = vadd.f32 %v6323, %v6324
        %v6326 = vmax.f32 %v6325, 0.0
        %v6327 = vadd.f32 %v6326, 0.0
        %6329 = vrot.lane.b32.xlu0 %v6327, 96
        %v6330 = vpop.permute.xlu0 %6329
        %v6332 = vadd.f32 %v6327, %v6330
        %6333 = vrot.lane.b32.xlu0 %v6327, 64
        %v6334 = vpop.permute.xlu0 %6333
        %v6336 = vadd.f32 %v6332, %v6334
        %v6337 = vmul.f32 %v6336, 0.33333334
        %vm6338 = vcmask 253952
        %6339 = vst.msk [vmem:[%s764] sm:$0x1] %vm6338, %v6337
        %v6340 = vld [vmem:[%s22] sm:$0x1]
        %v6341 = vmul.f32 %v6337, %v6340
        %v6342 = vsel %vm6338, %v6341, 0.0
        %6343 = vadd.xlane.f32.xlu0 %v6342
        %v6344 = vpop.xlane.xlu0 %6343
        %v6345 = vld [vmem:[#allocation10] sm:$0x1]
        %v6346 = vadd.f32 %v6344, %v6345
        %vm6347 = vcmask 0
        %6348 = vst.msk [vmem:[%s772] sm:$0x1] %vm6347, %v6346
        %p6349 = scmp.lt.s32.totalorder %s42, 1
        %s6350 = scalar_select %p6349, %s42, 1
        %s6351 = scalar_lea.vmem %s24, %s6350
        %s6352 = sand.u32 %s585, 1
        %s6353 = scalar_lea.sflag [#allocation12], %s6352
        %s6354 = sand.u32 %s585, 1
        %s6355 = scalar_lea.vmem [#allocation11], %s6354
        // Predicated region
        $region117: #{baseline_classifier_forward.1} parent=115 // pred_check
          %p6356 = pneg %p569
        $region118: #{baseline_classifier_forward.1} parent=115 // pred_check_branch
          %6358 = sbr.rel (%p6356) target = $region120
        $region119: #{baseline_classifier_forward.1} parent=115 // pred_region
          _
        $region120: #{baseline_classifier_forward.1} parent=115 // pred_fallthru
          _
        // Predicated region
        $region121: #{baseline_classifier_forward.1} parent=115 // pred_check
          %p6359 = pneg %p595
        $region122: #{baseline_classifier_forward.1} parent=115 // pred_check_branch
          %6361 = sbr.rel (%p6359) target = $region124
        $region123: #{baseline_classifier_forward.1} parent=115 // pred_region
          %s6363 = ssub.s32 16, 16
          %6364 = vsyncadd %s6353, %s6363
          %s6365 = smul.addr %s42, 16
          %s6366 = scalar_lea.hbm %s25, %s6365
          %s6368 = sshll.u32 %s6355, 4
          %s6369 = int_to_ptr.vmem [resolvable:$true] %s6368
          %6371 = dma.vmem_to_hbm [thread:$0]  %s6369, 16, %s6366, %s6353
        $region124: #{baseline_classifier_forward.1} parent=115 // pred_fallthru
          _
      $region116: #{baseline_classifier_forward.1} parent=5 // pred_fallthru
        _
      %p6372 = scmp.le.s32.totalorder 2, %s37
      // Predicated region
      $region125: #{baseline_classifier_forward.1} parent=5 // pred_check
        %p6373 = pneg %p6372
      $region126: #{baseline_classifier_forward.1} parent=5 // pred_check_branch
        %6375 = sbr.rel (%p6373) target = $region128
      $region127: #{baseline_classifier_forward.1} parent=5 // pred_region
        %s6376 = ssub.s32 %s37, 2
        // Predicated region
        $region129: #{baseline_classifier_forward.1} parent=127 // pred_check
          %p6377 = pneg %p575
        $region130: #{baseline_classifier_forward.1} parent=127 // pred_check_branch
          %6379 = sbr.rel (%p6377) target = $region132
        $region131: #{baseline_classifier_forward.1} parent=127 // pred_region
          %p6380 = scmp.lt.s32.totalorder %s43, 1
          %s6381 = scalar_select %p6380, %s43, 1
          %s6382 = scalar_lea.vmem %s24, %s6381
        $region132: #{baseline_classifier_forward.1} parent=127 // pred_fallthru
          _
        // Predicated region
        $region133: #{baseline_classifier_forward.1} parent=127 // pred_check
          %p6383 = pneg %p601
        $region134: #{baseline_classifier_forward.1} parent=127 // pred_check_branch
          %6385 = sbr.rel (%p6383) target = $region136
        $region135: #{baseline_classifier_forward.1} parent=127 // pred_region
          %s6386 = sand.u32 %s586, 1
          %s6387 = scalar_lea.sflag [#allocation12], %s6386
          %s6388 = sand.u32 %s586, 1
          %s6389 = scalar_lea.vmem [#allocation11], %s6388
          %6390 = dma.done %s6387, 16
        $region136: #{baseline_classifier_forward.1} parent=127 // pred_fallthru
          _
      $region128: #{baseline_classifier_forward.1} parent=5 // pred_fallthru
        _
    $region6: #{baseline_classifier_forward.1} parent=1 // loop_footer
      %s41 = sadd.s32 1, %s37
    $region7: #{baseline_classifier_forward.1} parent=1 // loop_footer_branch
      %36 = sbr.rel target = $region3
    $region8: #{baseline_classifier_forward.1} parent=1 // loop_exit
      _
    %6391 = vsyncpa [#allocation12], 1
    %s6392 = scalar_lea.sflag [#allocation12], 1
    %6393 = vsyncpa %s6392, 1

</llo_original>
